<compile_context>
chip_gen: v6e
topology: v6e:2x2x1
jax: 0.10.0
libtpu: 0.0.40
codegen_flags: <defaults>
</compile_context>

<pallas_src>
from functools import partial

import jax
import jax.numpy as jnp
from jax.experimental import pallas as pl
from jax.experimental.pallas import tpu as pltpu


def ga_kernel(x_ref, wqkv_ref, wproj_ref, o_ref, *, num_heads, head_dim, scale):
    # x_ref:     (1, C, N)  current batch element, lane dim = N
    # wqkv_ref:  (3A, C)    qkv.weight in PyTorch (out, in) layout
    # wproj_ref: (C, A)     proj.weight in PyTorch (out, in) layout
    # o_ref:     (1, C, N)
    x = x_ref[0]                                       # (C, N)
    A = num_heads * head_dim

    # qkv projection: (3A, C) @ (C, N) -> (3A, N).  Lane dim stays N.
    qkv = jnp.dot(wqkv_ref[...], x, preferred_element_type=jnp.float32)

    # Row (sublane) slices -- cheap, no lane relayout.  Fold softmax scale into q.
    q = qkv[0:A, :] * scale                            # (A, N)
    k = qkv[A:2 * A, :]                                # (A, N)
    v = qkv[2 * A:3 * A, :]                            # (A, N)

    # Per-head attention (static unrolled loop).  Scores are computed transposed
    # (keys on sublanes, queries on lanes) so both the score matmul and the
    # attn @ v matmul are standard MXU (M,K)@(K,N) with no large transposes.
    head_outs = []
    for h in range(num_heads):
        lo = h * head_dim
        hi = lo + head_dim
        qh = q[lo:hi, :]                               # (hd, N)
        kh = k[lo:hi, :]                               # (hd, N)
        vh = v[lo:hi, :]                               # (hd, N)

        # scores^T[key, query] = sum_d k[d, key] * (scale * q[d, query])
        s_t = jnp.dot(kh.T, qh, preferred_element_type=jnp.float32)   # (Nk, Nq)

        # softmax over the key axis (sublane axis here)
        s_t = jnp.exp(s_t - jnp.max(s_t, axis=0, keepdims=True))
        denom = jnp.sum(s_t, axis=0, keepdims=True)                   # (1, Nq)
        p_t = s_t * pl.reciprocal(denom, approx=True)                 # (Nk, Nq)

        # ctx[d, query] = sum_key v[d, key] * p_t[key, query]  -> (hd, N), lane dim N
        head_outs.append(jnp.dot(vh, p_t, preferred_element_type=jnp.float32))

    # Sublane-axis concat -> (A, N), head-major rows (matches torch reshape order).
    ctx = jnp.concatenate(head_outs, axis=0)

    # output projection: (C, A) @ (A, N) -> (C, N)
    out = jnp.dot(wproj_ref[...], ctx, preferred_element_type=jnp.float32)
    o_ref[0] = out.astype(o_ref.dtype)


def ga_forward(x_nchw, wqkv, wproj, *, num_heads, head_dim):
    """x_nchw: (B, C, H, W). wqkv: (3A, C), wproj: (C, A) (PyTorch (out, in) layout)."""
    B, C, H, W = x_nchw.shape
    N = H * W
    A = num_heads * head_dim
    scale = float(head_dim) ** (-0.5)

    # NCHW flattens directly to the kernel's lane-dense (B, C, N) layout.
    x_bcn = x_nchw.reshape(B, C, N)

    flops = B * (2 * C * (3 * A) * N                       # qkv projection
                 + num_heads * (2 * head_dim * N * N       # scores
                                + 2 * head_dim * N * N)    # attn @ v
                 + 2 * A * C * N)                          # output projection
    transcendentals = B * num_heads * N * N                # exp in softmax
    bytes_accessed = 4 * (2 * B * C * N + (3 * A) * C + A * C)

    out_bcn = pl.pallas_call(
        partial(ga_kernel, num_heads=num_heads, head_dim=head_dim, scale=scale),
        out_shape=jax.ShapeDtypeStruct((B, C, N), x_nchw.dtype),
        grid_spec=pltpu.PrefetchScalarGridSpec(
            num_scalar_prefetch=0,
            grid=(B,),
            in_specs=[
                pl.BlockSpec((1, C, N), lambda b: (b, 0, 0)),
                pl.BlockSpec((3 * A, C), lambda b: (0, 0)),
                pl.BlockSpec((C, A), lambda b: (0, 0)),
            ],
            out_specs=pl.BlockSpec((1, C, N), lambda b: (b, 0, 0)),
        ),
        compiler_params=pltpu.CompilerParams(dimension_semantics=("parallel",)),
        cost_estimate=pl.CostEstimate(flops=flops,
                                      transcendentals=transcendentals,
                                      bytes_accessed=bytes_accessed),
    )(x_bcn, wqkv, wproj)

    # TODO(synk): optional bf16 cast at the MXU boundary (v6e/v7x) and flash-style
    # tiling for N >> 256 are not needed at these shapes and are omitted.
    return out_bcn.reshape(B, C, H, W)


def ga_reference(x_nchw, wqkv, wproj, *, num_heads, head_dim):
    """Pure-JAX reference mirroring the PyTorch forward."""
    B, C, H, W = x_nchw.shape
    N = H * W
    A = num_heads * head_dim
    scale = float(head_dim) ** (-0.5)
    x = jnp.transpose(x_nchw, (0, 2, 3, 1)).reshape(B, N, C)
    qkv = x @ wqkv.T                                               # (B, N, 3A)
    qkv = qkv.reshape(B, N, 3, num_heads, head_dim).transpose(2, 0, 3, 1, 4)
    q, k, v = qkv[0], qkv[1], qkv[2]                               # (B, nh, N, hd)
    attn = jnp.einsum('bhnd,bhmd->bhnm', q, k) * scale
    attn = jax.nn.softmax(attn, axis=-1)
    out = jnp.einsum('bhnm,bhmd->bhnd', attn, v)                   # (B, nh, N, hd)
    out = out.transpose(0, 2, 1, 3).reshape(B, H, W, A)
    out = out @ wproj.T                                            # (B, H, W, C)
    return jnp.transpose(out, (0, 3, 1, 2))


if __name__ == "__main__":
    # Module config: dim=32, head_dim=4 (default) -> num_heads = 32 // 4 = 8,
    # attention_dim = 32. qkv_bias/proj_bias are False by default.
    dim = 32
    head_dim = 4
    num_heads = dim // head_dim
    attention_dim = num_heads * head_dim
    B, H, W = 2, 16, 16

    key = jax.random.PRNGKey(0)
    kx, kqkv, kproj = jax.random.split(key, 3)

    x = jax.random.normal(kx, (B, dim, H, W), dtype=jnp.float32)
    # PyTorch Linear stores weight as (out, in); we keep that layout.
    wqkv = jax.random.uniform(kqkv, (attention_dim * 3, dim), jnp.float32,
                              minval=-(dim ** -0.5), maxval=dim ** -0.5)
    wproj = jax.random.uniform(kproj, (dim, attention_dim), jnp.float32,
                               minval=-(attention_dim ** -0.5), maxval=attention_dim ** -0.5)

    out = ga_forward(x, wqkv, wproj, num_heads=num_heads, head_dim=head_dim)
    out = jax.block_until_ready(out)

    ref = ga_reference(x, wqkv, wproj, num_heads=num_heads, head_dim=head_dim)
    assert out.shape == (B, dim, H, W)
    # approx reciprocal (EUP) + MXU rounding -> slightly relaxed tolerance vs exact ref.
    assert jnp.allclose(out, ref, atol=2e-3, rtol=2e-3), "Pallas output mismatch vs reference"

    print("KERNEL_OK")
</pallas_src>

<mosaic_0001>
module attributes {stable_mosaic.version = 11 : i64} {
  func.func @ga_kernel(%arg0: i32, %arg1: memref<1x32x256xf32, #tpu.memory_space<vmem>>, %arg2: memref<96x32xf32, #tpu.memory_space<vmem>>, %arg3: memref<32x32xf32, #tpu.memory_space<vmem>>, %arg4: memref<1x32x256xf32, #tpu.memory_space<vmem>>) attributes {dimension_semantics = [#tpu.dimension_semantics<parallel>], iteration_bounds = array<i64: 2>, scalar_prefetch = 0 : i64, scratch_operands = 0 : i64, tpu.core_type = #tpu.core_type<tc>, window_params = [{transform_indices = @transform_0, window_bounds = array<i64: 1, 32, 256>}, {pipeline_mode = #tpu.pipeline_mode<synchronous>, transform_indices = @transform_1, window_bounds = array<i64: 96, 32>}, {pipeline_mode = #tpu.pipeline_mode<synchronous>, transform_indices = @transform_2, window_bounds = array<i64: 32, 32>}, {transform_indices = @transform_3, window_bounds = array<i64: 1, 32, 256>}]} {
    %c0 = arith.constant 0 : index
    %c0_0 = arith.constant 0 : index
    %c0_1 = arith.constant 0 : index
    %0 = vector.load %arg1[%c0, %c0_0, %c0_1] : memref<1x32x256xf32, #tpu.memory_space<vmem>>, vector<1x32x256xf32>
    %1 = vector.shape_cast %0 : vector<1x32x256xf32> to vector<32x256xf32>
    %c0_2 = arith.constant 0 : index
    %c0_3 = arith.constant 0 : index
    %2 = vector.load %arg2[%c0_2, %c0_3] : memref<96x32xf32, #tpu.memory_space<vmem>>, vector<96x32xf32>
    %cst = arith.constant dense<0.000000e+00> : vector<96x256xf32>
    %3 = tpu.matmul %2, %1, %cst {dimension_numbers = #tpu.dot_dimension_numbers<[1], [0], [0], [1], [0, 0, 1, 1], [], []>} : vector<96x32xf32>, vector<32x256xf32>, vector<96x256xf32> -> vector<96x256xf32>
    %4 = vector.extract_strided_slice %3 {offsets = [0, 0], sizes = [32, 256], strides = [1, 1]} : vector<96x256xf32> to vector<32x256xf32>
    %cst_4 = arith.constant 5.000000e-01 : f32
    %5 = vector.broadcast %cst_4 : f32 to vector<32x256xf32>
    %6 = arith.mulf %4, %5 : vector<32x256xf32>
    %7 = vector.extract_strided_slice %3 {offsets = [32, 0], sizes = [32, 256], strides = [1, 1]} : vector<96x256xf32> to vector<32x256xf32>
    %8 = vector.extract_strided_slice %3 {offsets = [64, 0], sizes = [32, 256], strides = [1, 1]} : vector<96x256xf32> to vector<32x256xf32>
    %9 = vector.extract_strided_slice %6 {offsets = [0, 0], sizes = [4, 256], strides = [1, 1]} : vector<32x256xf32> to vector<4x256xf32>
    %10 = vector.extract_strided_slice %7 {offsets = [0, 0], sizes = [4, 256], strides = [1, 1]} : vector<32x256xf32> to vector<4x256xf32>
    %11 = vector.extract_strided_slice %8 {offsets = [0, 0], sizes = [4, 256], strides = [1, 1]} : vector<32x256xf32> to vector<4x256xf32>
    %12 = tpu.transpose %10, [1, 0] : vector<4x256xf32> -> vector<256x4xf32>
    %cst_5 = arith.constant dense<0.000000e+00> : vector<256x256xf32>
    %13 = tpu.matmul %12, %9, %cst_5 {dimension_numbers = #tpu.dot_dimension_numbers<[1], [0], [0], [1], [0, 0, 1, 1], [], []>} : vector<256x4xf32>, vector<4x256xf32>, vector<256x256xf32> -> vector<256x256xf32>
    %cst_6 = arith.constant dense<0xFF800000> : vector<256xf32>
    %14 = vector.multi_reduction <maximumf>, %13, %cst_6 [0] : vector<256x256xf32> to vector<256xf32>
    %15 = vector.shape_cast %14 : vector<256xf32> to vector<1x256xf32>
    %16 = vector.broadcast %15 : vector<1x256xf32> to vector<256x256xf32>
    %17 = arith.subf %13, %16 : vector<256x256xf32>
    %18 = math.exp %17 : vector<256x256xf32>
    %cst_7 = arith.constant dense<0.000000e+00> : vector<256xf32>
    %19 = vector.multi_reduction <add>, %18, %cst_7 [0] : vector<256x256xf32> to vector<256xf32>
    %20 = vector.shape_cast %19 : vector<256xf32> to vector<1x256xf32>
    %21 = tpu.reciprocal %20 {approx = true} : vector<1x256xf32> -> vector<1x256xf32>
    %22 = vector.broadcast %21 : vector<1x256xf32> to vector<256x256xf32>
    %23 = arith.mulf %18, %22 : vector<256x256xf32>
    %cst_8 = arith.constant dense<0.000000e+00> : vector<4x256xf32>
    %24 = tpu.matmul %11, %23, %cst_8 {dimension_numbers = #tpu.dot_dimension_numbers<[1], [0], [0], [1], [0, 0, 1, 1], [], []>} : vector<4x256xf32>, vector<256x256xf32>, vector<4x256xf32> -> vector<4x256xf32>
    %25 = vector.extract_strided_slice %6 {offsets = [4, 0], sizes = [4, 256], strides = [1, 1]} : vector<32x256xf32> to vector<4x256xf32>
    %26 = vector.extract_strided_slice %7 {offsets = [4, 0], sizes = [4, 256], strides = [1, 1]} : vector<32x256xf32> to vector<4x256xf32>
    %27 = vector.extract_strided_slice %8 {offsets = [4, 0], sizes = [4, 256], strides = [1, 1]} : vector<32x256xf32> to vector<4x256xf32>
    %28 = tpu.transpose %26, [1, 0] : vector<4x256xf32> -> vector<256x4xf32>
    %cst_9 = arith.constant dense<0.000000e+00> : vector<256x256xf32>
    %29 = tpu.matmul %28, %25, %cst_9 {dimension_numbers = #tpu.dot_dimension_numbers<[1], [0], [0], [1], [0, 0, 1, 1], [], []>} : vector<256x4xf32>, vector<4x256xf32>, vector<256x256xf32> -> vector<256x256xf32>
    %cst_10 = arith.constant dense<0xFF800000> : vector<256xf32>
    %30 = vector.multi_reduction <maximumf>, %29, %cst_10 [0] : vector<256x256xf32> to vector<256xf32>
    %31 = vector.shape_cast %30 : vector<256xf32> to vector<1x256xf32>
    %32 = vector.broadcast %31 : vector<1x256xf32> to vector<256x256xf32>
    %33 = arith.subf %29, %32 : vector<256x256xf32>
    %34 = math.exp %33 : vector<256x256xf32>
    %cst_11 = arith.constant dense<0.000000e+00> : vector<256xf32>
    %35 = vector.multi_reduction <add>, %34, %cst_11 [0] : vector<256x256xf32> to vector<256xf32>
    %36 = vector.shape_cast %35 : vector<256xf32> to vector<1x256xf32>
    %37 = tpu.reciprocal %36 {approx = true} : vector<1x256xf32> -> vector<1x256xf32>
    %38 = vector.broadcast %37 : vector<1x256xf32> to vector<256x256xf32>
    %39 = arith.mulf %34, %38 : vector<256x256xf32>
    %cst_12 = arith.constant dense<0.000000e+00> : vector<4x256xf32>
    %40 = tpu.matmul %27, %39, %cst_12 {dimension_numbers = #tpu.dot_dimension_numbers<[1], [0], [0], [1], [0, 0, 1, 1], [], []>} : vector<4x256xf32>, vector<256x256xf32>, vector<4x256xf32> -> vector<4x256xf32>
    %41 = vector.extract_strided_slice %6 {offsets = [8, 0], sizes = [4, 256], strides = [1, 1]} : vector<32x256xf32> to vector<4x256xf32>
    %42 = vector.extract_strided_slice %7 {offsets = [8, 0], sizes = [4, 256], strides = [1, 1]} : vector<32x256xf32> to vector<4x256xf32>
    %43 = vector.extract_strided_slice %8 {offsets = [8, 0], sizes = [4, 256], strides = [1, 1]} : vector<32x256xf32> to vector<4x256xf32>
    %44 = tpu.transpose %42, [1, 0] : vector<4x256xf32> -> vector<256x4xf32>
    %cst_13 = arith.constant dense<0.000000e+00> : vector<256x256xf32>
    %45 = tpu.matmul %44, %41, %cst_13 {dimension_numbers = #tpu.dot_dimension_numbers<[1], [0], [0], [1], [0, 0, 1, 1], [], []>} : vector<256x4xf32>, vector<4x256xf32>, vector<256x256xf32> -> vector<256x256xf32>
    %cst_14 = arith.constant dense<0xFF800000> : vector<256xf32>
    %46 = vector.multi_reduction <maximumf>, %45, %cst_14 [0] : vector<256x256xf32> to vector<256xf32>
    %47 = vector.shape_cast %46 : vector<256xf32> to vector<1x256xf32>
    %48 = vector.broadcast %47 : vector<1x256xf32> to vector<256x256xf32>
    %49 = arith.subf %45, %48 : vector<256x256xf32>
    %50 = math.exp %49 : vector<256x256xf32>
    %cst_15 = arith.constant dense<0.000000e+00> : vector<256xf32>
    %51 = vector.multi_reduction <add>, %50, %cst_15 [0] : vector<256x256xf32> to vector<256xf32>
    %52 = vector.shape_cast %51 : vector<256xf32> to vector<1x256xf32>
    %53 = tpu.reciprocal %52 {approx = true} : vector<1x256xf32> -> vector<1x256xf32>
    %54 = vector.broadcast %53 : vector<1x256xf32> to vector<256x256xf32>
    %55 = arith.mulf %50, %54 : vector<256x256xf32>
    %cst_16 = arith.constant dense<0.000000e+00> : vector<4x256xf32>
    %56 = tpu.matmul %43, %55, %cst_16 {dimension_numbers = #tpu.dot_dimension_numbers<[1], [0], [0], [1], [0, 0, 1, 1], [], []>} : vector<4x256xf32>, vector<256x256xf32>, vector<4x256xf32> -> vector<4x256xf32>
    %57 = vector.extract_strided_slice %6 {offsets = [12, 0], sizes = [4, 256], strides = [1, 1]} : vector<32x256xf32> to vector<4x256xf32>
    %58 = vector.extract_strided_slice %7 {offsets = [12, 0], sizes = [4, 256], strides = [1, 1]} : vector<32x256xf32> to vector<4x256xf32>
    %59 = vector.extract_strided_slice %8 {offsets = [12, 0], sizes = [4, 256], strides = [1, 1]} : vector<32x256xf32> to vector<4x256xf32>
    %60 = tpu.transpose %58, [1, 0] : vector<4x256xf32> -> vector<256x4xf32>
    %cst_17 = arith.constant dense<0.000000e+00> : vector<256x256xf32>
    %61 = tpu.matmul %60, %57, %cst_17 {dimension_numbers = #tpu.dot_dimension_numbers<[1], [0], [0], [1], [0, 0, 1, 1], [], []>} : vector<256x4xf32>, vector<4x256xf32>, vector<256x256xf32> -> vector<256x256xf32>
    %cst_18 = arith.constant dense<0xFF800000> : vector<256xf32>
    %62 = vector.multi_reduction <maximumf>, %61, %cst_18 [0] : vector<256x256xf32> to vector<256xf32>
    %63 = vector.shape_cast %62 : vector<256xf32> to vector<1x256xf32>
    %64 = vector.broadcast %63 : vector<1x256xf32> to vector<256x256xf32>
    %65 = arith.subf %61, %64 : vector<256x256xf32>
    %66 = math.exp %65 : vector<256x256xf32>
    %cst_19 = arith.constant dense<0.000000e+00> : vector<256xf32>
    %67 = vector.multi_reduction <add>, %66, %cst_19 [0] : vector<256x256xf32> to vector<256xf32>
    %68 = vector.shape_cast %67 : vector<256xf32> to vector<1x256xf32>
    %69 = tpu.reciprocal %68 {approx = true} : vector<1x256xf32> -> vector<1x256xf32>
    %70 = vector.broadcast %69 : vector<1x256xf32> to vector<256x256xf32>
    %71 = arith.mulf %66, %70 : vector<256x256xf32>
    %cst_20 = arith.constant dense<0.000000e+00> : vector<4x256xf32>
    %72 = tpu.matmul %59, %71, %cst_20 {dimension_numbers = #tpu.dot_dimension_numbers<[1], [0], [0], [1], [0, 0, 1, 1], [], []>} : vector<4x256xf32>, vector<256x256xf32>, vector<4x256xf32> -> vector<4x256xf32>
    %73 = vector.extract_strided_slice %6 {offsets = [16, 0], sizes = [4, 256], strides = [1, 1]} : vector<32x256xf32> to vector<4x256xf32>
    %74 = vector.extract_strided_slice %7 {offsets = [16, 0], sizes = [4, 256], strides = [1, 1]} : vector<32x256xf32> to vector<4x256xf32>
    %75 = vector.extract_strided_slice %8 {offsets = [16, 0], sizes = [4, 256], strides = [1, 1]} : vector<32x256xf32> to vector<4x256xf32>
    %76 = tpu.transpose %74, [1, 0] : vector<4x256xf32> -> vector<256x4xf32>
    %cst_21 = arith.constant dense<0.000000e+00> : vector<256x256xf32>
    %77 = tpu.matmul %76, %73, %cst_21 {dimension_numbers = #tpu.dot_dimension_numbers<[1], [0], [0], [1], [0, 0, 1, 1], [], []>} : vector<256x4xf32>, vector<4x256xf32>, vector<256x256xf32> -> vector<256x256xf32>
    %cst_22 = arith.constant dense<0xFF800000> : vector<256xf32>
    %78 = vector.multi_reduction <maximumf>, %77, %cst_22 [0] : vector<256x256xf32> to vector<256xf32>
    %79 = vector.shape_cast %78 : vector<256xf32> to vector<1x256xf32>
    %80 = vector.broadcast %79 : vector<1x256xf32> to vector<256x256xf32>
    %81 = arith.subf %77, %80 : vector<256x256xf32>
    %82 = math.exp %81 : vector<256x256xf32>
    %cst_23 = arith.constant dense<0.000000e+00> : vector<256xf32>
    %83 = vector.multi_reduction <add>, %82, %cst_23 [0] : vector<256x256xf32> to vector<256xf32>
    %84 = vector.shape_cast %83 : vector<256xf32> to vector<1x256xf32>
    %85 = tpu.reciprocal %84 {approx = true} : vector<1x256xf32> -> vector<1x256xf32>
    %86 = vector.broadcast %85 : vector<1x256xf32> to vector<256x256xf32>
    %87 = arith.mulf %82, %86 : vector<256x256xf32>
    %cst_24 = arith.constant dense<0.000000e+00> : vector<4x256xf32>
    %88 = tpu.matmul %75, %87, %cst_24 {dimension_numbers = #tpu.dot_dimension_numbers<[1], [0], [0], [1], [0, 0, 1, 1], [], []>} : vector<4x256xf32>, vector<256x256xf32>, vector<4x256xf32> -> vector<4x256xf32>
    %89 = vector.extract_strided_slice %6 {offsets = [20, 0], sizes = [4, 256], strides = [1, 1]} : vector<32x256xf32> to vector<4x256xf32>
    %90 = vector.extract_strided_slice %7 {offsets = [20, 0], sizes = [4, 256], strides = [1, 1]} : vector<32x256xf32> to vector<4x256xf32>
    %91 = vector.extract_strided_slice %8 {offsets = [20, 0], sizes = [4, 256], strides = [1, 1]} : vector<32x256xf32> to vector<4x256xf32>
    %92 = tpu.transpose %90, [1, 0] : vector<4x256xf32> -> vector<256x4xf32>
    %cst_25 = arith.constant dense<0.000000e+00> : vector<256x256xf32>
    %93 = tpu.matmul %92, %89, %cst_25 {dimension_numbers = #tpu.dot_dimension_numbers<[1], [0], [0], [1], [0, 0, 1, 1], [], []>} : vector<256x4xf32>, vector<4x256xf32>, vector<256x256xf32> -> vector<256x256xf32>
    %cst_26 = arith.constant dense<0xFF800000> : vector<256xf32>
    %94 = vector.multi_reduction <maximumf>, %93, %cst_26 [0] : vector<256x256xf32> to vector<256xf32>
    %95 = vector.shape_cast %94 : vector<256xf32> to vector<1x256xf32>
    %96 = vector.broadcast %95 : vector<1x256xf32> to vector<256x256xf32>
    %97 = arith.subf %93, %96 : vector<256x256xf32>
    %98 = math.exp %97 : vector<256x256xf32>
    %cst_27 = arith.constant dense<0.000000e+00> : vector<256xf32>
    %99 = vector.multi_reduction <add>, %98, %cst_27 [0] : vector<256x256xf32> to vector<256xf32>
    %100 = vector.shape_cast %99 : vector<256xf32> to vector<1x256xf32>
    %101 = tpu.reciprocal %100 {approx = true} : vector<1x256xf32> -> vector<1x256xf32>
    %102 = vector.broadcast %101 : vector<1x256xf32> to vector<256x256xf32>
    %103 = arith.mulf %98, %102 : vector<256x256xf32>
    %cst_28 = arith.constant dense<0.000000e+00> : vector<4x256xf32>
    %104 = tpu.matmul %91, %103, %cst_28 {dimension_numbers = #tpu.dot_dimension_numbers<[1], [0], [0], [1], [0, 0, 1, 1], [], []>} : vector<4x256xf32>, vector<256x256xf32>, vector<4x256xf32> -> vector<4x256xf32>
    %105 = vector.extract_strided_slice %6 {offsets = [24, 0], sizes = [4, 256], strides = [1, 1]} : vector<32x256xf32> to vector<4x256xf32>
    %106 = vector.extract_strided_slice %7 {offsets = [24, 0], sizes = [4, 256], strides = [1, 1]} : vector<32x256xf32> to vector<4x256xf32>
    %107 = vector.extract_strided_slice %8 {offsets = [24, 0], sizes = [4, 256], strides = [1, 1]} : vector<32x256xf32> to vector<4x256xf32>
    %108 = tpu.transpose %106, [1, 0] : vector<4x256xf32> -> vector<256x4xf32>
    %cst_29 = arith.constant dense<0.000000e+00> : vector<256x256xf32>
    %109 = tpu.matmul %108, %105, %cst_29 {dimension_numbers = #tpu.dot_dimension_numbers<[1], [0], [0], [1], [0, 0, 1, 1], [], []>} : vector<256x4xf32>, vector<4x256xf32>, vector<256x256xf32> -> vector<256x256xf32>
    %cst_30 = arith.constant dense<0xFF800000> : vector<256xf32>
    %110 = vector.multi_reduction <maximumf>, %109, %cst_30 [0] : vector<256x256xf32> to vector<256xf32>
    %111 = vector.shape_cast %110 : vector<256xf32> to vector<1x256xf32>
    %112 = vector.broadcast %111 : vector<1x256xf32> to vector<256x256xf32>
    %113 = arith.subf %109, %112 : vector<256x256xf32>
    %114 = math.exp %113 : vector<256x256xf32>
    %cst_31 = arith.constant dense<0.000000e+00> : vector<256xf32>
    %115 = vector.multi_reduction <add>, %114, %cst_31 [0] : vector<256x256xf32> to vector<256xf32>
    %116 = vector.shape_cast %115 : vector<256xf32> to vector<1x256xf32>
    %117 = tpu.reciprocal %116 {approx = true} : vector<1x256xf32> -> vector<1x256xf32>
    %118 = vector.broadcast %117 : vector<1x256xf32> to vector<256x256xf32>
    %119 = arith.mulf %114, %118 : vector<256x256xf32>
    %cst_32 = arith.constant dense<0.000000e+00> : vector<4x256xf32>
    %120 = tpu.matmul %107, %119, %cst_32 {dimension_numbers = #tpu.dot_dimension_numbers<[1], [0], [0], [1], [0, 0, 1, 1], [], []>} : vector<4x256xf32>, vector<256x256xf32>, vector<4x256xf32> -> vector<4x256xf32>
    %121 = vector.extract_strided_slice %6 {offsets = [28, 0], sizes = [4, 256], strides = [1, 1]} : vector<32x256xf32> to vector<4x256xf32>
    %122 = vector.extract_strided_slice %7 {offsets = [28, 0], sizes = [4, 256], strides = [1, 1]} : vector<32x256xf32> to vector<4x256xf32>
    %123 = vector.extract_strided_slice %8 {offsets = [28, 0], sizes = [4, 256], strides = [1, 1]} : vector<32x256xf32> to vector<4x256xf32>
    %124 = tpu.transpose %122, [1, 0] : vector<4x256xf32> -> vector<256x4xf32>
    %cst_33 = arith.constant dense<0.000000e+00> : vector<256x256xf32>
    %125 = tpu.matmul %124, %121, %cst_33 {dimension_numbers = #tpu.dot_dimension_numbers<[1], [0], [0], [1], [0, 0, 1, 1], [], []>} : vector<256x4xf32>, vector<4x256xf32>, vector<256x256xf32> -> vector<256x256xf32>
    %cst_34 = arith.constant dense<0xFF800000> : vector<256xf32>
    %126 = vector.multi_reduction <maximumf>, %125, %cst_34 [0] : vector<256x256xf32> to vector<256xf32>
    %127 = vector.shape_cast %126 : vector<256xf32> to vector<1x256xf32>
    %128 = vector.broadcast %127 : vector<1x256xf32> to vector<256x256xf32>
    %129 = arith.subf %125, %128 : vector<256x256xf32>
    %130 = math.exp %129 : vector<256x256xf32>
    %cst_35 = arith.constant dense<0.000000e+00> : vector<256xf32>
    %131 = vector.multi_reduction <add>, %130, %cst_35 [0] : vector<256x256xf32> to vector<256xf32>
    %132 = vector.shape_cast %131 : vector<256xf32> to vector<1x256xf32>
    %133 = tpu.reciprocal %132 {approx = true} : vector<1x256xf32> -> vector<1x256xf32>
    %134 = vector.broadcast %133 : vector<1x256xf32> to vector<256x256xf32>
    %135 = arith.mulf %130, %134 : vector<256x256xf32>
    %cst_36 = arith.constant dense<0.000000e+00> : vector<4x256xf32>
    %136 = tpu.matmul %123, %135, %cst_36 {dimension_numbers = #tpu.dot_dimension_numbers<[1], [0], [0], [1], [0, 0, 1, 1], [], []>} : vector<4x256xf32>, vector<256x256xf32>, vector<4x256xf32> -> vector<4x256xf32>
    %137 = tpu.concatenate %24, %40, %56, %72, %88, %104, %120, %136 in 0 : vector<4x256xf32>, vector<4x256xf32>, vector<4x256xf32>, vector<4x256xf32>, vector<4x256xf32>, vector<4x256xf32>, vector<4x256xf32>, vector<4x256xf32> -> vector<32x256xf32>
    %c0_37 = arith.constant 0 : index
    %c0_38 = arith.constant 0 : index
    %138 = vector.load %arg3[%c0_37, %c0_38] : memref<32x32xf32, #tpu.memory_space<vmem>>, vector<32x32xf32>
    %cst_39 = arith.constant dense<0.000000e+00> : vector<32x256xf32>
    %139 = tpu.matmul %138, %137, %cst_39 {dimension_numbers = #tpu.dot_dimension_numbers<[1], [0], [0], [1], [0, 0, 1, 1], [], []>} : vector<32x32xf32>, vector<32x256xf32>, vector<32x256xf32> -> vector<32x256xf32>
    %c0_40 = arith.constant 0 : index
    %c0_41 = arith.constant 0 : index
    %c0_42 = arith.constant 0 : index
    %140 = vector.load %arg4[%c0_40, %c0_41, %c0_42] : memref<1x32x256xf32, #tpu.memory_space<vmem>>, vector<1x32x256xf32>
    %141 = vector.shape_cast %140 : vector<1x32x256xf32> to vector<32x256xf32>
    %142 = vector.shape_cast %139 : vector<32x256xf32> to vector<1x32x256xf32>
    tpu.vector_store %arg4[%c0_40, %c0_41, %c0_42], %142 {strides = array<i32>} : memref<1x32x256xf32, #tpu.memory_space<vmem>>, vector<1x32x256xf32>,
    return
  }
  func.func @transform_0(%arg0: i32) -> (i32, i32, i32) {
    %c0_i32 = arith.constant 0 : i32
    %c0_i32_0 = arith.constant 0 : i32
    %c0_i32_1 = arith.constant 0 : i32
    return %arg0, %c0_i32, %c0_i32_0 : i32, i32, i32
  }
  func.func @transform_1(%arg0: i32) -> (i32, i32) {
    %c0_i32 = arith.constant 0 : i32
    %c0_i32_0 = arith.constant 0 : i32
    %c0_i32_1 = arith.constant 0 : i32
    return %c0_i32, %c0_i32_0 : i32, i32
  }
  func.func @transform_2(%arg0: i32) -> (i32, i32) {
    %c0_i32 = arith.constant 0 : i32
    %c0_i32_0 = arith.constant 0 : i32
    %c0_i32_1 = arith.constant 0 : i32
    return %c0_i32, %c0_i32_0 : i32, i32
  }
  func.func @transform_3(%arg0: i32) -> (i32, i32, i32) {
    %c0_i32 = arith.constant 0 : i32
    %c0_i32_0 = arith.constant 0 : i32
    %c0_i32_1 = arith.constant 0 : i32
    return %arg0, %c0_i32, %c0_i32_0 : i32, i32, i32
  }
}

</mosaic_0001>

<llo_original>
// kernel: tpu_custom_call.1
$region0: #{tpu_custom_call.1}
  #allocation0 [shape = 'u32[]', space=smem, size = 0x4, offset = 0x4, fixed_abs, tag = 'smem constant byte address 0x4 - core index']
  #allocation1 [shape = 'u32[144,128]{1,0:T(1,128)}', space=vmem, size = 0x12000, scoped, tag = 'internal scratch']
  %s0 = inlined_call_operand.vmem [shape: f32[2,32,256], index: 0, kind: input, shape index: {}]
  %s1 = inlined_call_operand.vmem [shape: f32[96,32], index: 1, kind: input, shape index: {}]
  %s2 = inlined_call_operand.hbm [shape: f32[32,32], index: 2, kind: input, shape index: {}]
  %s3 = inlined_call_operand.hbm [shape: f32[2,32,256], index: 3, kind: output, shape index: {}]
  %s4 = sld [smem:[#allocation0]]
  $region49: #{tpu_custom_call.1} parent=0
    _
  %s6 = ssub.s32 1, %s4
  %s7 = scalar_select 0, %s6, %s4
  $region1: #{tpu_custom_call.1} parent=0
    #allocation2 [shape = 'u8[16384]{0}', space=vmem, size = 0x4000, scoped, tag = 'input window, operand 2, single buffered']
    #allocation3 [shape = 's32[2]{0}', space=sflag, size = 0x8, scoped, tag = 'scoped memory for tpu_custom_call.1']
    #allocation4 [shape = 's32[2]{0}', space=sflag, size = 0x8, scoped, tag = 'scoped memory for tpu_custom_call.1']
    #allocation5 [shape = 'u8[65536]{0}', space=vmem, size = 0x10000, scoped, tag = 'output window, operand 0']
    %8 = vsyncpa [#allocation3], 0
    %9 = vsyncpa [#allocation4], 0
    %s10 = scalar_lea.sflag [#allocation4], 1
    %11 = vsyncpa %s10, 0
    loop: start=0, step=1, limit=4
    $region2: #{tpu_custom_call.1} parent=1 // loop_pre_header
      _
    $region3: #{tpu_custom_call.1} parent=1 // loop_header
      %s13 = sphi 0, %s17
      %p14 = scmp.ge.s32.totalorder %s13, 4
      %s23 = sphi 0, %s25
      %s26 = sphi 0, %s23
      %s27 = sphi 0, %s26
      %s43 = sphi 0, %s27
      %s47 = sphi 0, %s47
      %s49 = sphi 0, %s47
      %s50 = sphi 0, %s49
      %s64 = sphi 0, %s50
      %s68 = sphi 0, %s68
      %s70 = sphi 0, %s68
      %s71 = sphi 0, %s70
      %s85 = sphi 0, %s71
      %s91 = sphi 0, %s93
      %s94 = sphi 0, %s91
      %s95 = sphi 0, %s94
      %s111 = sphi 0, %s95
    $region4: #{tpu_custom_call.1} parent=1 // loop_header_branch
      %16 = sbr.rel (%p14) target = $region8
    $region5: #{tpu_custom_call.1} parent=1 // loop_body
      %s18 = ssub.s32 %s13, 1
      %s19 = ssub.s32 %s13, 2
      %s20 = sadd.s32 %s13, 1
      %s21 = ssub.s32 %s13, %s20
      %p22 = scmp.eq.s32.totalorder %s21, 0
      %s24 = sadd.s32 %s23, 1
      %s25 = scalar_select %p22, %s23, %s24
      %p28 = pneg %p22
      %p29 = scmp.eq.s32.totalorder %s13, 1
      %p30 = por %p28, %p29
      %p31 = scmp.ne.s32.totalorder %s23, %s26
      %p32 = scmp.eq.s32.totalorder %s13, 0
      %p33 = por %p31, %p32
      %p34 = scmp.ne.s32.totalorder %s23, %s26
      %p35 = scmp.eq.s32.totalorder %s18, 1
      %p36 = por %p34, %p35
      %p37 = scmp.ne.s32.totalorder %s26, %s27
      %p38 = scmp.eq.s32.totalorder %s18, 0
      %p39 = por %p37, %p38
      %p40 = scmp.ne.s32.totalorder %s26, %s27
      %p41 = scmp.eq.s32.totalorder %s19, 1
      %p42 = por %p40, %p41
      %p44 = scmp.ne.s32.totalorder %s27, %s43
      %p45 = scmp.eq.s32.totalorder %s19, 0
      %p46 = por %p44, %p45
      %s48 = sadd.s32 %s47, 1
      %p51 = scmp.eq.s32.totalorder %s13, 1
      %p52 = scmp.ne.s32.totalorder %s47, %s49
      %p53 = scmp.eq.s32.totalorder %s13, 0
      %p54 = por %p52, %p53
      %p55 = scmp.ne.s32.totalorder %s47, %s49
      %p56 = scmp.eq.s32.totalorder %s18, 1
      %p57 = por %p55, %p56
      %p58 = scmp.ne.s32.totalorder %s49, %s50
      %p59 = scmp.eq.s32.totalorder %s18, 0
      %p60 = por %p58, %p59
      %p61 = scmp.ne.s32.totalorder %s49, %s50
      %p62 = scmp.eq.s32.totalorder %s19, 1
      %p63 = por %p61, %p62
      %p65 = scmp.ne.s32.totalorder %s50, %s64
      %p66 = scmp.eq.s32.totalorder %s19, 0
      %p67 = por %p65, %p66
      %s69 = sadd.s32 %s68, 1
      %p72 = scmp.eq.s32.totalorder %s13, 1
      %p73 = scmp.ne.s32.totalorder %s68, %s70
      %p74 = scmp.eq.s32.totalorder %s13, 0
      %p75 = por %p73, %p74
      %p76 = scmp.ne.s32.totalorder %s68, %s70
      %p77 = scmp.eq.s32.totalorder %s18, 1
      %p78 = por %p76, %p77
      %p79 = scmp.ne.s32.totalorder %s70, %s71
      %p80 = scmp.eq.s32.totalorder %s18, 0
      %p81 = por %p79, %p80
      %p82 = scmp.ne.s32.totalorder %s70, %s71
      %p83 = scmp.eq.s32.totalorder %s19, 1
      %p84 = por %p82, %p83
      %p86 = scmp.ne.s32.totalorder %s71, %s85
      %p87 = scmp.eq.s32.totalorder %s19, 0
      %p88 = por %p86, %p87
      %s89 = ssub.s32 %s13, %s20
      %p90 = scmp.eq.s32.totalorder %s89, 0
      %s92 = sadd.s32 %s91, 1
      %s93 = scalar_select %p90, %s91, %s92
      %p96 = pneg %p90
      %p97 = scmp.eq.s32.totalorder %s13, 1
      %p98 = por %p96, %p97
      %p99 = scmp.ne.s32.totalorder %s91, %s94
      %p100 = scmp.eq.s32.totalorder %s13, 0
      %p101 = por %p99, %p100
      %p102 = scmp.ne.s32.totalorder %s91, %s94
      %p103 = scmp.eq.s32.totalorder %s18, 1
      %p104 = por %p102, %p103
      %p105 = scmp.ne.s32.totalorder %s94, %s95
      %p106 = scmp.eq.s32.totalorder %s18, 0
      %p107 = por %p105, %p106
      %p108 = scmp.ne.s32.totalorder %s94, %s95
      %p109 = scmp.eq.s32.totalorder %s19, 1
      %p110 = por %p108, %p109
      %p112 = scmp.ne.s32.totalorder %s95, %s111
      %p113 = scmp.eq.s32.totalorder %s19, 0
      %p114 = por %p112, %p113
      %p115 = scmp.le.s32.totalorder 1, %s13
      %p116 = scmp.lt.s32.totalorder %s13, 3
      %p117 = pnand %p115, %p116
      %p118 = pneg %p117
      // Predicated region
      $region9: #{tpu_custom_call.1} parent=5 // pred_check
        _
      $region10: #{tpu_custom_call.1} parent=5 // pred_check_branch
        %120 = sbr.rel (%p117) target = $region12
      $region11: #{tpu_custom_call.1} parent=5 // pred_region
        %s121 = ssub.s32 %s13, 1
        // Predicated region
        $region13: #{tpu_custom_call.1} parent=11 // pred_check
          %p122 = pneg %p60
        $region14: #{tpu_custom_call.1} parent=11 // pred_check_branch
          %124 = sbr.rel (%p122) target = $region16
        $region15: #{tpu_custom_call.1} parent=11 // pred_region
          _
        $region16: #{tpu_custom_call.1} parent=11 // pred_fallthru
          _
        // Predicated region
        $region17: #{tpu_custom_call.1} parent=11 // pred_check
          %p125 = pneg %p81
        $region18: #{tpu_custom_call.1} parent=11 // pred_check_branch
          %127 = sbr.rel (%p125) target = $region20
        $region19: #{tpu_custom_call.1} parent=11 // pred_region
          %s129 = ssub.s32 512, 512
          %130 = vsyncadd [#allocation3], %s129
          %s131 = sshll.u32 [#allocation2], 4
          %s132 = int_to_ptr.vmem [resolvable:$true] %s131
          %137 = dma.hbm_to_vmem [thread:$0]  %s2, 512, %s132, [#allocation3], 128, 128, 8
        $region20: #{tpu_custom_call.1} parent=11 // pred_fallthru
          _
      $region12: #{tpu_custom_call.1} parent=5 // pred_fallthru
        _
      %p138 = scmp.lt.s32.totalorder %s13, 2
      // Predicated region
      $region21: #{tpu_custom_call.1} parent=5 // pred_check
        %p139 = pneg %p138
      $region22: #{tpu_custom_call.1} parent=5 // pred_check_branch
        %141 = sbr.rel (%p139) target = $region24
      $region23: #{tpu_custom_call.1} parent=5 // pred_region
        // Predicated region
        $region25: #{tpu_custom_call.1} parent=23 // pred_check
          %p142 = pneg %p33
        $region26: #{tpu_custom_call.1} parent=23 // pred_check_branch
          %144 = sbr.rel (%p142) target = $region28
        $region27: #{tpu_custom_call.1} parent=23 // pred_region
          %p145 = scmp.lt.s32.totalorder %s13, 1
          %s146 = scalar_select %p145, %s13, 1
          %s147 = smul.addr %s146, 8
          %s148 = smul.addr %s147, 8
          %s149 = scalar_lea.vmem %s0, %s148
        $region28: #{tpu_custom_call.1} parent=23 // pred_fallthru
          _
      $region24: #{tpu_custom_call.1} parent=5 // pred_fallthru
        _
      %p150 = scmp.le.s32.totalorder 1, %s13
      %p151 = scmp.lt.s32.totalorder %s13, 3
      %p152 = pnand %p150, %p151
      %p153 = pneg %p152
      // Predicated region
      $region29: #{tpu_custom_call.1} parent=5 // pred_check
        _
      $region30: #{tpu_custom_call.1} parent=5 // pred_check_branch
        %155 = sbr.rel (%p152) target = $region32
      $region31: #{tpu_custom_call.1} parent=5 // pred_region
        %s156 = ssub.s32 %s13, 1
        // Predicated region
        $region33: #{tpu_custom_call.1} parent=31 // pred_check
          %p157 = pneg %p81
        $region34: #{tpu_custom_call.1} parent=31 // pred_check_branch
          %159 = sbr.rel (%p157) target = $region36
        $region35: #{tpu_custom_call.1} parent=31 // pred_region
          %160 = dma.done [#allocation3], 512
        $region36: #{tpu_custom_call.1} parent=31 // pred_fallthru
          _
        %p161 = scmp.lt.s32.totalorder %s18, 1
        %s162 = scalar_select %p161, %s18, 1
        %s163 = smul.addr %s162, 8
        %s164 = smul.addr %s163, 8
        %s165 = scalar_lea.vmem %s0, %s164
        %p166 = pneg %p39
        %p167 = pneg %p36
        %p168 = pneg %p60
        %p169 = pneg %p57
        %p170 = pneg %p81
        %p171 = pneg %p78
        %p172 = pneg %p107
        %p173 = pneg %p104
        %s174 = sand.u32 %s94, 1
        %s175 = scalar_lea.sflag [#allocation4], %s174
        %s176 = sand.u32 %s94, 1
        %s177 = smul.addr %s176, 64
        %s178 = scalar_lea.vmem [#allocation5], %s177
        %p179 = scmp.lt.s32.totalorder %s18, 1
        %s180 = scalar_select %p179, %s18, 1
        %s181 = smul.addr %s180, 8
        %s182 = smul.addr %s181, 8
        %s183 = scalar_lea.vmem %s0, %s182
        %v184 = vld [vmem:[%s183] sm:$0xff]
        %v185 = vld [vmem:[%s183 + $0x8] sm:$0xff]
        %v186 = vld [vmem:[%s183 + $0x10] sm:$0xff]
        %v187 = vld [vmem:[%s183 + $0x18] sm:$0xff]
        %v188 = vld [vmem:[%s183 + $0x20] sm:$0xff]
        %v189 = vld [vmem:[%s183 + $0x28] sm:$0xff]
        %v190 = vld [vmem:[%s183 + $0x30] sm:$0xff]
        %v191 = vld [vmem:[%s183 + $0x38] sm:$0xff]
        %v192 = vld [vmem:[%s1] sm:$0xff]
        %v193 = vld [vmem:[%s1 + $0x8] sm:$0xff]
        %v194 = vld [vmem:[%s1 + $0x10] sm:$0xff]
        %v195 = vld [vmem:[%s1 + $0x18] sm:$0xff]
        %v196 = vld [vmem:[%s1 + $0x20] sm:$0xff]
        %v197 = vld [vmem:[%s1 + $0x28] sm:$0xff]
        %v198 = vld [vmem:[%s1 + $0x30] sm:$0xff]
        %v199 = vld [vmem:[%s1 + $0x38] sm:$0xff]
        %v200 = vld [vmem:[%s1 + $0x40] sm:$0xff]
        %v201 = vld [vmem:[%s1 + $0x48] sm:$0xff]
        %v202 = vld [vmem:[%s1 + $0x50] sm:$0xff]
        %v203 = vld [vmem:[%s1 + $0x58] sm:$0xff]
        %vm204 = vcmask 261120
        %v206 = vsel %vm204, %v192, 0
        %v209 = vsel %vm204, %v193, 0
        %v212 = vsel %vm204, %v194, 0
        %v215 = vsel %vm204, %v195, 0
        %v218 = vsel %vm204, %v196, 0
        %v221 = vsel %vm204, %v197, 0
        %v224 = vsel %vm204, %v198, 0
        %v227 = vsel %vm204, %v199, 0
        %v230 = vsel %vm204, %v200, 0
        %v233 = vsel %vm204, %v201, 0
        %v236 = vsel %vm204, %v202, 0
        %v239 = vsel %vm204, %v203, 0
        %241 = vmatprep.subr.mxu0 0.0
        %242 = vmatpush1.msra.mxu0 0.0
        %243 = vmatprep.subr.mxu0 0.0
        %244 = vmatpush1.msra.mxu0 0.0
        %245 = vmatprep.subr.mxu0 0.0
        %246 = vmatpush1.msra.mxu0 0.0
        %247 = vmatprep.subr.mxu0 0.0
        %248 = vmatpush1.msra.mxu0 0.0
        %249 = vmatprep.subr.mxu0 0.0
        %250 = vmatpush1.msra.mxu0 0.0
        %251 = vmatprep.subr.mxu0 0.0
        %252 = vmatpush1.msra.mxu0 0.0
        %253 = vmatprep.subr.mxu0 0.0
        %254 = vmatpush1.msra.mxu0 0.0
        %255 = vmatprep.subr.mxu0 0.0
        %256 = vmatpush1.msra.mxu0 0.0
        %257 = vmatprep.subr.mxu0 0.0
        %258 = vmatpush1.msra.mxu0 0.0
        %259 = vmatprep.subr.mxu0 0.0
        %260 = vmatpush1.msra.mxu0 0.0
        %261 = vmatprep.subr.mxu0 0.0
        %262 = vmatpush1.msra.mxu0 0.0
        %263 = vmatprep.subr.mxu0 0.0
        %264 = vmatpush1.msra.mxu0 0.0
        %265 = vmatprep.subr.mxu0 %v191
        %266 = vmatpush1.msra.mxu0 %v190
        %267 = vmatprep.subr.mxu0 %v189
        %268 = vmatpush1.msra.mxu0 %v188
        %269 = vmatprep.subr.mxu0 %v187
        %270 = vmatpush1.msra.mxu0 %v186
        %271 = vmatprep.subr.mxu0 %v185
        %272 = vmatpush1.msra.mxu0 %v184
        %273 = vmatprep.subr.mxu0 0.0
        %274 = vmatpush2.msra.mxu0 0.0
        %275 = vmatprep.subr.mxu0 0.0
        %276 = vmatpush2.msra.mxu0 0.0
        %277 = vmatprep.subr.mxu0 0.0
        %278 = vmatpush2.msra.mxu0 0.0
        %279 = vmatprep.subr.mxu0 0.0
        %280 = vmatpush2.msra.mxu0 0.0
        %281 = vmatprep.subr.mxu0 0.0
        %282 = vmatpush2.msra.mxu0 0.0
        %283 = vmatprep.subr.mxu0 0.0
        %284 = vmatpush2.msra.mxu0 0.0
        %285 = vmatprep.subr.mxu0 0.0
        %286 = vmatpush2.msra.mxu0 0.0
        %287 = vmatprep.subr.mxu0 0.0
        %288 = vmatpush2.msra.mxu0 0.0
        %289 = vmatprep.subr.mxu0 0.0
        %290 = vmatpush2.msra.mxu0 0.0
        %291 = vmatprep.subr.mxu0 0.0
        %292 = vmatpush2.msra.mxu0 0.0
        %293 = vmatprep.subr.mxu0 0.0
        %294 = vmatpush2.msra.mxu0 0.0
        %295 = vmatprep.subr.mxu0 0.0
        %296 = vmatpush2.msra.mxu0 0.0
        %297 = vmatprep.subr.mxu0 0.0
        %298 = vmatpush2.msra.mxu0 0.0
        %299 = vmatprep.subr.mxu0 0.0
        %300 = vmatpush2.msra.mxu0 0.0
        %301 = vmatprep.subr.mxu0 0.0
        %302 = vmatpush2.msra.mxu0 0.0
        %303 = vmatprep.subr.mxu0 0.0
        %304 = vmatpush2.msra.mxu0 0.0
        %305 = vmatprep.mubr.f32.mxu0 0.0
        %306 = vmatmul.mubr.f32.gmra.mxu0 %v206
        %v307 = vpop.f32.mrf.mxu0
        %v308 = vadd.f32 0.0, %v307
        %v309 = vpop.f32.mrf.mxu0
        %v310 = vadd.f32 0.0, %v309
        %311 = vmatprep.mubr.f32.mxu0 0.0
        %312 = vmatmul.mubr.f32.gmra.mxu0 %v209
        %v313 = vpop.f32.mrf.mxu0
        %v314 = vadd.f32 0.0, %v313
        %v315 = vpop.f32.mrf.mxu0
        %v316 = vadd.f32 0.0, %v315
        %317 = vmatprep.mubr.f32.mxu0 0.0
        %318 = vmatmul.mubr.f32.gmra.mxu0 %v212
        %v319 = vpop.f32.mrf.mxu0
        %v320 = vadd.f32 0.0, %v319
        %v321 = vpop.f32.mrf.mxu0
        %v322 = vadd.f32 0.0, %v321
        %323 = vmatprep.mubr.f32.mxu0 0.0
        %324 = vmatmul.mubr.f32.gmra.mxu0 %v215
        %v325 = vpop.f32.mrf.mxu0
        %v326 = vadd.f32 0.0, %v325
        %v327 = vpop.f32.mrf.mxu0
        %v328 = vadd.f32 0.0, %v327
        %329 = vmatprep.mubr.f32.mxu0 0.0
        %330 = vmatmul.mubr.f32.gmra.mxu0 %v218
        %v331 = vpop.f32.mrf.mxu0
        %v332 = vadd.f32 0.0, %v331
        %v333 = vpop.f32.mrf.mxu0
        %v334 = vadd.f32 0.0, %v333
        %335 = vmatprep.mubr.f32.mxu0 0.0
        %336 = vmatmul.mubr.f32.gmra.mxu0 %v221
        %v337 = vpop.f32.mrf.mxu0
        %v338 = vadd.f32 0.0, %v337
        %v339 = vpop.f32.mrf.mxu0
        %v340 = vadd.f32 0.0, %v339
        %341 = vmatprep.mubr.f32.mxu0 0.0
        %342 = vmatmul.mubr.f32.gmra.mxu0 %v224
        %v343 = vpop.f32.mrf.mxu0
        %v344 = vadd.f32 0.0, %v343
        %v345 = vpop.f32.mrf.mxu0
        %v346 = vadd.f32 0.0, %v345
        %347 = vmatprep.mubr.f32.mxu0 0.0
        %348 = vmatmul.mubr.f32.gmra.mxu0 %v227
        %v349 = vpop.f32.mrf.mxu0
        %v350 = vadd.f32 0.0, %v349
        %v351 = vpop.f32.mrf.mxu0
        %v352 = vadd.f32 0.0, %v351
        %353 = vmatprep.mubr.f32.mxu0 0.0
        %354 = vmatmul.mubr.f32.gmra.mxu0 %v230
        %v355 = vpop.f32.mrf.mxu0
        %v356 = vadd.f32 0.0, %v355
        %v357 = vpop.f32.mrf.mxu0
        %v358 = vadd.f32 0.0, %v357
        %359 = vmatprep.mubr.f32.mxu0 0.0
        %360 = vmatmul.mubr.f32.gmra.mxu0 %v233
        %v361 = vpop.f32.mrf.mxu0
        %v362 = vadd.f32 0.0, %v361
        %v363 = vpop.f32.mrf.mxu0
        %v364 = vadd.f32 0.0, %v363
        %365 = vmatprep.mubr.f32.mxu0 0.0
        %366 = vmatmul.mubr.f32.gmra.mxu0 %v236
        %v367 = vpop.f32.mrf.mxu0
        %v368 = vadd.f32 0.0, %v367
        %v369 = vpop.f32.mrf.mxu0
        %v370 = vadd.f32 0.0, %v369
        %371 = vmatprep.mubr.f32.mxu0 0.0
        %372 = vmatmul.mubr.f32.gmra.mxu0 %v239
        %v373 = vpop.f32.mrf.mxu0
        %v374 = vadd.f32 0.0, %v373
        %v375 = vpop.f32.mrf.mxu0
        %v376 = vadd.f32 0.0, %v375
        %377 = vdwg.mxu0
        %v378 = vmul.f32 %v308, 0.5
        %v379 = vmul.f32 %v310, 0.5
        %v380 = vmul.f32 %v314, 0.5
        %v381 = vmul.f32 %v316, 0.5
        %v382 = vmul.f32 %v320, 0.5
        %v383 = vmul.f32 %v322, 0.5
        %v384 = vmul.f32 %v326, 0.5
        %v385 = vmul.f32 %v328, 0.5
        %386 = vxpose.xlu0.b32.start [1/16] %v332, 128
        %387 = vxpose.xlu0.b32.cont [2/16] 0.0, 128
        %388 = vxpose.xlu0.b32.cont [3/16] 0.0, 128
        %389 = vxpose.xlu0.b32.cont [4/16] 0.0, 128
        %390 = vxpose.xlu0.b32.cont [5/16] 0.0, 128
        %391 = vxpose.xlu0.b32.cont [6/16] 0.0, 128
        %392 = vxpose.xlu0.b32.cont [7/16] 0.0, 128
        %393 = vxpose.xlu0.b32.cont [8/16] 0.0, 128
        %394 = vxpose.xlu0.b32.cont [9/16] 0.0, 128
        %395 = vxpose.xlu0.b32.cont [10/16] 0.0, 128
        %396 = vxpose.xlu0.b32.cont [11/16] 0.0, 128
        %397 = vxpose.xlu0.b32.cont [12/16] 0.0, 128
        %398 = vxpose.xlu0.b32.cont [13/16] 0.0, 128
        %399 = vxpose.xlu0.b32.cont [14/16] 0.0, 128
        %400 = vxpose.xlu0.b32.cont [15/16] 0.0, 128
        %401 = vxpose.xlu0.b32.end [16/16] 0.0, 128
        %v402 = vpop.trf.xlu0
        %v403 = vpop.trf.xlu0
        %v404 = vpop.trf.xlu0
        %v405 = vpop.trf.xlu0
        %v406 = vpop.trf.xlu0
        %v407 = vpop.trf.xlu0
        %v408 = vpop.trf.xlu0
        %v409 = vpop.trf.xlu0
        %v410 = vpop.trf.xlu0
        %v411 = vpop.trf.xlu0
        %v412 = vpop.trf.xlu0
        %v413 = vpop.trf.xlu0
        %v414 = vpop.trf.xlu0
        %v415 = vpop.trf.xlu0
        %v416 = vpop.trf.xlu0
        %v417 = vpop.trf.xlu0
        %418 = vxpose.xlu0.b32.start [1/16] %v334, 128
        %419 = vxpose.xlu0.b32.cont [2/16] 0.0, 128
        %420 = vxpose.xlu0.b32.cont [3/16] 0.0, 128
        %421 = vxpose.xlu0.b32.cont [4/16] 0.0, 128
        %422 = vxpose.xlu0.b32.cont [5/16] 0.0, 128
        %423 = vxpose.xlu0.b32.cont [6/16] 0.0, 128
        %424 = vxpose.xlu0.b32.cont [7/16] 0.0, 128
        %425 = vxpose.xlu0.b32.cont [8/16] 0.0, 128
        %426 = vxpose.xlu0.b32.cont [9/16] 0.0, 128
        %427 = vxpose.xlu0.b32.cont [10/16] 0.0, 128
        %428 = vxpose.xlu0.b32.cont [11/16] 0.0, 128
        %429 = vxpose.xlu0.b32.cont [12/16] 0.0, 128
        %430 = vxpose.xlu0.b32.cont [13/16] 0.0, 128
        %431 = vxpose.xlu0.b32.cont [14/16] 0.0, 128
        %432 = vxpose.xlu0.b32.cont [15/16] 0.0, 128
        %433 = vxpose.xlu0.b32.end [16/16] 0.0, 128
        %v434 = vpop.trf.xlu0
        %v435 = vpop.trf.xlu0
        %v436 = vpop.trf.xlu0
        %v437 = vpop.trf.xlu0
        %v438 = vpop.trf.xlu0
        %v439 = vpop.trf.xlu0
        %v440 = vpop.trf.xlu0
        %v441 = vpop.trf.xlu0
        %v442 = vpop.trf.xlu0
        %v443 = vpop.trf.xlu0
        %v444 = vpop.trf.xlu0
        %v445 = vpop.trf.xlu0
        %v446 = vpop.trf.xlu0
        %v447 = vpop.trf.xlu0
        %v448 = vpop.trf.xlu0
        %v449 = vpop.trf.xlu0
        %vm450 = vcmask 31744
        %v452 = vsel %vm450, %v402, 0
        %v455 = vsel %vm450, %v403, 0
        %v458 = vsel %vm450, %v404, 0
        %v461 = vsel %vm450, %v405, 0
        %v464 = vsel %vm450, %v406, 0
        %v467 = vsel %vm450, %v407, 0
        %v470 = vsel %vm450, %v408, 0
        %v473 = vsel %vm450, %v409, 0
        %v476 = vsel %vm450, %v410, 0
        %v479 = vsel %vm450, %v411, 0
        %v482 = vsel %vm450, %v412, 0
        %v485 = vsel %vm450, %v413, 0
        %v488 = vsel %vm450, %v414, 0
        %v491 = vsel %vm450, %v415, 0
        %v494 = vsel %vm450, %v416, 0
        %v497 = vsel %vm450, %v417, 0
        %v500 = vsel %vm450, %v434, 0
        %v503 = vsel %vm450, %v435, 0
        %v506 = vsel %vm450, %v436, 0
        %v509 = vsel %vm450, %v437, 0
        %v512 = vsel %vm450, %v438, 0
        %v515 = vsel %vm450, %v439, 0
        %v518 = vsel %vm450, %v440, 0
        %v521 = vsel %vm450, %v441, 0
        %v524 = vsel %vm450, %v442, 0
        %v527 = vsel %vm450, %v443, 0
        %v530 = vsel %vm450, %v444, 0
        %v533 = vsel %vm450, %v445, 0
        %v536 = vsel %vm450, %v446, 0
        %v539 = vsel %vm450, %v447, 0
        %v542 = vsel %vm450, %v448, 0
        %v545 = vsel %vm450, %v449, 0
        %vm547 = vcmask 1043456
        %v549 = vsel %vm547, %v378, 0
        %v552 = vsel %vm547, %v379, 0
        %554 = vmatprep.subr.mxu0 0.0
        %555 = vmatpush1.msra.mxu0 0.0
        %556 = vmatprep.subr.mxu0 0.0
        %557 = vmatpush1.msra.mxu0 0.0
        %558 = vmatprep.subr.mxu0 0.0
        %559 = vmatpush1.msra.mxu0 0.0
        %560 = vmatprep.subr.mxu0 0.0
        %561 = vmatpush1.msra.mxu0 0.0
        %562 = vmatprep.subr.mxu0 0.0
        %563 = vmatpush1.msra.mxu0 0.0
        %564 = vmatprep.subr.mxu0 0.0
        %565 = vmatpush1.msra.mxu0 0.0
        %566 = vmatprep.subr.mxu0 0.0
        %567 = vmatpush1.msra.mxu0 0.0
        %568 = vmatprep.subr.mxu0 0.0
        %569 = vmatpush1.msra.mxu0 0.0
        %570 = vmatprep.subr.mxu0 0.0
        %571 = vmatpush1.msra.mxu0 0.0
        %572 = vmatprep.subr.mxu0 0.0
        %573 = vmatpush1.msra.mxu0 0.0
        %574 = vmatprep.subr.mxu0 0.0
        %575 = vmatpush1.msra.mxu0 0.0
        %576 = vmatprep.subr.mxu0 0.0
        %577 = vmatpush1.msra.mxu0 0.0
        %578 = vmatprep.subr.mxu0 0.0
        %579 = vmatpush1.msra.mxu0 0.0
        %580 = vmatprep.subr.mxu0 0.0
        %581 = vmatpush1.msra.mxu0 0.0
        %582 = vmatprep.subr.mxu0 0.0
        %583 = vmatpush1.msra.mxu0 0.0
        %584 = vmatprep.subr.mxu0 %v552
        %585 = vmatpush1.msra.mxu0 %v549
        %586 = vmatprep.subr.mxu0 0.0
        %587 = vmatpush2.msra.mxu0 0.0
        %588 = vmatprep.subr.mxu0 0.0
        %589 = vmatpush2.msra.mxu0 0.0
        %590 = vmatprep.subr.mxu0 0.0
        %591 = vmatpush2.msra.mxu0 0.0
        %592 = vmatprep.subr.mxu0 0.0
        %593 = vmatpush2.msra.mxu0 0.0
        %594 = vmatprep.subr.mxu0 0.0
        %595 = vmatpush2.msra.mxu0 0.0
        %596 = vmatprep.subr.mxu0 0.0
        %597 = vmatpush2.msra.mxu0 0.0
        %598 = vmatprep.subr.mxu0 0.0
        %599 = vmatpush2.msra.mxu0 0.0
        %600 = vmatprep.subr.mxu0 0.0
        %601 = vmatpush2.msra.mxu0 0.0
        %602 = vmatprep.subr.mxu0 0.0
        %603 = vmatpush2.msra.mxu0 0.0
        %604 = vmatprep.subr.mxu0 0.0
        %605 = vmatpush2.msra.mxu0 0.0
        %606 = vmatprep.subr.mxu0 0.0
        %607 = vmatpush2.msra.mxu0 0.0
        %608 = vmatprep.subr.mxu0 0.0
        %609 = vmatpush2.msra.mxu0 0.0
        %610 = vmatprep.subr.mxu0 0.0
        %611 = vmatpush2.msra.mxu0 0.0
        %612 = vmatprep.subr.mxu0 0.0
        %613 = vmatpush2.msra.mxu0 0.0
        %614 = vmatprep.subr.mxu0 0.0
        %615 = vmatpush2.msra.mxu0 0.0
        %616 = vmatprep.subr.mxu0 0.0
        %617 = vmatpush2.msra.mxu0 0.0
        %618 = vmatprep.mubr.f32.mxu0 0.0
        %619 = vmatmul.mubr.f32.gmra.mxu0 %v452
        %v620 = vpop.f32.mrf.mxu0
        %v621 = vadd.f32 0.0, %v620
        %v622 = vpop.f32.mrf.mxu0
        %v623 = vadd.f32 0.0, %v622
        %624 = vmatprep.mubr.f32.mxu0 0.0
        %625 = vmatmul.mubr.f32.gmra.mxu0 %v455
        %v626 = vpop.f32.mrf.mxu0
        %v627 = vadd.f32 0.0, %v626
        %v628 = vpop.f32.mrf.mxu0
        %v629 = vadd.f32 0.0, %v628
        %630 = vmatprep.mubr.f32.mxu0 0.0
        %631 = vmatmul.mubr.f32.gmra.mxu0 %v458
        %v632 = vpop.f32.mrf.mxu0
        %v633 = vadd.f32 0.0, %v632
        %v634 = vpop.f32.mrf.mxu0
        %v635 = vadd.f32 0.0, %v634
        %636 = vmatprep.mubr.f32.mxu0 0.0
        %637 = vmatmul.mubr.f32.gmra.mxu0 %v461
        %v638 = vpop.f32.mrf.mxu0
        %v639 = vadd.f32 0.0, %v638
        %v640 = vpop.f32.mrf.mxu0
        %v641 = vadd.f32 0.0, %v640
        %642 = vmatprep.mubr.f32.mxu0 0.0
        %643 = vmatmul.mubr.f32.gmra.mxu0 %v464
        %v644 = vpop.f32.mrf.mxu0
        %v645 = vadd.f32 0.0, %v644
        %v646 = vpop.f32.mrf.mxu0
        %v647 = vadd.f32 0.0, %v646
        %648 = vmatprep.mubr.f32.mxu0 0.0
        %649 = vmatmul.mubr.f32.gmra.mxu0 %v467
        %v650 = vpop.f32.mrf.mxu0
        %v651 = vadd.f32 0.0, %v650
        %v652 = vpop.f32.mrf.mxu0
        %v653 = vadd.f32 0.0, %v652
        %654 = vmatprep.mubr.f32.mxu0 0.0
        %655 = vmatmul.mubr.f32.gmra.mxu0 %v470
        %v656 = vpop.f32.mrf.mxu0
        %v657 = vadd.f32 0.0, %v656
        %v658 = vpop.f32.mrf.mxu0
        %v659 = vadd.f32 0.0, %v658
        %660 = vmatprep.mubr.f32.mxu0 0.0
        %661 = vmatmul.mubr.f32.gmra.mxu0 %v473
        %v662 = vpop.f32.mrf.mxu0
        %v663 = vadd.f32 0.0, %v662
        %v664 = vpop.f32.mrf.mxu0
        %v665 = vadd.f32 0.0, %v664
        %666 = vmatprep.mubr.f32.mxu0 0.0
        %667 = vmatmul.mubr.f32.gmra.mxu0 %v476
        %v668 = vpop.f32.mrf.mxu0
        %v669 = vadd.f32 0.0, %v668
        %v670 = vpop.f32.mrf.mxu0
        %v671 = vadd.f32 0.0, %v670
        %672 = vmatprep.mubr.f32.mxu0 0.0
        %673 = vmatmul.mubr.f32.gmra.mxu0 %v479
        %v674 = vpop.f32.mrf.mxu0
        %v675 = vadd.f32 0.0, %v674
        %v676 = vpop.f32.mrf.mxu0
        %v677 = vadd.f32 0.0, %v676
        %678 = vmatprep.mubr.f32.mxu0 0.0
        %679 = vmatmul.mubr.f32.gmra.mxu0 %v482
        %v680 = vpop.f32.mrf.mxu0
        %v681 = vadd.f32 0.0, %v680
        %v682 = vpop.f32.mrf.mxu0
        %v683 = vadd.f32 0.0, %v682
        %684 = vmatprep.mubr.f32.mxu0 0.0
        %685 = vmatmul.mubr.f32.gmra.mxu0 %v485
        %v686 = vpop.f32.mrf.mxu0
        %v687 = vadd.f32 0.0, %v686
        %v688 = vpop.f32.mrf.mxu0
        %v689 = vadd.f32 0.0, %v688
        %690 = vmatprep.mubr.f32.mxu0 0.0
        %691 = vmatmul.mubr.f32.gmra.mxu0 %v488
        %v692 = vpop.f32.mrf.mxu0
        %v693 = vadd.f32 0.0, %v692
        %v694 = vpop.f32.mrf.mxu0
        %v695 = vadd.f32 0.0, %v694
        %696 = vmatprep.mubr.f32.mxu0 0.0
        %697 = vmatmul.mubr.f32.gmra.mxu0 %v491
        %v698 = vpop.f32.mrf.mxu0
        %v699 = vadd.f32 0.0, %v698
        %v700 = vpop.f32.mrf.mxu0
        %v701 = vadd.f32 0.0, %v700
        %702 = vmatprep.mubr.f32.mxu0 0.0
        %703 = vmatmul.mubr.f32.gmra.mxu0 %v494
        %v704 = vpop.f32.mrf.mxu0
        %v705 = vadd.f32 0.0, %v704
        %v706 = vpop.f32.mrf.mxu0
        %v707 = vadd.f32 0.0, %v706
        %708 = vmatprep.mubr.f32.mxu0 0.0
        %709 = vmatmul.mubr.f32.gmra.mxu0 %v497
        %v710 = vpop.f32.mrf.mxu0
        %v711 = vadd.f32 0.0, %v710
        %v712 = vpop.f32.mrf.mxu0
        %v713 = vadd.f32 0.0, %v712
        %714 = vmatprep.mubr.f32.mxu0 0.0
        %715 = vmatmul.mubr.f32.gmra.mxu0 %v500
        %v716 = vpop.f32.mrf.mxu0
        %v717 = vadd.f32 0.0, %v716
        %v718 = vpop.f32.mrf.mxu0
        %v719 = vadd.f32 0.0, %v718
        %720 = vmatprep.mubr.f32.mxu0 0.0
        %721 = vmatmul.mubr.f32.gmra.mxu0 %v503
        %v722 = vpop.f32.mrf.mxu0
        %v723 = vadd.f32 0.0, %v722
        %v724 = vpop.f32.mrf.mxu0
        %v725 = vadd.f32 0.0, %v724
        %726 = vmatprep.mubr.f32.mxu0 0.0
        %727 = vmatmul.mubr.f32.gmra.mxu0 %v506
        %v728 = vpop.f32.mrf.mxu0
        %v729 = vadd.f32 0.0, %v728
        %v730 = vpop.f32.mrf.mxu0
        %v731 = vadd.f32 0.0, %v730
        %732 = vmatprep.mubr.f32.mxu0 0.0
        %733 = vmatmul.mubr.f32.gmra.mxu0 %v509
        %v734 = vpop.f32.mrf.mxu0
        %v735 = vadd.f32 0.0, %v734
        %v736 = vpop.f32.mrf.mxu0
        %v737 = vadd.f32 0.0, %v736
        %738 = vmatprep.mubr.f32.mxu0 0.0
        %739 = vmatmul.mubr.f32.gmra.mxu0 %v512
        %v740 = vpop.f32.mrf.mxu0
        %v741 = vadd.f32 0.0, %v740
        %v742 = vpop.f32.mrf.mxu0
        %v743 = vadd.f32 0.0, %v742
        %744 = vmatprep.mubr.f32.mxu0 0.0
        %745 = vmatmul.mubr.f32.gmra.mxu0 %v515
        %v746 = vpop.f32.mrf.mxu0
        %v747 = vadd.f32 0.0, %v746
        %v748 = vpop.f32.mrf.mxu0
        %v749 = vadd.f32 0.0, %v748
        %750 = vmatprep.mubr.f32.mxu0 0.0
        %751 = vmatmul.mubr.f32.gmra.mxu0 %v518
        %v752 = vpop.f32.mrf.mxu0
        %v753 = vadd.f32 0.0, %v752
        %v754 = vpop.f32.mrf.mxu0
        %v755 = vadd.f32 0.0, %v754
        %756 = vmatprep.mubr.f32.mxu0 0.0
        %757 = vmatmul.mubr.f32.gmra.mxu0 %v521
        %v758 = vpop.f32.mrf.mxu0
        %v759 = vadd.f32 0.0, %v758
        %v760 = vpop.f32.mrf.mxu0
        %v761 = vadd.f32 0.0, %v760
        %762 = vmatprep.mubr.f32.mxu0 0.0
        %763 = vmatmul.mubr.f32.gmra.mxu0 %v524
        %v764 = vpop.f32.mrf.mxu0
        %v765 = vadd.f32 0.0, %v764
        %v766 = vpop.f32.mrf.mxu0
        %v767 = vadd.f32 0.0, %v766
        %768 = vmatprep.mubr.f32.mxu0 0.0
        %769 = vmatmul.mubr.f32.gmra.mxu0 %v527
        %v770 = vpop.f32.mrf.mxu0
        %v771 = vadd.f32 0.0, %v770
        %v772 = vpop.f32.mrf.mxu0
        %v773 = vadd.f32 0.0, %v772
        %774 = vmatprep.mubr.f32.mxu0 0.0
        %775 = vmatmul.mubr.f32.gmra.mxu0 %v530
        %v776 = vpop.f32.mrf.mxu0
        %v777 = vadd.f32 0.0, %v776
        %v778 = vpop.f32.mrf.mxu0
        %v779 = vadd.f32 0.0, %v778
        %780 = vmatprep.mubr.f32.mxu0 0.0
        %781 = vmatmul.mubr.f32.gmra.mxu0 %v533
        %v782 = vpop.f32.mrf.mxu0
        %v783 = vadd.f32 0.0, %v782
        %v784 = vpop.f32.mrf.mxu0
        %v785 = vadd.f32 0.0, %v784
        %786 = vmatprep.mubr.f32.mxu0 0.0
        %787 = vmatmul.mubr.f32.gmra.mxu0 %v536
        %v788 = vpop.f32.mrf.mxu0
        %v789 = vadd.f32 0.0, %v788
        %v790 = vpop.f32.mrf.mxu0
        %v791 = vadd.f32 0.0, %v790
        %792 = vmatprep.mubr.f32.mxu0 0.0
        %793 = vmatmul.mubr.f32.gmra.mxu0 %v539
        %v794 = vpop.f32.mrf.mxu0
        %v795 = vadd.f32 0.0, %v794
        %v796 = vpop.f32.mrf.mxu0
        %v797 = vadd.f32 0.0, %v796
        %798 = vmatprep.mubr.f32.mxu0 0.0
        %799 = vmatmul.mubr.f32.gmra.mxu0 %v542
        %v800 = vpop.f32.mrf.mxu0
        %v801 = vadd.f32 0.0, %v800
        %v802 = vpop.f32.mrf.mxu0
        %v803 = vadd.f32 0.0, %v802
        %804 = vmatprep.mubr.f32.mxu0 0.0
        %805 = vmatmul.mubr.f32.gmra.mxu0 %v545
        %v806 = vpop.f32.mrf.mxu0
        %v807 = vadd.f32 0.0, %v806
        %v808 = vpop.f32.mrf.mxu0
        %v809 = vadd.f32 0.0, %v808
        %810 = vdwg.mxu0
        %v811 = vmax.f32 %v621, %v633
        %v812 = vmax.f32 %v627, %v639
        %v813 = vmax.f32 %v811, %v645
        %v814 = vmax.f32 %v812, %v651
        %v815 = vmax.f32 %v813, %v657
        %v816 = vmax.f32 %v814, %v663
        %v817 = vmax.f32 %v815, %v669
        %v818 = vmax.f32 %v816, %v675
        %v819 = vmax.f32 %v817, %v681
        %v820 = vmax.f32 %v818, %v687
        %v821 = vmax.f32 %v819, %v693
        %v822 = vmax.f32 %v820, %v699
        %v823 = vmax.f32 %v821, %v705
        %v824 = vmax.f32 %v822, %v711
        %v825 = vmax.f32 %v823, %v717
        %v826 = vmax.f32 %v824, %v723
        %v827 = vmax.f32 %v825, %v729
        %v828 = vmax.f32 %v826, %v735
        %v829 = vmax.f32 %v827, %v741
        %v830 = vmax.f32 %v828, %v747
        %v831 = vmax.f32 %v829, %v753
        %v832 = vmax.f32 %v830, %v759
        %v833 = vmax.f32 %v831, %v765
        %v834 = vmax.f32 %v832, %v771
        %v835 = vmax.f32 %v833, %v777
        %v836 = vmax.f32 %v834, %v783
        %v837 = vmax.f32 %v835, %v789
        %v838 = vmax.f32 %v836, %v795
        %v839 = vmax.f32 %v837, %v801
        %v840 = vmax.f32 %v838, %v807
        %v841 = vmax.f32 %v839, %v840
        %v842 = vrot.slane %v841, 4
        %v843 = vmax.f32 %v841, %v842
        %v844 = vrot.slane %v843, 2
        %v845 = vmax.f32 %v843, %v844
        %v846 = vrot.slane %v845, 1
        %v847 = vmax.f32 %v845, %v846
        %v848 = vmax.f32 %v623, %v635
        %v849 = vmax.f32 %v629, %v641
        %v850 = vmax.f32 %v848, %v647
        %v851 = vmax.f32 %v849, %v653
        %v852 = vmax.f32 %v850, %v659
        %v853 = vmax.f32 %v851, %v665
        %v854 = vmax.f32 %v852, %v671
        %v855 = vmax.f32 %v853, %v677
        %v856 = vmax.f32 %v854, %v683
        %v857 = vmax.f32 %v855, %v689
        %v858 = vmax.f32 %v856, %v695
        %v859 = vmax.f32 %v857, %v701
        %v860 = vmax.f32 %v858, %v707
        %v861 = vmax.f32 %v859, %v713
        %v862 = vmax.f32 %v860, %v719
        %v863 = vmax.f32 %v861, %v725
        %v864 = vmax.f32 %v862, %v731
        %v865 = vmax.f32 %v863, %v737
        %v866 = vmax.f32 %v864, %v743
        %v867 = vmax.f32 %v865, %v749
        %v868 = vmax.f32 %v866, %v755
        %v869 = vmax.f32 %v867, %v761
        %v870 = vmax.f32 %v868, %v767
        %v871 = vmax.f32 %v869, %v773
        %v872 = vmax.f32 %v870, %v779
        %v873 = vmax.f32 %v871, %v785
        %v874 = vmax.f32 %v872, %v791
        %v875 = vmax.f32 %v873, %v797
        %v876 = vmax.f32 %v874, %v803
        %v877 = vmax.f32 %v875, %v809
        %v878 = vmax.f32 %v876, %v877
        %v879 = vrot.slane %v878, 4
        %v880 = vmax.f32 %v878, %v879
        %v881 = vrot.slane %v880, 2
        %v882 = vmax.f32 %v880, %v881
        %v883 = vrot.slane %v882, 1
        %v884 = vmax.f32 %v882, %v883
        %v885 = vsub.f32 %v621, %v847
        %v886 = vsub.f32 %v623, %v884
        %v887 = vsub.f32 %v627, %v847
        %v888 = vsub.f32 %v629, %v884
        %v889 = vsub.f32 %v633, %v847
        %v890 = vsub.f32 %v635, %v884
        %v891 = vsub.f32 %v639, %v847
        %v892 = vsub.f32 %v641, %v884
        %v893 = vsub.f32 %v645, %v847
        %v894 = vsub.f32 %v647, %v884
        %v895 = vsub.f32 %v651, %v847
        %v896 = vsub.f32 %v653, %v884
        %v897 = vsub.f32 %v657, %v847
        %v898 = vsub.f32 %v659, %v884
        %v899 = vsub.f32 %v663, %v847
        %v900 = vsub.f32 %v665, %v884
        %v901 = vsub.f32 %v669, %v847
        %v902 = vsub.f32 %v671, %v884
        %v903 = vsub.f32 %v675, %v847
        %v904 = vsub.f32 %v677, %v884
        %v905 = vsub.f32 %v681, %v847
        %v906 = vsub.f32 %v683, %v884
        %v907 = vsub.f32 %v687, %v847
        %v908 = vsub.f32 %v689, %v884
        %v909 = vsub.f32 %v693, %v847
        %v910 = vsub.f32 %v695, %v884
        %v911 = vsub.f32 %v699, %v847
        %v912 = vsub.f32 %v701, %v884
        %v913 = vsub.f32 %v705, %v847
        %v914 = vsub.f32 %v707, %v884
        %v915 = vsub.f32 %v711, %v847
        %v916 = vsub.f32 %v713, %v884
        %v917 = vsub.f32 %v717, %v847
        %v918 = vsub.f32 %v719, %v884
        %v919 = vsub.f32 %v723, %v847
        %v920 = vsub.f32 %v725, %v884
        %v921 = vsub.f32 %v729, %v847
        %v922 = vsub.f32 %v731, %v884
        %v923 = vsub.f32 %v735, %v847
        %v924 = vsub.f32 %v737, %v884
        %v925 = vsub.f32 %v741, %v847
        %v926 = vsub.f32 %v743, %v884
        %v927 = vsub.f32 %v747, %v847
        %v928 = vsub.f32 %v749, %v884
        %v929 = vsub.f32 %v753, %v847
        %v930 = vsub.f32 %v755, %v884
        %v931 = vsub.f32 %v759, %v847
        %v932 = vsub.f32 %v761, %v884
        %v933 = vsub.f32 %v765, %v847
        %v934 = vsub.f32 %v767, %v884
        %v935 = vsub.f32 %v771, %v847
        %v936 = vsub.f32 %v773, %v884
        %v937 = vsub.f32 %v777, %v847
        %v938 = vsub.f32 %v779, %v884
        %v939 = vsub.f32 %v783, %v847
        %v940 = vsub.f32 %v785, %v884
        %v941 = vsub.f32 %v789, %v847
        %v942 = vsub.f32 %v791, %v884
        %v943 = vsub.f32 %v795, %v847
        %v944 = vsub.f32 %v797, %v884
        %v945 = vsub.f32 %v801, %v847
        %v946 = vsub.f32 %v803, %v884
        %v947 = vsub.f32 %v807, %v847
        %v948 = vsub.f32 %v809, %v884
        %v949 = vmul.f32 %v885, 1.442695
        %v950 = vpow.pop %v949
        %v951 = vmul.f32 %v886, 1.442695
        %v952 = vpow.pop %v951
        %v953 = vmul.f32 %v887, 1.442695
        %v954 = vpow.pop %v953
        %v955 = vmul.f32 %v888, 1.442695
        %v956 = vpow.pop %v955
        %v957 = vmul.f32 %v889, 1.442695
        %v958 = vpow.pop %v957
        %v959 = vmul.f32 %v890, 1.442695
        %v960 = vpow.pop %v959
        %v961 = vmul.f32 %v891, 1.442695
        %v962 = vpow.pop %v961
        %v963 = vmul.f32 %v892, 1.442695
        %v964 = vpow.pop %v963
        %v965 = vmul.f32 %v893, 1.442695
        %v966 = vpow.pop %v965
        %v967 = vmul.f32 %v894, 1.442695
        %v968 = vpow.pop %v967
        %v969 = vmul.f32 %v895, 1.442695
        %v970 = vpow.pop %v969
        %v971 = vmul.f32 %v896, 1.442695
        %v972 = vpow.pop %v971
        %v973 = vmul.f32 %v897, 1.442695
        %v974 = vpow.pop %v973
        %v975 = vmul.f32 %v898, 1.442695
        %v976 = vpow.pop %v975
        %v977 = vmul.f32 %v899, 1.442695
        %v978 = vpow.pop %v977
        %v979 = vmul.f32 %v900, 1.442695
        %v980 = vpow.pop %v979
        %v981 = vmul.f32 %v901, 1.442695
        %v982 = vpow.pop %v981
        %v983 = vmul.f32 %v902, 1.442695
        %v984 = vpow.pop %v983
        %v985 = vmul.f32 %v903, 1.442695
        %v986 = vpow.pop %v985
        %v987 = vmul.f32 %v904, 1.442695
        %v988 = vpow.pop %v987
        %v989 = vmul.f32 %v905, 1.442695
        %v990 = vpow.pop %v989
        %v991 = vmul.f32 %v906, 1.442695
        %v992 = vpow.pop %v991
        %v993 = vmul.f32 %v907, 1.442695
        %v994 = vpow.pop %v993
        %v995 = vmul.f32 %v908, 1.442695
        %v996 = vpow.pop %v995
        %v997 = vmul.f32 %v909, 1.442695
        %v998 = vpow.pop %v997
        %v999 = vmul.f32 %v910, 1.442695
        %v1000 = vpow.pop %v999
        %v1001 = vmul.f32 %v911, 1.442695
        %v1002 = vpow.pop %v1001
        %v1003 = vmul.f32 %v912, 1.442695
        %v1004 = vpow.pop %v1003
        %v1005 = vmul.f32 %v913, 1.442695
        %v1006 = vpow.pop %v1005
        %v1007 = vmul.f32 %v914, 1.442695
        %v1008 = vpow.pop %v1007
        %v1009 = vmul.f32 %v915, 1.442695
        %v1010 = vpow.pop %v1009
        %v1011 = vmul.f32 %v916, 1.442695
        %v1012 = vpow.pop %v1011
        %v1013 = vmul.f32 %v917, 1.442695
        %v1014 = vpow.pop %v1013
        %v1015 = vmul.f32 %v918, 1.442695
        %v1016 = vpow.pop %v1015
        %v1017 = vmul.f32 %v919, 1.442695
        %v1018 = vpow.pop %v1017
        %v1019 = vmul.f32 %v920, 1.442695
        %v1020 = vpow.pop %v1019
        %v1021 = vmul.f32 %v921, 1.442695
        %v1022 = vpow.pop %v1021
        %v1023 = vmul.f32 %v922, 1.442695
        %v1024 = vpow.pop %v1023
        %v1025 = vmul.f32 %v923, 1.442695
        %v1026 = vpow.pop %v1025
        %v1027 = vmul.f32 %v924, 1.442695
        %v1028 = vpow.pop %v1027
        %v1029 = vmul.f32 %v925, 1.442695
        %v1030 = vpow.pop %v1029
        %v1031 = vmul.f32 %v926, 1.442695
        %v1032 = vpow.pop %v1031
        %v1033 = vmul.f32 %v927, 1.442695
        %v1034 = vpow.pop %v1033
        %v1035 = vmul.f32 %v928, 1.442695
        %v1036 = vpow.pop %v1035
        %v1037 = vmul.f32 %v929, 1.442695
        %v1038 = vpow.pop %v1037
        %v1039 = vmul.f32 %v930, 1.442695
        %v1040 = vpow.pop %v1039
        %v1041 = vmul.f32 %v931, 1.442695
        %v1042 = vpow.pop %v1041
        %v1043 = vmul.f32 %v932, 1.442695
        %v1044 = vpow.pop %v1043
        %v1045 = vmul.f32 %v933, 1.442695
        %v1046 = vpow.pop %v1045
        %v1047 = vmul.f32 %v934, 1.442695
        %v1048 = vpow.pop %v1047
        %v1049 = vmul.f32 %v935, 1.442695
        %v1050 = vpow.pop %v1049
        %v1051 = vmul.f32 %v936, 1.442695
        %v1052 = vpow.pop %v1051
        %v1053 = vmul.f32 %v937, 1.442695
        %v1054 = vpow.pop %v1053
        %v1055 = vmul.f32 %v938, 1.442695
        %v1056 = vpow.pop %v1055
        %v1057 = vmul.f32 %v939, 1.442695
        %v1058 = vpow.pop %v1057
        %v1059 = vmul.f32 %v940, 1.442695
        %v1060 = vpow.pop %v1059
        %v1061 = vmul.f32 %v941, 1.442695
        %v1062 = vpow.pop %v1061
        %v1063 = vmul.f32 %v942, 1.442695
        %v1064 = vpow.pop %v1063
        %v1065 = vmul.f32 %v943, 1.442695
        %v1066 = vpow.pop %v1065
        %v1067 = vmul.f32 %v944, 1.442695
        %v1068 = vpow.pop %v1067
        %v1069 = vmul.f32 %v945, 1.442695
        %v1070 = vpow.pop %v1069
        %v1071 = vmul.f32 %v946, 1.442695
        %v1072 = vpow.pop %v1071
        %v1073 = vmul.f32 %v947, 1.442695
        %v1074 = vpow.pop %v1073
        %v1075 = vmul.f32 %v948, 1.442695
        %v1076 = vpow.pop %v1075
        %v1077 = vadd.f32 %v950, %v954
        %v1078 = vadd.f32 %v1077, %v958
        %v1079 = vadd.f32 %v1078, %v962
        %v1080 = vadd.f32 %v1079, %v966
        %v1081 = vadd.f32 %v1080, %v970
        %v1082 = vadd.f32 %v1081, %v974
        %v1083 = vadd.f32 %v1082, %v978
        %v1084 = vadd.f32 %v1083, %v982
        %v1085 = vadd.f32 %v1084, %v986
        %v1086 = vadd.f32 %v1085, %v990
        %v1087 = vadd.f32 %v1086, %v994
        %v1088 = vadd.f32 %v1087, %v998
        %v1089 = vadd.f32 %v1088, %v1002
        %v1090 = vadd.f32 %v1089, %v1006
        %v1091 = vadd.f32 %v1090, %v1010
        %v1092 = vadd.f32 %v1091, %v1014
        %v1093 = vadd.f32 %v1092, %v1018
        %v1094 = vadd.f32 %v1093, %v1022
        %v1095 = vadd.f32 %v1094, %v1026
        %v1096 = vadd.f32 %v1095, %v1030
        %v1097 = vadd.f32 %v1096, %v1034
        %v1098 = vadd.f32 %v1097, %v1038
        %v1099 = vadd.f32 %v1098, %v1042
        %v1100 = vadd.f32 %v1099, %v1046
        %v1101 = vadd.f32 %v1100, %v1050
        %v1102 = vadd.f32 %v1101, %v1054
        %v1103 = vadd.f32 %v1102, %v1058
        %v1104 = vadd.f32 %v1103, %v1062
        %v1105 = vadd.f32 %v1104, %v1066
        %v1106 = vadd.f32 %v1105, %v1070
        %v1107 = vadd.f32 %v1106, %v1074
        %v1108 = vrot.slane %v1107, 4
        %v1109 = vadd.f32 %v1107, %v1108
        %v1110 = vrot.slane %v1109, 2
        %v1111 = vadd.f32 %v1109, %v1110
        %v1112 = vrot.slane %v1111, 1
        %v1113 = vadd.f32 %v1111, %v1112
        %v1114 = vadd.f32 %v952, %v956
        %v1115 = vadd.f32 %v1114, %v960
        %v1116 = vadd.f32 %v1115, %v964
        %v1117 = vadd.f32 %v1116, %v968
        %v1118 = vadd.f32 %v1117, %v972
        %v1119 = vadd.f32 %v1118, %v976
        %v1120 = vadd.f32 %v1119, %v980
        %v1121 = vadd.f32 %v1120, %v984
        %v1122 = vadd.f32 %v1121, %v988
        %v1123 = vadd.f32 %v1122, %v992
        %v1124 = vadd.f32 %v1123, %v996
        %v1125 = vadd.f32 %v1124, %v1000
        %v1126 = vadd.f32 %v1125, %v1004
        %v1127 = vadd.f32 %v1126, %v1008
        %v1128 = vadd.f32 %v1127, %v1012
        %v1129 = vadd.f32 %v1128, %v1016
        %v1130 = vadd.f32 %v1129, %v1020
        %v1131 = vadd.f32 %v1130, %v1024
        %v1132 = vadd.f32 %v1131, %v1028
        %v1133 = vadd.f32 %v1132, %v1032
        %v1134 = vadd.f32 %v1133, %v1036
        %v1135 = vadd.f32 %v1134, %v1040
        %v1136 = vadd.f32 %v1135, %v1044
        %v1137 = vadd.f32 %v1136, %v1048
        %v1138 = vadd.f32 %v1137, %v1052
        %v1139 = vadd.f32 %v1138, %v1056
        %v1140 = vadd.f32 %v1139, %v1060
        %v1141 = vadd.f32 %v1140, %v1064
        %v1142 = vadd.f32 %v1141, %v1068
        %v1143 = vadd.f32 %v1142, %v1072
        %v1144 = vadd.f32 %v1143, %v1076
        %v1145 = vrot.slane %v1144, 4
        %v1146 = vadd.f32 %v1144, %v1145
        %v1147 = vrot.slane %v1146, 2
        %v1148 = vadd.f32 %v1146, %v1147
        %v1149 = vrot.slane %v1148, 1
        %v1150 = vadd.f32 %v1148, %v1149
        %v1151 = vrcp.pop %v1113
        %v1152 = vrcp.pop %v1150
        %v1153 = vmul.f32 %v950, %v1151
        %v1154 = vmul.f32 %v952, %v1152
        %v1155 = vmul.f32 %v954, %v1151
        %v1156 = vmul.f32 %v956, %v1152
        %v1157 = vmul.f32 %v958, %v1151
        %v1158 = vmul.f32 %v960, %v1152
        %v1159 = vmul.f32 %v962, %v1151
        %v1160 = vmul.f32 %v964, %v1152
        %v1161 = vmul.f32 %v966, %v1151
        %v1162 = vmul.f32 %v968, %v1152
        %v1163 = vmul.f32 %v970, %v1151
        %v1164 = vmul.f32 %v972, %v1152
        %v1165 = vmul.f32 %v974, %v1151
        %v1166 = vmul.f32 %v976, %v1152
        %v1167 = vmul.f32 %v978, %v1151
        %v1168 = vmul.f32 %v980, %v1152
        %v1169 = vmul.f32 %v982, %v1151
        %v1170 = vmul.f32 %v984, %v1152
        %v1171 = vmul.f32 %v986, %v1151
        %v1172 = vmul.f32 %v988, %v1152
        %v1173 = vmul.f32 %v990, %v1151
        %v1174 = vmul.f32 %v992, %v1152
        %v1175 = vmul.f32 %v994, %v1151
        %v1176 = vmul.f32 %v996, %v1152
        %v1177 = vmul.f32 %v998, %v1151
        %v1178 = vmul.f32 %v1000, %v1152
        %v1179 = vmul.f32 %v1002, %v1151
        %v1180 = vmul.f32 %v1004, %v1152
        %v1181 = vmul.f32 %v1006, %v1151
        %v1182 = vmul.f32 %v1008, %v1152
        %v1183 = vmul.f32 %v1010, %v1151
        %v1184 = vmul.f32 %v1012, %v1152
        %v1185 = vmul.f32 %v1014, %v1151
        %v1186 = vmul.f32 %v1016, %v1152
        %v1187 = vmul.f32 %v1018, %v1151
        %v1188 = vmul.f32 %v1020, %v1152
        %v1189 = vmul.f32 %v1022, %v1151
        %v1190 = vmul.f32 %v1024, %v1152
        %v1191 = vmul.f32 %v1026, %v1151
        %v1192 = vmul.f32 %v1028, %v1152
        %v1193 = vmul.f32 %v1030, %v1151
        %v1194 = vmul.f32 %v1032, %v1152
        %v1195 = vmul.f32 %v1034, %v1151
        %v1196 = vmul.f32 %v1036, %v1152
        %v1197 = vmul.f32 %v1038, %v1151
        %v1198 = vmul.f32 %v1040, %v1152
        %v1199 = vmul.f32 %v1042, %v1151
        %v1200 = vmul.f32 %v1044, %v1152
        %v1201 = vmul.f32 %v1046, %v1151
        %v1202 = vmul.f32 %v1048, %v1152
        %v1203 = vmul.f32 %v1050, %v1151
        %v1204 = vmul.f32 %v1052, %v1152
        %v1205 = vmul.f32 %v1054, %v1151
        %v1206 = vmul.f32 %v1056, %v1152
        %v1207 = vmul.f32 %v1058, %v1151
        %v1208 = vmul.f32 %v1060, %v1152
        %v1209 = vmul.f32 %v1062, %v1151
        %v1210 = vmul.f32 %v1064, %v1152
        %v1211 = vmul.f32 %v1066, %v1151
        %v1212 = vmul.f32 %v1068, %v1152
        %v1213 = vmul.f32 %v1070, %v1151
        %v1214 = vmul.f32 %v1072, %v1152
        %v1215 = vmul.f32 %v1074, %v1151
        %v1216 = vmul.f32 %v1076, %v1152
        %1217 = vmatprep.subr.mxu0 %v1184
        %1218 = vmatpush1.msra.mxu0 %v1183
        %1219 = vmatprep.subr.mxu0 %v1182
        %1220 = vmatpush1.msra.mxu0 %v1181
        %1221 = vmatprep.subr.mxu0 %v1180
        %1222 = vmatpush1.msra.mxu0 %v1179
        %1223 = vmatprep.subr.mxu0 %v1178
        %1224 = vmatpush1.msra.mxu0 %v1177
        %1225 = vmatprep.subr.mxu0 %v1176
        %1226 = vmatpush1.msra.mxu0 %v1175
        %1227 = vmatprep.subr.mxu0 %v1174
        %1228 = vmatpush1.msra.mxu0 %v1173
        %1229 = vmatprep.subr.mxu0 %v1172
        %1230 = vmatpush1.msra.mxu0 %v1171
        %1231 = vmatprep.subr.mxu0 %v1170
        %1232 = vmatpush1.msra.mxu0 %v1169
        %1233 = vmatprep.subr.mxu0 %v1168
        %1234 = vmatpush1.msra.mxu0 %v1167
        %1235 = vmatprep.subr.mxu0 %v1166
        %1236 = vmatpush1.msra.mxu0 %v1165
        %1237 = vmatprep.subr.mxu0 %v1164
        %1238 = vmatpush1.msra.mxu0 %v1163
        %1239 = vmatprep.subr.mxu0 %v1162
        %1240 = vmatpush1.msra.mxu0 %v1161
        %1241 = vmatprep.subr.mxu0 %v1160
        %1242 = vmatpush1.msra.mxu0 %v1159
        %1243 = vmatprep.subr.mxu0 %v1158
        %1244 = vmatpush1.msra.mxu0 %v1157
        %1245 = vmatprep.subr.mxu0 %v1156
        %1246 = vmatpush1.msra.mxu0 %v1155
        %1247 = vmatprep.subr.mxu0 %v1154
        %1248 = vmatpush1.msra.mxu0 %v1153
        %1249 = vmatprep.subr.mxu0 %v1216
        %1250 = vmatpush2.msra.mxu0 %v1215
        %1251 = vmatprep.subr.mxu0 %v1214
        %1252 = vmatpush2.msra.mxu0 %v1213
        %1253 = vmatprep.subr.mxu0 %v1212
        %1254 = vmatpush2.msra.mxu0 %v1211
        %1255 = vmatprep.subr.mxu0 %v1210
        %1256 = vmatpush2.msra.mxu0 %v1209
        %1257 = vmatprep.subr.mxu0 %v1208
        %1258 = vmatpush2.msra.mxu0 %v1207
        %1259 = vmatprep.subr.mxu0 %v1206
        %1260 = vmatpush2.msra.mxu0 %v1205
        %1261 = vmatprep.subr.mxu0 %v1204
        %1262 = vmatpush2.msra.mxu0 %v1203
        %1263 = vmatprep.subr.mxu0 %v1202
        %1264 = vmatpush2.msra.mxu0 %v1201
        %1265 = vmatprep.subr.mxu0 %v1200
        %1266 = vmatpush2.msra.mxu0 %v1199
        %1267 = vmatprep.subr.mxu0 %v1198
        %1268 = vmatpush2.msra.mxu0 %v1197
        %1269 = vmatprep.subr.mxu0 %v1196
        %1270 = vmatpush2.msra.mxu0 %v1195
        %1271 = vmatprep.subr.mxu0 %v1194
        %1272 = vmatpush2.msra.mxu0 %v1193
        %1273 = vmatprep.subr.mxu0 %v1192
        %1274 = vmatpush2.msra.mxu0 %v1191
        %1275 = vmatprep.subr.mxu0 %v1190
        %1276 = vmatpush2.msra.mxu0 %v1189
        %1277 = vmatprep.subr.mxu0 %v1188
        %1278 = vmatpush2.msra.mxu0 %v1187
        %1279 = vmatprep.subr.mxu0 %v1186
        %1280 = vmatpush2.msra.mxu0 %v1185
        %1281 = vmatprep.mubr.f32.mxu0 %v358
        %1282 = vmatmul.mubr.f32.gmra.mxu0 %v356
        %v1283 = vpop.f32.mrf.mxu0
        %v1284 = vadd.f32 0.0, %v1283
        %v1285 = vpop.f32.mrf.mxu0
        %v1286 = vadd.f32 0.0, %v1285
        %1287 = vdwg.mxu0
        %v1290 = vrot.slane %v332, 4
        %v1291 = vrot.slane %v334, 4
        %1294 = vxpose.xlu0.b32.start [1/16] %v1290, 128
        %1295 = vxpose.xlu0.b32.cont [2/16] 0.0, 128
        %1296 = vxpose.xlu0.b32.cont [3/16] 0.0, 128
        %1297 = vxpose.xlu0.b32.cont [4/16] 0.0, 128
        %1298 = vxpose.xlu0.b32.cont [5/16] 0.0, 128
        %1299 = vxpose.xlu0.b32.cont [6/16] 0.0, 128
        %1300 = vxpose.xlu0.b32.cont [7/16] 0.0, 128
        %1301 = vxpose.xlu0.b32.cont [8/16] 0.0, 128
        %1302 = vxpose.xlu0.b32.cont [9/16] 0.0, 128
        %1303 = vxpose.xlu0.b32.cont [10/16] 0.0, 128
        %1304 = vxpose.xlu0.b32.cont [11/16] 0.0, 128
        %1305 = vxpose.xlu0.b32.cont [12/16] 0.0, 128
        %1306 = vxpose.xlu0.b32.cont [13/16] 0.0, 128
        %1307 = vxpose.xlu0.b32.cont [14/16] 0.0, 128
        %1308 = vxpose.xlu0.b32.cont [15/16] 0.0, 128
        %1309 = vxpose.xlu0.b32.end [16/16] 0.0, 128
        %v1310 = vpop.trf.xlu0
        %v1311 = vpop.trf.xlu0
        %v1312 = vpop.trf.xlu0
        %v1313 = vpop.trf.xlu0
        %v1314 = vpop.trf.xlu0
        %v1315 = vpop.trf.xlu0
        %v1316 = vpop.trf.xlu0
        %v1317 = vpop.trf.xlu0
        %v1318 = vpop.trf.xlu0
        %v1319 = vpop.trf.xlu0
        %v1320 = vpop.trf.xlu0
        %v1321 = vpop.trf.xlu0
        %v1322 = vpop.trf.xlu0
        %v1323 = vpop.trf.xlu0
        %v1324 = vpop.trf.xlu0
        %v1325 = vpop.trf.xlu0
        %1326 = vxpose.xlu0.b32.start [1/16] %v1291, 128
        %1327 = vxpose.xlu0.b32.cont [2/16] 0.0, 128
        %1328 = vxpose.xlu0.b32.cont [3/16] 0.0, 128
        %1329 = vxpose.xlu0.b32.cont [4/16] 0.0, 128
        %1330 = vxpose.xlu0.b32.cont [5/16] 0.0, 128
        %1331 = vxpose.xlu0.b32.cont [6/16] 0.0, 128
        %1332 = vxpose.xlu0.b32.cont [7/16] 0.0, 128
        %1333 = vxpose.xlu0.b32.cont [8/16] 0.0, 128
        %1334 = vxpose.xlu0.b32.cont [9/16] 0.0, 128
        %1335 = vxpose.xlu0.b32.cont [10/16] 0.0, 128
        %1336 = vxpose.xlu0.b32.cont [11/16] 0.0, 128
        %1337 = vxpose.xlu0.b32.cont [12/16] 0.0, 128
        %1338 = vxpose.xlu0.b32.cont [13/16] 0.0, 128
        %1339 = vxpose.xlu0.b32.cont [14/16] 0.0, 128
        %1340 = vxpose.xlu0.b32.cont [15/16] 0.0, 128
        %1341 = vxpose.xlu0.b32.end [16/16] 0.0, 128
        %v1342 = vpop.trf.xlu0
        %v1343 = vpop.trf.xlu0
        %v1344 = vpop.trf.xlu0
        %v1345 = vpop.trf.xlu0
        %v1346 = vpop.trf.xlu0
        %v1347 = vpop.trf.xlu0
        %v1348 = vpop.trf.xlu0
        %v1349 = vpop.trf.xlu0
        %v1350 = vpop.trf.xlu0
        %v1351 = vpop.trf.xlu0
        %v1352 = vpop.trf.xlu0
        %v1353 = vpop.trf.xlu0
        %v1354 = vpop.trf.xlu0
        %v1355 = vpop.trf.xlu0
        %v1356 = vpop.trf.xlu0
        %v1357 = vpop.trf.xlu0
        %v1358 = vrot.slane %v378, 4
        %v1359 = vrot.slane %v379, 4
        %v1361 = vsel %vm450, %v1310, 0
        %v1364 = vsel %vm450, %v1311, 0
        %v1367 = vsel %vm450, %v1312, 0
        %v1370 = vsel %vm450, %v1313, 0
        %v1373 = vsel %vm450, %v1314, 0
        %v1376 = vsel %vm450, %v1315, 0
        %v1379 = vsel %vm450, %v1316, 0
        %v1382 = vsel %vm450, %v1317, 0
        %v1385 = vsel %vm450, %v1318, 0
        %v1388 = vsel %vm450, %v1319, 0
        %v1391 = vsel %vm450, %v1320, 0
        %v1394 = vsel %vm450, %v1321, 0
        %v1397 = vsel %vm450, %v1322, 0
        %v1400 = vsel %vm450, %v1323, 0
        %v1403 = vsel %vm450, %v1324, 0
        %v1406 = vsel %vm450, %v1325, 0
        %v1409 = vsel %vm450, %v1342, 0
        %v1412 = vsel %vm450, %v1343, 0
        %v1415 = vsel %vm450, %v1344, 0
        %v1418 = vsel %vm450, %v1345, 0
        %v1421 = vsel %vm450, %v1346, 0
        %v1424 = vsel %vm450, %v1347, 0
        %v1427 = vsel %vm450, %v1348, 0
        %v1430 = vsel %vm450, %v1349, 0
        %v1433 = vsel %vm450, %v1350, 0
        %v1436 = vsel %vm450, %v1351, 0
        %v1439 = vsel %vm450, %v1352, 0
        %v1442 = vsel %vm450, %v1353, 0
        %v1445 = vsel %vm450, %v1354, 0
        %v1448 = vsel %vm450, %v1355, 0
        %v1451 = vsel %vm450, %v1356, 0
        %v1454 = vsel %vm450, %v1357, 0
        %v1456 = vsel %vm547, %v1358, 0
        %v1458 = vsel %vm547, %v1359, 0
        %1460 = vmatprep.subr.mxu0 0.0
        %1461 = vmatpush1.msra.mxu0 0.0
        %1462 = vmatprep.subr.mxu0 0.0
        %1463 = vmatpush1.msra.mxu0 0.0
        %1464 = vmatprep.subr.mxu0 0.0
        %1465 = vmatpush1.msra.mxu0 0.0
        %1466 = vmatprep.subr.mxu0 0.0
        %1467 = vmatpush1.msra.mxu0 0.0
        %1468 = vmatprep.subr.mxu0 0.0
        %1469 = vmatpush1.msra.mxu0 0.0
        %1470 = vmatprep.subr.mxu0 0.0
        %1471 = vmatpush1.msra.mxu0 0.0
        %1472 = vmatprep.subr.mxu0 0.0
        %1473 = vmatpush1.msra.mxu0 0.0
        %1474 = vmatprep.subr.mxu0 0.0
        %1475 = vmatpush1.msra.mxu0 0.0
        %1476 = vmatprep.subr.mxu0 0.0
        %1477 = vmatpush1.msra.mxu0 0.0
        %1478 = vmatprep.subr.mxu0 0.0
        %1479 = vmatpush1.msra.mxu0 0.0
        %1480 = vmatprep.subr.mxu0 0.0
        %1481 = vmatpush1.msra.mxu0 0.0
        %1482 = vmatprep.subr.mxu0 0.0
        %1483 = vmatpush1.msra.mxu0 0.0
        %1484 = vmatprep.subr.mxu0 0.0
        %1485 = vmatpush1.msra.mxu0 0.0
        %1486 = vmatprep.subr.mxu0 0.0
        %1487 = vmatpush1.msra.mxu0 0.0
        %1488 = vmatprep.subr.mxu0 0.0
        %1489 = vmatpush1.msra.mxu0 0.0
        %1490 = vmatprep.subr.mxu0 %v1458
        %1491 = vmatpush1.msra.mxu0 %v1456
        %1492 = vmatprep.subr.mxu0 0.0
        %1493 = vmatpush2.msra.mxu0 0.0
        %1494 = vmatprep.subr.mxu0 0.0
        %1495 = vmatpush2.msra.mxu0 0.0
        %1496 = vmatprep.subr.mxu0 0.0
        %1497 = vmatpush2.msra.mxu0 0.0
        %1498 = vmatprep.subr.mxu0 0.0
        %1499 = vmatpush2.msra.mxu0 0.0
        %1500 = vmatprep.subr.mxu0 0.0
        %1501 = vmatpush2.msra.mxu0 0.0
        %1502 = vmatprep.subr.mxu0 0.0
        %1503 = vmatpush2.msra.mxu0 0.0
        %1504 = vmatprep.subr.mxu0 0.0
        %1505 = vmatpush2.msra.mxu0 0.0
        %1506 = vmatprep.subr.mxu0 0.0
        %1507 = vmatpush2.msra.mxu0 0.0
        %1508 = vmatprep.subr.mxu0 0.0
        %1509 = vmatpush2.msra.mxu0 0.0
        %1510 = vmatprep.subr.mxu0 0.0
        %1511 = vmatpush2.msra.mxu0 0.0
        %1512 = vmatprep.subr.mxu0 0.0
        %1513 = vmatpush2.msra.mxu0 0.0
        %1514 = vmatprep.subr.mxu0 0.0
        %1515 = vmatpush2.msra.mxu0 0.0
        %1516 = vmatprep.subr.mxu0 0.0
        %1517 = vmatpush2.msra.mxu0 0.0
        %1518 = vmatprep.subr.mxu0 0.0
        %1519 = vmatpush2.msra.mxu0 0.0
        %1520 = vmatprep.subr.mxu0 0.0
        %1521 = vmatpush2.msra.mxu0 0.0
        %1522 = vmatprep.subr.mxu0 0.0
        %1523 = vmatpush2.msra.mxu0 0.0
        %1524 = vmatprep.mubr.f32.mxu0 0.0
        %1525 = vmatmul.mubr.f32.gmra.mxu0 %v1361
        %v1526 = vpop.f32.mrf.mxu0
        %v1527 = vadd.f32 0.0, %v1526
        %v1528 = vpop.f32.mrf.mxu0
        %v1529 = vadd.f32 0.0, %v1528
        %1530 = vmatprep.mubr.f32.mxu0 0.0
        %1531 = vmatmul.mubr.f32.gmra.mxu0 %v1364
        %v1532 = vpop.f32.mrf.mxu0
        %v1533 = vadd.f32 0.0, %v1532
        %v1534 = vpop.f32.mrf.mxu0
        %v1535 = vadd.f32 0.0, %v1534
        %1536 = vmatprep.mubr.f32.mxu0 0.0
        %1537 = vmatmul.mubr.f32.gmra.mxu0 %v1367
        %v1538 = vpop.f32.mrf.mxu0
        %v1539 = vadd.f32 0.0, %v1538
        %v1540 = vpop.f32.mrf.mxu0
        %v1541 = vadd.f32 0.0, %v1540
        %1542 = vmatprep.mubr.f32.mxu0 0.0
        %1543 = vmatmul.mubr.f32.gmra.mxu0 %v1370
        %v1544 = vpop.f32.mrf.mxu0
        %v1545 = vadd.f32 0.0, %v1544
        %v1546 = vpop.f32.mrf.mxu0
        %v1547 = vadd.f32 0.0, %v1546
        %1548 = vmatprep.mubr.f32.mxu0 0.0
        %1549 = vmatmul.mubr.f32.gmra.mxu0 %v1373
        %v1550 = vpop.f32.mrf.mxu0
        %v1551 = vadd.f32 0.0, %v1550
        %v1552 = vpop.f32.mrf.mxu0
        %v1553 = vadd.f32 0.0, %v1552
        %1554 = vmatprep.mubr.f32.mxu0 0.0
        %1555 = vmatmul.mubr.f32.gmra.mxu0 %v1376
        %v1556 = vpop.f32.mrf.mxu0
        %v1557 = vadd.f32 0.0, %v1556
        %v1558 = vpop.f32.mrf.mxu0
        %v1559 = vadd.f32 0.0, %v1558
        %1560 = vmatprep.mubr.f32.mxu0 0.0
        %1561 = vmatmul.mubr.f32.gmra.mxu0 %v1379
        %v1562 = vpop.f32.mrf.mxu0
        %v1563 = vadd.f32 0.0, %v1562
        %v1564 = vpop.f32.mrf.mxu0
        %v1565 = vadd.f32 0.0, %v1564
        %1566 = vmatprep.mubr.f32.mxu0 0.0
        %1567 = vmatmul.mubr.f32.gmra.mxu0 %v1382
        %v1568 = vpop.f32.mrf.mxu0
        %v1569 = vadd.f32 0.0, %v1568
        %v1570 = vpop.f32.mrf.mxu0
        %v1571 = vadd.f32 0.0, %v1570
        %1572 = vmatprep.mubr.f32.mxu0 0.0
        %1573 = vmatmul.mubr.f32.gmra.mxu0 %v1385
        %v1574 = vpop.f32.mrf.mxu0
        %v1575 = vadd.f32 0.0, %v1574
        %v1576 = vpop.f32.mrf.mxu0
        %v1577 = vadd.f32 0.0, %v1576
        %1578 = vmatprep.mubr.f32.mxu0 0.0
        %1579 = vmatmul.mubr.f32.gmra.mxu0 %v1388
        %v1580 = vpop.f32.mrf.mxu0
        %v1581 = vadd.f32 0.0, %v1580
        %v1582 = vpop.f32.mrf.mxu0
        %v1583 = vadd.f32 0.0, %v1582
        %1584 = vmatprep.mubr.f32.mxu0 0.0
        %1585 = vmatmul.mubr.f32.gmra.mxu0 %v1391
        %v1586 = vpop.f32.mrf.mxu0
        %v1587 = vadd.f32 0.0, %v1586
        %v1588 = vpop.f32.mrf.mxu0
        %v1589 = vadd.f32 0.0, %v1588
        %1590 = vmatprep.mubr.f32.mxu0 0.0
        %1591 = vmatmul.mubr.f32.gmra.mxu0 %v1394
        %v1592 = vpop.f32.mrf.mxu0
        %v1593 = vadd.f32 0.0, %v1592
        %v1594 = vpop.f32.mrf.mxu0
        %v1595 = vadd.f32 0.0, %v1594
        %1596 = vmatprep.mubr.f32.mxu0 0.0
        %1597 = vmatmul.mubr.f32.gmra.mxu0 %v1397
        %v1598 = vpop.f32.mrf.mxu0
        %v1599 = vadd.f32 0.0, %v1598
        %v1600 = vpop.f32.mrf.mxu0
        %v1601 = vadd.f32 0.0, %v1600
        %1602 = vmatprep.mubr.f32.mxu0 0.0
        %1603 = vmatmul.mubr.f32.gmra.mxu0 %v1400
        %v1604 = vpop.f32.mrf.mxu0
        %v1605 = vadd.f32 0.0, %v1604
        %v1606 = vpop.f32.mrf.mxu0
        %v1607 = vadd.f32 0.0, %v1606
        %1608 = vmatprep.mubr.f32.mxu0 0.0
        %1609 = vmatmul.mubr.f32.gmra.mxu0 %v1403
        %v1610 = vpop.f32.mrf.mxu0
        %v1611 = vadd.f32 0.0, %v1610
        %v1612 = vpop.f32.mrf.mxu0
        %v1613 = vadd.f32 0.0, %v1612
        %1614 = vmatprep.mubr.f32.mxu0 0.0
        %1615 = vmatmul.mubr.f32.gmra.mxu0 %v1406
        %v1616 = vpop.f32.mrf.mxu0
        %v1617 = vadd.f32 0.0, %v1616
        %v1618 = vpop.f32.mrf.mxu0
        %v1619 = vadd.f32 0.0, %v1618
        %1620 = vmatprep.mubr.f32.mxu0 0.0
        %1621 = vmatmul.mubr.f32.gmra.mxu0 %v1409
        %v1622 = vpop.f32.mrf.mxu0
        %v1623 = vadd.f32 0.0, %v1622
        %v1624 = vpop.f32.mrf.mxu0
        %v1625 = vadd.f32 0.0, %v1624
        %1626 = vmatprep.mubr.f32.mxu0 0.0
        %1627 = vmatmul.mubr.f32.gmra.mxu0 %v1412
        %v1628 = vpop.f32.mrf.mxu0
        %v1629 = vadd.f32 0.0, %v1628
        %v1630 = vpop.f32.mrf.mxu0
        %v1631 = vadd.f32 0.0, %v1630
        %1632 = vmatprep.mubr.f32.mxu0 0.0
        %1633 = vmatmul.mubr.f32.gmra.mxu0 %v1415
        %v1634 = vpop.f32.mrf.mxu0
        %v1635 = vadd.f32 0.0, %v1634
        %v1636 = vpop.f32.mrf.mxu0
        %v1637 = vadd.f32 0.0, %v1636
        %1638 = vmatprep.mubr.f32.mxu0 0.0
        %1639 = vmatmul.mubr.f32.gmra.mxu0 %v1418
        %v1640 = vpop.f32.mrf.mxu0
        %v1641 = vadd.f32 0.0, %v1640
        %v1642 = vpop.f32.mrf.mxu0
        %v1643 = vadd.f32 0.0, %v1642
        %1644 = vmatprep.mubr.f32.mxu0 0.0
        %1645 = vmatmul.mubr.f32.gmra.mxu0 %v1421
        %v1646 = vpop.f32.mrf.mxu0
        %v1647 = vadd.f32 0.0, %v1646
        %v1648 = vpop.f32.mrf.mxu0
        %v1649 = vadd.f32 0.0, %v1648
        %1650 = vmatprep.mubr.f32.mxu0 0.0
        %1651 = vmatmul.mubr.f32.gmra.mxu0 %v1424
        %v1652 = vpop.f32.mrf.mxu0
        %v1653 = vadd.f32 0.0, %v1652
        %v1654 = vpop.f32.mrf.mxu0
        %v1655 = vadd.f32 0.0, %v1654
        %1656 = vmatprep.mubr.f32.mxu0 0.0
        %1657 = vmatmul.mubr.f32.gmra.mxu0 %v1427
        %v1658 = vpop.f32.mrf.mxu0
        %v1659 = vadd.f32 0.0, %v1658
        %v1660 = vpop.f32.mrf.mxu0
        %v1661 = vadd.f32 0.0, %v1660
        %1662 = vmatprep.mubr.f32.mxu0 0.0
        %1663 = vmatmul.mubr.f32.gmra.mxu0 %v1430
        %v1664 = vpop.f32.mrf.mxu0
        %v1665 = vadd.f32 0.0, %v1664
        %v1666 = vpop.f32.mrf.mxu0
        %v1667 = vadd.f32 0.0, %v1666
        %1668 = vmatprep.mubr.f32.mxu0 0.0
        %1669 = vmatmul.mubr.f32.gmra.mxu0 %v1433
        %v1670 = vpop.f32.mrf.mxu0
        %v1671 = vadd.f32 0.0, %v1670
        %v1672 = vpop.f32.mrf.mxu0
        %v1673 = vadd.f32 0.0, %v1672
        %1674 = vmatprep.mubr.f32.mxu0 0.0
        %1675 = vmatmul.mubr.f32.gmra.mxu0 %v1436
        %v1676 = vpop.f32.mrf.mxu0
        %v1677 = vadd.f32 0.0, %v1676
        %v1678 = vpop.f32.mrf.mxu0
        %v1679 = vadd.f32 0.0, %v1678
        %1680 = vmatprep.mubr.f32.mxu0 0.0
        %1681 = vmatmul.mubr.f32.gmra.mxu0 %v1439
        %v1682 = vpop.f32.mrf.mxu0
        %v1683 = vadd.f32 0.0, %v1682
        %v1684 = vpop.f32.mrf.mxu0
        %v1685 = vadd.f32 0.0, %v1684
        %1686 = vmatprep.mubr.f32.mxu0 0.0
        %1687 = vmatmul.mubr.f32.gmra.mxu0 %v1442
        %v1688 = vpop.f32.mrf.mxu0
        %v1689 = vadd.f32 0.0, %v1688
        %v1690 = vpop.f32.mrf.mxu0
        %v1691 = vadd.f32 0.0, %v1690
        %1692 = vmatprep.mubr.f32.mxu0 0.0
        %1693 = vmatmul.mubr.f32.gmra.mxu0 %v1445
        %v1694 = vpop.f32.mrf.mxu0
        %v1695 = vadd.f32 0.0, %v1694
        %v1696 = vpop.f32.mrf.mxu0
        %v1697 = vadd.f32 0.0, %v1696
        %1698 = vmatprep.mubr.f32.mxu0 0.0
        %1699 = vmatmul.mubr.f32.gmra.mxu0 %v1448
        %v1700 = vpop.f32.mrf.mxu0
        %v1701 = vadd.f32 0.0, %v1700
        %v1702 = vpop.f32.mrf.mxu0
        %v1703 = vadd.f32 0.0, %v1702
        %1704 = vmatprep.mubr.f32.mxu0 0.0
        %1705 = vmatmul.mubr.f32.gmra.mxu0 %v1451
        %v1706 = vpop.f32.mrf.mxu0
        %v1707 = vadd.f32 0.0, %v1706
        %v1708 = vpop.f32.mrf.mxu0
        %v1709 = vadd.f32 0.0, %v1708
        %1710 = vmatprep.mubr.f32.mxu0 0.0
        %1711 = vmatmul.mubr.f32.gmra.mxu0 %v1454
        %v1712 = vpop.f32.mrf.mxu0
        %v1713 = vadd.f32 0.0, %v1712
        %v1714 = vpop.f32.mrf.mxu0
        %v1715 = vadd.f32 0.0, %v1714
        %1716 = vdwg.mxu0
        %v1717 = vmax.f32 %v1527, %v1539
        %v1718 = vmax.f32 %v1533, %v1545
        %v1719 = vmax.f32 %v1717, %v1551
        %v1720 = vmax.f32 %v1718, %v1557
        %v1721 = vmax.f32 %v1719, %v1563
        %v1722 = vmax.f32 %v1720, %v1569
        %v1723 = vmax.f32 %v1721, %v1575
        %v1724 = vmax.f32 %v1722, %v1581
        %v1725 = vmax.f32 %v1723, %v1587
        %v1726 = vmax.f32 %v1724, %v1593
        %v1727 = vmax.f32 %v1725, %v1599
        %v1728 = vmax.f32 %v1726, %v1605
        %v1729 = vmax.f32 %v1727, %v1611
        %v1730 = vmax.f32 %v1728, %v1617
        %v1731 = vmax.f32 %v1729, %v1623
        %v1732 = vmax.f32 %v1730, %v1629
        %v1733 = vmax.f32 %v1731, %v1635
        %v1734 = vmax.f32 %v1732, %v1641
        %v1735 = vmax.f32 %v1733, %v1647
        %v1736 = vmax.f32 %v1734, %v1653
        %v1737 = vmax.f32 %v1735, %v1659
        %v1738 = vmax.f32 %v1736, %v1665
        %v1739 = vmax.f32 %v1737, %v1671
        %v1740 = vmax.f32 %v1738, %v1677
        %v1741 = vmax.f32 %v1739, %v1683
        %v1742 = vmax.f32 %v1740, %v1689
        %v1743 = vmax.f32 %v1741, %v1695
        %v1744 = vmax.f32 %v1742, %v1701
        %v1745 = vmax.f32 %v1743, %v1707
        %v1746 = vmax.f32 %v1744, %v1713
        %v1747 = vmax.f32 %v1745, %v1746
        %v1748 = vrot.slane %v1747, 4
        %v1749 = vmax.f32 %v1747, %v1748
        %v1750 = vrot.slane %v1749, 2
        %v1751 = vmax.f32 %v1749, %v1750
        %v1752 = vrot.slane %v1751, 1
        %v1753 = vmax.f32 %v1751, %v1752
        %v1754 = vmax.f32 %v1529, %v1541
        %v1755 = vmax.f32 %v1535, %v1547
        %v1756 = vmax.f32 %v1754, %v1553
        %v1757 = vmax.f32 %v1755, %v1559
        %v1758 = vmax.f32 %v1756, %v1565
        %v1759 = vmax.f32 %v1757, %v1571
        %v1760 = vmax.f32 %v1758, %v1577
        %v1761 = vmax.f32 %v1759, %v1583
        %v1762 = vmax.f32 %v1760, %v1589
        %v1763 = vmax.f32 %v1761, %v1595
        %v1764 = vmax.f32 %v1762, %v1601
        %v1765 = vmax.f32 %v1763, %v1607
        %v1766 = vmax.f32 %v1764, %v1613
        %v1767 = vmax.f32 %v1765, %v1619
        %v1768 = vmax.f32 %v1766, %v1625
        %v1769 = vmax.f32 %v1767, %v1631
        %v1770 = vmax.f32 %v1768, %v1637
        %v1771 = vmax.f32 %v1769, %v1643
        %v1772 = vmax.f32 %v1770, %v1649
        %v1773 = vmax.f32 %v1771, %v1655
        %v1774 = vmax.f32 %v1772, %v1661
        %v1775 = vmax.f32 %v1773, %v1667
        %v1776 = vmax.f32 %v1774, %v1673
        %v1777 = vmax.f32 %v1775, %v1679
        %v1778 = vmax.f32 %v1776, %v1685
        %v1779 = vmax.f32 %v1777, %v1691
        %v1780 = vmax.f32 %v1778, %v1697
        %v1781 = vmax.f32 %v1779, %v1703
        %v1782 = vmax.f32 %v1780, %v1709
        %v1783 = vmax.f32 %v1781, %v1715
        %v1784 = vmax.f32 %v1782, %v1783
        %v1785 = vrot.slane %v1784, 4
        %v1786 = vmax.f32 %v1784, %v1785
        %v1787 = vrot.slane %v1786, 2
        %v1788 = vmax.f32 %v1786, %v1787
        %v1789 = vrot.slane %v1788, 1
        %v1790 = vmax.f32 %v1788, %v1789
        %v1791 = vsub.f32 %v1527, %v1753
        %v1792 = vsub.f32 %v1529, %v1790
        %v1793 = vsub.f32 %v1533, %v1753
        %v1794 = vsub.f32 %v1535, %v1790
        %v1795 = vsub.f32 %v1539, %v1753
        %v1796 = vsub.f32 %v1541, %v1790
        %v1797 = vsub.f32 %v1545, %v1753
        %v1798 = vsub.f32 %v1547, %v1790
        %v1799 = vsub.f32 %v1551, %v1753
        %v1800 = vsub.f32 %v1553, %v1790
        %v1801 = vsub.f32 %v1557, %v1753
        %v1802 = vsub.f32 %v1559, %v1790
        %v1803 = vsub.f32 %v1563, %v1753
        %v1804 = vsub.f32 %v1565, %v1790
        %v1805 = vsub.f32 %v1569, %v1753
        %v1806 = vsub.f32 %v1571, %v1790
        %v1807 = vsub.f32 %v1575, %v1753
        %v1808 = vsub.f32 %v1577, %v1790
        %v1809 = vsub.f32 %v1581, %v1753
        %v1810 = vsub.f32 %v1583, %v1790
        %v1811 = vsub.f32 %v1587, %v1753
        %v1812 = vsub.f32 %v1589, %v1790
        %v1813 = vsub.f32 %v1593, %v1753
        %v1814 = vsub.f32 %v1595, %v1790
        %v1815 = vsub.f32 %v1599, %v1753
        %v1816 = vsub.f32 %v1601, %v1790
        %v1817 = vsub.f32 %v1605, %v1753
        %v1818 = vsub.f32 %v1607, %v1790
        %v1819 = vsub.f32 %v1611, %v1753
        %v1820 = vsub.f32 %v1613, %v1790
        %v1821 = vsub.f32 %v1617, %v1753
        %v1822 = vsub.f32 %v1619, %v1790
        %v1823 = vsub.f32 %v1623, %v1753
        %v1824 = vsub.f32 %v1625, %v1790
        %v1825 = vsub.f32 %v1629, %v1753
        %v1826 = vsub.f32 %v1631, %v1790
        %v1827 = vsub.f32 %v1635, %v1753
        %v1828 = vsub.f32 %v1637, %v1790
        %v1829 = vsub.f32 %v1641, %v1753
        %v1830 = vsub.f32 %v1643, %v1790
        %v1831 = vsub.f32 %v1647, %v1753
        %v1832 = vsub.f32 %v1649, %v1790
        %v1833 = vsub.f32 %v1653, %v1753
        %v1834 = vsub.f32 %v1655, %v1790
        %v1835 = vsub.f32 %v1659, %v1753
        %v1836 = vsub.f32 %v1661, %v1790
        %v1837 = vsub.f32 %v1665, %v1753
        %v1838 = vsub.f32 %v1667, %v1790
        %v1839 = vsub.f32 %v1671, %v1753
        %v1840 = vsub.f32 %v1673, %v1790
        %v1841 = vsub.f32 %v1677, %v1753
        %v1842 = vsub.f32 %v1679, %v1790
        %v1843 = vsub.f32 %v1683, %v1753
        %v1844 = vsub.f32 %v1685, %v1790
        %v1845 = vsub.f32 %v1689, %v1753
        %v1846 = vsub.f32 %v1691, %v1790
        %v1847 = vsub.f32 %v1695, %v1753
        %v1848 = vsub.f32 %v1697, %v1790
        %v1849 = vsub.f32 %v1701, %v1753
        %v1850 = vsub.f32 %v1703, %v1790
        %v1851 = vsub.f32 %v1707, %v1753
        %v1852 = vsub.f32 %v1709, %v1790
        %v1853 = vsub.f32 %v1713, %v1753
        %v1854 = vsub.f32 %v1715, %v1790
        %v1855 = vmul.f32 %v1791, 1.442695
        %v1856 = vpow.pop %v1855
        %v1857 = vmul.f32 %v1792, 1.442695
        %v1858 = vpow.pop %v1857
        %v1859 = vmul.f32 %v1793, 1.442695
        %v1860 = vpow.pop %v1859
        %v1861 = vmul.f32 %v1794, 1.442695
        %v1862 = vpow.pop %v1861
        %v1863 = vmul.f32 %v1795, 1.442695
        %v1864 = vpow.pop %v1863
        %v1865 = vmul.f32 %v1796, 1.442695
        %v1866 = vpow.pop %v1865
        %v1867 = vmul.f32 %v1797, 1.442695
        %v1868 = vpow.pop %v1867
        %v1869 = vmul.f32 %v1798, 1.442695
        %v1870 = vpow.pop %v1869
        %v1871 = vmul.f32 %v1799, 1.442695
        %v1872 = vpow.pop %v1871
        %v1873 = vmul.f32 %v1800, 1.442695
        %v1874 = vpow.pop %v1873
        %v1875 = vmul.f32 %v1801, 1.442695
        %v1876 = vpow.pop %v1875
        %v1877 = vmul.f32 %v1802, 1.442695
        %v1878 = vpow.pop %v1877
        %v1879 = vmul.f32 %v1803, 1.442695
        %v1880 = vpow.pop %v1879
        %v1881 = vmul.f32 %v1804, 1.442695
        %v1882 = vpow.pop %v1881
        %v1883 = vmul.f32 %v1805, 1.442695
        %v1884 = vpow.pop %v1883
        %v1885 = vmul.f32 %v1806, 1.442695
        %v1886 = vpow.pop %v1885
        %v1887 = vmul.f32 %v1807, 1.442695
        %v1888 = vpow.pop %v1887
        %v1889 = vmul.f32 %v1808, 1.442695
        %v1890 = vpow.pop %v1889
        %v1891 = vmul.f32 %v1809, 1.442695
        %v1892 = vpow.pop %v1891
        %v1893 = vmul.f32 %v1810, 1.442695
        %v1894 = vpow.pop %v1893
        %v1895 = vmul.f32 %v1811, 1.442695
        %v1896 = vpow.pop %v1895
        %v1897 = vmul.f32 %v1812, 1.442695
        %v1898 = vpow.pop %v1897
        %v1899 = vmul.f32 %v1813, 1.442695
        %v1900 = vpow.pop %v1899
        %v1901 = vmul.f32 %v1814, 1.442695
        %v1902 = vpow.pop %v1901
        %v1903 = vmul.f32 %v1815, 1.442695
        %v1904 = vpow.pop %v1903
        %v1905 = vmul.f32 %v1816, 1.442695
        %v1906 = vpow.pop %v1905
        %v1907 = vmul.f32 %v1817, 1.442695
        %v1908 = vpow.pop %v1907
        %v1909 = vmul.f32 %v1818, 1.442695
        %v1910 = vpow.pop %v1909
        %v1911 = vmul.f32 %v1819, 1.442695
        %v1912 = vpow.pop %v1911
        %v1913 = vmul.f32 %v1820, 1.442695
        %v1914 = vpow.pop %v1913
        %v1915 = vmul.f32 %v1821, 1.442695
        %v1916 = vpow.pop %v1915
        %v1917 = vmul.f32 %v1822, 1.442695
        %v1918 = vpow.pop %v1917
        %v1919 = vmul.f32 %v1823, 1.442695
        %v1920 = vpow.pop %v1919
        %v1921 = vmul.f32 %v1824, 1.442695
        %v1922 = vpow.pop %v1921
        %v1923 = vmul.f32 %v1825, 1.442695
        %v1924 = vpow.pop %v1923
        %v1925 = vmul.f32 %v1826, 1.442695
        %v1926 = vpow.pop %v1925
        %v1927 = vmul.f32 %v1827, 1.442695
        %v1928 = vpow.pop %v1927
        %v1929 = vmul.f32 %v1828, 1.442695
        %v1930 = vpow.pop %v1929
        %v1931 = vmul.f32 %v1829, 1.442695
        %v1932 = vpow.pop %v1931
        %v1933 = vmul.f32 %v1830, 1.442695
        %v1934 = vpow.pop %v1933
        %v1935 = vmul.f32 %v1831, 1.442695
        %v1936 = vpow.pop %v1935
        %v1937 = vmul.f32 %v1832, 1.442695
        %v1938 = vpow.pop %v1937
        %v1939 = vmul.f32 %v1833, 1.442695
        %v1940 = vpow.pop %v1939
        %v1941 = vmul.f32 %v1834, 1.442695
        %v1942 = vpow.pop %v1941
        %v1943 = vmul.f32 %v1835, 1.442695
        %v1944 = vpow.pop %v1943
        %v1945 = vmul.f32 %v1836, 1.442695
        %v1946 = vpow.pop %v1945
        %v1947 = vmul.f32 %v1837, 1.442695
        %v1948 = vpow.pop %v1947
        %v1949 = vmul.f32 %v1838, 1.442695
        %v1950 = vpow.pop %v1949
        %v1951 = vmul.f32 %v1839, 1.442695
        %v1952 = vpow.pop %v1951
        %v1953 = vmul.f32 %v1840, 1.442695
        %v1954 = vpow.pop %v1953
        %v1955 = vmul.f32 %v1841, 1.442695
        %v1956 = vpow.pop %v1955
        %v1957 = vmul.f32 %v1842, 1.442695
        %v1958 = vpow.pop %v1957
        %v1959 = vmul.f32 %v1843, 1.442695
        %v1960 = vpow.pop %v1959
        %v1961 = vmul.f32 %v1844, 1.442695
        %v1962 = vpow.pop %v1961
        %v1963 = vmul.f32 %v1845, 1.442695
        %v1964 = vpow.pop %v1963
        %v1965 = vmul.f32 %v1846, 1.442695
        %v1966 = vpow.pop %v1965
        %v1967 = vmul.f32 %v1847, 1.442695
        %v1968 = vpow.pop %v1967
        %v1969 = vmul.f32 %v1848, 1.442695
        %v1970 = vpow.pop %v1969
        %v1971 = vmul.f32 %v1849, 1.442695
        %v1972 = vpow.pop %v1971
        %v1973 = vmul.f32 %v1850, 1.442695
        %v1974 = vpow.pop %v1973
        %v1975 = vmul.f32 %v1851, 1.442695
        %v1976 = vpow.pop %v1975
        %v1977 = vmul.f32 %v1852, 1.442695
        %v1978 = vpow.pop %v1977
        %v1979 = vmul.f32 %v1853, 1.442695
        %v1980 = vpow.pop %v1979
        %v1981 = vmul.f32 %v1854, 1.442695
        %v1982 = vpow.pop %v1981
        %v1983 = vadd.f32 %v1856, %v1860
        %v1984 = vadd.f32 %v1983, %v1864
        %v1985 = vadd.f32 %v1984, %v1868
        %v1986 = vadd.f32 %v1985, %v1872
        %v1987 = vadd.f32 %v1986, %v1876
        %v1988 = vadd.f32 %v1987, %v1880
        %v1989 = vadd.f32 %v1988, %v1884
        %v1990 = vadd.f32 %v1989, %v1888
        %v1991 = vadd.f32 %v1990, %v1892
        %v1992 = vadd.f32 %v1991, %v1896
        %v1993 = vadd.f32 %v1992, %v1900
        %v1994 = vadd.f32 %v1993, %v1904
        %v1995 = vadd.f32 %v1994, %v1908
        %v1996 = vadd.f32 %v1995, %v1912
        %v1997 = vadd.f32 %v1996, %v1916
        %v1998 = vadd.f32 %v1997, %v1920
        %v1999 = vadd.f32 %v1998, %v1924
        %v2000 = vadd.f32 %v1999, %v1928
        %v2001 = vadd.f32 %v2000, %v1932
        %v2002 = vadd.f32 %v2001, %v1936
        %v2003 = vadd.f32 %v2002, %v1940
        %v2004 = vadd.f32 %v2003, %v1944
        %v2005 = vadd.f32 %v2004, %v1948
        %v2006 = vadd.f32 %v2005, %v1952
        %v2007 = vadd.f32 %v2006, %v1956
        %v2008 = vadd.f32 %v2007, %v1960
        %v2009 = vadd.f32 %v2008, %v1964
        %v2010 = vadd.f32 %v2009, %v1968
        %v2011 = vadd.f32 %v2010, %v1972
        %v2012 = vadd.f32 %v2011, %v1976
        %v2013 = vadd.f32 %v2012, %v1980
        %v2014 = vrot.slane %v2013, 4
        %v2015 = vadd.f32 %v2013, %v2014
        %v2016 = vrot.slane %v2015, 2
        %v2017 = vadd.f32 %v2015, %v2016
        %v2018 = vrot.slane %v2017, 1
        %v2019 = vadd.f32 %v2017, %v2018
        %v2020 = vadd.f32 %v1858, %v1862
        %v2021 = vadd.f32 %v2020, %v1866
        %v2022 = vadd.f32 %v2021, %v1870
        %v2023 = vadd.f32 %v2022, %v1874
        %v2024 = vadd.f32 %v2023, %v1878
        %v2025 = vadd.f32 %v2024, %v1882
        %v2026 = vadd.f32 %v2025, %v1886
        %v2027 = vadd.f32 %v2026, %v1890
        %v2028 = vadd.f32 %v2027, %v1894
        %v2029 = vadd.f32 %v2028, %v1898
        %v2030 = vadd.f32 %v2029, %v1902
        %v2031 = vadd.f32 %v2030, %v1906
        %v2032 = vadd.f32 %v2031, %v1910
        %v2033 = vadd.f32 %v2032, %v1914
        %v2034 = vadd.f32 %v2033, %v1918
        %v2035 = vadd.f32 %v2034, %v1922
        %v2036 = vadd.f32 %v2035, %v1926
        %v2037 = vadd.f32 %v2036, %v1930
        %v2038 = vadd.f32 %v2037, %v1934
        %v2039 = vadd.f32 %v2038, %v1938
        %v2040 = vadd.f32 %v2039, %v1942
        %v2041 = vadd.f32 %v2040, %v1946
        %v2042 = vadd.f32 %v2041, %v1950
        %v2043 = vadd.f32 %v2042, %v1954
        %v2044 = vadd.f32 %v2043, %v1958
        %v2045 = vadd.f32 %v2044, %v1962
        %v2046 = vadd.f32 %v2045, %v1966
        %v2047 = vadd.f32 %v2046, %v1970
        %v2048 = vadd.f32 %v2047, %v1974
        %v2049 = vadd.f32 %v2048, %v1978
        %v2050 = vadd.f32 %v2049, %v1982
        %v2051 = vrot.slane %v2050, 4
        %v2052 = vadd.f32 %v2050, %v2051
        %v2053 = vrot.slane %v2052, 2
        %v2054 = vadd.f32 %v2052, %v2053
        %v2055 = vrot.slane %v2054, 1
        %v2056 = vadd.f32 %v2054, %v2055
        %v2057 = vrcp.pop %v2019
        %v2058 = vrcp.pop %v2056
        %v2059 = vmul.f32 %v1856, %v2057
        %v2060 = vmul.f32 %v1858, %v2058
        %v2061 = vmul.f32 %v1860, %v2057
        %v2062 = vmul.f32 %v1862, %v2058
        %v2063 = vmul.f32 %v1864, %v2057
        %v2064 = vmul.f32 %v1866, %v2058
        %v2065 = vmul.f32 %v1868, %v2057
        %v2066 = vmul.f32 %v1870, %v2058
        %v2067 = vmul.f32 %v1872, %v2057
        %v2068 = vmul.f32 %v1874, %v2058
        %v2069 = vmul.f32 %v1876, %v2057
        %v2070 = vmul.f32 %v1878, %v2058
        %v2071 = vmul.f32 %v1880, %v2057
        %v2072 = vmul.f32 %v1882, %v2058
        %v2073 = vmul.f32 %v1884, %v2057
        %v2074 = vmul.f32 %v1886, %v2058
        %v2075 = vmul.f32 %v1888, %v2057
        %v2076 = vmul.f32 %v1890, %v2058
        %v2077 = vmul.f32 %v1892, %v2057
        %v2078 = vmul.f32 %v1894, %v2058
        %v2079 = vmul.f32 %v1896, %v2057
        %v2080 = vmul.f32 %v1898, %v2058
        %v2081 = vmul.f32 %v1900, %v2057
        %v2082 = vmul.f32 %v1902, %v2058
        %v2083 = vmul.f32 %v1904, %v2057
        %v2084 = vmul.f32 %v1906, %v2058
        %v2085 = vmul.f32 %v1908, %v2057
        %v2086 = vmul.f32 %v1910, %v2058
        %v2087 = vmul.f32 %v1912, %v2057
        %v2088 = vmul.f32 %v1914, %v2058
        %v2089 = vmul.f32 %v1916, %v2057
        %v2090 = vmul.f32 %v1918, %v2058
        %v2091 = vmul.f32 %v1920, %v2057
        %v2092 = vmul.f32 %v1922, %v2058
        %v2093 = vmul.f32 %v1924, %v2057
        %v2094 = vmul.f32 %v1926, %v2058
        %v2095 = vmul.f32 %v1928, %v2057
        %v2096 = vmul.f32 %v1930, %v2058
        %v2097 = vmul.f32 %v1932, %v2057
        %v2098 = vmul.f32 %v1934, %v2058
        %v2099 = vmul.f32 %v1936, %v2057
        %v2100 = vmul.f32 %v1938, %v2058
        %v2101 = vmul.f32 %v1940, %v2057
        %v2102 = vmul.f32 %v1942, %v2058
        %v2103 = vmul.f32 %v1944, %v2057
        %v2104 = vmul.f32 %v1946, %v2058
        %v2105 = vmul.f32 %v1948, %v2057
        %v2106 = vmul.f32 %v1950, %v2058
        %v2107 = vmul.f32 %v1952, %v2057
        %v2108 = vmul.f32 %v1954, %v2058
        %v2109 = vmul.f32 %v1956, %v2057
        %v2110 = vmul.f32 %v1958, %v2058
        %v2111 = vmul.f32 %v1960, %v2057
        %v2112 = vmul.f32 %v1962, %v2058
        %v2113 = vmul.f32 %v1964, %v2057
        %v2114 = vmul.f32 %v1966, %v2058
        %v2115 = vmul.f32 %v1968, %v2057
        %v2116 = vmul.f32 %v1970, %v2058
        %v2117 = vmul.f32 %v1972, %v2057
        %v2118 = vmul.f32 %v1974, %v2058
        %v2119 = vmul.f32 %v1976, %v2057
        %v2120 = vmul.f32 %v1978, %v2058
        %v2121 = vmul.f32 %v1980, %v2057
        %v2122 = vmul.f32 %v1982, %v2058
        %v2125 = vrot.slane %v356, 4
        %v2126 = vrot.slane %v358, 4
        %2129 = vmatprep.subr.mxu0 %v2090
        %2130 = vmatpush1.msra.mxu0 %v2089
        %2131 = vmatprep.subr.mxu0 %v2088
        %2132 = vmatpush1.msra.mxu0 %v2087
        %2133 = vmatprep.subr.mxu0 %v2086
        %2134 = vmatpush1.msra.mxu0 %v2085
        %2135 = vmatprep.subr.mxu0 %v2084
        %2136 = vmatpush1.msra.mxu0 %v2083
        %2137 = vmatprep.subr.mxu0 %v2082
        %2138 = vmatpush1.msra.mxu0 %v2081
        %2139 = vmatprep.subr.mxu0 %v2080
        %2140 = vmatpush1.msra.mxu0 %v2079
        %2141 = vmatprep.subr.mxu0 %v2078
        %2142 = vmatpush1.msra.mxu0 %v2077
        %2143 = vmatprep.subr.mxu0 %v2076
        %2144 = vmatpush1.msra.mxu0 %v2075
        %2145 = vmatprep.subr.mxu0 %v2074
        %2146 = vmatpush1.msra.mxu0 %v2073
        %2147 = vmatprep.subr.mxu0 %v2072
        %2148 = vmatpush1.msra.mxu0 %v2071
        %2149 = vmatprep.subr.mxu0 %v2070
        %2150 = vmatpush1.msra.mxu0 %v2069
        %2151 = vmatprep.subr.mxu0 %v2068
        %2152 = vmatpush1.msra.mxu0 %v2067
        %2153 = vmatprep.subr.mxu0 %v2066
        %2154 = vmatpush1.msra.mxu0 %v2065
        %2155 = vmatprep.subr.mxu0 %v2064
        %2156 = vmatpush1.msra.mxu0 %v2063
        %2157 = vmatprep.subr.mxu0 %v2062
        %2158 = vmatpush1.msra.mxu0 %v2061
        %2159 = vmatprep.subr.mxu0 %v2060
        %2160 = vmatpush1.msra.mxu0 %v2059
        %2161 = vmatprep.subr.mxu0 %v2122
        %2162 = vmatpush2.msra.mxu0 %v2121
        %2163 = vmatprep.subr.mxu0 %v2120
        %2164 = vmatpush2.msra.mxu0 %v2119
        %2165 = vmatprep.subr.mxu0 %v2118
        %2166 = vmatpush2.msra.mxu0 %v2117
        %2167 = vmatprep.subr.mxu0 %v2116
        %2168 = vmatpush2.msra.mxu0 %v2115
        %2169 = vmatprep.subr.mxu0 %v2114
        %2170 = vmatpush2.msra.mxu0 %v2113
        %2171 = vmatprep.subr.mxu0 %v2112
        %2172 = vmatpush2.msra.mxu0 %v2111
        %2173 = vmatprep.subr.mxu0 %v2110
        %2174 = vmatpush2.msra.mxu0 %v2109
        %2175 = vmatprep.subr.mxu0 %v2108
        %2176 = vmatpush2.msra.mxu0 %v2107
        %2177 = vmatprep.subr.mxu0 %v2106
        %2178 = vmatpush2.msra.mxu0 %v2105
        %2179 = vmatprep.subr.mxu0 %v2104
        %2180 = vmatpush2.msra.mxu0 %v2103
        %2181 = vmatprep.subr.mxu0 %v2102
        %2182 = vmatpush2.msra.mxu0 %v2101
        %2183 = vmatprep.subr.mxu0 %v2100
        %2184 = vmatpush2.msra.mxu0 %v2099
        %2185 = vmatprep.subr.mxu0 %v2098
        %2186 = vmatpush2.msra.mxu0 %v2097
        %2187 = vmatprep.subr.mxu0 %v2096
        %2188 = vmatpush2.msra.mxu0 %v2095
        %2189 = vmatprep.subr.mxu0 %v2094
        %2190 = vmatpush2.msra.mxu0 %v2093
        %2191 = vmatprep.subr.mxu0 %v2092
        %2192 = vmatpush2.msra.mxu0 %v2091
        %2193 = vmatprep.mubr.f32.mxu0 %v2126
        %2194 = vmatmul.mubr.f32.gmra.mxu0 %v2125
        %v2195 = vpop.f32.mrf.mxu0
        %v2196 = vadd.f32 0.0, %v2195
        %v2197 = vpop.f32.mrf.mxu0
        %v2198 = vadd.f32 0.0, %v2197
        %2199 = vdwg.mxu0
        %2200 = vxpose.xlu0.b32.start [1/16] %v338, 128
        %2201 = vxpose.xlu0.b32.cont [2/16] 0.0, 128
        %2202 = vxpose.xlu0.b32.cont [3/16] 0.0, 128
        %2203 = vxpose.xlu0.b32.cont [4/16] 0.0, 128
        %2204 = vxpose.xlu0.b32.cont [5/16] 0.0, 128
        %2205 = vxpose.xlu0.b32.cont [6/16] 0.0, 128
        %2206 = vxpose.xlu0.b32.cont [7/16] 0.0, 128
        %2207 = vxpose.xlu0.b32.cont [8/16] 0.0, 128
        %2208 = vxpose.xlu0.b32.cont [9/16] 0.0, 128
        %2209 = vxpose.xlu0.b32.cont [10/16] 0.0, 128
        %2210 = vxpose.xlu0.b32.cont [11/16] 0.0, 128
        %2211 = vxpose.xlu0.b32.cont [12/16] 0.0, 128
        %2212 = vxpose.xlu0.b32.cont [13/16] 0.0, 128
        %2213 = vxpose.xlu0.b32.cont [14/16] 0.0, 128
        %2214 = vxpose.xlu0.b32.cont [15/16] 0.0, 128
        %2215 = vxpose.xlu0.b32.end [16/16] 0.0, 128
        %v2216 = vpop.trf.xlu0
        %v2217 = vpop.trf.xlu0
        %v2218 = vpop.trf.xlu0
        %v2219 = vpop.trf.xlu0
        %v2220 = vpop.trf.xlu0
        %v2221 = vpop.trf.xlu0
        %v2222 = vpop.trf.xlu0
        %v2223 = vpop.trf.xlu0
        %v2224 = vpop.trf.xlu0
        %v2225 = vpop.trf.xlu0
        %v2226 = vpop.trf.xlu0
        %v2227 = vpop.trf.xlu0
        %v2228 = vpop.trf.xlu0
        %v2229 = vpop.trf.xlu0
        %v2230 = vpop.trf.xlu0
        %v2231 = vpop.trf.xlu0
        %2232 = vxpose.xlu0.b32.start [1/16] %v340, 128
        %2233 = vxpose.xlu0.b32.cont [2/16] 0.0, 128
        %2234 = vxpose.xlu0.b32.cont [3/16] 0.0, 128
        %2235 = vxpose.xlu0.b32.cont [4/16] 0.0, 128
        %2236 = vxpose.xlu0.b32.cont [5/16] 0.0, 128
        %2237 = vxpose.xlu0.b32.cont [6/16] 0.0, 128
        %2238 = vxpose.xlu0.b32.cont [7/16] 0.0, 128
        %2239 = vxpose.xlu0.b32.cont [8/16] 0.0, 128
        %2240 = vxpose.xlu0.b32.cont [9/16] 0.0, 128
        %2241 = vxpose.xlu0.b32.cont [10/16] 0.0, 128
        %2242 = vxpose.xlu0.b32.cont [11/16] 0.0, 128
        %2243 = vxpose.xlu0.b32.cont [12/16] 0.0, 128
        %2244 = vxpose.xlu0.b32.cont [13/16] 0.0, 128
        %2245 = vxpose.xlu0.b32.cont [14/16] 0.0, 128
        %2246 = vxpose.xlu0.b32.cont [15/16] 0.0, 128
        %2247 = vxpose.xlu0.b32.end [16/16] 0.0, 128
        %v2248 = vpop.trf.xlu0
        %v2249 = vpop.trf.xlu0
        %v2250 = vpop.trf.xlu0
        %v2251 = vpop.trf.xlu0
        %v2252 = vpop.trf.xlu0
        %v2253 = vpop.trf.xlu0
        %v2254 = vpop.trf.xlu0
        %v2255 = vpop.trf.xlu0
        %v2256 = vpop.trf.xlu0
        %v2257 = vpop.trf.xlu0
        %v2258 = vpop.trf.xlu0
        %v2259 = vpop.trf.xlu0
        %v2260 = vpop.trf.xlu0
        %v2261 = vpop.trf.xlu0
        %v2262 = vpop.trf.xlu0
        %v2263 = vpop.trf.xlu0
        %v2265 = vsel %vm450, %v2216, 0
        %v2268 = vsel %vm450, %v2217, 0
        %v2271 = vsel %vm450, %v2218, 0
        %v2274 = vsel %vm450, %v2219, 0
        %v2277 = vsel %vm450, %v2220, 0
        %v2280 = vsel %vm450, %v2221, 0
        %v2283 = vsel %vm450, %v2222, 0
        %v2286 = vsel %vm450, %v2223, 0
        %v2289 = vsel %vm450, %v2224, 0
        %v2292 = vsel %vm450, %v2225, 0
        %v2295 = vsel %vm450, %v2226, 0
        %v2298 = vsel %vm450, %v2227, 0
        %v2301 = vsel %vm450, %v2228, 0
        %v2304 = vsel %vm450, %v2229, 0
        %v2307 = vsel %vm450, %v2230, 0
        %v2310 = vsel %vm450, %v2231, 0
        %v2313 = vsel %vm450, %v2248, 0
        %v2316 = vsel %vm450, %v2249, 0
        %v2319 = vsel %vm450, %v2250, 0
        %v2322 = vsel %vm450, %v2251, 0
        %v2325 = vsel %vm450, %v2252, 0
        %v2328 = vsel %vm450, %v2253, 0
        %v2331 = vsel %vm450, %v2254, 0
        %v2334 = vsel %vm450, %v2255, 0
        %v2337 = vsel %vm450, %v2256, 0
        %v2340 = vsel %vm450, %v2257, 0
        %v2343 = vsel %vm450, %v2258, 0
        %v2346 = vsel %vm450, %v2259, 0
        %v2349 = vsel %vm450, %v2260, 0
        %v2352 = vsel %vm450, %v2261, 0
        %v2355 = vsel %vm450, %v2262, 0
        %v2358 = vsel %vm450, %v2263, 0
        %v2361 = vsel %vm547, %v380, 0
        %v2364 = vsel %vm547, %v381, 0
        %2366 = vmatprep.subr.mxu0 0.0
        %2367 = vmatpush1.msra.mxu0 0.0
        %2368 = vmatprep.subr.mxu0 0.0
        %2369 = vmatpush1.msra.mxu0 0.0
        %2370 = vmatprep.subr.mxu0 0.0
        %2371 = vmatpush1.msra.mxu0 0.0
        %2372 = vmatprep.subr.mxu0 0.0
        %2373 = vmatpush1.msra.mxu0 0.0
        %2374 = vmatprep.subr.mxu0 0.0
        %2375 = vmatpush1.msra.mxu0 0.0
        %2376 = vmatprep.subr.mxu0 0.0
        %2377 = vmatpush1.msra.mxu0 0.0
        %2378 = vmatprep.subr.mxu0 0.0
        %2379 = vmatpush1.msra.mxu0 0.0
        %2380 = vmatprep.subr.mxu0 0.0
        %2381 = vmatpush1.msra.mxu0 0.0
        %2382 = vmatprep.subr.mxu0 0.0
        %2383 = vmatpush1.msra.mxu0 0.0
        %2384 = vmatprep.subr.mxu0 0.0
        %2385 = vmatpush1.msra.mxu0 0.0
        %2386 = vmatprep.subr.mxu0 0.0
        %2387 = vmatpush1.msra.mxu0 0.0
        %2388 = vmatprep.subr.mxu0 0.0
        %2389 = vmatpush1.msra.mxu0 0.0
        %2390 = vmatprep.subr.mxu0 0.0
        %2391 = vmatpush1.msra.mxu0 0.0
        %2392 = vmatprep.subr.mxu0 0.0
        %2393 = vmatpush1.msra.mxu0 0.0
        %2394 = vmatprep.subr.mxu0 0.0
        %2395 = vmatpush1.msra.mxu0 0.0
        %2396 = vmatprep.subr.mxu0 %v2364
        %2397 = vmatpush1.msra.mxu0 %v2361
        %2398 = vmatprep.subr.mxu0 0.0
        %2399 = vmatpush2.msra.mxu0 0.0
        %2400 = vmatprep.subr.mxu0 0.0
        %2401 = vmatpush2.msra.mxu0 0.0
        %2402 = vmatprep.subr.mxu0 0.0
        %2403 = vmatpush2.msra.mxu0 0.0
        %2404 = vmatprep.subr.mxu0 0.0
        %2405 = vmatpush2.msra.mxu0 0.0
        %2406 = vmatprep.subr.mxu0 0.0
        %2407 = vmatpush2.msra.mxu0 0.0
        %2408 = vmatprep.subr.mxu0 0.0
        %2409 = vmatpush2.msra.mxu0 0.0
        %2410 = vmatprep.subr.mxu0 0.0
        %2411 = vmatpush2.msra.mxu0 0.0
        %2412 = vmatprep.subr.mxu0 0.0
        %2413 = vmatpush2.msra.mxu0 0.0
        %2414 = vmatprep.subr.mxu0 0.0
        %2415 = vmatpush2.msra.mxu0 0.0
        %2416 = vmatprep.subr.mxu0 0.0
        %2417 = vmatpush2.msra.mxu0 0.0
        %2418 = vmatprep.subr.mxu0 0.0
        %2419 = vmatpush2.msra.mxu0 0.0
        %2420 = vmatprep.subr.mxu0 0.0
        %2421 = vmatpush2.msra.mxu0 0.0
        %2422 = vmatprep.subr.mxu0 0.0
        %2423 = vmatpush2.msra.mxu0 0.0
        %2424 = vmatprep.subr.mxu0 0.0
        %2425 = vmatpush2.msra.mxu0 0.0
        %2426 = vmatprep.subr.mxu0 0.0
        %2427 = vmatpush2.msra.mxu0 0.0
        %2428 = vmatprep.subr.mxu0 0.0
        %2429 = vmatpush2.msra.mxu0 0.0
        %2430 = vmatprep.mubr.f32.mxu0 0.0
        %2431 = vmatmul.mubr.f32.gmra.mxu0 %v2265
        %v2432 = vpop.f32.mrf.mxu0
        %v2433 = vadd.f32 0.0, %v2432
        %v2434 = vpop.f32.mrf.mxu0
        %v2435 = vadd.f32 0.0, %v2434
        %2436 = vmatprep.mubr.f32.mxu0 0.0
        %2437 = vmatmul.mubr.f32.gmra.mxu0 %v2268
        %v2438 = vpop.f32.mrf.mxu0
        %v2439 = vadd.f32 0.0, %v2438
        %v2440 = vpop.f32.mrf.mxu0
        %v2441 = vadd.f32 0.0, %v2440
        %2442 = vmatprep.mubr.f32.mxu0 0.0
        %2443 = vmatmul.mubr.f32.gmra.mxu0 %v2271
        %v2444 = vpop.f32.mrf.mxu0
        %v2445 = vadd.f32 0.0, %v2444
        %v2446 = vpop.f32.mrf.mxu0
        %v2447 = vadd.f32 0.0, %v2446
        %2448 = vmatprep.mubr.f32.mxu0 0.0
        %2449 = vmatmul.mubr.f32.gmra.mxu0 %v2274
        %v2450 = vpop.f32.mrf.mxu0
        %v2451 = vadd.f32 0.0, %v2450
        %v2452 = vpop.f32.mrf.mxu0
        %v2453 = vadd.f32 0.0, %v2452
        %2454 = vmatprep.mubr.f32.mxu0 0.0
        %2455 = vmatmul.mubr.f32.gmra.mxu0 %v2277
        %v2456 = vpop.f32.mrf.mxu0
        %v2457 = vadd.f32 0.0, %v2456
        %v2458 = vpop.f32.mrf.mxu0
        %v2459 = vadd.f32 0.0, %v2458
        %2460 = vmatprep.mubr.f32.mxu0 0.0
        %2461 = vmatmul.mubr.f32.gmra.mxu0 %v2280
        %v2462 = vpop.f32.mrf.mxu0
        %v2463 = vadd.f32 0.0, %v2462
        %v2464 = vpop.f32.mrf.mxu0
        %v2465 = vadd.f32 0.0, %v2464
        %2466 = vmatprep.mubr.f32.mxu0 0.0
        %2467 = vmatmul.mubr.f32.gmra.mxu0 %v2283
        %v2468 = vpop.f32.mrf.mxu0
        %v2469 = vadd.f32 0.0, %v2468
        %v2470 = vpop.f32.mrf.mxu0
        %v2471 = vadd.f32 0.0, %v2470
        %2472 = vmatprep.mubr.f32.mxu0 0.0
        %2473 = vmatmul.mubr.f32.gmra.mxu0 %v2286
        %v2474 = vpop.f32.mrf.mxu0
        %v2475 = vadd.f32 0.0, %v2474
        %v2476 = vpop.f32.mrf.mxu0
        %v2477 = vadd.f32 0.0, %v2476
        %2478 = vmatprep.mubr.f32.mxu0 0.0
        %2479 = vmatmul.mubr.f32.gmra.mxu0 %v2289
        %v2480 = vpop.f32.mrf.mxu0
        %v2481 = vadd.f32 0.0, %v2480
        %v2482 = vpop.f32.mrf.mxu0
        %v2483 = vadd.f32 0.0, %v2482
        %2484 = vmatprep.mubr.f32.mxu0 0.0
        %2485 = vmatmul.mubr.f32.gmra.mxu0 %v2292
        %v2486 = vpop.f32.mrf.mxu0
        %v2487 = vadd.f32 0.0, %v2486
        %v2488 = vpop.f32.mrf.mxu0
        %v2489 = vadd.f32 0.0, %v2488
        %2490 = vmatprep.mubr.f32.mxu0 0.0
        %2491 = vmatmul.mubr.f32.gmra.mxu0 %v2295
        %v2492 = vpop.f32.mrf.mxu0
        %v2493 = vadd.f32 0.0, %v2492
        %v2494 = vpop.f32.mrf.mxu0
        %v2495 = vadd.f32 0.0, %v2494
        %2496 = vmatprep.mubr.f32.mxu0 0.0
        %2497 = vmatmul.mubr.f32.gmra.mxu0 %v2298
        %v2498 = vpop.f32.mrf.mxu0
        %v2499 = vadd.f32 0.0, %v2498
        %v2500 = vpop.f32.mrf.mxu0
        %v2501 = vadd.f32 0.0, %v2500
        %2502 = vmatprep.mubr.f32.mxu0 0.0
        %2503 = vmatmul.mubr.f32.gmra.mxu0 %v2301
        %v2504 = vpop.f32.mrf.mxu0
        %v2505 = vadd.f32 0.0, %v2504
        %v2506 = vpop.f32.mrf.mxu0
        %v2507 = vadd.f32 0.0, %v2506
        %2508 = vmatprep.mubr.f32.mxu0 0.0
        %2509 = vmatmul.mubr.f32.gmra.mxu0 %v2304
        %v2510 = vpop.f32.mrf.mxu0
        %v2511 = vadd.f32 0.0, %v2510
        %v2512 = vpop.f32.mrf.mxu0
        %v2513 = vadd.f32 0.0, %v2512
        %2514 = vmatprep.mubr.f32.mxu0 0.0
        %2515 = vmatmul.mubr.f32.gmra.mxu0 %v2307
        %v2516 = vpop.f32.mrf.mxu0
        %v2517 = vadd.f32 0.0, %v2516
        %v2518 = vpop.f32.mrf.mxu0
        %v2519 = vadd.f32 0.0, %v2518
        %2520 = vmatprep.mubr.f32.mxu0 0.0
        %2521 = vmatmul.mubr.f32.gmra.mxu0 %v2310
        %v2522 = vpop.f32.mrf.mxu0
        %v2523 = vadd.f32 0.0, %v2522
        %v2524 = vpop.f32.mrf.mxu0
        %v2525 = vadd.f32 0.0, %v2524
        %2526 = vmatprep.mubr.f32.mxu0 0.0
        %2527 = vmatmul.mubr.f32.gmra.mxu0 %v2313
        %v2528 = vpop.f32.mrf.mxu0
        %v2529 = vadd.f32 0.0, %v2528
        %v2530 = vpop.f32.mrf.mxu0
        %v2531 = vadd.f32 0.0, %v2530
        %2532 = vmatprep.mubr.f32.mxu0 0.0
        %2533 = vmatmul.mubr.f32.gmra.mxu0 %v2316
        %v2534 = vpop.f32.mrf.mxu0
        %v2535 = vadd.f32 0.0, %v2534
        %v2536 = vpop.f32.mrf.mxu0
        %v2537 = vadd.f32 0.0, %v2536
        %2538 = vmatprep.mubr.f32.mxu0 0.0
        %2539 = vmatmul.mubr.f32.gmra.mxu0 %v2319
        %v2540 = vpop.f32.mrf.mxu0
        %v2541 = vadd.f32 0.0, %v2540
        %v2542 = vpop.f32.mrf.mxu0
        %v2543 = vadd.f32 0.0, %v2542
        %2544 = vmatprep.mubr.f32.mxu0 0.0
        %2545 = vmatmul.mubr.f32.gmra.mxu0 %v2322
        %v2546 = vpop.f32.mrf.mxu0
        %v2547 = vadd.f32 0.0, %v2546
        %v2548 = vpop.f32.mrf.mxu0
        %v2549 = vadd.f32 0.0, %v2548
        %2550 = vmatprep.mubr.f32.mxu0 0.0
        %2551 = vmatmul.mubr.f32.gmra.mxu0 %v2325
        %v2552 = vpop.f32.mrf.mxu0
        %v2553 = vadd.f32 0.0, %v2552
        %v2554 = vpop.f32.mrf.mxu0
        %v2555 = vadd.f32 0.0, %v2554
        %2556 = vmatprep.mubr.f32.mxu0 0.0
        %2557 = vmatmul.mubr.f32.gmra.mxu0 %v2328
        %v2558 = vpop.f32.mrf.mxu0
        %v2559 = vadd.f32 0.0, %v2558
        %v2560 = vpop.f32.mrf.mxu0
        %v2561 = vadd.f32 0.0, %v2560
        %2562 = vmatprep.mubr.f32.mxu0 0.0
        %2563 = vmatmul.mubr.f32.gmra.mxu0 %v2331
        %v2564 = vpop.f32.mrf.mxu0
        %v2565 = vadd.f32 0.0, %v2564
        %v2566 = vpop.f32.mrf.mxu0
        %v2567 = vadd.f32 0.0, %v2566
        %2568 = vmatprep.mubr.f32.mxu0 0.0
        %2569 = vmatmul.mubr.f32.gmra.mxu0 %v2334
        %v2570 = vpop.f32.mrf.mxu0
        %v2571 = vadd.f32 0.0, %v2570
        %v2572 = vpop.f32.mrf.mxu0
        %v2573 = vadd.f32 0.0, %v2572
        %2574 = vmatprep.mubr.f32.mxu0 0.0
        %2575 = vmatmul.mubr.f32.gmra.mxu0 %v2337
        %v2576 = vpop.f32.mrf.mxu0
        %v2577 = vadd.f32 0.0, %v2576
        %v2578 = vpop.f32.mrf.mxu0
        %v2579 = vadd.f32 0.0, %v2578
        %2580 = vmatprep.mubr.f32.mxu0 0.0
        %2581 = vmatmul.mubr.f32.gmra.mxu0 %v2340
        %v2582 = vpop.f32.mrf.mxu0
        %v2583 = vadd.f32 0.0, %v2582
        %v2584 = vpop.f32.mrf.mxu0
        %v2585 = vadd.f32 0.0, %v2584
        %2586 = vmatprep.mubr.f32.mxu0 0.0
        %2587 = vmatmul.mubr.f32.gmra.mxu0 %v2343
        %v2588 = vpop.f32.mrf.mxu0
        %v2589 = vadd.f32 0.0, %v2588
        %v2590 = vpop.f32.mrf.mxu0
        %v2591 = vadd.f32 0.0, %v2590
        %2592 = vmatprep.mubr.f32.mxu0 0.0
        %2593 = vmatmul.mubr.f32.gmra.mxu0 %v2346
        %v2594 = vpop.f32.mrf.mxu0
        %v2595 = vadd.f32 0.0, %v2594
        %v2596 = vpop.f32.mrf.mxu0
        %v2597 = vadd.f32 0.0, %v2596
        %2598 = vmatprep.mubr.f32.mxu0 0.0
        %2599 = vmatmul.mubr.f32.gmra.mxu0 %v2349
        %v2600 = vpop.f32.mrf.mxu0
        %v2601 = vadd.f32 0.0, %v2600
        %v2602 = vpop.f32.mrf.mxu0
        %v2603 = vadd.f32 0.0, %v2602
        %2604 = vmatprep.mubr.f32.mxu0 0.0
        %2605 = vmatmul.mubr.f32.gmra.mxu0 %v2352
        %v2606 = vpop.f32.mrf.mxu0
        %v2607 = vadd.f32 0.0, %v2606
        %v2608 = vpop.f32.mrf.mxu0
        %v2609 = vadd.f32 0.0, %v2608
        %2610 = vmatprep.mubr.f32.mxu0 0.0
        %2611 = vmatmul.mubr.f32.gmra.mxu0 %v2355
        %v2612 = vpop.f32.mrf.mxu0
        %v2613 = vadd.f32 0.0, %v2612
        %v2614 = vpop.f32.mrf.mxu0
        %v2615 = vadd.f32 0.0, %v2614
        %2616 = vmatprep.mubr.f32.mxu0 0.0
        %2617 = vmatmul.mubr.f32.gmra.mxu0 %v2358
        %v2618 = vpop.f32.mrf.mxu0
        %v2619 = vadd.f32 0.0, %v2618
        %v2620 = vpop.f32.mrf.mxu0
        %v2621 = vadd.f32 0.0, %v2620
        %2622 = vdwg.mxu0
        %v2623 = vmax.f32 %v2433, %v2445
        %v2624 = vmax.f32 %v2439, %v2451
        %v2625 = vmax.f32 %v2623, %v2457
        %v2626 = vmax.f32 %v2624, %v2463
        %v2627 = vmax.f32 %v2625, %v2469
        %v2628 = vmax.f32 %v2626, %v2475
        %v2629 = vmax.f32 %v2627, %v2481
        %v2630 = vmax.f32 %v2628, %v2487
        %v2631 = vmax.f32 %v2629, %v2493
        %v2632 = vmax.f32 %v2630, %v2499
        %v2633 = vmax.f32 %v2631, %v2505
        %v2634 = vmax.f32 %v2632, %v2511
        %v2635 = vmax.f32 %v2633, %v2517
        %v2636 = vmax.f32 %v2634, %v2523
        %v2637 = vmax.f32 %v2635, %v2529
        %v2638 = vmax.f32 %v2636, %v2535
        %v2639 = vmax.f32 %v2637, %v2541
        %v2640 = vmax.f32 %v2638, %v2547
        %v2641 = vmax.f32 %v2639, %v2553
        %v2642 = vmax.f32 %v2640, %v2559
        %v2643 = vmax.f32 %v2641, %v2565
        %v2644 = vmax.f32 %v2642, %v2571
        %v2645 = vmax.f32 %v2643, %v2577
        %v2646 = vmax.f32 %v2644, %v2583
        %v2647 = vmax.f32 %v2645, %v2589
        %v2648 = vmax.f32 %v2646, %v2595
        %v2649 = vmax.f32 %v2647, %v2601
        %v2650 = vmax.f32 %v2648, %v2607
        %v2651 = vmax.f32 %v2649, %v2613
        %v2652 = vmax.f32 %v2650, %v2619
        %v2653 = vmax.f32 %v2651, %v2652
        %v2654 = vrot.slane %v2653, 4
        %v2655 = vmax.f32 %v2653, %v2654
        %v2656 = vrot.slane %v2655, 2
        %v2657 = vmax.f32 %v2655, %v2656
        %v2658 = vrot.slane %v2657, 1
        %v2659 = vmax.f32 %v2657, %v2658
        %v2660 = vmax.f32 %v2435, %v2447
        %v2661 = vmax.f32 %v2441, %v2453
        %v2662 = vmax.f32 %v2660, %v2459
        %v2663 = vmax.f32 %v2661, %v2465
        %v2664 = vmax.f32 %v2662, %v2471
        %v2665 = vmax.f32 %v2663, %v2477
        %v2666 = vmax.f32 %v2664, %v2483
        %v2667 = vmax.f32 %v2665, %v2489
        %v2668 = vmax.f32 %v2666, %v2495
        %v2669 = vmax.f32 %v2667, %v2501
        %v2670 = vmax.f32 %v2668, %v2507
        %v2671 = vmax.f32 %v2669, %v2513
        %v2672 = vmax.f32 %v2670, %v2519
        %v2673 = vmax.f32 %v2671, %v2525
        %v2674 = vmax.f32 %v2672, %v2531
        %v2675 = vmax.f32 %v2673, %v2537
        %v2676 = vmax.f32 %v2674, %v2543
        %v2677 = vmax.f32 %v2675, %v2549
        %v2678 = vmax.f32 %v2676, %v2555
        %v2679 = vmax.f32 %v2677, %v2561
        %v2680 = vmax.f32 %v2678, %v2567
        %v2681 = vmax.f32 %v2679, %v2573
        %v2682 = vmax.f32 %v2680, %v2579
        %v2683 = vmax.f32 %v2681, %v2585
        %v2684 = vmax.f32 %v2682, %v2591
        %v2685 = vmax.f32 %v2683, %v2597
        %v2686 = vmax.f32 %v2684, %v2603
        %v2687 = vmax.f32 %v2685, %v2609
        %v2688 = vmax.f32 %v2686, %v2615
        %v2689 = vmax.f32 %v2687, %v2621
        %v2690 = vmax.f32 %v2688, %v2689
        %v2691 = vrot.slane %v2690, 4
        %v2692 = vmax.f32 %v2690, %v2691
        %v2693 = vrot.slane %v2692, 2
        %v2694 = vmax.f32 %v2692, %v2693
        %v2695 = vrot.slane %v2694, 1
        %v2696 = vmax.f32 %v2694, %v2695
        %v2697 = vsub.f32 %v2433, %v2659
        %v2698 = vsub.f32 %v2435, %v2696
        %v2699 = vsub.f32 %v2439, %v2659
        %v2700 = vsub.f32 %v2441, %v2696
        %v2701 = vsub.f32 %v2445, %v2659
        %v2702 = vsub.f32 %v2447, %v2696
        %v2703 = vsub.f32 %v2451, %v2659
        %v2704 = vsub.f32 %v2453, %v2696
        %v2705 = vsub.f32 %v2457, %v2659
        %v2706 = vsub.f32 %v2459, %v2696
        %v2707 = vsub.f32 %v2463, %v2659
        %v2708 = vsub.f32 %v2465, %v2696
        %v2709 = vsub.f32 %v2469, %v2659
        %v2710 = vsub.f32 %v2471, %v2696
        %v2711 = vsub.f32 %v2475, %v2659
        %v2712 = vsub.f32 %v2477, %v2696
        %v2713 = vsub.f32 %v2481, %v2659
        %v2714 = vsub.f32 %v2483, %v2696
        %v2715 = vsub.f32 %v2487, %v2659
        %v2716 = vsub.f32 %v2489, %v2696
        %v2717 = vsub.f32 %v2493, %v2659
        %v2718 = vsub.f32 %v2495, %v2696
        %v2719 = vsub.f32 %v2499, %v2659
        %v2720 = vsub.f32 %v2501, %v2696
        %v2721 = vsub.f32 %v2505, %v2659
        %v2722 = vsub.f32 %v2507, %v2696
        %v2723 = vsub.f32 %v2511, %v2659
        %v2724 = vsub.f32 %v2513, %v2696
        %v2725 = vsub.f32 %v2517, %v2659
        %v2726 = vsub.f32 %v2519, %v2696
        %v2727 = vsub.f32 %v2523, %v2659
        %v2728 = vsub.f32 %v2525, %v2696
        %v2729 = vsub.f32 %v2529, %v2659
        %v2730 = vsub.f32 %v2531, %v2696
        %v2731 = vsub.f32 %v2535, %v2659
        %v2732 = vsub.f32 %v2537, %v2696
        %v2733 = vsub.f32 %v2541, %v2659
        %v2734 = vsub.f32 %v2543, %v2696
        %v2735 = vsub.f32 %v2547, %v2659
        %v2736 = vsub.f32 %v2549, %v2696
        %v2737 = vsub.f32 %v2553, %v2659
        %v2738 = vsub.f32 %v2555, %v2696
        %v2739 = vsub.f32 %v2559, %v2659
        %v2740 = vsub.f32 %v2561, %v2696
        %v2741 = vsub.f32 %v2565, %v2659
        %v2742 = vsub.f32 %v2567, %v2696
        %v2743 = vsub.f32 %v2571, %v2659
        %v2744 = vsub.f32 %v2573, %v2696
        %v2745 = vsub.f32 %v2577, %v2659
        %v2746 = vsub.f32 %v2579, %v2696
        %v2747 = vsub.f32 %v2583, %v2659
        %v2748 = vsub.f32 %v2585, %v2696
        %v2749 = vsub.f32 %v2589, %v2659
        %v2750 = vsub.f32 %v2591, %v2696
        %v2751 = vsub.f32 %v2595, %v2659
        %v2752 = vsub.f32 %v2597, %v2696
        %v2753 = vsub.f32 %v2601, %v2659
        %v2754 = vsub.f32 %v2603, %v2696
        %v2755 = vsub.f32 %v2607, %v2659
        %v2756 = vsub.f32 %v2609, %v2696
        %v2757 = vsub.f32 %v2613, %v2659
        %v2758 = vsub.f32 %v2615, %v2696
        %v2759 = vsub.f32 %v2619, %v2659
        %v2760 = vsub.f32 %v2621, %v2696
        %v2761 = vmul.f32 %v2697, 1.442695
        %v2762 = vpow.pop %v2761
        %v2763 = vmul.f32 %v2698, 1.442695
        %v2764 = vpow.pop %v2763
        %v2765 = vmul.f32 %v2699, 1.442695
        %v2766 = vpow.pop %v2765
        %v2767 = vmul.f32 %v2700, 1.442695
        %v2768 = vpow.pop %v2767
        %v2769 = vmul.f32 %v2701, 1.442695
        %v2770 = vpow.pop %v2769
        %v2771 = vmul.f32 %v2702, 1.442695
        %v2772 = vpow.pop %v2771
        %v2773 = vmul.f32 %v2703, 1.442695
        %v2774 = vpow.pop %v2773
        %v2775 = vmul.f32 %v2704, 1.442695
        %v2776 = vpow.pop %v2775
        %v2777 = vmul.f32 %v2705, 1.442695
        %v2778 = vpow.pop %v2777
        %v2779 = vmul.f32 %v2706, 1.442695
        %v2780 = vpow.pop %v2779
        %v2781 = vmul.f32 %v2707, 1.442695
        %v2782 = vpow.pop %v2781
        %v2783 = vmul.f32 %v2708, 1.442695
        %v2784 = vpow.pop %v2783
        %v2785 = vmul.f32 %v2709, 1.442695
        %v2786 = vpow.pop %v2785
        %v2787 = vmul.f32 %v2710, 1.442695
        %v2788 = vpow.pop %v2787
        %v2789 = vmul.f32 %v2711, 1.442695
        %v2790 = vpow.pop %v2789
        %v2791 = vmul.f32 %v2712, 1.442695
        %v2792 = vpow.pop %v2791
        %v2793 = vmul.f32 %v2713, 1.442695
        %v2794 = vpow.pop %v2793
        %v2795 = vmul.f32 %v2714, 1.442695
        %v2796 = vpow.pop %v2795
        %v2797 = vmul.f32 %v2715, 1.442695
        %v2798 = vpow.pop %v2797
        %v2799 = vmul.f32 %v2716, 1.442695
        %v2800 = vpow.pop %v2799
        %v2801 = vmul.f32 %v2717, 1.442695
        %v2802 = vpow.pop %v2801
        %v2803 = vmul.f32 %v2718, 1.442695
        %v2804 = vpow.pop %v2803
        %v2805 = vmul.f32 %v2719, 1.442695
        %v2806 = vpow.pop %v2805
        %v2807 = vmul.f32 %v2720, 1.442695
        %v2808 = vpow.pop %v2807
        %v2809 = vmul.f32 %v2721, 1.442695
        %v2810 = vpow.pop %v2809
        %v2811 = vmul.f32 %v2722, 1.442695
        %v2812 = vpow.pop %v2811
        %v2813 = vmul.f32 %v2723, 1.442695
        %v2814 = vpow.pop %v2813
        %v2815 = vmul.f32 %v2724, 1.442695
        %v2816 = vpow.pop %v2815
        %v2817 = vmul.f32 %v2725, 1.442695
        %v2818 = vpow.pop %v2817
        %v2819 = vmul.f32 %v2726, 1.442695
        %v2820 = vpow.pop %v2819
        %v2821 = vmul.f32 %v2727, 1.442695
        %v2822 = vpow.pop %v2821
        %v2823 = vmul.f32 %v2728, 1.442695
        %v2824 = vpow.pop %v2823
        %v2825 = vmul.f32 %v2729, 1.442695
        %v2826 = vpow.pop %v2825
        %v2827 = vmul.f32 %v2730, 1.442695
        %v2828 = vpow.pop %v2827
        %v2829 = vmul.f32 %v2731, 1.442695
        %v2830 = vpow.pop %v2829
        %v2831 = vmul.f32 %v2732, 1.442695
        %v2832 = vpow.pop %v2831
        %v2833 = vmul.f32 %v2733, 1.442695
        %v2834 = vpow.pop %v2833
        %v2835 = vmul.f32 %v2734, 1.442695
        %v2836 = vpow.pop %v2835
        %v2837 = vmul.f32 %v2735, 1.442695
        %v2838 = vpow.pop %v2837
        %v2839 = vmul.f32 %v2736, 1.442695
        %v2840 = vpow.pop %v2839
        %v2841 = vmul.f32 %v2737, 1.442695
        %v2842 = vpow.pop %v2841
        %v2843 = vmul.f32 %v2738, 1.442695
        %v2844 = vpow.pop %v2843
        %v2845 = vmul.f32 %v2739, 1.442695
        %v2846 = vpow.pop %v2845
        %v2847 = vmul.f32 %v2740, 1.442695
        %v2848 = vpow.pop %v2847
        %v2849 = vmul.f32 %v2741, 1.442695
        %v2850 = vpow.pop %v2849
        %v2851 = vmul.f32 %v2742, 1.442695
        %v2852 = vpow.pop %v2851
        %v2853 = vmul.f32 %v2743, 1.442695
        %v2854 = vpow.pop %v2853
        %v2855 = vmul.f32 %v2744, 1.442695
        %v2856 = vpow.pop %v2855
        %v2857 = vmul.f32 %v2745, 1.442695
        %v2858 = vpow.pop %v2857
        %v2859 = vmul.f32 %v2746, 1.442695
        %v2860 = vpow.pop %v2859
        %v2861 = vmul.f32 %v2747, 1.442695
        %v2862 = vpow.pop %v2861
        %v2863 = vmul.f32 %v2748, 1.442695
        %v2864 = vpow.pop %v2863
        %v2865 = vmul.f32 %v2749, 1.442695
        %v2866 = vpow.pop %v2865
        %v2867 = vmul.f32 %v2750, 1.442695
        %v2868 = vpow.pop %v2867
        %v2869 = vmul.f32 %v2751, 1.442695
        %v2870 = vpow.pop %v2869
        %v2871 = vmul.f32 %v2752, 1.442695
        %v2872 = vpow.pop %v2871
        %v2873 = vmul.f32 %v2753, 1.442695
        %v2874 = vpow.pop %v2873
        %v2875 = vmul.f32 %v2754, 1.442695
        %v2876 = vpow.pop %v2875
        %v2877 = vmul.f32 %v2755, 1.442695
        %v2878 = vpow.pop %v2877
        %v2879 = vmul.f32 %v2756, 1.442695
        %v2880 = vpow.pop %v2879
        %v2881 = vmul.f32 %v2757, 1.442695
        %v2882 = vpow.pop %v2881
        %v2883 = vmul.f32 %v2758, 1.442695
        %v2884 = vpow.pop %v2883
        %v2885 = vmul.f32 %v2759, 1.442695
        %v2886 = vpow.pop %v2885
        %v2887 = vmul.f32 %v2760, 1.442695
        %v2888 = vpow.pop %v2887
        %v2889 = vadd.f32 %v2762, %v2766
        %v2890 = vadd.f32 %v2889, %v2770
        %v2891 = vadd.f32 %v2890, %v2774
        %v2892 = vadd.f32 %v2891, %v2778
        %v2893 = vadd.f32 %v2892, %v2782
        %v2894 = vadd.f32 %v2893, %v2786
        %v2895 = vadd.f32 %v2894, %v2790
        %v2896 = vadd.f32 %v2895, %v2794
        %v2897 = vadd.f32 %v2896, %v2798
        %v2898 = vadd.f32 %v2897, %v2802
        %v2899 = vadd.f32 %v2898, %v2806
        %v2900 = vadd.f32 %v2899, %v2810
        %v2901 = vadd.f32 %v2900, %v2814
        %v2902 = vadd.f32 %v2901, %v2818
        %v2903 = vadd.f32 %v2902, %v2822
        %v2904 = vadd.f32 %v2903, %v2826
        %v2905 = vadd.f32 %v2904, %v2830
        %v2906 = vadd.f32 %v2905, %v2834
        %v2907 = vadd.f32 %v2906, %v2838
        %v2908 = vadd.f32 %v2907, %v2842
        %v2909 = vadd.f32 %v2908, %v2846
        %v2910 = vadd.f32 %v2909, %v2850
        %v2911 = vadd.f32 %v2910, %v2854
        %v2912 = vadd.f32 %v2911, %v2858
        %v2913 = vadd.f32 %v2912, %v2862
        %v2914 = vadd.f32 %v2913, %v2866
        %v2915 = vadd.f32 %v2914, %v2870
        %v2916 = vadd.f32 %v2915, %v2874
        %v2917 = vadd.f32 %v2916, %v2878
        %v2918 = vadd.f32 %v2917, %v2882
        %v2919 = vadd.f32 %v2918, %v2886
        %v2920 = vrot.slane %v2919, 4
        %v2921 = vadd.f32 %v2919, %v2920
        %v2922 = vrot.slane %v2921, 2
        %v2923 = vadd.f32 %v2921, %v2922
        %v2924 = vrot.slane %v2923, 1
        %v2925 = vadd.f32 %v2923, %v2924
        %v2926 = vadd.f32 %v2764, %v2768
        %v2927 = vadd.f32 %v2926, %v2772
        %v2928 = vadd.f32 %v2927, %v2776
        %v2929 = vadd.f32 %v2928, %v2780
        %v2930 = vadd.f32 %v2929, %v2784
        %v2931 = vadd.f32 %v2930, %v2788
        %v2932 = vadd.f32 %v2931, %v2792
        %v2933 = vadd.f32 %v2932, %v2796
        %v2934 = vadd.f32 %v2933, %v2800
        %v2935 = vadd.f32 %v2934, %v2804
        %v2936 = vadd.f32 %v2935, %v2808
        %v2937 = vadd.f32 %v2936, %v2812
        %v2938 = vadd.f32 %v2937, %v2816
        %v2939 = vadd.f32 %v2938, %v2820
        %v2940 = vadd.f32 %v2939, %v2824
        %v2941 = vadd.f32 %v2940, %v2828
        %v2942 = vadd.f32 %v2941, %v2832
        %v2943 = vadd.f32 %v2942, %v2836
        %v2944 = vadd.f32 %v2943, %v2840
        %v2945 = vadd.f32 %v2944, %v2844
        %v2946 = vadd.f32 %v2945, %v2848
        %v2947 = vadd.f32 %v2946, %v2852
        %v2948 = vadd.f32 %v2947, %v2856
        %v2949 = vadd.f32 %v2948, %v2860
        %v2950 = vadd.f32 %v2949, %v2864
        %v2951 = vadd.f32 %v2950, %v2868
        %v2952 = vadd.f32 %v2951, %v2872
        %v2953 = vadd.f32 %v2952, %v2876
        %v2954 = vadd.f32 %v2953, %v2880
        %v2955 = vadd.f32 %v2954, %v2884
        %v2956 = vadd.f32 %v2955, %v2888
        %v2957 = vrot.slane %v2956, 4
        %v2958 = vadd.f32 %v2956, %v2957
        %v2959 = vrot.slane %v2958, 2
        %v2960 = vadd.f32 %v2958, %v2959
        %v2961 = vrot.slane %v2960, 1
        %v2962 = vadd.f32 %v2960, %v2961
        %v2963 = vrcp.pop %v2925
        %v2964 = vrcp.pop %v2962
        %v2965 = vmul.f32 %v2762, %v2963
        %v2966 = vmul.f32 %v2764, %v2964
        %v2967 = vmul.f32 %v2766, %v2963
        %v2968 = vmul.f32 %v2768, %v2964
        %v2969 = vmul.f32 %v2770, %v2963
        %v2970 = vmul.f32 %v2772, %v2964
        %v2971 = vmul.f32 %v2774, %v2963
        %v2972 = vmul.f32 %v2776, %v2964
        %v2973 = vmul.f32 %v2778, %v2963
        %v2974 = vmul.f32 %v2780, %v2964
        %v2975 = vmul.f32 %v2782, %v2963
        %v2976 = vmul.f32 %v2784, %v2964
        %v2977 = vmul.f32 %v2786, %v2963
        %v2978 = vmul.f32 %v2788, %v2964
        %v2979 = vmul.f32 %v2790, %v2963
        %v2980 = vmul.f32 %v2792, %v2964
        %v2981 = vmul.f32 %v2794, %v2963
        %v2982 = vmul.f32 %v2796, %v2964
        %v2983 = vmul.f32 %v2798, %v2963
        %v2984 = vmul.f32 %v2800, %v2964
        %v2985 = vmul.f32 %v2802, %v2963
        %v2986 = vmul.f32 %v2804, %v2964
        %v2987 = vmul.f32 %v2806, %v2963
        %v2988 = vmul.f32 %v2808, %v2964
        %v2989 = vmul.f32 %v2810, %v2963
        %v2990 = vmul.f32 %v2812, %v2964
        %v2991 = vmul.f32 %v2814, %v2963
        %v2992 = vmul.f32 %v2816, %v2964
        %v2993 = vmul.f32 %v2818, %v2963
        %v2994 = vmul.f32 %v2820, %v2964
        %v2995 = vmul.f32 %v2822, %v2963
        %v2996 = vmul.f32 %v2824, %v2964
        %v2997 = vmul.f32 %v2826, %v2963
        %v2998 = vmul.f32 %v2828, %v2964
        %v2999 = vmul.f32 %v2830, %v2963
        %v3000 = vmul.f32 %v2832, %v2964
        %v3001 = vmul.f32 %v2834, %v2963
        %v3002 = vmul.f32 %v2836, %v2964
        %v3003 = vmul.f32 %v2838, %v2963
        %v3004 = vmul.f32 %v2840, %v2964
        %v3005 = vmul.f32 %v2842, %v2963
        %v3006 = vmul.f32 %v2844, %v2964
        %v3007 = vmul.f32 %v2846, %v2963
        %v3008 = vmul.f32 %v2848, %v2964
        %v3009 = vmul.f32 %v2850, %v2963
        %v3010 = vmul.f32 %v2852, %v2964
        %v3011 = vmul.f32 %v2854, %v2963
        %v3012 = vmul.f32 %v2856, %v2964
        %v3013 = vmul.f32 %v2858, %v2963
        %v3014 = vmul.f32 %v2860, %v2964
        %v3015 = vmul.f32 %v2862, %v2963
        %v3016 = vmul.f32 %v2864, %v2964
        %v3017 = vmul.f32 %v2866, %v2963
        %v3018 = vmul.f32 %v2868, %v2964
        %v3019 = vmul.f32 %v2870, %v2963
        %v3020 = vmul.f32 %v2872, %v2964
        %v3021 = vmul.f32 %v2874, %v2963
        %v3022 = vmul.f32 %v2876, %v2964
        %v3023 = vmul.f32 %v2878, %v2963
        %v3024 = vmul.f32 %v2880, %v2964
        %v3025 = vmul.f32 %v2882, %v2963
        %v3026 = vmul.f32 %v2884, %v2964
        %v3027 = vmul.f32 %v2886, %v2963
        %v3028 = vmul.f32 %v2888, %v2964
        %3029 = vmatprep.subr.mxu0 %v2996
        %3030 = vmatpush1.msra.mxu0 %v2995
        %3031 = vmatprep.subr.mxu0 %v2994
        %3032 = vmatpush1.msra.mxu0 %v2993
        %3033 = vmatprep.subr.mxu0 %v2992
        %3034 = vmatpush1.msra.mxu0 %v2991
        %3035 = vmatprep.subr.mxu0 %v2990
        %3036 = vmatpush1.msra.mxu0 %v2989
        %3037 = vmatprep.subr.mxu0 %v2988
        %3038 = vmatpush1.msra.mxu0 %v2987
        %3039 = vmatprep.subr.mxu0 %v2986
        %3040 = vmatpush1.msra.mxu0 %v2985
        %3041 = vmatprep.subr.mxu0 %v2984
        %3042 = vmatpush1.msra.mxu0 %v2983
        %3043 = vmatprep.subr.mxu0 %v2982
        %3044 = vmatpush1.msra.mxu0 %v2981
        %3045 = vmatprep.subr.mxu0 %v2980
        %3046 = vmatpush1.msra.mxu0 %v2979
        %3047 = vmatprep.subr.mxu0 %v2978
        %3048 = vmatpush1.msra.mxu0 %v2977
        %3049 = vmatprep.subr.mxu0 %v2976
        %3050 = vmatpush1.msra.mxu0 %v2975
        %3051 = vmatprep.subr.mxu0 %v2974
        %3052 = vmatpush1.msra.mxu0 %v2973
        %3053 = vmatprep.subr.mxu0 %v2972
        %3054 = vmatpush1.msra.mxu0 %v2971
        %3055 = vmatprep.subr.mxu0 %v2970
        %3056 = vmatpush1.msra.mxu0 %v2969
        %3057 = vmatprep.subr.mxu0 %v2968
        %3058 = vmatpush1.msra.mxu0 %v2967
        %3059 = vmatprep.subr.mxu0 %v2966
        %3060 = vmatpush1.msra.mxu0 %v2965
        %3061 = vmatprep.subr.mxu0 %v3028
        %3062 = vmatpush2.msra.mxu0 %v3027
        %3063 = vmatprep.subr.mxu0 %v3026
        %3064 = vmatpush2.msra.mxu0 %v3025
        %3065 = vmatprep.subr.mxu0 %v3024
        %3066 = vmatpush2.msra.mxu0 %v3023
        %3067 = vmatprep.subr.mxu0 %v3022
        %3068 = vmatpush2.msra.mxu0 %v3021
        %3069 = vmatprep.subr.mxu0 %v3020
        %3070 = vmatpush2.msra.mxu0 %v3019
        %3071 = vmatprep.subr.mxu0 %v3018
        %3072 = vmatpush2.msra.mxu0 %v3017
        %3073 = vmatprep.subr.mxu0 %v3016
        %3074 = vmatpush2.msra.mxu0 %v3015
        %3075 = vmatprep.subr.mxu0 %v3014
        %3076 = vmatpush2.msra.mxu0 %v3013
        %3077 = vmatprep.subr.mxu0 %v3012
        %3078 = vmatpush2.msra.mxu0 %v3011
        %3079 = vmatprep.subr.mxu0 %v3010
        %3080 = vmatpush2.msra.mxu0 %v3009
        %3081 = vmatprep.subr.mxu0 %v3008
        %3082 = vmatpush2.msra.mxu0 %v3007
        %3083 = vmatprep.subr.mxu0 %v3006
        %3084 = vmatpush2.msra.mxu0 %v3005
        %3085 = vmatprep.subr.mxu0 %v3004
        %3086 = vmatpush2.msra.mxu0 %v3003
        %3087 = vmatprep.subr.mxu0 %v3002
        %3088 = vmatpush2.msra.mxu0 %v3001
        %3089 = vmatprep.subr.mxu0 %v3000
        %3090 = vmatpush2.msra.mxu0 %v2999
        %3091 = vmatprep.subr.mxu0 %v2998
        %3092 = vmatpush2.msra.mxu0 %v2997
        %3093 = vmatprep.mubr.f32.mxu0 %v364
        %3094 = vmatmul.mubr.f32.gmra.mxu0 %v362
        %v3095 = vpop.f32.mrf.mxu0
        %v3096 = vadd.f32 0.0, %v3095
        %v3097 = vpop.f32.mrf.mxu0
        %v3098 = vadd.f32 0.0, %v3097
        %3099 = vdwg.mxu0
        %v3102 = vrot.slane %v338, 4
        %v3103 = vrot.slane %v340, 4
        %3106 = vxpose.xlu0.b32.start [1/16] %v3102, 128
        %3107 = vxpose.xlu0.b32.cont [2/16] 0.0, 128
        %3108 = vxpose.xlu0.b32.cont [3/16] 0.0, 128
        %3109 = vxpose.xlu0.b32.cont [4/16] 0.0, 128
        %3110 = vxpose.xlu0.b32.cont [5/16] 0.0, 128
        %3111 = vxpose.xlu0.b32.cont [6/16] 0.0, 128
        %3112 = vxpose.xlu0.b32.cont [7/16] 0.0, 128
        %3113 = vxpose.xlu0.b32.cont [8/16] 0.0, 128
        %3114 = vxpose.xlu0.b32.cont [9/16] 0.0, 128
        %3115 = vxpose.xlu0.b32.cont [10/16] 0.0, 128
        %3116 = vxpose.xlu0.b32.cont [11/16] 0.0, 128
        %3117 = vxpose.xlu0.b32.cont [12/16] 0.0, 128
        %3118 = vxpose.xlu0.b32.cont [13/16] 0.0, 128
        %3119 = vxpose.xlu0.b32.cont [14/16] 0.0, 128
        %3120 = vxpose.xlu0.b32.cont [15/16] 0.0, 128
        %3121 = vxpose.xlu0.b32.end [16/16] 0.0, 128
        %v3122 = vpop.trf.xlu0
        %v3123 = vpop.trf.xlu0
        %v3124 = vpop.trf.xlu0
        %v3125 = vpop.trf.xlu0
        %v3126 = vpop.trf.xlu0
        %v3127 = vpop.trf.xlu0
        %v3128 = vpop.trf.xlu0
        %v3129 = vpop.trf.xlu0
        %v3130 = vpop.trf.xlu0
        %v3131 = vpop.trf.xlu0
        %v3132 = vpop.trf.xlu0
        %v3133 = vpop.trf.xlu0
        %v3134 = vpop.trf.xlu0
        %v3135 = vpop.trf.xlu0
        %v3136 = vpop.trf.xlu0
        %v3137 = vpop.trf.xlu0
        %3138 = vxpose.xlu0.b32.start [1/16] %v3103, 128
        %3139 = vxpose.xlu0.b32.cont [2/16] 0.0, 128
        %3140 = vxpose.xlu0.b32.cont [3/16] 0.0, 128
        %3141 = vxpose.xlu0.b32.cont [4/16] 0.0, 128
        %3142 = vxpose.xlu0.b32.cont [5/16] 0.0, 128
        %3143 = vxpose.xlu0.b32.cont [6/16] 0.0, 128
        %3144 = vxpose.xlu0.b32.cont [7/16] 0.0, 128
        %3145 = vxpose.xlu0.b32.cont [8/16] 0.0, 128
        %3146 = vxpose.xlu0.b32.cont [9/16] 0.0, 128
        %3147 = vxpose.xlu0.b32.cont [10/16] 0.0, 128
        %3148 = vxpose.xlu0.b32.cont [11/16] 0.0, 128
        %3149 = vxpose.xlu0.b32.cont [12/16] 0.0, 128
        %3150 = vxpose.xlu0.b32.cont [13/16] 0.0, 128
        %3151 = vxpose.xlu0.b32.cont [14/16] 0.0, 128
        %3152 = vxpose.xlu0.b32.cont [15/16] 0.0, 128
        %3153 = vxpose.xlu0.b32.end [16/16] 0.0, 128
        %v3154 = vpop.trf.xlu0
        %v3155 = vpop.trf.xlu0
        %v3156 = vpop.trf.xlu0
        %v3157 = vpop.trf.xlu0
        %v3158 = vpop.trf.xlu0
        %v3159 = vpop.trf.xlu0
        %v3160 = vpop.trf.xlu0
        %v3161 = vpop.trf.xlu0
        %v3162 = vpop.trf.xlu0
        %v3163 = vpop.trf.xlu0
        %v3164 = vpop.trf.xlu0
        %v3165 = vpop.trf.xlu0
        %v3166 = vpop.trf.xlu0
        %v3167 = vpop.trf.xlu0
        %v3168 = vpop.trf.xlu0
        %v3169 = vpop.trf.xlu0
        %v3170 = vrot.slane %v380, 4
        %v3171 = vrot.slane %v381, 4
        %v3173 = vsel %vm450, %v3122, 0
        %v3176 = vsel %vm450, %v3123, 0
        %v3179 = vsel %vm450, %v3124, 0
        %v3182 = vsel %vm450, %v3125, 0
        %v3185 = vsel %vm450, %v3126, 0
        %v3188 = vsel %vm450, %v3127, 0
        %v3191 = vsel %vm450, %v3128, 0
        %v3194 = vsel %vm450, %v3129, 0
        %v3197 = vsel %vm450, %v3130, 0
        %v3200 = vsel %vm450, %v3131, 0
        %v3203 = vsel %vm450, %v3132, 0
        %v3206 = vsel %vm450, %v3133, 0
        %v3209 = vsel %vm450, %v3134, 0
        %v3212 = vsel %vm450, %v3135, 0
        %v3215 = vsel %vm450, %v3136, 0
        %v3218 = vsel %vm450, %v3137, 0
        %v3221 = vsel %vm450, %v3154, 0
        %v3224 = vsel %vm450, %v3155, 0
        %v3227 = vsel %vm450, %v3156, 0
        %v3230 = vsel %vm450, %v3157, 0
        %v3233 = vsel %vm450, %v3158, 0
        %v3236 = vsel %vm450, %v3159, 0
        %v3239 = vsel %vm450, %v3160, 0
        %v3242 = vsel %vm450, %v3161, 0
        %v3245 = vsel %vm450, %v3162, 0
        %v3248 = vsel %vm450, %v3163, 0
        %v3251 = vsel %vm450, %v3164, 0
        %v3254 = vsel %vm450, %v3165, 0
        %v3257 = vsel %vm450, %v3166, 0
        %v3260 = vsel %vm450, %v3167, 0
        %v3263 = vsel %vm450, %v3168, 0
        %v3266 = vsel %vm450, %v3169, 0
        %v3268 = vsel %vm547, %v3170, 0
        %v3270 = vsel %vm547, %v3171, 0
        %3272 = vmatprep.subr.mxu0 0.0
        %3273 = vmatpush1.msra.mxu0 0.0
        %3274 = vmatprep.subr.mxu0 0.0
        %3275 = vmatpush1.msra.mxu0 0.0
        %3276 = vmatprep.subr.mxu0 0.0
        %3277 = vmatpush1.msra.mxu0 0.0
        %3278 = vmatprep.subr.mxu0 0.0
        %3279 = vmatpush1.msra.mxu0 0.0
        %3280 = vmatprep.subr.mxu0 0.0
        %3281 = vmatpush1.msra.mxu0 0.0
        %3282 = vmatprep.subr.mxu0 0.0
        %3283 = vmatpush1.msra.mxu0 0.0
        %3284 = vmatprep.subr.mxu0 0.0
        %3285 = vmatpush1.msra.mxu0 0.0
        %3286 = vmatprep.subr.mxu0 0.0
        %3287 = vmatpush1.msra.mxu0 0.0
        %3288 = vmatprep.subr.mxu0 0.0
        %3289 = vmatpush1.msra.mxu0 0.0
        %3290 = vmatprep.subr.mxu0 0.0
        %3291 = vmatpush1.msra.mxu0 0.0
        %3292 = vmatprep.subr.mxu0 0.0
        %3293 = vmatpush1.msra.mxu0 0.0
        %3294 = vmatprep.subr.mxu0 0.0
        %3295 = vmatpush1.msra.mxu0 0.0
        %3296 = vmatprep.subr.mxu0 0.0
        %3297 = vmatpush1.msra.mxu0 0.0
        %3298 = vmatprep.subr.mxu0 0.0
        %3299 = vmatpush1.msra.mxu0 0.0
        %3300 = vmatprep.subr.mxu0 0.0
        %3301 = vmatpush1.msra.mxu0 0.0
        %3302 = vmatprep.subr.mxu0 %v3270
        %3303 = vmatpush1.msra.mxu0 %v3268
        %3304 = vmatprep.subr.mxu0 0.0
        %3305 = vmatpush2.msra.mxu0 0.0
        %3306 = vmatprep.subr.mxu0 0.0
        %3307 = vmatpush2.msra.mxu0 0.0
        %3308 = vmatprep.subr.mxu0 0.0
        %3309 = vmatpush2.msra.mxu0 0.0
        %3310 = vmatprep.subr.mxu0 0.0
        %3311 = vmatpush2.msra.mxu0 0.0
        %3312 = vmatprep.subr.mxu0 0.0
        %3313 = vmatpush2.msra.mxu0 0.0
        %3314 = vmatprep.subr.mxu0 0.0
        %3315 = vmatpush2.msra.mxu0 0.0
        %3316 = vmatprep.subr.mxu0 0.0
        %3317 = vmatpush2.msra.mxu0 0.0
        %3318 = vmatprep.subr.mxu0 0.0
        %3319 = vmatpush2.msra.mxu0 0.0
        %3320 = vmatprep.subr.mxu0 0.0
        %3321 = vmatpush2.msra.mxu0 0.0
        %3322 = vmatprep.subr.mxu0 0.0
        %3323 = vmatpush2.msra.mxu0 0.0
        %3324 = vmatprep.subr.mxu0 0.0
        %3325 = vmatpush2.msra.mxu0 0.0
        %3326 = vmatprep.subr.mxu0 0.0
        %3327 = vmatpush2.msra.mxu0 0.0
        %3328 = vmatprep.subr.mxu0 0.0
        %3329 = vmatpush2.msra.mxu0 0.0
        %3330 = vmatprep.subr.mxu0 0.0
        %3331 = vmatpush2.msra.mxu0 0.0
        %3332 = vmatprep.subr.mxu0 0.0
        %3333 = vmatpush2.msra.mxu0 0.0
        %3334 = vmatprep.subr.mxu0 0.0
        %3335 = vmatpush2.msra.mxu0 0.0
        %3336 = vmatprep.mubr.f32.mxu0 0.0
        %3337 = vmatmul.mubr.f32.gmra.mxu0 %v3173
        %v3338 = vpop.f32.mrf.mxu0
        %v3339 = vadd.f32 0.0, %v3338
        %v3340 = vpop.f32.mrf.mxu0
        %v3341 = vadd.f32 0.0, %v3340
        %3342 = vmatprep.mubr.f32.mxu0 0.0
        %3343 = vmatmul.mubr.f32.gmra.mxu0 %v3176
        %v3344 = vpop.f32.mrf.mxu0
        %v3345 = vadd.f32 0.0, %v3344
        %v3346 = vpop.f32.mrf.mxu0
        %v3347 = vadd.f32 0.0, %v3346
        %3348 = vmatprep.mubr.f32.mxu0 0.0
        %3349 = vmatmul.mubr.f32.gmra.mxu0 %v3179
        %v3350 = vpop.f32.mrf.mxu0
        %v3351 = vadd.f32 0.0, %v3350
        %v3352 = vpop.f32.mrf.mxu0
        %v3353 = vadd.f32 0.0, %v3352
        %3354 = vmatprep.mubr.f32.mxu0 0.0
        %3355 = vmatmul.mubr.f32.gmra.mxu0 %v3182
        %v3356 = vpop.f32.mrf.mxu0
        %v3357 = vadd.f32 0.0, %v3356
        %v3358 = vpop.f32.mrf.mxu0
        %v3359 = vadd.f32 0.0, %v3358
        %3360 = vmatprep.mubr.f32.mxu0 0.0
        %3361 = vmatmul.mubr.f32.gmra.mxu0 %v3185
        %v3362 = vpop.f32.mrf.mxu0
        %v3363 = vadd.f32 0.0, %v3362
        %v3364 = vpop.f32.mrf.mxu0
        %v3365 = vadd.f32 0.0, %v3364
        %3366 = vmatprep.mubr.f32.mxu0 0.0
        %3367 = vmatmul.mubr.f32.gmra.mxu0 %v3188
        %v3368 = vpop.f32.mrf.mxu0
        %v3369 = vadd.f32 0.0, %v3368
        %v3370 = vpop.f32.mrf.mxu0
        %v3371 = vadd.f32 0.0, %v3370
        %3372 = vmatprep.mubr.f32.mxu0 0.0
        %3373 = vmatmul.mubr.f32.gmra.mxu0 %v3191
        %v3374 = vpop.f32.mrf.mxu0
        %v3375 = vadd.f32 0.0, %v3374
        %v3376 = vpop.f32.mrf.mxu0
        %v3377 = vadd.f32 0.0, %v3376
        %3378 = vmatprep.mubr.f32.mxu0 0.0
        %3379 = vmatmul.mubr.f32.gmra.mxu0 %v3194
        %v3380 = vpop.f32.mrf.mxu0
        %v3381 = vadd.f32 0.0, %v3380
        %v3382 = vpop.f32.mrf.mxu0
        %v3383 = vadd.f32 0.0, %v3382
        %3384 = vmatprep.mubr.f32.mxu0 0.0
        %3385 = vmatmul.mubr.f32.gmra.mxu0 %v3197
        %v3386 = vpop.f32.mrf.mxu0
        %v3387 = vadd.f32 0.0, %v3386
        %v3388 = vpop.f32.mrf.mxu0
        %v3389 = vadd.f32 0.0, %v3388
        %3390 = vmatprep.mubr.f32.mxu0 0.0
        %3391 = vmatmul.mubr.f32.gmra.mxu0 %v3200
        %v3392 = vpop.f32.mrf.mxu0
        %v3393 = vadd.f32 0.0, %v3392
        %v3394 = vpop.f32.mrf.mxu0
        %v3395 = vadd.f32 0.0, %v3394
        %3396 = vmatprep.mubr.f32.mxu0 0.0
        %3397 = vmatmul.mubr.f32.gmra.mxu0 %v3203
        %v3398 = vpop.f32.mrf.mxu0
        %v3399 = vadd.f32 0.0, %v3398
        %v3400 = vpop.f32.mrf.mxu0
        %v3401 = vadd.f32 0.0, %v3400
        %3402 = vmatprep.mubr.f32.mxu0 0.0
        %3403 = vmatmul.mubr.f32.gmra.mxu0 %v3206
        %v3404 = vpop.f32.mrf.mxu0
        %v3405 = vadd.f32 0.0, %v3404
        %v3406 = vpop.f32.mrf.mxu0
        %v3407 = vadd.f32 0.0, %v3406
        %3408 = vmatprep.mubr.f32.mxu0 0.0
        %3409 = vmatmul.mubr.f32.gmra.mxu0 %v3209
        %v3410 = vpop.f32.mrf.mxu0
        %v3411 = vadd.f32 0.0, %v3410
        %v3412 = vpop.f32.mrf.mxu0
        %v3413 = vadd.f32 0.0, %v3412
        %3414 = vmatprep.mubr.f32.mxu0 0.0
        %3415 = vmatmul.mubr.f32.gmra.mxu0 %v3212
        %v3416 = vpop.f32.mrf.mxu0
        %v3417 = vadd.f32 0.0, %v3416
        %v3418 = vpop.f32.mrf.mxu0
        %v3419 = vadd.f32 0.0, %v3418
        %3420 = vmatprep.mubr.f32.mxu0 0.0
        %3421 = vmatmul.mubr.f32.gmra.mxu0 %v3215
        %v3422 = vpop.f32.mrf.mxu0
        %v3423 = vadd.f32 0.0, %v3422
        %v3424 = vpop.f32.mrf.mxu0
        %v3425 = vadd.f32 0.0, %v3424
        %3426 = vmatprep.mubr.f32.mxu0 0.0
        %3427 = vmatmul.mubr.f32.gmra.mxu0 %v3218
        %v3428 = vpop.f32.mrf.mxu0
        %v3429 = vadd.f32 0.0, %v3428
        %v3430 = vpop.f32.mrf.mxu0
        %v3431 = vadd.f32 0.0, %v3430
        %3432 = vmatprep.mubr.f32.mxu0 0.0
        %3433 = vmatmul.mubr.f32.gmra.mxu0 %v3221
        %v3434 = vpop.f32.mrf.mxu0
        %v3435 = vadd.f32 0.0, %v3434
        %v3436 = vpop.f32.mrf.mxu0
        %v3437 = vadd.f32 0.0, %v3436
        %3438 = vmatprep.mubr.f32.mxu0 0.0
        %3439 = vmatmul.mubr.f32.gmra.mxu0 %v3224
        %v3440 = vpop.f32.mrf.mxu0
        %v3441 = vadd.f32 0.0, %v3440
        %v3442 = vpop.f32.mrf.mxu0
        %v3443 = vadd.f32 0.0, %v3442
        %3444 = vmatprep.mubr.f32.mxu0 0.0
        %3445 = vmatmul.mubr.f32.gmra.mxu0 %v3227
        %v3446 = vpop.f32.mrf.mxu0
        %v3447 = vadd.f32 0.0, %v3446
        %v3448 = vpop.f32.mrf.mxu0
        %v3449 = vadd.f32 0.0, %v3448
        %3450 = vmatprep.mubr.f32.mxu0 0.0
        %3451 = vmatmul.mubr.f32.gmra.mxu0 %v3230
        %v3452 = vpop.f32.mrf.mxu0
        %v3453 = vadd.f32 0.0, %v3452
        %v3454 = vpop.f32.mrf.mxu0
        %v3455 = vadd.f32 0.0, %v3454
        %3456 = vmatprep.mubr.f32.mxu0 0.0
        %3457 = vmatmul.mubr.f32.gmra.mxu0 %v3233
        %v3458 = vpop.f32.mrf.mxu0
        %v3459 = vadd.f32 0.0, %v3458
        %v3460 = vpop.f32.mrf.mxu0
        %v3461 = vadd.f32 0.0, %v3460
        %3462 = vmatprep.mubr.f32.mxu0 0.0
        %3463 = vmatmul.mubr.f32.gmra.mxu0 %v3236
        %v3464 = vpop.f32.mrf.mxu0
        %v3465 = vadd.f32 0.0, %v3464
        %v3466 = vpop.f32.mrf.mxu0
        %v3467 = vadd.f32 0.0, %v3466
        %3468 = vmatprep.mubr.f32.mxu0 0.0
        %3469 = vmatmul.mubr.f32.gmra.mxu0 %v3239
        %v3470 = vpop.f32.mrf.mxu0
        %v3471 = vadd.f32 0.0, %v3470
        %v3472 = vpop.f32.mrf.mxu0
        %v3473 = vadd.f32 0.0, %v3472
        %3474 = vmatprep.mubr.f32.mxu0 0.0
        %3475 = vmatmul.mubr.f32.gmra.mxu0 %v3242
        %v3476 = vpop.f32.mrf.mxu0
        %v3477 = vadd.f32 0.0, %v3476
        %v3478 = vpop.f32.mrf.mxu0
        %v3479 = vadd.f32 0.0, %v3478
        %3480 = vmatprep.mubr.f32.mxu0 0.0
        %3481 = vmatmul.mubr.f32.gmra.mxu0 %v3245
        %v3482 = vpop.f32.mrf.mxu0
        %v3483 = vadd.f32 0.0, %v3482
        %v3484 = vpop.f32.mrf.mxu0
        %v3485 = vadd.f32 0.0, %v3484
        %3486 = vmatprep.mubr.f32.mxu0 0.0
        %3487 = vmatmul.mubr.f32.gmra.mxu0 %v3248
        %v3488 = vpop.f32.mrf.mxu0
        %v3489 = vadd.f32 0.0, %v3488
        %v3490 = vpop.f32.mrf.mxu0
        %v3491 = vadd.f32 0.0, %v3490
        %3492 = vmatprep.mubr.f32.mxu0 0.0
        %3493 = vmatmul.mubr.f32.gmra.mxu0 %v3251
        %v3494 = vpop.f32.mrf.mxu0
        %v3495 = vadd.f32 0.0, %v3494
        %v3496 = vpop.f32.mrf.mxu0
        %v3497 = vadd.f32 0.0, %v3496
        %3498 = vmatprep.mubr.f32.mxu0 0.0
        %3499 = vmatmul.mubr.f32.gmra.mxu0 %v3254
        %v3500 = vpop.f32.mrf.mxu0
        %v3501 = vadd.f32 0.0, %v3500
        %v3502 = vpop.f32.mrf.mxu0
        %v3503 = vadd.f32 0.0, %v3502
        %3504 = vmatprep.mubr.f32.mxu0 0.0
        %3505 = vmatmul.mubr.f32.gmra.mxu0 %v3257
        %v3506 = vpop.f32.mrf.mxu0
        %v3507 = vadd.f32 0.0, %v3506
        %v3508 = vpop.f32.mrf.mxu0
        %v3509 = vadd.f32 0.0, %v3508
        %3510 = vmatprep.mubr.f32.mxu0 0.0
        %3511 = vmatmul.mubr.f32.gmra.mxu0 %v3260
        %v3512 = vpop.f32.mrf.mxu0
        %v3513 = vadd.f32 0.0, %v3512
        %v3514 = vpop.f32.mrf.mxu0
        %v3515 = vadd.f32 0.0, %v3514
        %3516 = vmatprep.mubr.f32.mxu0 0.0
        %3517 = vmatmul.mubr.f32.gmra.mxu0 %v3263
        %v3518 = vpop.f32.mrf.mxu0
        %v3519 = vadd.f32 0.0, %v3518
        %v3520 = vpop.f32.mrf.mxu0
        %v3521 = vadd.f32 0.0, %v3520
        %3522 = vmatprep.mubr.f32.mxu0 0.0
        %3523 = vmatmul.mubr.f32.gmra.mxu0 %v3266
        %v3524 = vpop.f32.mrf.mxu0
        %v3525 = vadd.f32 0.0, %v3524
        %v3526 = vpop.f32.mrf.mxu0
        %v3527 = vadd.f32 0.0, %v3526
        %3528 = vdwg.mxu0
        %v3529 = vmax.f32 %v3339, %v3351
        %v3530 = vmax.f32 %v3345, %v3357
        %v3531 = vmax.f32 %v3529, %v3363
        %v3532 = vmax.f32 %v3530, %v3369
        %v3533 = vmax.f32 %v3531, %v3375
        %v3534 = vmax.f32 %v3532, %v3381
        %v3535 = vmax.f32 %v3533, %v3387
        %v3536 = vmax.f32 %v3534, %v3393
        %v3537 = vmax.f32 %v3535, %v3399
        %v3538 = vmax.f32 %v3536, %v3405
        %v3539 = vmax.f32 %v3537, %v3411
        %v3540 = vmax.f32 %v3538, %v3417
        %v3541 = vmax.f32 %v3539, %v3423
        %v3542 = vmax.f32 %v3540, %v3429
        %v3543 = vmax.f32 %v3541, %v3435
        %v3544 = vmax.f32 %v3542, %v3441
        %v3545 = vmax.f32 %v3543, %v3447
        %v3546 = vmax.f32 %v3544, %v3453
        %v3547 = vmax.f32 %v3545, %v3459
        %v3548 = vmax.f32 %v3546, %v3465
        %v3549 = vmax.f32 %v3547, %v3471
        %v3550 = vmax.f32 %v3548, %v3477
        %v3551 = vmax.f32 %v3549, %v3483
        %v3552 = vmax.f32 %v3550, %v3489
        %v3553 = vmax.f32 %v3551, %v3495
        %v3554 = vmax.f32 %v3552, %v3501
        %v3555 = vmax.f32 %v3553, %v3507
        %v3556 = vmax.f32 %v3554, %v3513
        %v3557 = vmax.f32 %v3555, %v3519
        %v3558 = vmax.f32 %v3556, %v3525
        %v3559 = vmax.f32 %v3557, %v3558
        %v3560 = vrot.slane %v3559, 4
        %v3561 = vmax.f32 %v3559, %v3560
        %v3562 = vrot.slane %v3561, 2
        %v3563 = vmax.f32 %v3561, %v3562
        %v3564 = vrot.slane %v3563, 1
        %v3565 = vmax.f32 %v3563, %v3564
        %v3566 = vmax.f32 %v3341, %v3353
        %v3567 = vmax.f32 %v3347, %v3359
        %v3568 = vmax.f32 %v3566, %v3365
        %v3569 = vmax.f32 %v3567, %v3371
        %v3570 = vmax.f32 %v3568, %v3377
        %v3571 = vmax.f32 %v3569, %v3383
        %v3572 = vmax.f32 %v3570, %v3389
        %v3573 = vmax.f32 %v3571, %v3395
        %v3574 = vmax.f32 %v3572, %v3401
        %v3575 = vmax.f32 %v3573, %v3407
        %v3576 = vmax.f32 %v3574, %v3413
        %v3577 = vmax.f32 %v3575, %v3419
        %v3578 = vmax.f32 %v3576, %v3425
        %v3579 = vmax.f32 %v3577, %v3431
        %v3580 = vmax.f32 %v3578, %v3437
        %v3581 = vmax.f32 %v3579, %v3443
        %v3582 = vmax.f32 %v3580, %v3449
        %v3583 = vmax.f32 %v3581, %v3455
        %v3584 = vmax.f32 %v3582, %v3461
        %v3585 = vmax.f32 %v3583, %v3467
        %v3586 = vmax.f32 %v3584, %v3473
        %v3587 = vmax.f32 %v3585, %v3479
        %v3588 = vmax.f32 %v3586, %v3485
        %v3589 = vmax.f32 %v3587, %v3491
        %v3590 = vmax.f32 %v3588, %v3497
        %v3591 = vmax.f32 %v3589, %v3503
        %v3592 = vmax.f32 %v3590, %v3509
        %v3593 = vmax.f32 %v3591, %v3515
        %v3594 = vmax.f32 %v3592, %v3521
        %v3595 = vmax.f32 %v3593, %v3527
        %v3596 = vmax.f32 %v3594, %v3595
        %v3597 = vrot.slane %v3596, 4
        %v3598 = vmax.f32 %v3596, %v3597
        %v3599 = vrot.slane %v3598, 2
        %v3600 = vmax.f32 %v3598, %v3599
        %v3601 = vrot.slane %v3600, 1
        %v3602 = vmax.f32 %v3600, %v3601
        %v3603 = vsub.f32 %v3339, %v3565
        %v3604 = vsub.f32 %v3341, %v3602
        %v3605 = vsub.f32 %v3345, %v3565
        %v3606 = vsub.f32 %v3347, %v3602
        %v3607 = vsub.f32 %v3351, %v3565
        %v3608 = vsub.f32 %v3353, %v3602
        %v3609 = vsub.f32 %v3357, %v3565
        %v3610 = vsub.f32 %v3359, %v3602
        %v3611 = vsub.f32 %v3363, %v3565
        %v3612 = vsub.f32 %v3365, %v3602
        %v3613 = vsub.f32 %v3369, %v3565
        %v3614 = vsub.f32 %v3371, %v3602
        %v3615 = vsub.f32 %v3375, %v3565
        %v3616 = vsub.f32 %v3377, %v3602
        %v3617 = vsub.f32 %v3381, %v3565
        %v3618 = vsub.f32 %v3383, %v3602
        %v3619 = vsub.f32 %v3387, %v3565
        %v3620 = vsub.f32 %v3389, %v3602
        %v3621 = vsub.f32 %v3393, %v3565
        %v3622 = vsub.f32 %v3395, %v3602
        %v3623 = vsub.f32 %v3399, %v3565
        %v3624 = vsub.f32 %v3401, %v3602
        %v3625 = vsub.f32 %v3405, %v3565
        %v3626 = vsub.f32 %v3407, %v3602
        %v3627 = vsub.f32 %v3411, %v3565
        %v3628 = vsub.f32 %v3413, %v3602
        %v3629 = vsub.f32 %v3417, %v3565
        %v3630 = vsub.f32 %v3419, %v3602
        %v3631 = vsub.f32 %v3423, %v3565
        %v3632 = vsub.f32 %v3425, %v3602
        %v3633 = vsub.f32 %v3429, %v3565
        %v3634 = vsub.f32 %v3431, %v3602
        %v3635 = vsub.f32 %v3435, %v3565
        %v3636 = vsub.f32 %v3437, %v3602
        %v3637 = vsub.f32 %v3441, %v3565
        %v3638 = vsub.f32 %v3443, %v3602
        %v3639 = vsub.f32 %v3447, %v3565
        %v3640 = vsub.f32 %v3449, %v3602
        %v3641 = vsub.f32 %v3453, %v3565
        %v3642 = vsub.f32 %v3455, %v3602
        %v3643 = vsub.f32 %v3459, %v3565
        %v3644 = vsub.f32 %v3461, %v3602
        %v3645 = vsub.f32 %v3465, %v3565
        %v3646 = vsub.f32 %v3467, %v3602
        %v3647 = vsub.f32 %v3471, %v3565
        %v3648 = vsub.f32 %v3473, %v3602
        %v3649 = vsub.f32 %v3477, %v3565
        %v3650 = vsub.f32 %v3479, %v3602
        %v3651 = vsub.f32 %v3483, %v3565
        %v3652 = vsub.f32 %v3485, %v3602
        %v3653 = vsub.f32 %v3489, %v3565
        %v3654 = vsub.f32 %v3491, %v3602
        %v3655 = vsub.f32 %v3495, %v3565
        %v3656 = vsub.f32 %v3497, %v3602
        %v3657 = vsub.f32 %v3501, %v3565
        %v3658 = vsub.f32 %v3503, %v3602
        %v3659 = vsub.f32 %v3507, %v3565
        %v3660 = vsub.f32 %v3509, %v3602
        %v3661 = vsub.f32 %v3513, %v3565
        %v3662 = vsub.f32 %v3515, %v3602
        %v3663 = vsub.f32 %v3519, %v3565
        %v3664 = vsub.f32 %v3521, %v3602
        %v3665 = vsub.f32 %v3525, %v3565
        %v3666 = vsub.f32 %v3527, %v3602
        %v3667 = vmul.f32 %v3603, 1.442695
        %v3668 = vpow.pop %v3667
        %v3669 = vmul.f32 %v3604, 1.442695
        %v3670 = vpow.pop %v3669
        %v3671 = vmul.f32 %v3605, 1.442695
        %v3672 = vpow.pop %v3671
        %v3673 = vmul.f32 %v3606, 1.442695
        %v3674 = vpow.pop %v3673
        %v3675 = vmul.f32 %v3607, 1.442695
        %v3676 = vpow.pop %v3675
        %v3677 = vmul.f32 %v3608, 1.442695
        %v3678 = vpow.pop %v3677
        %v3679 = vmul.f32 %v3609, 1.442695
        %v3680 = vpow.pop %v3679
        %v3681 = vmul.f32 %v3610, 1.442695
        %v3682 = vpow.pop %v3681
        %v3683 = vmul.f32 %v3611, 1.442695
        %v3684 = vpow.pop %v3683
        %v3685 = vmul.f32 %v3612, 1.442695
        %v3686 = vpow.pop %v3685
        %v3687 = vmul.f32 %v3613, 1.442695
        %v3688 = vpow.pop %v3687
        %v3689 = vmul.f32 %v3614, 1.442695
        %v3690 = vpow.pop %v3689
        %v3691 = vmul.f32 %v3615, 1.442695
        %v3692 = vpow.pop %v3691
        %v3693 = vmul.f32 %v3616, 1.442695
        %v3694 = vpow.pop %v3693
        %v3695 = vmul.f32 %v3617, 1.442695
        %v3696 = vpow.pop %v3695
        %v3697 = vmul.f32 %v3618, 1.442695
        %v3698 = vpow.pop %v3697
        %v3699 = vmul.f32 %v3619, 1.442695
        %v3700 = vpow.pop %v3699
        %v3701 = vmul.f32 %v3620, 1.442695
        %v3702 = vpow.pop %v3701
        %v3703 = vmul.f32 %v3621, 1.442695
        %v3704 = vpow.pop %v3703
        %v3705 = vmul.f32 %v3622, 1.442695
        %v3706 = vpow.pop %v3705
        %v3707 = vmul.f32 %v3623, 1.442695
        %v3708 = vpow.pop %v3707
        %v3709 = vmul.f32 %v3624, 1.442695
        %v3710 = vpow.pop %v3709
        %v3711 = vmul.f32 %v3625, 1.442695
        %v3712 = vpow.pop %v3711
        %v3713 = vmul.f32 %v3626, 1.442695
        %v3714 = vpow.pop %v3713
        %v3715 = vmul.f32 %v3627, 1.442695
        %v3716 = vpow.pop %v3715
        %v3717 = vmul.f32 %v3628, 1.442695
        %v3718 = vpow.pop %v3717
        %v3719 = vmul.f32 %v3629, 1.442695
        %v3720 = vpow.pop %v3719
        %v3721 = vmul.f32 %v3630, 1.442695
        %v3722 = vpow.pop %v3721
        %v3723 = vmul.f32 %v3631, 1.442695
        %v3724 = vpow.pop %v3723
        %v3725 = vmul.f32 %v3632, 1.442695
        %v3726 = vpow.pop %v3725
        %v3727 = vmul.f32 %v3633, 1.442695
        %v3728 = vpow.pop %v3727
        %v3729 = vmul.f32 %v3634, 1.442695
        %v3730 = vpow.pop %v3729
        %v3731 = vmul.f32 %v3635, 1.442695
        %v3732 = vpow.pop %v3731
        %v3733 = vmul.f32 %v3636, 1.442695
        %v3734 = vpow.pop %v3733
        %v3735 = vmul.f32 %v3637, 1.442695
        %v3736 = vpow.pop %v3735
        %v3737 = vmul.f32 %v3638, 1.442695
        %v3738 = vpow.pop %v3737
        %v3739 = vmul.f32 %v3639, 1.442695
        %v3740 = vpow.pop %v3739
        %v3741 = vmul.f32 %v3640, 1.442695
        %v3742 = vpow.pop %v3741
        %v3743 = vmul.f32 %v3641, 1.442695
        %v3744 = vpow.pop %v3743
        %v3745 = vmul.f32 %v3642, 1.442695
        %v3746 = vpow.pop %v3745
        %v3747 = vmul.f32 %v3643, 1.442695
        %v3748 = vpow.pop %v3747
        %v3749 = vmul.f32 %v3644, 1.442695
        %v3750 = vpow.pop %v3749
        %v3751 = vmul.f32 %v3645, 1.442695
        %v3752 = vpow.pop %v3751
        %v3753 = vmul.f32 %v3646, 1.442695
        %v3754 = vpow.pop %v3753
        %v3755 = vmul.f32 %v3647, 1.442695
        %v3756 = vpow.pop %v3755
        %v3757 = vmul.f32 %v3648, 1.442695
        %v3758 = vpow.pop %v3757
        %v3759 = vmul.f32 %v3649, 1.442695
        %v3760 = vpow.pop %v3759
        %v3761 = vmul.f32 %v3650, 1.442695
        %v3762 = vpow.pop %v3761
        %v3763 = vmul.f32 %v3651, 1.442695
        %v3764 = vpow.pop %v3763
        %v3765 = vmul.f32 %v3652, 1.442695
        %v3766 = vpow.pop %v3765
        %v3767 = vmul.f32 %v3653, 1.442695
        %v3768 = vpow.pop %v3767
        %v3769 = vmul.f32 %v3654, 1.442695
        %v3770 = vpow.pop %v3769
        %v3771 = vmul.f32 %v3655, 1.442695
        %v3772 = vpow.pop %v3771
        %v3773 = vmul.f32 %v3656, 1.442695
        %v3774 = vpow.pop %v3773
        %v3775 = vmul.f32 %v3657, 1.442695
        %v3776 = vpow.pop %v3775
        %v3777 = vmul.f32 %v3658, 1.442695
        %v3778 = vpow.pop %v3777
        %v3779 = vmul.f32 %v3659, 1.442695
        %v3780 = vpow.pop %v3779
        %v3781 = vmul.f32 %v3660, 1.442695
        %v3782 = vpow.pop %v3781
        %v3783 = vmul.f32 %v3661, 1.442695
        %v3784 = vpow.pop %v3783
        %v3785 = vmul.f32 %v3662, 1.442695
        %v3786 = vpow.pop %v3785
        %v3787 = vmul.f32 %v3663, 1.442695
        %v3788 = vpow.pop %v3787
        %v3789 = vmul.f32 %v3664, 1.442695
        %v3790 = vpow.pop %v3789
        %v3791 = vmul.f32 %v3665, 1.442695
        %v3792 = vpow.pop %v3791
        %v3793 = vmul.f32 %v3666, 1.442695
        %v3794 = vpow.pop %v3793
        %v3795 = vadd.f32 %v3668, %v3672
        %v3796 = vadd.f32 %v3795, %v3676
        %v3797 = vadd.f32 %v3796, %v3680
        %v3798 = vadd.f32 %v3797, %v3684
        %v3799 = vadd.f32 %v3798, %v3688
        %v3800 = vadd.f32 %v3799, %v3692
        %v3801 = vadd.f32 %v3800, %v3696
        %v3802 = vadd.f32 %v3801, %v3700
        %v3803 = vadd.f32 %v3802, %v3704
        %v3804 = vadd.f32 %v3803, %v3708
        %v3805 = vadd.f32 %v3804, %v3712
        %v3806 = vadd.f32 %v3805, %v3716
        %v3807 = vadd.f32 %v3806, %v3720
        %v3808 = vadd.f32 %v3807, %v3724
        %v3809 = vadd.f32 %v3808, %v3728
        %v3810 = vadd.f32 %v3809, %v3732
        %v3811 = vadd.f32 %v3810, %v3736
        %v3812 = vadd.f32 %v3811, %v3740
        %v3813 = vadd.f32 %v3812, %v3744
        %v3814 = vadd.f32 %v3813, %v3748
        %v3815 = vadd.f32 %v3814, %v3752
        %v3816 = vadd.f32 %v3815, %v3756
        %v3817 = vadd.f32 %v3816, %v3760
        %v3818 = vadd.f32 %v3817, %v3764
        %v3819 = vadd.f32 %v3818, %v3768
        %v3820 = vadd.f32 %v3819, %v3772
        %v3821 = vadd.f32 %v3820, %v3776
        %v3822 = vadd.f32 %v3821, %v3780
        %v3823 = vadd.f32 %v3822, %v3784
        %v3824 = vadd.f32 %v3823, %v3788
        %v3825 = vadd.f32 %v3824, %v3792
        %v3826 = vrot.slane %v3825, 4
        %v3827 = vadd.f32 %v3825, %v3826
        %v3828 = vrot.slane %v3827, 2
        %v3829 = vadd.f32 %v3827, %v3828
        %v3830 = vrot.slane %v3829, 1
        %v3831 = vadd.f32 %v3829, %v3830
        %v3832 = vadd.f32 %v3670, %v3674
        %v3833 = vadd.f32 %v3832, %v3678
        %v3834 = vadd.f32 %v3833, %v3682
        %v3835 = vadd.f32 %v3834, %v3686
        %v3836 = vadd.f32 %v3835, %v3690
        %v3837 = vadd.f32 %v3836, %v3694
        %v3838 = vadd.f32 %v3837, %v3698
        %v3839 = vadd.f32 %v3838, %v3702
        %v3840 = vadd.f32 %v3839, %v3706
        %v3841 = vadd.f32 %v3840, %v3710
        %v3842 = vadd.f32 %v3841, %v3714
        %v3843 = vadd.f32 %v3842, %v3718
        %v3844 = vadd.f32 %v3843, %v3722
        %v3845 = vadd.f32 %v3844, %v3726
        %v3846 = vadd.f32 %v3845, %v3730
        %v3847 = vadd.f32 %v3846, %v3734
        %v3848 = vadd.f32 %v3847, %v3738
        %v3849 = vadd.f32 %v3848, %v3742
        %v3850 = vadd.f32 %v3849, %v3746
        %v3851 = vadd.f32 %v3850, %v3750
        %v3852 = vadd.f32 %v3851, %v3754
        %v3853 = vadd.f32 %v3852, %v3758
        %v3854 = vadd.f32 %v3853, %v3762
        %v3855 = vadd.f32 %v3854, %v3766
        %v3856 = vadd.f32 %v3855, %v3770
        %v3857 = vadd.f32 %v3856, %v3774
        %v3858 = vadd.f32 %v3857, %v3778
        %v3859 = vadd.f32 %v3858, %v3782
        %v3860 = vadd.f32 %v3859, %v3786
        %v3861 = vadd.f32 %v3860, %v3790
        %v3862 = vadd.f32 %v3861, %v3794
        %v3863 = vrot.slane %v3862, 4
        %v3864 = vadd.f32 %v3862, %v3863
        %v3865 = vrot.slane %v3864, 2
        %v3866 = vadd.f32 %v3864, %v3865
        %v3867 = vrot.slane %v3866, 1
        %v3868 = vadd.f32 %v3866, %v3867
        %v3869 = vrcp.pop %v3831
        %v3870 = vrcp.pop %v3868
        %v3871 = vmul.f32 %v3668, %v3869
        %v3872 = vmul.f32 %v3670, %v3870
        %v3873 = vmul.f32 %v3672, %v3869
        %v3874 = vmul.f32 %v3674, %v3870
        %v3875 = vmul.f32 %v3676, %v3869
        %v3876 = vmul.f32 %v3678, %v3870
        %v3877 = vmul.f32 %v3680, %v3869
        %v3878 = vmul.f32 %v3682, %v3870
        %v3879 = vmul.f32 %v3684, %v3869
        %v3880 = vmul.f32 %v3686, %v3870
        %v3881 = vmul.f32 %v3688, %v3869
        %v3882 = vmul.f32 %v3690, %v3870
        %v3883 = vmul.f32 %v3692, %v3869
        %v3884 = vmul.f32 %v3694, %v3870
        %v3885 = vmul.f32 %v3696, %v3869
        %v3886 = vmul.f32 %v3698, %v3870
        %v3887 = vmul.f32 %v3700, %v3869
        %v3888 = vmul.f32 %v3702, %v3870
        %v3889 = vmul.f32 %v3704, %v3869
        %v3890 = vmul.f32 %v3706, %v3870
        %v3891 = vmul.f32 %v3708, %v3869
        %v3892 = vmul.f32 %v3710, %v3870
        %v3893 = vmul.f32 %v3712, %v3869
        %v3894 = vmul.f32 %v3714, %v3870
        %v3895 = vmul.f32 %v3716, %v3869
        %v3896 = vmul.f32 %v3718, %v3870
        %v3897 = vmul.f32 %v3720, %v3869
        %v3898 = vmul.f32 %v3722, %v3870
        %v3899 = vmul.f32 %v3724, %v3869
        %v3900 = vmul.f32 %v3726, %v3870
        %v3901 = vmul.f32 %v3728, %v3869
        %v3902 = vmul.f32 %v3730, %v3870
        %v3903 = vmul.f32 %v3732, %v3869
        %v3904 = vmul.f32 %v3734, %v3870
        %v3905 = vmul.f32 %v3736, %v3869
        %v3906 = vmul.f32 %v3738, %v3870
        %v3907 = vmul.f32 %v3740, %v3869
        %v3908 = vmul.f32 %v3742, %v3870
        %v3909 = vmul.f32 %v3744, %v3869
        %v3910 = vmul.f32 %v3746, %v3870
        %v3911 = vmul.f32 %v3748, %v3869
        %v3912 = vmul.f32 %v3750, %v3870
        %v3913 = vmul.f32 %v3752, %v3869
        %v3914 = vmul.f32 %v3754, %v3870
        %v3915 = vmul.f32 %v3756, %v3869
        %v3916 = vmul.f32 %v3758, %v3870
        %v3917 = vmul.f32 %v3760, %v3869
        %v3918 = vmul.f32 %v3762, %v3870
        %v3919 = vmul.f32 %v3764, %v3869
        %v3920 = vmul.f32 %v3766, %v3870
        %v3921 = vmul.f32 %v3768, %v3869
        %v3922 = vmul.f32 %v3770, %v3870
        %v3923 = vmul.f32 %v3772, %v3869
        %v3924 = vmul.f32 %v3774, %v3870
        %v3925 = vmul.f32 %v3776, %v3869
        %v3926 = vmul.f32 %v3778, %v3870
        %v3927 = vmul.f32 %v3780, %v3869
        %v3928 = vmul.f32 %v3782, %v3870
        %v3929 = vmul.f32 %v3784, %v3869
        %v3930 = vmul.f32 %v3786, %v3870
        %v3931 = vmul.f32 %v3788, %v3869
        %v3932 = vmul.f32 %v3790, %v3870
        %v3933 = vmul.f32 %v3792, %v3869
        %v3934 = vmul.f32 %v3794, %v3870
        %v3937 = vrot.slane %v362, 4
        %v3938 = vrot.slane %v364, 4
        %3941 = vmatprep.subr.mxu0 %v3902
        %3942 = vmatpush1.msra.mxu0 %v3901
        %3943 = vmatprep.subr.mxu0 %v3900
        %3944 = vmatpush1.msra.mxu0 %v3899
        %3945 = vmatprep.subr.mxu0 %v3898
        %3946 = vmatpush1.msra.mxu0 %v3897
        %3947 = vmatprep.subr.mxu0 %v3896
        %3948 = vmatpush1.msra.mxu0 %v3895
        %3949 = vmatprep.subr.mxu0 %v3894
        %3950 = vmatpush1.msra.mxu0 %v3893
        %3951 = vmatprep.subr.mxu0 %v3892
        %3952 = vmatpush1.msra.mxu0 %v3891
        %3953 = vmatprep.subr.mxu0 %v3890
        %3954 = vmatpush1.msra.mxu0 %v3889
        %3955 = vmatprep.subr.mxu0 %v3888
        %3956 = vmatpush1.msra.mxu0 %v3887
        %3957 = vmatprep.subr.mxu0 %v3886
        %3958 = vmatpush1.msra.mxu0 %v3885
        %3959 = vmatprep.subr.mxu0 %v3884
        %3960 = vmatpush1.msra.mxu0 %v3883
        %3961 = vmatprep.subr.mxu0 %v3882
        %3962 = vmatpush1.msra.mxu0 %v3881
        %3963 = vmatprep.subr.mxu0 %v3880
        %3964 = vmatpush1.msra.mxu0 %v3879
        %3965 = vmatprep.subr.mxu0 %v3878
        %3966 = vmatpush1.msra.mxu0 %v3877
        %3967 = vmatprep.subr.mxu0 %v3876
        %3968 = vmatpush1.msra.mxu0 %v3875
        %3969 = vmatprep.subr.mxu0 %v3874
        %3970 = vmatpush1.msra.mxu0 %v3873
        %3971 = vmatprep.subr.mxu0 %v3872
        %3972 = vmatpush1.msra.mxu0 %v3871
        %3973 = vmatprep.subr.mxu0 %v3934
        %3974 = vmatpush2.msra.mxu0 %v3933
        %3975 = vmatprep.subr.mxu0 %v3932
        %3976 = vmatpush2.msra.mxu0 %v3931
        %3977 = vmatprep.subr.mxu0 %v3930
        %3978 = vmatpush2.msra.mxu0 %v3929
        %3979 = vmatprep.subr.mxu0 %v3928
        %3980 = vmatpush2.msra.mxu0 %v3927
        %3981 = vmatprep.subr.mxu0 %v3926
        %3982 = vmatpush2.msra.mxu0 %v3925
        %3983 = vmatprep.subr.mxu0 %v3924
        %3984 = vmatpush2.msra.mxu0 %v3923
        %3985 = vmatprep.subr.mxu0 %v3922
        %3986 = vmatpush2.msra.mxu0 %v3921
        %3987 = vmatprep.subr.mxu0 %v3920
        %3988 = vmatpush2.msra.mxu0 %v3919
        %3989 = vmatprep.subr.mxu0 %v3918
        %3990 = vmatpush2.msra.mxu0 %v3917
        %3991 = vmatprep.subr.mxu0 %v3916
        %3992 = vmatpush2.msra.mxu0 %v3915
        %3993 = vmatprep.subr.mxu0 %v3914
        %3994 = vmatpush2.msra.mxu0 %v3913
        %3995 = vmatprep.subr.mxu0 %v3912
        %3996 = vmatpush2.msra.mxu0 %v3911
        %3997 = vmatprep.subr.mxu0 %v3910
        %3998 = vmatpush2.msra.mxu0 %v3909
        %3999 = vmatprep.subr.mxu0 %v3908
        %4000 = vmatpush2.msra.mxu0 %v3907
        %4001 = vmatprep.subr.mxu0 %v3906
        %4002 = vmatpush2.msra.mxu0 %v3905
        %4003 = vmatprep.subr.mxu0 %v3904
        %4004 = vmatpush2.msra.mxu0 %v3903
        %4005 = vmatprep.mubr.f32.mxu0 %v3938
        %4006 = vmatmul.mubr.f32.gmra.mxu0 %v3937
        %v4007 = vpop.f32.mrf.mxu0
        %v4008 = vadd.f32 0.0, %v4007
        %v4009 = vpop.f32.mrf.mxu0
        %v4010 = vadd.f32 0.0, %v4009
        %4011 = vdwg.mxu0
        %4012 = vxpose.xlu0.b32.start [1/16] %v344, 128
        %4013 = vxpose.xlu0.b32.cont [2/16] 0.0, 128
        %4014 = vxpose.xlu0.b32.cont [3/16] 0.0, 128
        %4015 = vxpose.xlu0.b32.cont [4/16] 0.0, 128
        %4016 = vxpose.xlu0.b32.cont [5/16] 0.0, 128
        %4017 = vxpose.xlu0.b32.cont [6/16] 0.0, 128
        %4018 = vxpose.xlu0.b32.cont [7/16] 0.0, 128
        %4019 = vxpose.xlu0.b32.cont [8/16] 0.0, 128
        %4020 = vxpose.xlu0.b32.cont [9/16] 0.0, 128
        %4021 = vxpose.xlu0.b32.cont [10/16] 0.0, 128
        %4022 = vxpose.xlu0.b32.cont [11/16] 0.0, 128
        %4023 = vxpose.xlu0.b32.cont [12/16] 0.0, 128
        %4024 = vxpose.xlu0.b32.cont [13/16] 0.0, 128
        %4025 = vxpose.xlu0.b32.cont [14/16] 0.0, 128
        %4026 = vxpose.xlu0.b32.cont [15/16] 0.0, 128
        %4027 = vxpose.xlu0.b32.end [16/16] 0.0, 128
        %v4028 = vpop.trf.xlu0
        %v4029 = vpop.trf.xlu0
        %v4030 = vpop.trf.xlu0
        %v4031 = vpop.trf.xlu0
        %v4032 = vpop.trf.xlu0
        %v4033 = vpop.trf.xlu0
        %v4034 = vpop.trf.xlu0
        %v4035 = vpop.trf.xlu0
        %v4036 = vpop.trf.xlu0
        %v4037 = vpop.trf.xlu0
        %v4038 = vpop.trf.xlu0
        %v4039 = vpop.trf.xlu0
        %v4040 = vpop.trf.xlu0
        %v4041 = vpop.trf.xlu0
        %v4042 = vpop.trf.xlu0
        %v4043 = vpop.trf.xlu0
        %4044 = vxpose.xlu0.b32.start [1/16] %v346, 128
        %4045 = vxpose.xlu0.b32.cont [2/16] 0.0, 128
        %4046 = vxpose.xlu0.b32.cont [3/16] 0.0, 128
        %4047 = vxpose.xlu0.b32.cont [4/16] 0.0, 128
        %4048 = vxpose.xlu0.b32.cont [5/16] 0.0, 128
        %4049 = vxpose.xlu0.b32.cont [6/16] 0.0, 128
        %4050 = vxpose.xlu0.b32.cont [7/16] 0.0, 128
        %4051 = vxpose.xlu0.b32.cont [8/16] 0.0, 128
        %4052 = vxpose.xlu0.b32.cont [9/16] 0.0, 128
        %4053 = vxpose.xlu0.b32.cont [10/16] 0.0, 128
        %4054 = vxpose.xlu0.b32.cont [11/16] 0.0, 128
        %4055 = vxpose.xlu0.b32.cont [12/16] 0.0, 128
        %4056 = vxpose.xlu0.b32.cont [13/16] 0.0, 128
        %4057 = vxpose.xlu0.b32.cont [14/16] 0.0, 128
        %4058 = vxpose.xlu0.b32.cont [15/16] 0.0, 128
        %4059 = vxpose.xlu0.b32.end [16/16] 0.0, 128
        %v4060 = vpop.trf.xlu0
        %v4061 = vpop.trf.xlu0
        %v4062 = vpop.trf.xlu0
        %v4063 = vpop.trf.xlu0
        %v4064 = vpop.trf.xlu0
        %v4065 = vpop.trf.xlu0
        %v4066 = vpop.trf.xlu0
        %v4067 = vpop.trf.xlu0
        %v4068 = vpop.trf.xlu0
        %v4069 = vpop.trf.xlu0
        %v4070 = vpop.trf.xlu0
        %v4071 = vpop.trf.xlu0
        %v4072 = vpop.trf.xlu0
        %v4073 = vpop.trf.xlu0
        %v4074 = vpop.trf.xlu0
        %v4075 = vpop.trf.xlu0
        %v4077 = vsel %vm450, %v4028, 0
        %v4080 = vsel %vm450, %v4029, 0
        %v4083 = vsel %vm450, %v4030, 0
        %v4086 = vsel %vm450, %v4031, 0
        %v4089 = vsel %vm450, %v4032, 0
        %v4092 = vsel %vm450, %v4033, 0
        %v4095 = vsel %vm450, %v4034, 0
        %v4098 = vsel %vm450, %v4035, 0
        %v4101 = vsel %vm450, %v4036, 0
        %v4104 = vsel %vm450, %v4037, 0
        %v4107 = vsel %vm450, %v4038, 0
        %v4110 = vsel %vm450, %v4039, 0
        %v4113 = vsel %vm450, %v4040, 0
        %v4116 = vsel %vm450, %v4041, 0
        %v4119 = vsel %vm450, %v4042, 0
        %v4122 = vsel %vm450, %v4043, 0
        %v4125 = vsel %vm450, %v4060, 0
        %v4128 = vsel %vm450, %v4061, 0
        %v4131 = vsel %vm450, %v4062, 0
        %v4134 = vsel %vm450, %v4063, 0
        %v4137 = vsel %vm450, %v4064, 0
        %v4140 = vsel %vm450, %v4065, 0
        %v4143 = vsel %vm450, %v4066, 0
        %v4146 = vsel %vm450, %v4067, 0
        %v4149 = vsel %vm450, %v4068, 0
        %v4152 = vsel %vm450, %v4069, 0
        %v4155 = vsel %vm450, %v4070, 0
        %v4158 = vsel %vm450, %v4071, 0
        %v4161 = vsel %vm450, %v4072, 0
        %v4164 = vsel %vm450, %v4073, 0
        %v4167 = vsel %vm450, %v4074, 0
        %v4170 = vsel %vm450, %v4075, 0
        %v4173 = vsel %vm547, %v382, 0
        %v4176 = vsel %vm547, %v383, 0
        %4178 = vmatprep.subr.mxu0 0.0
        %4179 = vmatpush1.msra.mxu0 0.0
        %4180 = vmatprep.subr.mxu0 0.0
        %4181 = vmatpush1.msra.mxu0 0.0
        %4182 = vmatprep.subr.mxu0 0.0
        %4183 = vmatpush1.msra.mxu0 0.0
        %4184 = vmatprep.subr.mxu0 0.0
        %4185 = vmatpush1.msra.mxu0 0.0
        %4186 = vmatprep.subr.mxu0 0.0
        %4187 = vmatpush1.msra.mxu0 0.0
        %4188 = vmatprep.subr.mxu0 0.0
        %4189 = vmatpush1.msra.mxu0 0.0
        %4190 = vmatprep.subr.mxu0 0.0
        %4191 = vmatpush1.msra.mxu0 0.0
        %4192 = vmatprep.subr.mxu0 0.0
        %4193 = vmatpush1.msra.mxu0 0.0
        %4194 = vmatprep.subr.mxu0 0.0
        %4195 = vmatpush1.msra.mxu0 0.0
        %4196 = vmatprep.subr.mxu0 0.0
        %4197 = vmatpush1.msra.mxu0 0.0
        %4198 = vmatprep.subr.mxu0 0.0
        %4199 = vmatpush1.msra.mxu0 0.0
        %4200 = vmatprep.subr.mxu0 0.0
        %4201 = vmatpush1.msra.mxu0 0.0
        %4202 = vmatprep.subr.mxu0 0.0
        %4203 = vmatpush1.msra.mxu0 0.0
        %4204 = vmatprep.subr.mxu0 0.0
        %4205 = vmatpush1.msra.mxu0 0.0
        %4206 = vmatprep.subr.mxu0 0.0
        %4207 = vmatpush1.msra.mxu0 0.0
        %4208 = vmatprep.subr.mxu0 %v4176
        %4209 = vmatpush1.msra.mxu0 %v4173
        %4210 = vmatprep.subr.mxu0 0.0
        %4211 = vmatpush2.msra.mxu0 0.0
        %4212 = vmatprep.subr.mxu0 0.0
        %4213 = vmatpush2.msra.mxu0 0.0
        %4214 = vmatprep.subr.mxu0 0.0
        %4215 = vmatpush2.msra.mxu0 0.0
        %4216 = vmatprep.subr.mxu0 0.0
        %4217 = vmatpush2.msra.mxu0 0.0
        %4218 = vmatprep.subr.mxu0 0.0
        %4219 = vmatpush2.msra.mxu0 0.0
        %4220 = vmatprep.subr.mxu0 0.0
        %4221 = vmatpush2.msra.mxu0 0.0
        %4222 = vmatprep.subr.mxu0 0.0
        %4223 = vmatpush2.msra.mxu0 0.0
        %4224 = vmatprep.subr.mxu0 0.0
        %4225 = vmatpush2.msra.mxu0 0.0
        %4226 = vmatprep.subr.mxu0 0.0
        %4227 = vmatpush2.msra.mxu0 0.0
        %4228 = vmatprep.subr.mxu0 0.0
        %4229 = vmatpush2.msra.mxu0 0.0
        %4230 = vmatprep.subr.mxu0 0.0
        %4231 = vmatpush2.msra.mxu0 0.0
        %4232 = vmatprep.subr.mxu0 0.0
        %4233 = vmatpush2.msra.mxu0 0.0
        %4234 = vmatprep.subr.mxu0 0.0
        %4235 = vmatpush2.msra.mxu0 0.0
        %4236 = vmatprep.subr.mxu0 0.0
        %4237 = vmatpush2.msra.mxu0 0.0
        %4238 = vmatprep.subr.mxu0 0.0
        %4239 = vmatpush2.msra.mxu0 0.0
        %4240 = vmatprep.subr.mxu0 0.0
        %4241 = vmatpush2.msra.mxu0 0.0
        %4242 = vmatprep.mubr.f32.mxu0 0.0
        %4243 = vmatmul.mubr.f32.gmra.mxu0 %v4077
        %v4244 = vpop.f32.mrf.mxu0
        %v4245 = vadd.f32 0.0, %v4244
        %v4246 = vpop.f32.mrf.mxu0
        %v4247 = vadd.f32 0.0, %v4246
        %4248 = vmatprep.mubr.f32.mxu0 0.0
        %4249 = vmatmul.mubr.f32.gmra.mxu0 %v4080
        %v4250 = vpop.f32.mrf.mxu0
        %v4251 = vadd.f32 0.0, %v4250
        %v4252 = vpop.f32.mrf.mxu0
        %v4253 = vadd.f32 0.0, %v4252
        %4254 = vmatprep.mubr.f32.mxu0 0.0
        %4255 = vmatmul.mubr.f32.gmra.mxu0 %v4083
        %v4256 = vpop.f32.mrf.mxu0
        %v4257 = vadd.f32 0.0, %v4256
        %v4258 = vpop.f32.mrf.mxu0
        %v4259 = vadd.f32 0.0, %v4258
        %4260 = vmatprep.mubr.f32.mxu0 0.0
        %4261 = vmatmul.mubr.f32.gmra.mxu0 %v4086
        %v4262 = vpop.f32.mrf.mxu0
        %v4263 = vadd.f32 0.0, %v4262
        %v4264 = vpop.f32.mrf.mxu0
        %v4265 = vadd.f32 0.0, %v4264
        %4266 = vmatprep.mubr.f32.mxu0 0.0
        %4267 = vmatmul.mubr.f32.gmra.mxu0 %v4089
        %v4268 = vpop.f32.mrf.mxu0
        %v4269 = vadd.f32 0.0, %v4268
        %v4270 = vpop.f32.mrf.mxu0
        %v4271 = vadd.f32 0.0, %v4270
        %4272 = vmatprep.mubr.f32.mxu0 0.0
        %4273 = vmatmul.mubr.f32.gmra.mxu0 %v4092
        %v4274 = vpop.f32.mrf.mxu0
        %v4275 = vadd.f32 0.0, %v4274
        %v4276 = vpop.f32.mrf.mxu0
        %v4277 = vadd.f32 0.0, %v4276
        %4278 = vmatprep.mubr.f32.mxu0 0.0
        %4279 = vmatmul.mubr.f32.gmra.mxu0 %v4095
        %v4280 = vpop.f32.mrf.mxu0
        %v4281 = vadd.f32 0.0, %v4280
        %v4282 = vpop.f32.mrf.mxu0
        %v4283 = vadd.f32 0.0, %v4282
        %4284 = vmatprep.mubr.f32.mxu0 0.0
        %4285 = vmatmul.mubr.f32.gmra.mxu0 %v4098
        %v4286 = vpop.f32.mrf.mxu0
        %v4287 = vadd.f32 0.0, %v4286
        %v4288 = vpop.f32.mrf.mxu0
        %v4289 = vadd.f32 0.0, %v4288
        %4290 = vmatprep.mubr.f32.mxu0 0.0
        %4291 = vmatmul.mubr.f32.gmra.mxu0 %v4101
        %v4292 = vpop.f32.mrf.mxu0
        %v4293 = vadd.f32 0.0, %v4292
        %v4294 = vpop.f32.mrf.mxu0
        %v4295 = vadd.f32 0.0, %v4294
        %4296 = vmatprep.mubr.f32.mxu0 0.0
        %4297 = vmatmul.mubr.f32.gmra.mxu0 %v4104
        %v4298 = vpop.f32.mrf.mxu0
        %v4299 = vadd.f32 0.0, %v4298
        %v4300 = vpop.f32.mrf.mxu0
        %v4301 = vadd.f32 0.0, %v4300
        %4302 = vmatprep.mubr.f32.mxu0 0.0
        %4303 = vmatmul.mubr.f32.gmra.mxu0 %v4107
        %v4304 = vpop.f32.mrf.mxu0
        %v4305 = vadd.f32 0.0, %v4304
        %v4306 = vpop.f32.mrf.mxu0
        %v4307 = vadd.f32 0.0, %v4306
        %4308 = vmatprep.mubr.f32.mxu0 0.0
        %4309 = vmatmul.mubr.f32.gmra.mxu0 %v4110
        %v4310 = vpop.f32.mrf.mxu0
        %v4311 = vadd.f32 0.0, %v4310
        %v4312 = vpop.f32.mrf.mxu0
        %v4313 = vadd.f32 0.0, %v4312
        %4314 = vmatprep.mubr.f32.mxu0 0.0
        %4315 = vmatmul.mubr.f32.gmra.mxu0 %v4113
        %v4316 = vpop.f32.mrf.mxu0
        %v4317 = vadd.f32 0.0, %v4316
        %v4318 = vpop.f32.mrf.mxu0
        %v4319 = vadd.f32 0.0, %v4318
        %4320 = vmatprep.mubr.f32.mxu0 0.0
        %4321 = vmatmul.mubr.f32.gmra.mxu0 %v4116
        %v4322 = vpop.f32.mrf.mxu0
        %v4323 = vadd.f32 0.0, %v4322
        %v4324 = vpop.f32.mrf.mxu0
        %v4325 = vadd.f32 0.0, %v4324
        %4326 = vmatprep.mubr.f32.mxu0 0.0
        %4327 = vmatmul.mubr.f32.gmra.mxu0 %v4119
        %v4328 = vpop.f32.mrf.mxu0
        %v4329 = vadd.f32 0.0, %v4328
        %v4330 = vpop.f32.mrf.mxu0
        %v4331 = vadd.f32 0.0, %v4330
        %4332 = vmatprep.mubr.f32.mxu0 0.0
        %4333 = vmatmul.mubr.f32.gmra.mxu0 %v4122
        %v4334 = vpop.f32.mrf.mxu0
        %v4335 = vadd.f32 0.0, %v4334
        %v4336 = vpop.f32.mrf.mxu0
        %v4337 = vadd.f32 0.0, %v4336
        %4338 = vmatprep.mubr.f32.mxu0 0.0
        %4339 = vmatmul.mubr.f32.gmra.mxu0 %v4125
        %v4340 = vpop.f32.mrf.mxu0
        %v4341 = vadd.f32 0.0, %v4340
        %v4342 = vpop.f32.mrf.mxu0
        %v4343 = vadd.f32 0.0, %v4342
        %4344 = vmatprep.mubr.f32.mxu0 0.0
        %4345 = vmatmul.mubr.f32.gmra.mxu0 %v4128
        %v4346 = vpop.f32.mrf.mxu0
        %v4347 = vadd.f32 0.0, %v4346
        %v4348 = vpop.f32.mrf.mxu0
        %v4349 = vadd.f32 0.0, %v4348
        %4350 = vmatprep.mubr.f32.mxu0 0.0
        %4351 = vmatmul.mubr.f32.gmra.mxu0 %v4131
        %v4352 = vpop.f32.mrf.mxu0
        %v4353 = vadd.f32 0.0, %v4352
        %v4354 = vpop.f32.mrf.mxu0
        %v4355 = vadd.f32 0.0, %v4354
        %4356 = vmatprep.mubr.f32.mxu0 0.0
        %4357 = vmatmul.mubr.f32.gmra.mxu0 %v4134
        %v4358 = vpop.f32.mrf.mxu0
        %v4359 = vadd.f32 0.0, %v4358
        %v4360 = vpop.f32.mrf.mxu0
        %v4361 = vadd.f32 0.0, %v4360
        %4362 = vmatprep.mubr.f32.mxu0 0.0
        %4363 = vmatmul.mubr.f32.gmra.mxu0 %v4137
        %v4364 = vpop.f32.mrf.mxu0
        %v4365 = vadd.f32 0.0, %v4364
        %v4366 = vpop.f32.mrf.mxu0
        %v4367 = vadd.f32 0.0, %v4366
        %4368 = vmatprep.mubr.f32.mxu0 0.0
        %4369 = vmatmul.mubr.f32.gmra.mxu0 %v4140
        %v4370 = vpop.f32.mrf.mxu0
        %v4371 = vadd.f32 0.0, %v4370
        %v4372 = vpop.f32.mrf.mxu0
        %v4373 = vadd.f32 0.0, %v4372
        %4374 = vmatprep.mubr.f32.mxu0 0.0
        %4375 = vmatmul.mubr.f32.gmra.mxu0 %v4143
        %v4376 = vpop.f32.mrf.mxu0
        %v4377 = vadd.f32 0.0, %v4376
        %v4378 = vpop.f32.mrf.mxu0
        %v4379 = vadd.f32 0.0, %v4378
        %4380 = vmatprep.mubr.f32.mxu0 0.0
        %4381 = vmatmul.mubr.f32.gmra.mxu0 %v4146
        %v4382 = vpop.f32.mrf.mxu0
        %v4383 = vadd.f32 0.0, %v4382
        %v4384 = vpop.f32.mrf.mxu0
        %v4385 = vadd.f32 0.0, %v4384
        %4386 = vmatprep.mubr.f32.mxu0 0.0
        %4387 = vmatmul.mubr.f32.gmra.mxu0 %v4149
        %v4388 = vpop.f32.mrf.mxu0
        %v4389 = vadd.f32 0.0, %v4388
        %v4390 = vpop.f32.mrf.mxu0
        %v4391 = vadd.f32 0.0, %v4390
        %4392 = vmatprep.mubr.f32.mxu0 0.0
        %4393 = vmatmul.mubr.f32.gmra.mxu0 %v4152
        %v4394 = vpop.f32.mrf.mxu0
        %v4395 = vadd.f32 0.0, %v4394
        %v4396 = vpop.f32.mrf.mxu0
        %v4397 = vadd.f32 0.0, %v4396
        %4398 = vmatprep.mubr.f32.mxu0 0.0
        %4399 = vmatmul.mubr.f32.gmra.mxu0 %v4155
        %v4400 = vpop.f32.mrf.mxu0
        %v4401 = vadd.f32 0.0, %v4400
        %v4402 = vpop.f32.mrf.mxu0
        %v4403 = vadd.f32 0.0, %v4402
        %4404 = vmatprep.mubr.f32.mxu0 0.0
        %4405 = vmatmul.mubr.f32.gmra.mxu0 %v4158
        %v4406 = vpop.f32.mrf.mxu0
        %v4407 = vadd.f32 0.0, %v4406
        %v4408 = vpop.f32.mrf.mxu0
        %v4409 = vadd.f32 0.0, %v4408
        %4410 = vmatprep.mubr.f32.mxu0 0.0
        %4411 = vmatmul.mubr.f32.gmra.mxu0 %v4161
        %v4412 = vpop.f32.mrf.mxu0
        %v4413 = vadd.f32 0.0, %v4412
        %v4414 = vpop.f32.mrf.mxu0
        %v4415 = vadd.f32 0.0, %v4414
        %4416 = vmatprep.mubr.f32.mxu0 0.0
        %4417 = vmatmul.mubr.f32.gmra.mxu0 %v4164
        %v4418 = vpop.f32.mrf.mxu0
        %v4419 = vadd.f32 0.0, %v4418
        %v4420 = vpop.f32.mrf.mxu0
        %v4421 = vadd.f32 0.0, %v4420
        %4422 = vmatprep.mubr.f32.mxu0 0.0
        %4423 = vmatmul.mubr.f32.gmra.mxu0 %v4167
        %v4424 = vpop.f32.mrf.mxu0
        %v4425 = vadd.f32 0.0, %v4424
        %v4426 = vpop.f32.mrf.mxu0
        %v4427 = vadd.f32 0.0, %v4426
        %4428 = vmatprep.mubr.f32.mxu0 0.0
        %4429 = vmatmul.mubr.f32.gmra.mxu0 %v4170
        %v4430 = vpop.f32.mrf.mxu0
        %v4431 = vadd.f32 0.0, %v4430
        %v4432 = vpop.f32.mrf.mxu0
        %v4433 = vadd.f32 0.0, %v4432
        %4434 = vdwg.mxu0
        %v4435 = vmax.f32 %v4245, %v4257
        %v4436 = vmax.f32 %v4251, %v4263
        %v4437 = vmax.f32 %v4435, %v4269
        %v4438 = vmax.f32 %v4436, %v4275
        %v4439 = vmax.f32 %v4437, %v4281
        %v4440 = vmax.f32 %v4438, %v4287
        %v4441 = vmax.f32 %v4439, %v4293
        %v4442 = vmax.f32 %v4440, %v4299
        %v4443 = vmax.f32 %v4441, %v4305
        %v4444 = vmax.f32 %v4442, %v4311
        %v4445 = vmax.f32 %v4443, %v4317
        %v4446 = vmax.f32 %v4444, %v4323
        %v4447 = vmax.f32 %v4445, %v4329
        %v4448 = vmax.f32 %v4446, %v4335
        %v4449 = vmax.f32 %v4447, %v4341
        %v4450 = vmax.f32 %v4448, %v4347
        %v4451 = vmax.f32 %v4449, %v4353
        %v4452 = vmax.f32 %v4450, %v4359
        %v4453 = vmax.f32 %v4451, %v4365
        %v4454 = vmax.f32 %v4452, %v4371
        %v4455 = vmax.f32 %v4453, %v4377
        %v4456 = vmax.f32 %v4454, %v4383
        %v4457 = vmax.f32 %v4455, %v4389
        %v4458 = vmax.f32 %v4456, %v4395
        %v4459 = vmax.f32 %v4457, %v4401
        %v4460 = vmax.f32 %v4458, %v4407
        %v4461 = vmax.f32 %v4459, %v4413
        %v4462 = vmax.f32 %v4460, %v4419
        %v4463 = vmax.f32 %v4461, %v4425
        %v4464 = vmax.f32 %v4462, %v4431
        %v4465 = vmax.f32 %v4463, %v4464
        %v4466 = vrot.slane %v4465, 4
        %v4467 = vmax.f32 %v4465, %v4466
        %v4468 = vrot.slane %v4467, 2
        %v4469 = vmax.f32 %v4467, %v4468
        %v4470 = vrot.slane %v4469, 1
        %v4471 = vmax.f32 %v4469, %v4470
        %v4472 = vmax.f32 %v4247, %v4259
        %v4473 = vmax.f32 %v4253, %v4265
        %v4474 = vmax.f32 %v4472, %v4271
        %v4475 = vmax.f32 %v4473, %v4277
        %v4476 = vmax.f32 %v4474, %v4283
        %v4477 = vmax.f32 %v4475, %v4289
        %v4478 = vmax.f32 %v4476, %v4295
        %v4479 = vmax.f32 %v4477, %v4301
        %v4480 = vmax.f32 %v4478, %v4307
        %v4481 = vmax.f32 %v4479, %v4313
        %v4482 = vmax.f32 %v4480, %v4319
        %v4483 = vmax.f32 %v4481, %v4325
        %v4484 = vmax.f32 %v4482, %v4331
        %v4485 = vmax.f32 %v4483, %v4337
        %v4486 = vmax.f32 %v4484, %v4343
        %v4487 = vmax.f32 %v4485, %v4349
        %v4488 = vmax.f32 %v4486, %v4355
        %v4489 = vmax.f32 %v4487, %v4361
        %v4490 = vmax.f32 %v4488, %v4367
        %v4491 = vmax.f32 %v4489, %v4373
        %v4492 = vmax.f32 %v4490, %v4379
        %v4493 = vmax.f32 %v4491, %v4385
        %v4494 = vmax.f32 %v4492, %v4391
        %v4495 = vmax.f32 %v4493, %v4397
        %v4496 = vmax.f32 %v4494, %v4403
        %v4497 = vmax.f32 %v4495, %v4409
        %v4498 = vmax.f32 %v4496, %v4415
        %v4499 = vmax.f32 %v4497, %v4421
        %v4500 = vmax.f32 %v4498, %v4427
        %v4501 = vmax.f32 %v4499, %v4433
        %v4502 = vmax.f32 %v4500, %v4501
        %v4503 = vrot.slane %v4502, 4
        %v4504 = vmax.f32 %v4502, %v4503
        %v4505 = vrot.slane %v4504, 2
        %v4506 = vmax.f32 %v4504, %v4505
        %v4507 = vrot.slane %v4506, 1
        %v4508 = vmax.f32 %v4506, %v4507
        %v4509 = vsub.f32 %v4245, %v4471
        %v4510 = vsub.f32 %v4247, %v4508
        %v4511 = vsub.f32 %v4251, %v4471
        %v4512 = vsub.f32 %v4253, %v4508
        %v4513 = vsub.f32 %v4257, %v4471
        %v4514 = vsub.f32 %v4259, %v4508
        %v4515 = vsub.f32 %v4263, %v4471
        %v4516 = vsub.f32 %v4265, %v4508
        %v4517 = vsub.f32 %v4269, %v4471
        %v4518 = vsub.f32 %v4271, %v4508
        %v4519 = vsub.f32 %v4275, %v4471
        %v4520 = vsub.f32 %v4277, %v4508
        %v4521 = vsub.f32 %v4281, %v4471
        %v4522 = vsub.f32 %v4283, %v4508
        %v4523 = vsub.f32 %v4287, %v4471
        %v4524 = vsub.f32 %v4289, %v4508
        %v4525 = vsub.f32 %v4293, %v4471
        %v4526 = vsub.f32 %v4295, %v4508
        %v4527 = vsub.f32 %v4299, %v4471
        %v4528 = vsub.f32 %v4301, %v4508
        %v4529 = vsub.f32 %v4305, %v4471
        %v4530 = vsub.f32 %v4307, %v4508
        %v4531 = vsub.f32 %v4311, %v4471
        %v4532 = vsub.f32 %v4313, %v4508
        %v4533 = vsub.f32 %v4317, %v4471
        %v4534 = vsub.f32 %v4319, %v4508
        %v4535 = vsub.f32 %v4323, %v4471
        %v4536 = vsub.f32 %v4325, %v4508
        %v4537 = vsub.f32 %v4329, %v4471
        %v4538 = vsub.f32 %v4331, %v4508
        %v4539 = vsub.f32 %v4335, %v4471
        %v4540 = vsub.f32 %v4337, %v4508
        %v4541 = vsub.f32 %v4341, %v4471
        %v4542 = vsub.f32 %v4343, %v4508
        %v4543 = vsub.f32 %v4347, %v4471
        %v4544 = vsub.f32 %v4349, %v4508
        %v4545 = vsub.f32 %v4353, %v4471
        %v4546 = vsub.f32 %v4355, %v4508
        %v4547 = vsub.f32 %v4359, %v4471
        %v4548 = vsub.f32 %v4361, %v4508
        %v4549 = vsub.f32 %v4365, %v4471
        %v4550 = vsub.f32 %v4367, %v4508
        %v4551 = vsub.f32 %v4371, %v4471
        %v4552 = vsub.f32 %v4373, %v4508
        %v4553 = vsub.f32 %v4377, %v4471
        %v4554 = vsub.f32 %v4379, %v4508
        %v4555 = vsub.f32 %v4383, %v4471
        %v4556 = vsub.f32 %v4385, %v4508
        %v4557 = vsub.f32 %v4389, %v4471
        %v4558 = vsub.f32 %v4391, %v4508
        %v4559 = vsub.f32 %v4395, %v4471
        %v4560 = vsub.f32 %v4397, %v4508
        %v4561 = vsub.f32 %v4401, %v4471
        %v4562 = vsub.f32 %v4403, %v4508
        %v4563 = vsub.f32 %v4407, %v4471
        %v4564 = vsub.f32 %v4409, %v4508
        %v4565 = vsub.f32 %v4413, %v4471
        %v4566 = vsub.f32 %v4415, %v4508
        %v4567 = vsub.f32 %v4419, %v4471
        %v4568 = vsub.f32 %v4421, %v4508
        %v4569 = vsub.f32 %v4425, %v4471
        %v4570 = vsub.f32 %v4427, %v4508
        %v4571 = vsub.f32 %v4431, %v4471
        %v4572 = vsub.f32 %v4433, %v4508
        %v4573 = vmul.f32 %v4509, 1.442695
        %v4574 = vpow.pop %v4573
        %v4575 = vmul.f32 %v4510, 1.442695
        %v4576 = vpow.pop %v4575
        %v4577 = vmul.f32 %v4511, 1.442695
        %v4578 = vpow.pop %v4577
        %v4579 = vmul.f32 %v4512, 1.442695
        %v4580 = vpow.pop %v4579
        %v4581 = vmul.f32 %v4513, 1.442695
        %v4582 = vpow.pop %v4581
        %v4583 = vmul.f32 %v4514, 1.442695
        %v4584 = vpow.pop %v4583
        %v4585 = vmul.f32 %v4515, 1.442695
        %v4586 = vpow.pop %v4585
        %v4587 = vmul.f32 %v4516, 1.442695
        %v4588 = vpow.pop %v4587
        %v4589 = vmul.f32 %v4517, 1.442695
        %v4590 = vpow.pop %v4589
        %v4591 = vmul.f32 %v4518, 1.442695
        %v4592 = vpow.pop %v4591
        %v4593 = vmul.f32 %v4519, 1.442695
        %v4594 = vpow.pop %v4593
        %v4595 = vmul.f32 %v4520, 1.442695
        %v4596 = vpow.pop %v4595
        %v4597 = vmul.f32 %v4521, 1.442695
        %v4598 = vpow.pop %v4597
        %v4599 = vmul.f32 %v4522, 1.442695
        %v4600 = vpow.pop %v4599
        %v4601 = vmul.f32 %v4523, 1.442695
        %v4602 = vpow.pop %v4601
        %v4603 = vmul.f32 %v4524, 1.442695
        %v4604 = vpow.pop %v4603
        %v4605 = vmul.f32 %v4525, 1.442695
        %v4606 = vpow.pop %v4605
        %v4607 = vmul.f32 %v4526, 1.442695
        %v4608 = vpow.pop %v4607
        %v4609 = vmul.f32 %v4527, 1.442695
        %v4610 = vpow.pop %v4609
        %v4611 = vmul.f32 %v4528, 1.442695
        %v4612 = vpow.pop %v4611
        %v4613 = vmul.f32 %v4529, 1.442695
        %v4614 = vpow.pop %v4613
        %v4615 = vmul.f32 %v4530, 1.442695
        %v4616 = vpow.pop %v4615
        %v4617 = vmul.f32 %v4531, 1.442695
        %v4618 = vpow.pop %v4617
        %v4619 = vmul.f32 %v4532, 1.442695
        %v4620 = vpow.pop %v4619
        %v4621 = vmul.f32 %v4533, 1.442695
        %v4622 = vpow.pop %v4621
        %v4623 = vmul.f32 %v4534, 1.442695
        %v4624 = vpow.pop %v4623
        %v4625 = vmul.f32 %v4535, 1.442695
        %v4626 = vpow.pop %v4625
        %v4627 = vmul.f32 %v4536, 1.442695
        %v4628 = vpow.pop %v4627
        %v4629 = vmul.f32 %v4537, 1.442695
        %v4630 = vpow.pop %v4629
        %v4631 = vmul.f32 %v4538, 1.442695
        %v4632 = vpow.pop %v4631
        %v4633 = vmul.f32 %v4539, 1.442695
        %v4634 = vpow.pop %v4633
        %v4635 = vmul.f32 %v4540, 1.442695
        %v4636 = vpow.pop %v4635
        %v4637 = vmul.f32 %v4541, 1.442695
        %v4638 = vpow.pop %v4637
        %v4639 = vmul.f32 %v4542, 1.442695
        %v4640 = vpow.pop %v4639
        %v4641 = vmul.f32 %v4543, 1.442695
        %v4642 = vpow.pop %v4641
        %v4643 = vmul.f32 %v4544, 1.442695
        %v4644 = vpow.pop %v4643
        %v4645 = vmul.f32 %v4545, 1.442695
        %v4646 = vpow.pop %v4645
        %v4647 = vmul.f32 %v4546, 1.442695
        %v4648 = vpow.pop %v4647
        %v4649 = vmul.f32 %v4547, 1.442695
        %v4650 = vpow.pop %v4649
        %v4651 = vmul.f32 %v4548, 1.442695
        %v4652 = vpow.pop %v4651
        %v4653 = vmul.f32 %v4549, 1.442695
        %v4654 = vpow.pop %v4653
        %v4655 = vmul.f32 %v4550, 1.442695
        %v4656 = vpow.pop %v4655
        %v4657 = vmul.f32 %v4551, 1.442695
        %v4658 = vpow.pop %v4657
        %v4659 = vmul.f32 %v4552, 1.442695
        %v4660 = vpow.pop %v4659
        %v4661 = vmul.f32 %v4553, 1.442695
        %v4662 = vpow.pop %v4661
        %v4663 = vmul.f32 %v4554, 1.442695
        %v4664 = vpow.pop %v4663
        %v4665 = vmul.f32 %v4555, 1.442695
        %v4666 = vpow.pop %v4665
        %v4667 = vmul.f32 %v4556, 1.442695
        %v4668 = vpow.pop %v4667
        %v4669 = vmul.f32 %v4557, 1.442695
        %v4670 = vpow.pop %v4669
        %v4671 = vmul.f32 %v4558, 1.442695
        %v4672 = vpow.pop %v4671
        %v4673 = vmul.f32 %v4559, 1.442695
        %v4674 = vpow.pop %v4673
        %v4675 = vmul.f32 %v4560, 1.442695
        %v4676 = vpow.pop %v4675
        %v4677 = vmul.f32 %v4561, 1.442695
        %v4678 = vpow.pop %v4677
        %v4679 = vmul.f32 %v4562, 1.442695
        %v4680 = vpow.pop %v4679
        %v4681 = vmul.f32 %v4563, 1.442695
        %v4682 = vpow.pop %v4681
        %v4683 = vmul.f32 %v4564, 1.442695
        %v4684 = vpow.pop %v4683
        %v4685 = vmul.f32 %v4565, 1.442695
        %v4686 = vpow.pop %v4685
        %v4687 = vmul.f32 %v4566, 1.442695
        %v4688 = vpow.pop %v4687
        %v4689 = vmul.f32 %v4567, 1.442695
        %v4690 = vpow.pop %v4689
        %v4691 = vmul.f32 %v4568, 1.442695
        %v4692 = vpow.pop %v4691
        %v4693 = vmul.f32 %v4569, 1.442695
        %v4694 = vpow.pop %v4693
        %v4695 = vmul.f32 %v4570, 1.442695
        %v4696 = vpow.pop %v4695
        %v4697 = vmul.f32 %v4571, 1.442695
        %v4698 = vpow.pop %v4697
        %v4699 = vmul.f32 %v4572, 1.442695
        %v4700 = vpow.pop %v4699
        %v4701 = vadd.f32 %v4574, %v4578
        %v4702 = vadd.f32 %v4701, %v4582
        %v4703 = vadd.f32 %v4702, %v4586
        %v4704 = vadd.f32 %v4703, %v4590
        %v4705 = vadd.f32 %v4704, %v4594
        %v4706 = vadd.f32 %v4705, %v4598
        %v4707 = vadd.f32 %v4706, %v4602
        %v4708 = vadd.f32 %v4707, %v4606
        %v4709 = vadd.f32 %v4708, %v4610
        %v4710 = vadd.f32 %v4709, %v4614
        %v4711 = vadd.f32 %v4710, %v4618
        %v4712 = vadd.f32 %v4711, %v4622
        %v4713 = vadd.f32 %v4712, %v4626
        %v4714 = vadd.f32 %v4713, %v4630
        %v4715 = vadd.f32 %v4714, %v4634
        %v4716 = vadd.f32 %v4715, %v4638
        %v4717 = vadd.f32 %v4716, %v4642
        %v4718 = vadd.f32 %v4717, %v4646
        %v4719 = vadd.f32 %v4718, %v4650
        %v4720 = vadd.f32 %v4719, %v4654
        %v4721 = vadd.f32 %v4720, %v4658
        %v4722 = vadd.f32 %v4721, %v4662
        %v4723 = vadd.f32 %v4722, %v4666
        %v4724 = vadd.f32 %v4723, %v4670
        %v4725 = vadd.f32 %v4724, %v4674
        %v4726 = vadd.f32 %v4725, %v4678
        %v4727 = vadd.f32 %v4726, %v4682
        %v4728 = vadd.f32 %v4727, %v4686
        %v4729 = vadd.f32 %v4728, %v4690
        %v4730 = vadd.f32 %v4729, %v4694
        %v4731 = vadd.f32 %v4730, %v4698
        %v4732 = vrot.slane %v4731, 4
        %v4733 = vadd.f32 %v4731, %v4732
        %v4734 = vrot.slane %v4733, 2
        %v4735 = vadd.f32 %v4733, %v4734
        %v4736 = vrot.slane %v4735, 1
        %v4737 = vadd.f32 %v4735, %v4736
        %v4738 = vadd.f32 %v4576, %v4580
        %v4739 = vadd.f32 %v4738, %v4584
        %v4740 = vadd.f32 %v4739, %v4588
        %v4741 = vadd.f32 %v4740, %v4592
        %v4742 = vadd.f32 %v4741, %v4596
        %v4743 = vadd.f32 %v4742, %v4600
        %v4744 = vadd.f32 %v4743, %v4604
        %v4745 = vadd.f32 %v4744, %v4608
        %v4746 = vadd.f32 %v4745, %v4612
        %v4747 = vadd.f32 %v4746, %v4616
        %v4748 = vadd.f32 %v4747, %v4620
        %v4749 = vadd.f32 %v4748, %v4624
        %v4750 = vadd.f32 %v4749, %v4628
        %v4751 = vadd.f32 %v4750, %v4632
        %v4752 = vadd.f32 %v4751, %v4636
        %v4753 = vadd.f32 %v4752, %v4640
        %v4754 = vadd.f32 %v4753, %v4644
        %v4755 = vadd.f32 %v4754, %v4648
        %v4756 = vadd.f32 %v4755, %v4652
        %v4757 = vadd.f32 %v4756, %v4656
        %v4758 = vadd.f32 %v4757, %v4660
        %v4759 = vadd.f32 %v4758, %v4664
        %v4760 = vadd.f32 %v4759, %v4668
        %v4761 = vadd.f32 %v4760, %v4672
        %v4762 = vadd.f32 %v4761, %v4676
        %v4763 = vadd.f32 %v4762, %v4680
        %v4764 = vadd.f32 %v4763, %v4684
        %v4765 = vadd.f32 %v4764, %v4688
        %v4766 = vadd.f32 %v4765, %v4692
        %v4767 = vadd.f32 %v4766, %v4696
        %v4768 = vadd.f32 %v4767, %v4700
        %v4769 = vrot.slane %v4768, 4
        %v4770 = vadd.f32 %v4768, %v4769
        %v4771 = vrot.slane %v4770, 2
        %v4772 = vadd.f32 %v4770, %v4771
        %v4773 = vrot.slane %v4772, 1
        %v4774 = vadd.f32 %v4772, %v4773
        %v4775 = vrcp.pop %v4737
        %v4776 = vrcp.pop %v4774
        %v4777 = vmul.f32 %v4574, %v4775
        %v4778 = vmul.f32 %v4576, %v4776
        %v4779 = vmul.f32 %v4578, %v4775
        %v4780 = vmul.f32 %v4580, %v4776
        %v4781 = vmul.f32 %v4582, %v4775
        %v4782 = vmul.f32 %v4584, %v4776
        %v4783 = vmul.f32 %v4586, %v4775
        %v4784 = vmul.f32 %v4588, %v4776
        %v4785 = vmul.f32 %v4590, %v4775
        %v4786 = vmul.f32 %v4592, %v4776
        %v4787 = vmul.f32 %v4594, %v4775
        %v4788 = vmul.f32 %v4596, %v4776
        %v4789 = vmul.f32 %v4598, %v4775
        %v4790 = vmul.f32 %v4600, %v4776
        %v4791 = vmul.f32 %v4602, %v4775
        %v4792 = vmul.f32 %v4604, %v4776
        %v4793 = vmul.f32 %v4606, %v4775
        %v4794 = vmul.f32 %v4608, %v4776
        %v4795 = vmul.f32 %v4610, %v4775
        %v4796 = vmul.f32 %v4612, %v4776
        %v4797 = vmul.f32 %v4614, %v4775
        %v4798 = vmul.f32 %v4616, %v4776
        %v4799 = vmul.f32 %v4618, %v4775
        %v4800 = vmul.f32 %v4620, %v4776
        %v4801 = vmul.f32 %v4622, %v4775
        %v4802 = vmul.f32 %v4624, %v4776
        %v4803 = vmul.f32 %v4626, %v4775
        %v4804 = vmul.f32 %v4628, %v4776
        %v4805 = vmul.f32 %v4630, %v4775
        %v4806 = vmul.f32 %v4632, %v4776
        %v4807 = vmul.f32 %v4634, %v4775
        %v4808 = vmul.f32 %v4636, %v4776
        %v4809 = vmul.f32 %v4638, %v4775
        %v4810 = vmul.f32 %v4640, %v4776
        %v4811 = vmul.f32 %v4642, %v4775
        %v4812 = vmul.f32 %v4644, %v4776
        %v4813 = vmul.f32 %v4646, %v4775
        %v4814 = vmul.f32 %v4648, %v4776
        %v4815 = vmul.f32 %v4650, %v4775
        %v4816 = vmul.f32 %v4652, %v4776
        %v4817 = vmul.f32 %v4654, %v4775
        %v4818 = vmul.f32 %v4656, %v4776
        %v4819 = vmul.f32 %v4658, %v4775
        %v4820 = vmul.f32 %v4660, %v4776
        %v4821 = vmul.f32 %v4662, %v4775
        %v4822 = vmul.f32 %v4664, %v4776
        %v4823 = vmul.f32 %v4666, %v4775
        %v4824 = vmul.f32 %v4668, %v4776
        %v4825 = vmul.f32 %v4670, %v4775
        %v4826 = vmul.f32 %v4672, %v4776
        %v4827 = vmul.f32 %v4674, %v4775
        %v4828 = vmul.f32 %v4676, %v4776
        %v4829 = vmul.f32 %v4678, %v4775
        %v4830 = vmul.f32 %v4680, %v4776
        %v4831 = vmul.f32 %v4682, %v4775
        %v4832 = vmul.f32 %v4684, %v4776
        %v4833 = vmul.f32 %v4686, %v4775
        %v4834 = vmul.f32 %v4688, %v4776
        %v4835 = vmul.f32 %v4690, %v4775
        %v4836 = vmul.f32 %v4692, %v4776
        %v4837 = vmul.f32 %v4694, %v4775
        %v4838 = vmul.f32 %v4696, %v4776
        %v4839 = vmul.f32 %v4698, %v4775
        %v4840 = vmul.f32 %v4700, %v4776
        %4841 = vmatprep.subr.mxu0 %v4808
        %4842 = vmatpush1.msra.mxu0 %v4807
        %4843 = vmatprep.subr.mxu0 %v4806
        %4844 = vmatpush1.msra.mxu0 %v4805
        %4845 = vmatprep.subr.mxu0 %v4804
        %4846 = vmatpush1.msra.mxu0 %v4803
        %4847 = vmatprep.subr.mxu0 %v4802
        %4848 = vmatpush1.msra.mxu0 %v4801
        %4849 = vmatprep.subr.mxu0 %v4800
        %4850 = vmatpush1.msra.mxu0 %v4799
        %4851 = vmatprep.subr.mxu0 %v4798
        %4852 = vmatpush1.msra.mxu0 %v4797
        %4853 = vmatprep.subr.mxu0 %v4796
        %4854 = vmatpush1.msra.mxu0 %v4795
        %4855 = vmatprep.subr.mxu0 %v4794
        %4856 = vmatpush1.msra.mxu0 %v4793
        %4857 = vmatprep.subr.mxu0 %v4792
        %4858 = vmatpush1.msra.mxu0 %v4791
        %4859 = vmatprep.subr.mxu0 %v4790
        %4860 = vmatpush1.msra.mxu0 %v4789
        %4861 = vmatprep.subr.mxu0 %v4788
        %4862 = vmatpush1.msra.mxu0 %v4787
        %4863 = vmatprep.subr.mxu0 %v4786
        %4864 = vmatpush1.msra.mxu0 %v4785
        %4865 = vmatprep.subr.mxu0 %v4784
        %4866 = vmatpush1.msra.mxu0 %v4783
        %4867 = vmatprep.subr.mxu0 %v4782
        %4868 = vmatpush1.msra.mxu0 %v4781
        %4869 = vmatprep.subr.mxu0 %v4780
        %4870 = vmatpush1.msra.mxu0 %v4779
        %4871 = vmatprep.subr.mxu0 %v4778
        %4872 = vmatpush1.msra.mxu0 %v4777
        %4873 = vmatprep.subr.mxu0 %v4840
        %4874 = vmatpush2.msra.mxu0 %v4839
        %4875 = vmatprep.subr.mxu0 %v4838
        %4876 = vmatpush2.msra.mxu0 %v4837
        %4877 = vmatprep.subr.mxu0 %v4836
        %4878 = vmatpush2.msra.mxu0 %v4835
        %4879 = vmatprep.subr.mxu0 %v4834
        %4880 = vmatpush2.msra.mxu0 %v4833
        %4881 = vmatprep.subr.mxu0 %v4832
        %4882 = vmatpush2.msra.mxu0 %v4831
        %4883 = vmatprep.subr.mxu0 %v4830
        %4884 = vmatpush2.msra.mxu0 %v4829
        %4885 = vmatprep.subr.mxu0 %v4828
        %4886 = vmatpush2.msra.mxu0 %v4827
        %4887 = vmatprep.subr.mxu0 %v4826
        %4888 = vmatpush2.msra.mxu0 %v4825
        %4889 = vmatprep.subr.mxu0 %v4824
        %4890 = vmatpush2.msra.mxu0 %v4823
        %4891 = vmatprep.subr.mxu0 %v4822
        %4892 = vmatpush2.msra.mxu0 %v4821
        %4893 = vmatprep.subr.mxu0 %v4820
        %4894 = vmatpush2.msra.mxu0 %v4819
        %4895 = vmatprep.subr.mxu0 %v4818
        %4896 = vmatpush2.msra.mxu0 %v4817
        %4897 = vmatprep.subr.mxu0 %v4816
        %4898 = vmatpush2.msra.mxu0 %v4815
        %4899 = vmatprep.subr.mxu0 %v4814
        %4900 = vmatpush2.msra.mxu0 %v4813
        %4901 = vmatprep.subr.mxu0 %v4812
        %4902 = vmatpush2.msra.mxu0 %v4811
        %4903 = vmatprep.subr.mxu0 %v4810
        %4904 = vmatpush2.msra.mxu0 %v4809
        %4905 = vmatprep.mubr.f32.mxu0 %v370
        %4906 = vmatmul.mubr.f32.gmra.mxu0 %v368
        %v4907 = vpop.f32.mrf.mxu0
        %v4908 = vadd.f32 0.0, %v4907
        %v4909 = vpop.f32.mrf.mxu0
        %v4910 = vadd.f32 0.0, %v4909
        %4911 = vdwg.mxu0
        %v4914 = vrot.slane %v344, 4
        %v4915 = vrot.slane %v346, 4
        %4918 = vxpose.xlu0.b32.start [1/16] %v4914, 128
        %4919 = vxpose.xlu0.b32.cont [2/16] 0.0, 128
        %4920 = vxpose.xlu0.b32.cont [3/16] 0.0, 128
        %4921 = vxpose.xlu0.b32.cont [4/16] 0.0, 128
        %4922 = vxpose.xlu0.b32.cont [5/16] 0.0, 128
        %4923 = vxpose.xlu0.b32.cont [6/16] 0.0, 128
        %4924 = vxpose.xlu0.b32.cont [7/16] 0.0, 128
        %4925 = vxpose.xlu0.b32.cont [8/16] 0.0, 128
        %4926 = vxpose.xlu0.b32.cont [9/16] 0.0, 128
        %4927 = vxpose.xlu0.b32.cont [10/16] 0.0, 128
        %4928 = vxpose.xlu0.b32.cont [11/16] 0.0, 128
        %4929 = vxpose.xlu0.b32.cont [12/16] 0.0, 128
        %4930 = vxpose.xlu0.b32.cont [13/16] 0.0, 128
        %4931 = vxpose.xlu0.b32.cont [14/16] 0.0, 128
        %4932 = vxpose.xlu0.b32.cont [15/16] 0.0, 128
        %4933 = vxpose.xlu0.b32.end [16/16] 0.0, 128
        %v4934 = vpop.trf.xlu0
        %v4935 = vpop.trf.xlu0
        %v4936 = vpop.trf.xlu0
        %v4937 = vpop.trf.xlu0
        %v4938 = vpop.trf.xlu0
        %v4939 = vpop.trf.xlu0
        %v4940 = vpop.trf.xlu0
        %v4941 = vpop.trf.xlu0
        %v4942 = vpop.trf.xlu0
        %v4943 = vpop.trf.xlu0
        %v4944 = vpop.trf.xlu0
        %v4945 = vpop.trf.xlu0
        %v4946 = vpop.trf.xlu0
        %v4947 = vpop.trf.xlu0
        %v4948 = vpop.trf.xlu0
        %v4949 = vpop.trf.xlu0
        %4950 = vxpose.xlu0.b32.start [1/16] %v4915, 128
        %4951 = vxpose.xlu0.b32.cont [2/16] 0.0, 128
        %4952 = vxpose.xlu0.b32.cont [3/16] 0.0, 128
        %4953 = vxpose.xlu0.b32.cont [4/16] 0.0, 128
        %4954 = vxpose.xlu0.b32.cont [5/16] 0.0, 128
        %4955 = vxpose.xlu0.b32.cont [6/16] 0.0, 128
        %4956 = vxpose.xlu0.b32.cont [7/16] 0.0, 128
        %4957 = vxpose.xlu0.b32.cont [8/16] 0.0, 128
        %4958 = vxpose.xlu0.b32.cont [9/16] 0.0, 128
        %4959 = vxpose.xlu0.b32.cont [10/16] 0.0, 128
        %4960 = vxpose.xlu0.b32.cont [11/16] 0.0, 128
        %4961 = vxpose.xlu0.b32.cont [12/16] 0.0, 128
        %4962 = vxpose.xlu0.b32.cont [13/16] 0.0, 128
        %4963 = vxpose.xlu0.b32.cont [14/16] 0.0, 128
        %4964 = vxpose.xlu0.b32.cont [15/16] 0.0, 128
        %4965 = vxpose.xlu0.b32.end [16/16] 0.0, 128
        %v4966 = vpop.trf.xlu0
        %v4967 = vpop.trf.xlu0
        %v4968 = vpop.trf.xlu0
        %v4969 = vpop.trf.xlu0
        %v4970 = vpop.trf.xlu0
        %v4971 = vpop.trf.xlu0
        %v4972 = vpop.trf.xlu0
        %v4973 = vpop.trf.xlu0
        %v4974 = vpop.trf.xlu0
        %v4975 = vpop.trf.xlu0
        %v4976 = vpop.trf.xlu0
        %v4977 = vpop.trf.xlu0
        %v4978 = vpop.trf.xlu0
        %v4979 = vpop.trf.xlu0
        %v4980 = vpop.trf.xlu0
        %v4981 = vpop.trf.xlu0
        %v4982 = vrot.slane %v382, 4
        %v4983 = vrot.slane %v383, 4
        %v4985 = vsel %vm450, %v4934, 0
        %v4988 = vsel %vm450, %v4935, 0
        %v4991 = vsel %vm450, %v4936, 0
        %v4994 = vsel %vm450, %v4937, 0
        %v4997 = vsel %vm450, %v4938, 0
        %v5000 = vsel %vm450, %v4939, 0
        %v5003 = vsel %vm450, %v4940, 0
        %v5006 = vsel %vm450, %v4941, 0
        %v5009 = vsel %vm450, %v4942, 0
        %v5012 = vsel %vm450, %v4943, 0
        %v5015 = vsel %vm450, %v4944, 0
        %v5018 = vsel %vm450, %v4945, 0
        %v5021 = vsel %vm450, %v4946, 0
        %v5024 = vsel %vm450, %v4947, 0
        %v5027 = vsel %vm450, %v4948, 0
        %v5030 = vsel %vm450, %v4949, 0
        %v5033 = vsel %vm450, %v4966, 0
        %v5036 = vsel %vm450, %v4967, 0
        %v5039 = vsel %vm450, %v4968, 0
        %v5042 = vsel %vm450, %v4969, 0
        %v5045 = vsel %vm450, %v4970, 0
        %v5048 = vsel %vm450, %v4971, 0
        %v5051 = vsel %vm450, %v4972, 0
        %v5054 = vsel %vm450, %v4973, 0
        %v5057 = vsel %vm450, %v4974, 0
        %v5060 = vsel %vm450, %v4975, 0
        %v5063 = vsel %vm450, %v4976, 0
        %v5066 = vsel %vm450, %v4977, 0
        %v5069 = vsel %vm450, %v4978, 0
        %v5072 = vsel %vm450, %v4979, 0
        %v5075 = vsel %vm450, %v4980, 0
        %v5078 = vsel %vm450, %v4981, 0
        %v5080 = vsel %vm547, %v4982, 0
        %v5082 = vsel %vm547, %v4983, 0
        %5084 = vmatprep.subr.mxu0 0.0
        %5085 = vmatpush1.msra.mxu0 0.0
        %5086 = vmatprep.subr.mxu0 0.0
        %5087 = vmatpush1.msra.mxu0 0.0
        %5088 = vmatprep.subr.mxu0 0.0
        %5089 = vmatpush1.msra.mxu0 0.0
        %5090 = vmatprep.subr.mxu0 0.0
        %5091 = vmatpush1.msra.mxu0 0.0
        %5092 = vmatprep.subr.mxu0 0.0
        %5093 = vmatpush1.msra.mxu0 0.0
        %5094 = vmatprep.subr.mxu0 0.0
        %5095 = vmatpush1.msra.mxu0 0.0
        %5096 = vmatprep.subr.mxu0 0.0
        %5097 = vmatpush1.msra.mxu0 0.0
        %5098 = vmatprep.subr.mxu0 0.0
        %5099 = vmatpush1.msra.mxu0 0.0
        %5100 = vmatprep.subr.mxu0 0.0
        %5101 = vmatpush1.msra.mxu0 0.0
        %5102 = vmatprep.subr.mxu0 0.0
        %5103 = vmatpush1.msra.mxu0 0.0
        %5104 = vmatprep.subr.mxu0 0.0
        %5105 = vmatpush1.msra.mxu0 0.0
        %5106 = vmatprep.subr.mxu0 0.0
        %5107 = vmatpush1.msra.mxu0 0.0
        %5108 = vmatprep.subr.mxu0 0.0
        %5109 = vmatpush1.msra.mxu0 0.0
        %5110 = vmatprep.subr.mxu0 0.0
        %5111 = vmatpush1.msra.mxu0 0.0
        %5112 = vmatprep.subr.mxu0 0.0
        %5113 = vmatpush1.msra.mxu0 0.0
        %5114 = vmatprep.subr.mxu0 %v5082
        %5115 = vmatpush1.msra.mxu0 %v5080
        %5116 = vmatprep.subr.mxu0 0.0
        %5117 = vmatpush2.msra.mxu0 0.0
        %5118 = vmatprep.subr.mxu0 0.0
        %5119 = vmatpush2.msra.mxu0 0.0
        %5120 = vmatprep.subr.mxu0 0.0
        %5121 = vmatpush2.msra.mxu0 0.0
        %5122 = vmatprep.subr.mxu0 0.0
        %5123 = vmatpush2.msra.mxu0 0.0
        %5124 = vmatprep.subr.mxu0 0.0
        %5125 = vmatpush2.msra.mxu0 0.0
        %5126 = vmatprep.subr.mxu0 0.0
        %5127 = vmatpush2.msra.mxu0 0.0
        %5128 = vmatprep.subr.mxu0 0.0
        %5129 = vmatpush2.msra.mxu0 0.0
        %5130 = vmatprep.subr.mxu0 0.0
        %5131 = vmatpush2.msra.mxu0 0.0
        %5132 = vmatprep.subr.mxu0 0.0
        %5133 = vmatpush2.msra.mxu0 0.0
        %5134 = vmatprep.subr.mxu0 0.0
        %5135 = vmatpush2.msra.mxu0 0.0
        %5136 = vmatprep.subr.mxu0 0.0
        %5137 = vmatpush2.msra.mxu0 0.0
        %5138 = vmatprep.subr.mxu0 0.0
        %5139 = vmatpush2.msra.mxu0 0.0
        %5140 = vmatprep.subr.mxu0 0.0
        %5141 = vmatpush2.msra.mxu0 0.0
        %5142 = vmatprep.subr.mxu0 0.0
        %5143 = vmatpush2.msra.mxu0 0.0
        %5144 = vmatprep.subr.mxu0 0.0
        %5145 = vmatpush2.msra.mxu0 0.0
        %5146 = vmatprep.subr.mxu0 0.0
        %5147 = vmatpush2.msra.mxu0 0.0
        %5148 = vmatprep.mubr.f32.mxu0 0.0
        %5149 = vmatmul.mubr.f32.gmra.mxu0 %v4985
        %v5150 = vpop.f32.mrf.mxu0
        %v5151 = vadd.f32 0.0, %v5150
        %v5152 = vpop.f32.mrf.mxu0
        %v5153 = vadd.f32 0.0, %v5152
        %5154 = vmatprep.mubr.f32.mxu0 0.0
        %5155 = vmatmul.mubr.f32.gmra.mxu0 %v4988
        %v5156 = vpop.f32.mrf.mxu0
        %v5157 = vadd.f32 0.0, %v5156
        %v5158 = vpop.f32.mrf.mxu0
        %v5159 = vadd.f32 0.0, %v5158
        %5160 = vmatprep.mubr.f32.mxu0 0.0
        %5161 = vmatmul.mubr.f32.gmra.mxu0 %v4991
        %v5162 = vpop.f32.mrf.mxu0
        %v5163 = vadd.f32 0.0, %v5162
        %v5164 = vpop.f32.mrf.mxu0
        %v5165 = vadd.f32 0.0, %v5164
        %5166 = vmatprep.mubr.f32.mxu0 0.0
        %5167 = vmatmul.mubr.f32.gmra.mxu0 %v4994
        %v5168 = vpop.f32.mrf.mxu0
        %v5169 = vadd.f32 0.0, %v5168
        %v5170 = vpop.f32.mrf.mxu0
        %v5171 = vadd.f32 0.0, %v5170
        %5172 = vmatprep.mubr.f32.mxu0 0.0
        %5173 = vmatmul.mubr.f32.gmra.mxu0 %v4997
        %v5174 = vpop.f32.mrf.mxu0
        %v5175 = vadd.f32 0.0, %v5174
        %v5176 = vpop.f32.mrf.mxu0
        %v5177 = vadd.f32 0.0, %v5176
        %5178 = vmatprep.mubr.f32.mxu0 0.0
        %5179 = vmatmul.mubr.f32.gmra.mxu0 %v5000
        %v5180 = vpop.f32.mrf.mxu0
        %v5181 = vadd.f32 0.0, %v5180
        %v5182 = vpop.f32.mrf.mxu0
        %v5183 = vadd.f32 0.0, %v5182
        %5184 = vmatprep.mubr.f32.mxu0 0.0
        %5185 = vmatmul.mubr.f32.gmra.mxu0 %v5003
        %v5186 = vpop.f32.mrf.mxu0
        %v5187 = vadd.f32 0.0, %v5186
        %v5188 = vpop.f32.mrf.mxu0
        %v5189 = vadd.f32 0.0, %v5188
        %5190 = vmatprep.mubr.f32.mxu0 0.0
        %5191 = vmatmul.mubr.f32.gmra.mxu0 %v5006
        %v5192 = vpop.f32.mrf.mxu0
        %v5193 = vadd.f32 0.0, %v5192
        %v5194 = vpop.f32.mrf.mxu0
        %v5195 = vadd.f32 0.0, %v5194
        %5196 = vmatprep.mubr.f32.mxu0 0.0
        %5197 = vmatmul.mubr.f32.gmra.mxu0 %v5009
        %v5198 = vpop.f32.mrf.mxu0
        %v5199 = vadd.f32 0.0, %v5198
        %v5200 = vpop.f32.mrf.mxu0
        %v5201 = vadd.f32 0.0, %v5200
        %5202 = vmatprep.mubr.f32.mxu0 0.0
        %5203 = vmatmul.mubr.f32.gmra.mxu0 %v5012
        %v5204 = vpop.f32.mrf.mxu0
        %v5205 = vadd.f32 0.0, %v5204
        %v5206 = vpop.f32.mrf.mxu0
        %v5207 = vadd.f32 0.0, %v5206
        %5208 = vmatprep.mubr.f32.mxu0 0.0
        %5209 = vmatmul.mubr.f32.gmra.mxu0 %v5015
        %v5210 = vpop.f32.mrf.mxu0
        %v5211 = vadd.f32 0.0, %v5210
        %v5212 = vpop.f32.mrf.mxu0
        %v5213 = vadd.f32 0.0, %v5212
        %5214 = vmatprep.mubr.f32.mxu0 0.0
        %5215 = vmatmul.mubr.f32.gmra.mxu0 %v5018
        %v5216 = vpop.f32.mrf.mxu0
        %v5217 = vadd.f32 0.0, %v5216
        %v5218 = vpop.f32.mrf.mxu0
        %v5219 = vadd.f32 0.0, %v5218
        %5220 = vmatprep.mubr.f32.mxu0 0.0
        %5221 = vmatmul.mubr.f32.gmra.mxu0 %v5021
        %v5222 = vpop.f32.mrf.mxu0
        %v5223 = vadd.f32 0.0, %v5222
        %v5224 = vpop.f32.mrf.mxu0
        %v5225 = vadd.f32 0.0, %v5224
        %5226 = vmatprep.mubr.f32.mxu0 0.0
        %5227 = vmatmul.mubr.f32.gmra.mxu0 %v5024
        %v5228 = vpop.f32.mrf.mxu0
        %v5229 = vadd.f32 0.0, %v5228
        %v5230 = vpop.f32.mrf.mxu0
        %v5231 = vadd.f32 0.0, %v5230
        %5232 = vmatprep.mubr.f32.mxu0 0.0
        %5233 = vmatmul.mubr.f32.gmra.mxu0 %v5027
        %v5234 = vpop.f32.mrf.mxu0
        %v5235 = vadd.f32 0.0, %v5234
        %v5236 = vpop.f32.mrf.mxu0
        %v5237 = vadd.f32 0.0, %v5236
        %5238 = vmatprep.mubr.f32.mxu0 0.0
        %5239 = vmatmul.mubr.f32.gmra.mxu0 %v5030
        %v5240 = vpop.f32.mrf.mxu0
        %v5241 = vadd.f32 0.0, %v5240
        %v5242 = vpop.f32.mrf.mxu0
        %v5243 = vadd.f32 0.0, %v5242
        %5244 = vmatprep.mubr.f32.mxu0 0.0
        %5245 = vmatmul.mubr.f32.gmra.mxu0 %v5033
        %v5246 = vpop.f32.mrf.mxu0
        %v5247 = vadd.f32 0.0, %v5246
        %v5248 = vpop.f32.mrf.mxu0
        %v5249 = vadd.f32 0.0, %v5248
        %5250 = vmatprep.mubr.f32.mxu0 0.0
        %5251 = vmatmul.mubr.f32.gmra.mxu0 %v5036
        %v5252 = vpop.f32.mrf.mxu0
        %v5253 = vadd.f32 0.0, %v5252
        %v5254 = vpop.f32.mrf.mxu0
        %v5255 = vadd.f32 0.0, %v5254
        %5256 = vmatprep.mubr.f32.mxu0 0.0
        %5257 = vmatmul.mubr.f32.gmra.mxu0 %v5039
        %v5258 = vpop.f32.mrf.mxu0
        %v5259 = vadd.f32 0.0, %v5258
        %v5260 = vpop.f32.mrf.mxu0
        %v5261 = vadd.f32 0.0, %v5260
        %5262 = vmatprep.mubr.f32.mxu0 0.0
        %5263 = vmatmul.mubr.f32.gmra.mxu0 %v5042
        %v5264 = vpop.f32.mrf.mxu0
        %v5265 = vadd.f32 0.0, %v5264
        %v5266 = vpop.f32.mrf.mxu0
        %v5267 = vadd.f32 0.0, %v5266
        %5268 = vmatprep.mubr.f32.mxu0 0.0
        %5269 = vmatmul.mubr.f32.gmra.mxu0 %v5045
        %v5270 = vpop.f32.mrf.mxu0
        %v5271 = vadd.f32 0.0, %v5270
        %v5272 = vpop.f32.mrf.mxu0
        %v5273 = vadd.f32 0.0, %v5272
        %5274 = vmatprep.mubr.f32.mxu0 0.0
        %5275 = vmatmul.mubr.f32.gmra.mxu0 %v5048
        %v5276 = vpop.f32.mrf.mxu0
        %v5277 = vadd.f32 0.0, %v5276
        %v5278 = vpop.f32.mrf.mxu0
        %v5279 = vadd.f32 0.0, %v5278
        %5280 = vmatprep.mubr.f32.mxu0 0.0
        %5281 = vmatmul.mubr.f32.gmra.mxu0 %v5051
        %v5282 = vpop.f32.mrf.mxu0
        %v5283 = vadd.f32 0.0, %v5282
        %v5284 = vpop.f32.mrf.mxu0
        %v5285 = vadd.f32 0.0, %v5284
        %5286 = vmatprep.mubr.f32.mxu0 0.0
        %5287 = vmatmul.mubr.f32.gmra.mxu0 %v5054
        %v5288 = vpop.f32.mrf.mxu0
        %v5289 = vadd.f32 0.0, %v5288
        %v5290 = vpop.f32.mrf.mxu0
        %v5291 = vadd.f32 0.0, %v5290
        %5292 = vmatprep.mubr.f32.mxu0 0.0
        %5293 = vmatmul.mubr.f32.gmra.mxu0 %v5057
        %v5294 = vpop.f32.mrf.mxu0
        %v5295 = vadd.f32 0.0, %v5294
        %v5296 = vpop.f32.mrf.mxu0
        %v5297 = vadd.f32 0.0, %v5296
        %5298 = vmatprep.mubr.f32.mxu0 0.0
        %5299 = vmatmul.mubr.f32.gmra.mxu0 %v5060
        %v5300 = vpop.f32.mrf.mxu0
        %v5301 = vadd.f32 0.0, %v5300
        %v5302 = vpop.f32.mrf.mxu0
        %v5303 = vadd.f32 0.0, %v5302
        %5304 = vmatprep.mubr.f32.mxu0 0.0
        %5305 = vmatmul.mubr.f32.gmra.mxu0 %v5063
        %v5306 = vpop.f32.mrf.mxu0
        %v5307 = vadd.f32 0.0, %v5306
        %v5308 = vpop.f32.mrf.mxu0
        %v5309 = vadd.f32 0.0, %v5308
        %5310 = vmatprep.mubr.f32.mxu0 0.0
        %5311 = vmatmul.mubr.f32.gmra.mxu0 %v5066
        %v5312 = vpop.f32.mrf.mxu0
        %v5313 = vadd.f32 0.0, %v5312
        %v5314 = vpop.f32.mrf.mxu0
        %v5315 = vadd.f32 0.0, %v5314
        %5316 = vmatprep.mubr.f32.mxu0 0.0
        %5317 = vmatmul.mubr.f32.gmra.mxu0 %v5069
        %v5318 = vpop.f32.mrf.mxu0
        %v5319 = vadd.f32 0.0, %v5318
        %v5320 = vpop.f32.mrf.mxu0
        %v5321 = vadd.f32 0.0, %v5320
        %5322 = vmatprep.mubr.f32.mxu0 0.0
        %5323 = vmatmul.mubr.f32.gmra.mxu0 %v5072
        %v5324 = vpop.f32.mrf.mxu0
        %v5325 = vadd.f32 0.0, %v5324
        %v5326 = vpop.f32.mrf.mxu0
        %v5327 = vadd.f32 0.0, %v5326
        %5328 = vmatprep.mubr.f32.mxu0 0.0
        %5329 = vmatmul.mubr.f32.gmra.mxu0 %v5075
        %v5330 = vpop.f32.mrf.mxu0
        %v5331 = vadd.f32 0.0, %v5330
        %v5332 = vpop.f32.mrf.mxu0
        %v5333 = vadd.f32 0.0, %v5332
        %5334 = vmatprep.mubr.f32.mxu0 0.0
        %5335 = vmatmul.mubr.f32.gmra.mxu0 %v5078
        %v5336 = vpop.f32.mrf.mxu0
        %v5337 = vadd.f32 0.0, %v5336
        %v5338 = vpop.f32.mrf.mxu0
        %v5339 = vadd.f32 0.0, %v5338
        %5340 = vdwg.mxu0
        %v5341 = vmax.f32 %v5151, %v5163
        %v5342 = vmax.f32 %v5157, %v5169
        %v5343 = vmax.f32 %v5341, %v5175
        %v5344 = vmax.f32 %v5342, %v5181
        %v5345 = vmax.f32 %v5343, %v5187
        %v5346 = vmax.f32 %v5344, %v5193
        %v5347 = vmax.f32 %v5345, %v5199
        %v5348 = vmax.f32 %v5346, %v5205
        %v5349 = vmax.f32 %v5347, %v5211
        %v5350 = vmax.f32 %v5348, %v5217
        %v5351 = vmax.f32 %v5349, %v5223
        %v5352 = vmax.f32 %v5350, %v5229
        %v5353 = vmax.f32 %v5351, %v5235
        %v5354 = vmax.f32 %v5352, %v5241
        %v5355 = vmax.f32 %v5353, %v5247
        %v5356 = vmax.f32 %v5354, %v5253
        %v5357 = vmax.f32 %v5355, %v5259
        %v5358 = vmax.f32 %v5356, %v5265
        %v5359 = vmax.f32 %v5357, %v5271
        %v5360 = vmax.f32 %v5358, %v5277
        %v5361 = vmax.f32 %v5359, %v5283
        %v5362 = vmax.f32 %v5360, %v5289
        %v5363 = vmax.f32 %v5361, %v5295
        %v5364 = vmax.f32 %v5362, %v5301
        %v5365 = vmax.f32 %v5363, %v5307
        %v5366 = vmax.f32 %v5364, %v5313
        %v5367 = vmax.f32 %v5365, %v5319
        %v5368 = vmax.f32 %v5366, %v5325
        %v5369 = vmax.f32 %v5367, %v5331
        %v5370 = vmax.f32 %v5368, %v5337
        %v5371 = vmax.f32 %v5369, %v5370
        %v5372 = vrot.slane %v5371, 4
        %v5373 = vmax.f32 %v5371, %v5372
        %v5374 = vrot.slane %v5373, 2
        %v5375 = vmax.f32 %v5373, %v5374
        %v5376 = vrot.slane %v5375, 1
        %v5377 = vmax.f32 %v5375, %v5376
        %v5378 = vmax.f32 %v5153, %v5165
        %v5379 = vmax.f32 %v5159, %v5171
        %v5380 = vmax.f32 %v5378, %v5177
        %v5381 = vmax.f32 %v5379, %v5183
        %v5382 = vmax.f32 %v5380, %v5189
        %v5383 = vmax.f32 %v5381, %v5195
        %v5384 = vmax.f32 %v5382, %v5201
        %v5385 = vmax.f32 %v5383, %v5207
        %v5386 = vmax.f32 %v5384, %v5213
        %v5387 = vmax.f32 %v5385, %v5219
        %v5388 = vmax.f32 %v5386, %v5225
        %v5389 = vmax.f32 %v5387, %v5231
        %v5390 = vmax.f32 %v5388, %v5237
        %v5391 = vmax.f32 %v5389, %v5243
        %v5392 = vmax.f32 %v5390, %v5249
        %v5393 = vmax.f32 %v5391, %v5255
        %v5394 = vmax.f32 %v5392, %v5261
        %v5395 = vmax.f32 %v5393, %v5267
        %v5396 = vmax.f32 %v5394, %v5273
        %v5397 = vmax.f32 %v5395, %v5279
        %v5398 = vmax.f32 %v5396, %v5285
        %v5399 = vmax.f32 %v5397, %v5291
        %v5400 = vmax.f32 %v5398, %v5297
        %v5401 = vmax.f32 %v5399, %v5303
        %v5402 = vmax.f32 %v5400, %v5309
        %v5403 = vmax.f32 %v5401, %v5315
        %v5404 = vmax.f32 %v5402, %v5321
        %v5405 = vmax.f32 %v5403, %v5327
        %v5406 = vmax.f32 %v5404, %v5333
        %v5407 = vmax.f32 %v5405, %v5339
        %v5408 = vmax.f32 %v5406, %v5407
        %v5409 = vrot.slane %v5408, 4
        %v5410 = vmax.f32 %v5408, %v5409
        %v5411 = vrot.slane %v5410, 2
        %v5412 = vmax.f32 %v5410, %v5411
        %v5413 = vrot.slane %v5412, 1
        %v5414 = vmax.f32 %v5412, %v5413
        %v5415 = vsub.f32 %v5151, %v5377
        %v5416 = vsub.f32 %v5153, %v5414
        %v5417 = vsub.f32 %v5157, %v5377
        %v5418 = vsub.f32 %v5159, %v5414
        %v5419 = vsub.f32 %v5163, %v5377
        %v5420 = vsub.f32 %v5165, %v5414
        %v5421 = vsub.f32 %v5169, %v5377
        %v5422 = vsub.f32 %v5171, %v5414
        %v5423 = vsub.f32 %v5175, %v5377
        %v5424 = vsub.f32 %v5177, %v5414
        %v5425 = vsub.f32 %v5181, %v5377
        %v5426 = vsub.f32 %v5183, %v5414
        %v5427 = vsub.f32 %v5187, %v5377
        %v5428 = vsub.f32 %v5189, %v5414
        %v5429 = vsub.f32 %v5193, %v5377
        %v5430 = vsub.f32 %v5195, %v5414
        %v5431 = vsub.f32 %v5199, %v5377
        %v5432 = vsub.f32 %v5201, %v5414
        %v5433 = vsub.f32 %v5205, %v5377
        %v5434 = vsub.f32 %v5207, %v5414
        %v5435 = vsub.f32 %v5211, %v5377
        %v5436 = vsub.f32 %v5213, %v5414
        %v5437 = vsub.f32 %v5217, %v5377
        %v5438 = vsub.f32 %v5219, %v5414
        %v5439 = vsub.f32 %v5223, %v5377
        %v5440 = vsub.f32 %v5225, %v5414
        %v5441 = vsub.f32 %v5229, %v5377
        %v5442 = vsub.f32 %v5231, %v5414
        %v5443 = vsub.f32 %v5235, %v5377
        %v5444 = vsub.f32 %v5237, %v5414
        %v5445 = vsub.f32 %v5241, %v5377
        %v5446 = vsub.f32 %v5243, %v5414
        %v5447 = vsub.f32 %v5247, %v5377
        %v5448 = vsub.f32 %v5249, %v5414
        %v5449 = vsub.f32 %v5253, %v5377
        %v5450 = vsub.f32 %v5255, %v5414
        %v5451 = vsub.f32 %v5259, %v5377
        %v5452 = vsub.f32 %v5261, %v5414
        %v5453 = vsub.f32 %v5265, %v5377
        %v5454 = vsub.f32 %v5267, %v5414
        %v5455 = vsub.f32 %v5271, %v5377
        %v5456 = vsub.f32 %v5273, %v5414
        %v5457 = vsub.f32 %v5277, %v5377
        %v5458 = vsub.f32 %v5279, %v5414
        %v5459 = vsub.f32 %v5283, %v5377
        %v5460 = vsub.f32 %v5285, %v5414
        %v5461 = vsub.f32 %v5289, %v5377
        %v5462 = vsub.f32 %v5291, %v5414
        %v5463 = vsub.f32 %v5295, %v5377
        %v5464 = vsub.f32 %v5297, %v5414
        %v5465 = vsub.f32 %v5301, %v5377
        %v5466 = vsub.f32 %v5303, %v5414
        %v5467 = vsub.f32 %v5307, %v5377
        %v5468 = vsub.f32 %v5309, %v5414
        %v5469 = vsub.f32 %v5313, %v5377
        %v5470 = vsub.f32 %v5315, %v5414
        %v5471 = vsub.f32 %v5319, %v5377
        %v5472 = vsub.f32 %v5321, %v5414
        %v5473 = vsub.f32 %v5325, %v5377
        %v5474 = vsub.f32 %v5327, %v5414
        %v5475 = vsub.f32 %v5331, %v5377
        %v5476 = vsub.f32 %v5333, %v5414
        %v5477 = vsub.f32 %v5337, %v5377
        %v5478 = vsub.f32 %v5339, %v5414
        %v5479 = vmul.f32 %v5415, 1.442695
        %v5480 = vpow.pop %v5479
        %v5481 = vmul.f32 %v5416, 1.442695
        %v5482 = vpow.pop %v5481
        %v5483 = vmul.f32 %v5417, 1.442695
        %v5484 = vpow.pop %v5483
        %v5485 = vmul.f32 %v5418, 1.442695
        %v5486 = vpow.pop %v5485
        %v5487 = vmul.f32 %v5419, 1.442695
        %v5488 = vpow.pop %v5487
        %v5489 = vmul.f32 %v5420, 1.442695
        %v5490 = vpow.pop %v5489
        %v5491 = vmul.f32 %v5421, 1.442695
        %v5492 = vpow.pop %v5491
        %v5493 = vmul.f32 %v5422, 1.442695
        %v5494 = vpow.pop %v5493
        %v5495 = vmul.f32 %v5423, 1.442695
        %v5496 = vpow.pop %v5495
        %v5497 = vmul.f32 %v5424, 1.442695
        %v5498 = vpow.pop %v5497
        %v5499 = vmul.f32 %v5425, 1.442695
        %v5500 = vpow.pop %v5499
        %v5501 = vmul.f32 %v5426, 1.442695
        %v5502 = vpow.pop %v5501
        %v5503 = vmul.f32 %v5427, 1.442695
        %v5504 = vpow.pop %v5503
        %v5505 = vmul.f32 %v5428, 1.442695
        %v5506 = vpow.pop %v5505
        %v5507 = vmul.f32 %v5429, 1.442695
        %v5508 = vpow.pop %v5507
        %v5509 = vmul.f32 %v5430, 1.442695
        %v5510 = vpow.pop %v5509
        %v5511 = vmul.f32 %v5431, 1.442695
        %v5512 = vpow.pop %v5511
        %v5513 = vmul.f32 %v5432, 1.442695
        %v5514 = vpow.pop %v5513
        %v5515 = vmul.f32 %v5433, 1.442695
        %v5516 = vpow.pop %v5515
        %v5517 = vmul.f32 %v5434, 1.442695
        %v5518 = vpow.pop %v5517
        %v5519 = vmul.f32 %v5435, 1.442695
        %v5520 = vpow.pop %v5519
        %v5521 = vmul.f32 %v5436, 1.442695
        %v5522 = vpow.pop %v5521
        %v5523 = vmul.f32 %v5437, 1.442695
        %v5524 = vpow.pop %v5523
        %v5525 = vmul.f32 %v5438, 1.442695
        %v5526 = vpow.pop %v5525
        %v5527 = vmul.f32 %v5439, 1.442695
        %v5528 = vpow.pop %v5527
        %v5529 = vmul.f32 %v5440, 1.442695
        %v5530 = vpow.pop %v5529
        %v5531 = vmul.f32 %v5441, 1.442695
        %v5532 = vpow.pop %v5531
        %v5533 = vmul.f32 %v5442, 1.442695
        %v5534 = vpow.pop %v5533
        %v5535 = vmul.f32 %v5443, 1.442695
        %v5536 = vpow.pop %v5535
        %v5537 = vmul.f32 %v5444, 1.442695
        %v5538 = vpow.pop %v5537
        %v5539 = vmul.f32 %v5445, 1.442695
        %v5540 = vpow.pop %v5539
        %v5541 = vmul.f32 %v5446, 1.442695
        %v5542 = vpow.pop %v5541
        %v5543 = vmul.f32 %v5447, 1.442695
        %v5544 = vpow.pop %v5543
        %v5545 = vmul.f32 %v5448, 1.442695
        %v5546 = vpow.pop %v5545
        %v5547 = vmul.f32 %v5449, 1.442695
        %v5548 = vpow.pop %v5547
        %v5549 = vmul.f32 %v5450, 1.442695
        %v5550 = vpow.pop %v5549
        %v5551 = vmul.f32 %v5451, 1.442695
        %v5552 = vpow.pop %v5551
        %v5553 = vmul.f32 %v5452, 1.442695
        %v5554 = vpow.pop %v5553
        %v5555 = vmul.f32 %v5453, 1.442695
        %v5556 = vpow.pop %v5555
        %v5557 = vmul.f32 %v5454, 1.442695
        %v5558 = vpow.pop %v5557
        %v5559 = vmul.f32 %v5455, 1.442695
        %v5560 = vpow.pop %v5559
        %v5561 = vmul.f32 %v5456, 1.442695
        %v5562 = vpow.pop %v5561
        %v5563 = vmul.f32 %v5457, 1.442695
        %v5564 = vpow.pop %v5563
        %v5565 = vmul.f32 %v5458, 1.442695
        %v5566 = vpow.pop %v5565
        %v5567 = vmul.f32 %v5459, 1.442695
        %v5568 = vpow.pop %v5567
        %v5569 = vmul.f32 %v5460, 1.442695
        %v5570 = vpow.pop %v5569
        %v5571 = vmul.f32 %v5461, 1.442695
        %v5572 = vpow.pop %v5571
        %v5573 = vmul.f32 %v5462, 1.442695
        %v5574 = vpow.pop %v5573
        %v5575 = vmul.f32 %v5463, 1.442695
        %v5576 = vpow.pop %v5575
        %v5577 = vmul.f32 %v5464, 1.442695
        %v5578 = vpow.pop %v5577
        %v5579 = vmul.f32 %v5465, 1.442695
        %v5580 = vpow.pop %v5579
        %v5581 = vmul.f32 %v5466, 1.442695
        %v5582 = vpow.pop %v5581
        %v5583 = vmul.f32 %v5467, 1.442695
        %v5584 = vpow.pop %v5583
        %v5585 = vmul.f32 %v5468, 1.442695
        %v5586 = vpow.pop %v5585
        %v5587 = vmul.f32 %v5469, 1.442695
        %v5588 = vpow.pop %v5587
        %v5589 = vmul.f32 %v5470, 1.442695
        %v5590 = vpow.pop %v5589
        %v5591 = vmul.f32 %v5471, 1.442695
        %v5592 = vpow.pop %v5591
        %v5593 = vmul.f32 %v5472, 1.442695
        %v5594 = vpow.pop %v5593
        %v5595 = vmul.f32 %v5473, 1.442695
        %v5596 = vpow.pop %v5595
        %v5597 = vmul.f32 %v5474, 1.442695
        %v5598 = vpow.pop %v5597
        %v5599 = vmul.f32 %v5475, 1.442695
        %v5600 = vpow.pop %v5599
        %v5601 = vmul.f32 %v5476, 1.442695
        %v5602 = vpow.pop %v5601
        %v5603 = vmul.f32 %v5477, 1.442695
        %v5604 = vpow.pop %v5603
        %v5605 = vmul.f32 %v5478, 1.442695
        %v5606 = vpow.pop %v5605
        %v5607 = vadd.f32 %v5480, %v5484
        %v5608 = vadd.f32 %v5607, %v5488
        %v5609 = vadd.f32 %v5608, %v5492
        %v5610 = vadd.f32 %v5609, %v5496
        %v5611 = vadd.f32 %v5610, %v5500
        %v5612 = vadd.f32 %v5611, %v5504
        %v5613 = vadd.f32 %v5612, %v5508
        %v5614 = vadd.f32 %v5613, %v5512
        %v5615 = vadd.f32 %v5614, %v5516
        %v5616 = vadd.f32 %v5615, %v5520
        %v5617 = vadd.f32 %v5616, %v5524
        %v5618 = vadd.f32 %v5617, %v5528
        %v5619 = vadd.f32 %v5618, %v5532
        %v5620 = vadd.f32 %v5619, %v5536
        %v5621 = vadd.f32 %v5620, %v5540
        %v5622 = vadd.f32 %v5621, %v5544
        %v5623 = vadd.f32 %v5622, %v5548
        %v5624 = vadd.f32 %v5623, %v5552
        %v5625 = vadd.f32 %v5624, %v5556
        %v5626 = vadd.f32 %v5625, %v5560
        %v5627 = vadd.f32 %v5626, %v5564
        %v5628 = vadd.f32 %v5627, %v5568
        %v5629 = vadd.f32 %v5628, %v5572
        %v5630 = vadd.f32 %v5629, %v5576
        %v5631 = vadd.f32 %v5630, %v5580
        %v5632 = vadd.f32 %v5631, %v5584
        %v5633 = vadd.f32 %v5632, %v5588
        %v5634 = vadd.f32 %v5633, %v5592
        %v5635 = vadd.f32 %v5634, %v5596
        %v5636 = vadd.f32 %v5635, %v5600
        %v5637 = vadd.f32 %v5636, %v5604
        %v5638 = vrot.slane %v5637, 4
        %v5639 = vadd.f32 %v5637, %v5638
        %v5640 = vrot.slane %v5639, 2
        %v5641 = vadd.f32 %v5639, %v5640
        %v5642 = vrot.slane %v5641, 1
        %v5643 = vadd.f32 %v5641, %v5642
        %v5644 = vadd.f32 %v5482, %v5486
        %v5645 = vadd.f32 %v5644, %v5490
        %v5646 = vadd.f32 %v5645, %v5494
        %v5647 = vadd.f32 %v5646, %v5498
        %v5648 = vadd.f32 %v5647, %v5502
        %v5649 = vadd.f32 %v5648, %v5506
        %v5650 = vadd.f32 %v5649, %v5510
        %v5651 = vadd.f32 %v5650, %v5514
        %v5652 = vadd.f32 %v5651, %v5518
        %v5653 = vadd.f32 %v5652, %v5522
        %v5654 = vadd.f32 %v5653, %v5526
        %v5655 = vadd.f32 %v5654, %v5530
        %v5656 = vadd.f32 %v5655, %v5534
        %v5657 = vadd.f32 %v5656, %v5538
        %v5658 = vadd.f32 %v5657, %v5542
        %v5659 = vadd.f32 %v5658, %v5546
        %v5660 = vadd.f32 %v5659, %v5550
        %v5661 = vadd.f32 %v5660, %v5554
        %v5662 = vadd.f32 %v5661, %v5558
        %v5663 = vadd.f32 %v5662, %v5562
        %v5664 = vadd.f32 %v5663, %v5566
        %v5665 = vadd.f32 %v5664, %v5570
        %v5666 = vadd.f32 %v5665, %v5574
        %v5667 = vadd.f32 %v5666, %v5578
        %v5668 = vadd.f32 %v5667, %v5582
        %v5669 = vadd.f32 %v5668, %v5586
        %v5670 = vadd.f32 %v5669, %v5590
        %v5671 = vadd.f32 %v5670, %v5594
        %v5672 = vadd.f32 %v5671, %v5598
        %v5673 = vadd.f32 %v5672, %v5602
        %v5674 = vadd.f32 %v5673, %v5606
        %v5675 = vrot.slane %v5674, 4
        %v5676 = vadd.f32 %v5674, %v5675
        %v5677 = vrot.slane %v5676, 2
        %v5678 = vadd.f32 %v5676, %v5677
        %v5679 = vrot.slane %v5678, 1
        %v5680 = vadd.f32 %v5678, %v5679
        %v5681 = vrcp.pop %v5643
        %v5682 = vrcp.pop %v5680
        %v5683 = vmul.f32 %v5480, %v5681
        %v5684 = vmul.f32 %v5482, %v5682
        %v5685 = vmul.f32 %v5484, %v5681
        %v5686 = vmul.f32 %v5486, %v5682
        %v5687 = vmul.f32 %v5488, %v5681
        %v5688 = vmul.f32 %v5490, %v5682
        %v5689 = vmul.f32 %v5492, %v5681
        %v5690 = vmul.f32 %v5494, %v5682
        %v5691 = vmul.f32 %v5496, %v5681
        %v5692 = vmul.f32 %v5498, %v5682
        %v5693 = vmul.f32 %v5500, %v5681
        %v5694 = vmul.f32 %v5502, %v5682
        %v5695 = vmul.f32 %v5504, %v5681
        %v5696 = vmul.f32 %v5506, %v5682
        %v5697 = vmul.f32 %v5508, %v5681
        %v5698 = vmul.f32 %v5510, %v5682
        %v5699 = vmul.f32 %v5512, %v5681
        %v5700 = vmul.f32 %v5514, %v5682
        %v5701 = vmul.f32 %v5516, %v5681
        %v5702 = vmul.f32 %v5518, %v5682
        %v5703 = vmul.f32 %v5520, %v5681
        %v5704 = vmul.f32 %v5522, %v5682
        %v5705 = vmul.f32 %v5524, %v5681
        %v5706 = vmul.f32 %v5526, %v5682
        %v5707 = vmul.f32 %v5528, %v5681
        %v5708 = vmul.f32 %v5530, %v5682
        %v5709 = vmul.f32 %v5532, %v5681
        %v5710 = vmul.f32 %v5534, %v5682
        %v5711 = vmul.f32 %v5536, %v5681
        %v5712 = vmul.f32 %v5538, %v5682
        %v5713 = vmul.f32 %v5540, %v5681
        %v5714 = vmul.f32 %v5542, %v5682
        %v5715 = vmul.f32 %v5544, %v5681
        %v5716 = vmul.f32 %v5546, %v5682
        %v5717 = vmul.f32 %v5548, %v5681
        %v5718 = vmul.f32 %v5550, %v5682
        %v5719 = vmul.f32 %v5552, %v5681
        %v5720 = vmul.f32 %v5554, %v5682
        %v5721 = vmul.f32 %v5556, %v5681
        %v5722 = vmul.f32 %v5558, %v5682
        %v5723 = vmul.f32 %v5560, %v5681
        %v5724 = vmul.f32 %v5562, %v5682
        %v5725 = vmul.f32 %v5564, %v5681
        %v5726 = vmul.f32 %v5566, %v5682
        %v5727 = vmul.f32 %v5568, %v5681
        %v5728 = vmul.f32 %v5570, %v5682
        %v5729 = vmul.f32 %v5572, %v5681
        %v5730 = vmul.f32 %v5574, %v5682
        %v5731 = vmul.f32 %v5576, %v5681
        %v5732 = vmul.f32 %v5578, %v5682
        %v5733 = vmul.f32 %v5580, %v5681
        %v5734 = vmul.f32 %v5582, %v5682
        %v5735 = vmul.f32 %v5584, %v5681
        %v5736 = vmul.f32 %v5586, %v5682
        %v5737 = vmul.f32 %v5588, %v5681
        %v5738 = vmul.f32 %v5590, %v5682
        %v5739 = vmul.f32 %v5592, %v5681
        %v5740 = vmul.f32 %v5594, %v5682
        %v5741 = vmul.f32 %v5596, %v5681
        %v5742 = vmul.f32 %v5598, %v5682
        %v5743 = vmul.f32 %v5600, %v5681
        %v5744 = vmul.f32 %v5602, %v5682
        %v5745 = vmul.f32 %v5604, %v5681
        %v5746 = vmul.f32 %v5606, %v5682
        %v5749 = vrot.slane %v368, 4
        %v5750 = vrot.slane %v370, 4
        %5753 = vmatprep.subr.mxu0 %v5714
        %5754 = vmatpush1.msra.mxu0 %v5713
        %5755 = vmatprep.subr.mxu0 %v5712
        %5756 = vmatpush1.msra.mxu0 %v5711
        %5757 = vmatprep.subr.mxu0 %v5710
        %5758 = vmatpush1.msra.mxu0 %v5709
        %5759 = vmatprep.subr.mxu0 %v5708
        %5760 = vmatpush1.msra.mxu0 %v5707
        %5761 = vmatprep.subr.mxu0 %v5706
        %5762 = vmatpush1.msra.mxu0 %v5705
        %5763 = vmatprep.subr.mxu0 %v5704
        %5764 = vmatpush1.msra.mxu0 %v5703
        %5765 = vmatprep.subr.mxu0 %v5702
        %5766 = vmatpush1.msra.mxu0 %v5701
        %5767 = vmatprep.subr.mxu0 %v5700
        %5768 = vmatpush1.msra.mxu0 %v5699
        %5769 = vmatprep.subr.mxu0 %v5698
        %5770 = vmatpush1.msra.mxu0 %v5697
        %5771 = vmatprep.subr.mxu0 %v5696
        %5772 = vmatpush1.msra.mxu0 %v5695
        %5773 = vmatprep.subr.mxu0 %v5694
        %5774 = vmatpush1.msra.mxu0 %v5693
        %5775 = vmatprep.subr.mxu0 %v5692
        %5776 = vmatpush1.msra.mxu0 %v5691
        %5777 = vmatprep.subr.mxu0 %v5690
        %5778 = vmatpush1.msra.mxu0 %v5689
        %5779 = vmatprep.subr.mxu0 %v5688
        %5780 = vmatpush1.msra.mxu0 %v5687
        %5781 = vmatprep.subr.mxu0 %v5686
        %5782 = vmatpush1.msra.mxu0 %v5685
        %5783 = vmatprep.subr.mxu0 %v5684
        %5784 = vmatpush1.msra.mxu0 %v5683
        %5785 = vmatprep.subr.mxu0 %v5746
        %5786 = vmatpush2.msra.mxu0 %v5745
        %5787 = vmatprep.subr.mxu0 %v5744
        %5788 = vmatpush2.msra.mxu0 %v5743
        %5789 = vmatprep.subr.mxu0 %v5742
        %5790 = vmatpush2.msra.mxu0 %v5741
        %5791 = vmatprep.subr.mxu0 %v5740
        %5792 = vmatpush2.msra.mxu0 %v5739
        %5793 = vmatprep.subr.mxu0 %v5738
        %5794 = vmatpush2.msra.mxu0 %v5737
        %5795 = vmatprep.subr.mxu0 %v5736
        %5796 = vmatpush2.msra.mxu0 %v5735
        %5797 = vmatprep.subr.mxu0 %v5734
        %5798 = vmatpush2.msra.mxu0 %v5733
        %5799 = vmatprep.subr.mxu0 %v5732
        %5800 = vmatpush2.msra.mxu0 %v5731
        %5801 = vmatprep.subr.mxu0 %v5730
        %5802 = vmatpush2.msra.mxu0 %v5729
        %5803 = vmatprep.subr.mxu0 %v5728
        %5804 = vmatpush2.msra.mxu0 %v5727
        %5805 = vmatprep.subr.mxu0 %v5726
        %5806 = vmatpush2.msra.mxu0 %v5725
        %5807 = vmatprep.subr.mxu0 %v5724
        %5808 = vmatpush2.msra.mxu0 %v5723
        %5809 = vmatprep.subr.mxu0 %v5722
        %5810 = vmatpush2.msra.mxu0 %v5721
        %5811 = vmatprep.subr.mxu0 %v5720
        %5812 = vmatpush2.msra.mxu0 %v5719
        %5813 = vmatprep.subr.mxu0 %v5718
        %5814 = vmatpush2.msra.mxu0 %v5717
        %5815 = vmatprep.subr.mxu0 %v5716
        %5816 = vmatpush2.msra.mxu0 %v5715
        %5817 = vmatprep.mubr.f32.mxu0 %v5750
        %5818 = vmatmul.mubr.f32.gmra.mxu0 %v5749
        %v5819 = vpop.f32.mrf.mxu0
        %v5820 = vadd.f32 0.0, %v5819
        %v5821 = vpop.f32.mrf.mxu0
        %v5822 = vadd.f32 0.0, %v5821
        %5823 = vdwg.mxu0
        %5824 = vxpose.xlu0.b32.start [1/16] %v350, 128
        %5825 = vxpose.xlu0.b32.cont [2/16] 0.0, 128
        %5826 = vxpose.xlu0.b32.cont [3/16] 0.0, 128
        %5827 = vxpose.xlu0.b32.cont [4/16] 0.0, 128
        %5828 = vxpose.xlu0.b32.cont [5/16] 0.0, 128
        %5829 = vxpose.xlu0.b32.cont [6/16] 0.0, 128
        %5830 = vxpose.xlu0.b32.cont [7/16] 0.0, 128
        %5831 = vxpose.xlu0.b32.cont [8/16] 0.0, 128
        %5832 = vxpose.xlu0.b32.cont [9/16] 0.0, 128
        %5833 = vxpose.xlu0.b32.cont [10/16] 0.0, 128
        %5834 = vxpose.xlu0.b32.cont [11/16] 0.0, 128
        %5835 = vxpose.xlu0.b32.cont [12/16] 0.0, 128
        %5836 = vxpose.xlu0.b32.cont [13/16] 0.0, 128
        %5837 = vxpose.xlu0.b32.cont [14/16] 0.0, 128
        %5838 = vxpose.xlu0.b32.cont [15/16] 0.0, 128
        %5839 = vxpose.xlu0.b32.end [16/16] 0.0, 128
        %v5840 = vpop.trf.xlu0
        %v5841 = vpop.trf.xlu0
        %v5842 = vpop.trf.xlu0
        %v5843 = vpop.trf.xlu0
        %v5844 = vpop.trf.xlu0
        %v5845 = vpop.trf.xlu0
        %v5846 = vpop.trf.xlu0
        %v5847 = vpop.trf.xlu0
        %v5848 = vpop.trf.xlu0
        %v5849 = vpop.trf.xlu0
        %v5850 = vpop.trf.xlu0
        %v5851 = vpop.trf.xlu0
        %v5852 = vpop.trf.xlu0
        %v5853 = vpop.trf.xlu0
        %v5854 = vpop.trf.xlu0
        %v5855 = vpop.trf.xlu0
        %5856 = vxpose.xlu0.b32.start [1/16] %v352, 128
        %5857 = vxpose.xlu0.b32.cont [2/16] 0.0, 128
        %5858 = vxpose.xlu0.b32.cont [3/16] 0.0, 128
        %5859 = vxpose.xlu0.b32.cont [4/16] 0.0, 128
        %5860 = vxpose.xlu0.b32.cont [5/16] 0.0, 128
        %5861 = vxpose.xlu0.b32.cont [6/16] 0.0, 128
        %5862 = vxpose.xlu0.b32.cont [7/16] 0.0, 128
        %5863 = vxpose.xlu0.b32.cont [8/16] 0.0, 128
        %5864 = vxpose.xlu0.b32.cont [9/16] 0.0, 128
        %5865 = vxpose.xlu0.b32.cont [10/16] 0.0, 128
        %5866 = vxpose.xlu0.b32.cont [11/16] 0.0, 128
        %5867 = vxpose.xlu0.b32.cont [12/16] 0.0, 128
        %5868 = vxpose.xlu0.b32.cont [13/16] 0.0, 128
        %5869 = vxpose.xlu0.b32.cont [14/16] 0.0, 128
        %5870 = vxpose.xlu0.b32.cont [15/16] 0.0, 128
        %5871 = vxpose.xlu0.b32.end [16/16] 0.0, 128
        %v5872 = vpop.trf.xlu0
        %v5873 = vpop.trf.xlu0
        %v5874 = vpop.trf.xlu0
        %v5875 = vpop.trf.xlu0
        %v5876 = vpop.trf.xlu0
        %v5877 = vpop.trf.xlu0
        %v5878 = vpop.trf.xlu0
        %v5879 = vpop.trf.xlu0
        %v5880 = vpop.trf.xlu0
        %v5881 = vpop.trf.xlu0
        %v5882 = vpop.trf.xlu0
        %v5883 = vpop.trf.xlu0
        %v5884 = vpop.trf.xlu0
        %v5885 = vpop.trf.xlu0
        %v5886 = vpop.trf.xlu0
        %v5887 = vpop.trf.xlu0
        %v5889 = vsel %vm450, %v5840, 0
        %v5892 = vsel %vm450, %v5841, 0
        %v5895 = vsel %vm450, %v5842, 0
        %v5898 = vsel %vm450, %v5843, 0
        %v5901 = vsel %vm450, %v5844, 0
        %v5904 = vsel %vm450, %v5845, 0
        %v5907 = vsel %vm450, %v5846, 0
        %v5910 = vsel %vm450, %v5847, 0
        %v5913 = vsel %vm450, %v5848, 0
        %v5916 = vsel %vm450, %v5849, 0
        %v5919 = vsel %vm450, %v5850, 0
        %v5922 = vsel %vm450, %v5851, 0
        %v5925 = vsel %vm450, %v5852, 0
        %v5928 = vsel %vm450, %v5853, 0
        %v5931 = vsel %vm450, %v5854, 0
        %v5934 = vsel %vm450, %v5855, 0
        %v5937 = vsel %vm450, %v5872, 0
        %v5940 = vsel %vm450, %v5873, 0
        %v5943 = vsel %vm450, %v5874, 0
        %v5946 = vsel %vm450, %v5875, 0
        %v5949 = vsel %vm450, %v5876, 0
        %v5952 = vsel %vm450, %v5877, 0
        %v5955 = vsel %vm450, %v5878, 0
        %v5958 = vsel %vm450, %v5879, 0
        %v5961 = vsel %vm450, %v5880, 0
        %v5964 = vsel %vm450, %v5881, 0
        %v5967 = vsel %vm450, %v5882, 0
        %v5970 = vsel %vm450, %v5883, 0
        %v5973 = vsel %vm450, %v5884, 0
        %v5976 = vsel %vm450, %v5885, 0
        %v5979 = vsel %vm450, %v5886, 0
        %v5982 = vsel %vm450, %v5887, 0
        %v5985 = vsel %vm547, %v384, 0
        %v5988 = vsel %vm547, %v385, 0
        %5990 = vmatprep.subr.mxu0 0.0
        %5991 = vmatpush1.msra.mxu0 0.0
        %5992 = vmatprep.subr.mxu0 0.0
        %5993 = vmatpush1.msra.mxu0 0.0
        %5994 = vmatprep.subr.mxu0 0.0
        %5995 = vmatpush1.msra.mxu0 0.0
        %5996 = vmatprep.subr.mxu0 0.0
        %5997 = vmatpush1.msra.mxu0 0.0
        %5998 = vmatprep.subr.mxu0 0.0
        %5999 = vmatpush1.msra.mxu0 0.0
        %6000 = vmatprep.subr.mxu0 0.0
        %6001 = vmatpush1.msra.mxu0 0.0
        %6002 = vmatprep.subr.mxu0 0.0
        %6003 = vmatpush1.msra.mxu0 0.0
        %6004 = vmatprep.subr.mxu0 0.0
        %6005 = vmatpush1.msra.mxu0 0.0
        %6006 = vmatprep.subr.mxu0 0.0
        %6007 = vmatpush1.msra.mxu0 0.0
        %6008 = vmatprep.subr.mxu0 0.0
        %6009 = vmatpush1.msra.mxu0 0.0
        %6010 = vmatprep.subr.mxu0 0.0
        %6011 = vmatpush1.msra.mxu0 0.0
        %6012 = vmatprep.subr.mxu0 0.0
        %6013 = vmatpush1.msra.mxu0 0.0
        %6014 = vmatprep.subr.mxu0 0.0
        %6015 = vmatpush1.msra.mxu0 0.0
        %6016 = vmatprep.subr.mxu0 0.0
        %6017 = vmatpush1.msra.mxu0 0.0
        %6018 = vmatprep.subr.mxu0 0.0
        %6019 = vmatpush1.msra.mxu0 0.0
        %6020 = vmatprep.subr.mxu0 %v5988
        %6021 = vmatpush1.msra.mxu0 %v5985
        %6022 = vmatprep.subr.mxu0 0.0
        %6023 = vmatpush2.msra.mxu0 0.0
        %6024 = vmatprep.subr.mxu0 0.0
        %6025 = vmatpush2.msra.mxu0 0.0
        %6026 = vmatprep.subr.mxu0 0.0
        %6027 = vmatpush2.msra.mxu0 0.0
        %6028 = vmatprep.subr.mxu0 0.0
        %6029 = vmatpush2.msra.mxu0 0.0
        %6030 = vmatprep.subr.mxu0 0.0
        %6031 = vmatpush2.msra.mxu0 0.0
        %6032 = vmatprep.subr.mxu0 0.0
        %6033 = vmatpush2.msra.mxu0 0.0
        %6034 = vmatprep.subr.mxu0 0.0
        %6035 = vmatpush2.msra.mxu0 0.0
        %6036 = vmatprep.subr.mxu0 0.0
        %6037 = vmatpush2.msra.mxu0 0.0
        %6038 = vmatprep.subr.mxu0 0.0
        %6039 = vmatpush2.msra.mxu0 0.0
        %6040 = vmatprep.subr.mxu0 0.0
        %6041 = vmatpush2.msra.mxu0 0.0
        %6042 = vmatprep.subr.mxu0 0.0
        %6043 = vmatpush2.msra.mxu0 0.0
        %6044 = vmatprep.subr.mxu0 0.0
        %6045 = vmatpush2.msra.mxu0 0.0
        %6046 = vmatprep.subr.mxu0 0.0
        %6047 = vmatpush2.msra.mxu0 0.0
        %6048 = vmatprep.subr.mxu0 0.0
        %6049 = vmatpush2.msra.mxu0 0.0
        %6050 = vmatprep.subr.mxu0 0.0
        %6051 = vmatpush2.msra.mxu0 0.0
        %6052 = vmatprep.subr.mxu0 0.0
        %6053 = vmatpush2.msra.mxu0 0.0
        %6054 = vmatprep.mubr.f32.mxu0 0.0
        %6055 = vmatmul.mubr.f32.gmra.mxu0 %v5889
        %v6056 = vpop.f32.mrf.mxu0
        %v6057 = vadd.f32 0.0, %v6056
        %v6058 = vpop.f32.mrf.mxu0
        %v6059 = vadd.f32 0.0, %v6058
        %6060 = vmatprep.mubr.f32.mxu0 0.0
        %6061 = vmatmul.mubr.f32.gmra.mxu0 %v5892
        %v6062 = vpop.f32.mrf.mxu0
        %v6063 = vadd.f32 0.0, %v6062
        %v6064 = vpop.f32.mrf.mxu0
        %v6065 = vadd.f32 0.0, %v6064
        %6066 = vmatprep.mubr.f32.mxu0 0.0
        %6067 = vmatmul.mubr.f32.gmra.mxu0 %v5895
        %v6068 = vpop.f32.mrf.mxu0
        %v6069 = vadd.f32 0.0, %v6068
        %v6070 = vpop.f32.mrf.mxu0
        %v6071 = vadd.f32 0.0, %v6070
        %6072 = vmatprep.mubr.f32.mxu0 0.0
        %6073 = vmatmul.mubr.f32.gmra.mxu0 %v5898
        %v6074 = vpop.f32.mrf.mxu0
        %v6075 = vadd.f32 0.0, %v6074
        %v6076 = vpop.f32.mrf.mxu0
        %v6077 = vadd.f32 0.0, %v6076
        %6078 = vmatprep.mubr.f32.mxu0 0.0
        %6079 = vmatmul.mubr.f32.gmra.mxu0 %v5901
        %v6080 = vpop.f32.mrf.mxu0
        %v6081 = vadd.f32 0.0, %v6080
        %v6082 = vpop.f32.mrf.mxu0
        %v6083 = vadd.f32 0.0, %v6082
        %6084 = vmatprep.mubr.f32.mxu0 0.0
        %6085 = vmatmul.mubr.f32.gmra.mxu0 %v5904
        %v6086 = vpop.f32.mrf.mxu0
        %v6087 = vadd.f32 0.0, %v6086
        %v6088 = vpop.f32.mrf.mxu0
        %v6089 = vadd.f32 0.0, %v6088
        %6090 = vmatprep.mubr.f32.mxu0 0.0
        %6091 = vmatmul.mubr.f32.gmra.mxu0 %v5907
        %v6092 = vpop.f32.mrf.mxu0
        %v6093 = vadd.f32 0.0, %v6092
        %v6094 = vpop.f32.mrf.mxu0
        %v6095 = vadd.f32 0.0, %v6094
        %6096 = vmatprep.mubr.f32.mxu0 0.0
        %6097 = vmatmul.mubr.f32.gmra.mxu0 %v5910
        %v6098 = vpop.f32.mrf.mxu0
        %v6099 = vadd.f32 0.0, %v6098
        %v6100 = vpop.f32.mrf.mxu0
        %v6101 = vadd.f32 0.0, %v6100
        %6102 = vmatprep.mubr.f32.mxu0 0.0
        %6103 = vmatmul.mubr.f32.gmra.mxu0 %v5913
        %v6104 = vpop.f32.mrf.mxu0
        %v6105 = vadd.f32 0.0, %v6104
        %v6106 = vpop.f32.mrf.mxu0
        %v6107 = vadd.f32 0.0, %v6106
        %6108 = vmatprep.mubr.f32.mxu0 0.0
        %6109 = vmatmul.mubr.f32.gmra.mxu0 %v5916
        %v6110 = vpop.f32.mrf.mxu0
        %v6111 = vadd.f32 0.0, %v6110
        %v6112 = vpop.f32.mrf.mxu0
        %v6113 = vadd.f32 0.0, %v6112
        %6114 = vmatprep.mubr.f32.mxu0 0.0
        %6115 = vmatmul.mubr.f32.gmra.mxu0 %v5919
        %v6116 = vpop.f32.mrf.mxu0
        %v6117 = vadd.f32 0.0, %v6116
        %v6118 = vpop.f32.mrf.mxu0
        %v6119 = vadd.f32 0.0, %v6118
        %6120 = vmatprep.mubr.f32.mxu0 0.0
        %6121 = vmatmul.mubr.f32.gmra.mxu0 %v5922
        %v6122 = vpop.f32.mrf.mxu0
        %v6123 = vadd.f32 0.0, %v6122
        %v6124 = vpop.f32.mrf.mxu0
        %v6125 = vadd.f32 0.0, %v6124
        %6126 = vmatprep.mubr.f32.mxu0 0.0
        %6127 = vmatmul.mubr.f32.gmra.mxu0 %v5925
        %v6128 = vpop.f32.mrf.mxu0
        %v6129 = vadd.f32 0.0, %v6128
        %v6130 = vpop.f32.mrf.mxu0
        %v6131 = vadd.f32 0.0, %v6130
        %6132 = vmatprep.mubr.f32.mxu0 0.0
        %6133 = vmatmul.mubr.f32.gmra.mxu0 %v5928
        %v6134 = vpop.f32.mrf.mxu0
        %v6135 = vadd.f32 0.0, %v6134
        %v6136 = vpop.f32.mrf.mxu0
        %v6137 = vadd.f32 0.0, %v6136
        %6138 = vmatprep.mubr.f32.mxu0 0.0
        %6139 = vmatmul.mubr.f32.gmra.mxu0 %v5931
        %v6140 = vpop.f32.mrf.mxu0
        %v6141 = vadd.f32 0.0, %v6140
        %v6142 = vpop.f32.mrf.mxu0
        %v6143 = vadd.f32 0.0, %v6142
        %6144 = vmatprep.mubr.f32.mxu0 0.0
        %6145 = vmatmul.mubr.f32.gmra.mxu0 %v5934
        %v6146 = vpop.f32.mrf.mxu0
        %v6147 = vadd.f32 0.0, %v6146
        %v6148 = vpop.f32.mrf.mxu0
        %v6149 = vadd.f32 0.0, %v6148
        %6150 = vmatprep.mubr.f32.mxu0 0.0
        %6151 = vmatmul.mubr.f32.gmra.mxu0 %v5937
        %v6152 = vpop.f32.mrf.mxu0
        %v6153 = vadd.f32 0.0, %v6152
        %v6154 = vpop.f32.mrf.mxu0
        %v6155 = vadd.f32 0.0, %v6154
        %6156 = vmatprep.mubr.f32.mxu0 0.0
        %6157 = vmatmul.mubr.f32.gmra.mxu0 %v5940
        %v6158 = vpop.f32.mrf.mxu0
        %v6159 = vadd.f32 0.0, %v6158
        %v6160 = vpop.f32.mrf.mxu0
        %v6161 = vadd.f32 0.0, %v6160
        %6162 = vmatprep.mubr.f32.mxu0 0.0
        %6163 = vmatmul.mubr.f32.gmra.mxu0 %v5943
        %v6164 = vpop.f32.mrf.mxu0
        %v6165 = vadd.f32 0.0, %v6164
        %v6166 = vpop.f32.mrf.mxu0
        %v6167 = vadd.f32 0.0, %v6166
        %6168 = vmatprep.mubr.f32.mxu0 0.0
        %6169 = vmatmul.mubr.f32.gmra.mxu0 %v5946
        %v6170 = vpop.f32.mrf.mxu0
        %v6171 = vadd.f32 0.0, %v6170
        %v6172 = vpop.f32.mrf.mxu0
        %v6173 = vadd.f32 0.0, %v6172
        %6174 = vmatprep.mubr.f32.mxu0 0.0
        %6175 = vmatmul.mubr.f32.gmra.mxu0 %v5949
        %v6176 = vpop.f32.mrf.mxu0
        %v6177 = vadd.f32 0.0, %v6176
        %v6178 = vpop.f32.mrf.mxu0
        %v6179 = vadd.f32 0.0, %v6178
        %6180 = vmatprep.mubr.f32.mxu0 0.0
        %6181 = vmatmul.mubr.f32.gmra.mxu0 %v5952
        %v6182 = vpop.f32.mrf.mxu0
        %v6183 = vadd.f32 0.0, %v6182
        %v6184 = vpop.f32.mrf.mxu0
        %v6185 = vadd.f32 0.0, %v6184
        %6186 = vmatprep.mubr.f32.mxu0 0.0
        %6187 = vmatmul.mubr.f32.gmra.mxu0 %v5955
        %v6188 = vpop.f32.mrf.mxu0
        %v6189 = vadd.f32 0.0, %v6188
        %v6190 = vpop.f32.mrf.mxu0
        %v6191 = vadd.f32 0.0, %v6190
        %6192 = vmatprep.mubr.f32.mxu0 0.0
        %6193 = vmatmul.mubr.f32.gmra.mxu0 %v5958
        %v6194 = vpop.f32.mrf.mxu0
        %v6195 = vadd.f32 0.0, %v6194
        %v6196 = vpop.f32.mrf.mxu0
        %v6197 = vadd.f32 0.0, %v6196
        %6198 = vmatprep.mubr.f32.mxu0 0.0
        %6199 = vmatmul.mubr.f32.gmra.mxu0 %v5961
        %v6200 = vpop.f32.mrf.mxu0
        %v6201 = vadd.f32 0.0, %v6200
        %v6202 = vpop.f32.mrf.mxu0
        %v6203 = vadd.f32 0.0, %v6202
        %6204 = vmatprep.mubr.f32.mxu0 0.0
        %6205 = vmatmul.mubr.f32.gmra.mxu0 %v5964
        %v6206 = vpop.f32.mrf.mxu0
        %v6207 = vadd.f32 0.0, %v6206
        %v6208 = vpop.f32.mrf.mxu0
        %v6209 = vadd.f32 0.0, %v6208
        %6210 = vmatprep.mubr.f32.mxu0 0.0
        %6211 = vmatmul.mubr.f32.gmra.mxu0 %v5967
        %v6212 = vpop.f32.mrf.mxu0
        %v6213 = vadd.f32 0.0, %v6212
        %v6214 = vpop.f32.mrf.mxu0
        %v6215 = vadd.f32 0.0, %v6214
        %6216 = vmatprep.mubr.f32.mxu0 0.0
        %6217 = vmatmul.mubr.f32.gmra.mxu0 %v5970
        %v6218 = vpop.f32.mrf.mxu0
        %v6219 = vadd.f32 0.0, %v6218
        %v6220 = vpop.f32.mrf.mxu0
        %v6221 = vadd.f32 0.0, %v6220
        %6222 = vmatprep.mubr.f32.mxu0 0.0
        %6223 = vmatmul.mubr.f32.gmra.mxu0 %v5973
        %v6224 = vpop.f32.mrf.mxu0
        %v6225 = vadd.f32 0.0, %v6224
        %v6226 = vpop.f32.mrf.mxu0
        %v6227 = vadd.f32 0.0, %v6226
        %6228 = vmatprep.mubr.f32.mxu0 0.0
        %6229 = vmatmul.mubr.f32.gmra.mxu0 %v5976
        %v6230 = vpop.f32.mrf.mxu0
        %v6231 = vadd.f32 0.0, %v6230
        %v6232 = vpop.f32.mrf.mxu0
        %v6233 = vadd.f32 0.0, %v6232
        %6234 = vmatprep.mubr.f32.mxu0 0.0
        %6235 = vmatmul.mubr.f32.gmra.mxu0 %v5979
        %v6236 = vpop.f32.mrf.mxu0
        %v6237 = vadd.f32 0.0, %v6236
        %v6238 = vpop.f32.mrf.mxu0
        %v6239 = vadd.f32 0.0, %v6238
        %6240 = vmatprep.mubr.f32.mxu0 0.0
        %6241 = vmatmul.mubr.f32.gmra.mxu0 %v5982
        %v6242 = vpop.f32.mrf.mxu0
        %v6243 = vadd.f32 0.0, %v6242
        %v6244 = vpop.f32.mrf.mxu0
        %v6245 = vadd.f32 0.0, %v6244
        %6246 = vdwg.mxu0
        %v6247 = vmax.f32 %v6057, %v6069
        %v6248 = vmax.f32 %v6063, %v6075
        %v6249 = vmax.f32 %v6247, %v6081
        %v6250 = vmax.f32 %v6248, %v6087
        %v6251 = vmax.f32 %v6249, %v6093
        %v6252 = vmax.f32 %v6250, %v6099
        %v6253 = vmax.f32 %v6251, %v6105
        %v6254 = vmax.f32 %v6252, %v6111
        %v6255 = vmax.f32 %v6253, %v6117
        %v6256 = vmax.f32 %v6254, %v6123
        %v6257 = vmax.f32 %v6255, %v6129
        %v6258 = vmax.f32 %v6256, %v6135
        %v6259 = vmax.f32 %v6257, %v6141
        %v6260 = vmax.f32 %v6258, %v6147
        %v6261 = vmax.f32 %v6259, %v6153
        %v6262 = vmax.f32 %v6260, %v6159
        %v6263 = vmax.f32 %v6261, %v6165
        %v6264 = vmax.f32 %v6262, %v6171
        %v6265 = vmax.f32 %v6263, %v6177
        %v6266 = vmax.f32 %v6264, %v6183
        %v6267 = vmax.f32 %v6265, %v6189
        %v6268 = vmax.f32 %v6266, %v6195
        %v6269 = vmax.f32 %v6267, %v6201
        %v6270 = vmax.f32 %v6268, %v6207
        %v6271 = vmax.f32 %v6269, %v6213
        %v6272 = vmax.f32 %v6270, %v6219
        %v6273 = vmax.f32 %v6271, %v6225
        %v6274 = vmax.f32 %v6272, %v6231
        %v6275 = vmax.f32 %v6273, %v6237
        %v6276 = vmax.f32 %v6274, %v6243
        %v6277 = vmax.f32 %v6275, %v6276
        %v6278 = vrot.slane %v6277, 4
        %v6279 = vmax.f32 %v6277, %v6278
        %v6280 = vrot.slane %v6279, 2
        %v6281 = vmax.f32 %v6279, %v6280
        %v6282 = vrot.slane %v6281, 1
        %v6283 = vmax.f32 %v6281, %v6282
        %v6284 = vmax.f32 %v6059, %v6071
        %v6285 = vmax.f32 %v6065, %v6077
        %v6286 = vmax.f32 %v6284, %v6083
        %v6287 = vmax.f32 %v6285, %v6089
        %v6288 = vmax.f32 %v6286, %v6095
        %v6289 = vmax.f32 %v6287, %v6101
        %v6290 = vmax.f32 %v6288, %v6107
        %v6291 = vmax.f32 %v6289, %v6113
        %v6292 = vmax.f32 %v6290, %v6119
        %v6293 = vmax.f32 %v6291, %v6125
        %v6294 = vmax.f32 %v6292, %v6131
        %v6295 = vmax.f32 %v6293, %v6137
        %v6296 = vmax.f32 %v6294, %v6143
        %v6297 = vmax.f32 %v6295, %v6149
        %v6298 = vmax.f32 %v6296, %v6155
        %v6299 = vmax.f32 %v6297, %v6161
        %v6300 = vmax.f32 %v6298, %v6167
        %v6301 = vmax.f32 %v6299, %v6173
        %v6302 = vmax.f32 %v6300, %v6179
        %v6303 = vmax.f32 %v6301, %v6185
        %v6304 = vmax.f32 %v6302, %v6191
        %v6305 = vmax.f32 %v6303, %v6197
        %v6306 = vmax.f32 %v6304, %v6203
        %v6307 = vmax.f32 %v6305, %v6209
        %v6308 = vmax.f32 %v6306, %v6215
        %v6309 = vmax.f32 %v6307, %v6221
        %v6310 = vmax.f32 %v6308, %v6227
        %v6311 = vmax.f32 %v6309, %v6233
        %v6312 = vmax.f32 %v6310, %v6239
        %v6313 = vmax.f32 %v6311, %v6245
        %v6314 = vmax.f32 %v6312, %v6313
        %v6315 = vrot.slane %v6314, 4
        %v6316 = vmax.f32 %v6314, %v6315
        %v6317 = vrot.slane %v6316, 2
        %v6318 = vmax.f32 %v6316, %v6317
        %v6319 = vrot.slane %v6318, 1
        %v6320 = vmax.f32 %v6318, %v6319
        %v6321 = vsub.f32 %v6057, %v6283
        %v6322 = vsub.f32 %v6059, %v6320
        %v6323 = vsub.f32 %v6063, %v6283
        %v6324 = vsub.f32 %v6065, %v6320
        %v6325 = vsub.f32 %v6069, %v6283
        %v6326 = vsub.f32 %v6071, %v6320
        %v6327 = vsub.f32 %v6075, %v6283
        %v6328 = vsub.f32 %v6077, %v6320
        %v6329 = vsub.f32 %v6081, %v6283
        %v6330 = vsub.f32 %v6083, %v6320
        %v6331 = vsub.f32 %v6087, %v6283
        %v6332 = vsub.f32 %v6089, %v6320
        %v6333 = vsub.f32 %v6093, %v6283
        %v6334 = vsub.f32 %v6095, %v6320
        %v6335 = vsub.f32 %v6099, %v6283
        %v6336 = vsub.f32 %v6101, %v6320
        %v6337 = vsub.f32 %v6105, %v6283
        %v6338 = vsub.f32 %v6107, %v6320
        %v6339 = vsub.f32 %v6111, %v6283
        %v6340 = vsub.f32 %v6113, %v6320
        %v6341 = vsub.f32 %v6117, %v6283
        %v6342 = vsub.f32 %v6119, %v6320
        %v6343 = vsub.f32 %v6123, %v6283
        %v6344 = vsub.f32 %v6125, %v6320
        %v6345 = vsub.f32 %v6129, %v6283
        %v6346 = vsub.f32 %v6131, %v6320
        %v6347 = vsub.f32 %v6135, %v6283
        %v6348 = vsub.f32 %v6137, %v6320
        %v6349 = vsub.f32 %v6141, %v6283
        %v6350 = vsub.f32 %v6143, %v6320
        %v6351 = vsub.f32 %v6147, %v6283
        %v6352 = vsub.f32 %v6149, %v6320
        %v6353 = vsub.f32 %v6153, %v6283
        %v6354 = vsub.f32 %v6155, %v6320
        %v6355 = vsub.f32 %v6159, %v6283
        %v6356 = vsub.f32 %v6161, %v6320
        %v6357 = vsub.f32 %v6165, %v6283
        %v6358 = vsub.f32 %v6167, %v6320
        %v6359 = vsub.f32 %v6171, %v6283
        %v6360 = vsub.f32 %v6173, %v6320
        %v6361 = vsub.f32 %v6177, %v6283
        %v6362 = vsub.f32 %v6179, %v6320
        %v6363 = vsub.f32 %v6183, %v6283
        %v6364 = vsub.f32 %v6185, %v6320
        %v6365 = vsub.f32 %v6189, %v6283
        %v6366 = vsub.f32 %v6191, %v6320
        %v6367 = vsub.f32 %v6195, %v6283
        %v6368 = vsub.f32 %v6197, %v6320
        %v6369 = vsub.f32 %v6201, %v6283
        %v6370 = vsub.f32 %v6203, %v6320
        %v6371 = vsub.f32 %v6207, %v6283
        %v6372 = vsub.f32 %v6209, %v6320
        %v6373 = vsub.f32 %v6213, %v6283
        %v6374 = vsub.f32 %v6215, %v6320
        %v6375 = vsub.f32 %v6219, %v6283
        %v6376 = vsub.f32 %v6221, %v6320
        %v6377 = vsub.f32 %v6225, %v6283
        %v6378 = vsub.f32 %v6227, %v6320
        %v6379 = vsub.f32 %v6231, %v6283
        %v6380 = vsub.f32 %v6233, %v6320
        %v6381 = vsub.f32 %v6237, %v6283
        %v6382 = vsub.f32 %v6239, %v6320
        %v6383 = vsub.f32 %v6243, %v6283
        %v6384 = vsub.f32 %v6245, %v6320
        %v6385 = vmul.f32 %v6321, 1.442695
        %v6386 = vpow.pop %v6385
        %v6387 = vmul.f32 %v6322, 1.442695
        %v6388 = vpow.pop %v6387
        %v6389 = vmul.f32 %v6323, 1.442695
        %v6390 = vpow.pop %v6389
        %v6391 = vmul.f32 %v6324, 1.442695
        %v6392 = vpow.pop %v6391
        %v6393 = vmul.f32 %v6325, 1.442695
        %v6394 = vpow.pop %v6393
        %v6395 = vmul.f32 %v6326, 1.442695
        %v6396 = vpow.pop %v6395
        %v6397 = vmul.f32 %v6327, 1.442695
        %v6398 = vpow.pop %v6397
        %v6399 = vmul.f32 %v6328, 1.442695
        %v6400 = vpow.pop %v6399
        %v6401 = vmul.f32 %v6329, 1.442695
        %v6402 = vpow.pop %v6401
        %v6403 = vmul.f32 %v6330, 1.442695
        %v6404 = vpow.pop %v6403
        %v6405 = vmul.f32 %v6331, 1.442695
        %v6406 = vpow.pop %v6405
        %v6407 = vmul.f32 %v6332, 1.442695
        %v6408 = vpow.pop %v6407
        %v6409 = vmul.f32 %v6333, 1.442695
        %v6410 = vpow.pop %v6409
        %v6411 = vmul.f32 %v6334, 1.442695
        %v6412 = vpow.pop %v6411
        %v6413 = vmul.f32 %v6335, 1.442695
        %v6414 = vpow.pop %v6413
        %v6415 = vmul.f32 %v6336, 1.442695
        %v6416 = vpow.pop %v6415
        %v6417 = vmul.f32 %v6337, 1.442695
        %v6418 = vpow.pop %v6417
        %v6419 = vmul.f32 %v6338, 1.442695
        %v6420 = vpow.pop %v6419
        %v6421 = vmul.f32 %v6339, 1.442695
        %v6422 = vpow.pop %v6421
        %v6423 = vmul.f32 %v6340, 1.442695
        %v6424 = vpow.pop %v6423
        %v6425 = vmul.f32 %v6341, 1.442695
        %v6426 = vpow.pop %v6425
        %v6427 = vmul.f32 %v6342, 1.442695
        %v6428 = vpow.pop %v6427
        %v6429 = vmul.f32 %v6343, 1.442695
        %v6430 = vpow.pop %v6429
        %v6431 = vmul.f32 %v6344, 1.442695
        %v6432 = vpow.pop %v6431
        %v6433 = vmul.f32 %v6345, 1.442695
        %v6434 = vpow.pop %v6433
        %v6435 = vmul.f32 %v6346, 1.442695
        %v6436 = vpow.pop %v6435
        %v6437 = vmul.f32 %v6347, 1.442695
        %v6438 = vpow.pop %v6437
        %v6439 = vmul.f32 %v6348, 1.442695
        %v6440 = vpow.pop %v6439
        %v6441 = vmul.f32 %v6349, 1.442695
        %v6442 = vpow.pop %v6441
        %v6443 = vmul.f32 %v6350, 1.442695
        %v6444 = vpow.pop %v6443
        %v6445 = vmul.f32 %v6351, 1.442695
        %v6446 = vpow.pop %v6445
        %v6447 = vmul.f32 %v6352, 1.442695
        %v6448 = vpow.pop %v6447
        %v6449 = vmul.f32 %v6353, 1.442695
        %v6450 = vpow.pop %v6449
        %v6451 = vmul.f32 %v6354, 1.442695
        %v6452 = vpow.pop %v6451
        %v6453 = vmul.f32 %v6355, 1.442695
        %v6454 = vpow.pop %v6453
        %v6455 = vmul.f32 %v6356, 1.442695
        %v6456 = vpow.pop %v6455
        %v6457 = vmul.f32 %v6357, 1.442695
        %v6458 = vpow.pop %v6457
        %v6459 = vmul.f32 %v6358, 1.442695
        %v6460 = vpow.pop %v6459
        %v6461 = vmul.f32 %v6359, 1.442695
        %v6462 = vpow.pop %v6461
        %v6463 = vmul.f32 %v6360, 1.442695
        %v6464 = vpow.pop %v6463
        %v6465 = vmul.f32 %v6361, 1.442695
        %v6466 = vpow.pop %v6465
        %v6467 = vmul.f32 %v6362, 1.442695
        %v6468 = vpow.pop %v6467
        %v6469 = vmul.f32 %v6363, 1.442695
        %v6470 = vpow.pop %v6469
        %v6471 = vmul.f32 %v6364, 1.442695
        %v6472 = vpow.pop %v6471
        %v6473 = vmul.f32 %v6365, 1.442695
        %v6474 = vpow.pop %v6473
        %v6475 = vmul.f32 %v6366, 1.442695
        %v6476 = vpow.pop %v6475
        %v6477 = vmul.f32 %v6367, 1.442695
        %v6478 = vpow.pop %v6477
        %v6479 = vmul.f32 %v6368, 1.442695
        %v6480 = vpow.pop %v6479
        %v6481 = vmul.f32 %v6369, 1.442695
        %v6482 = vpow.pop %v6481
        %v6483 = vmul.f32 %v6370, 1.442695
        %v6484 = vpow.pop %v6483
        %v6485 = vmul.f32 %v6371, 1.442695
        %v6486 = vpow.pop %v6485
        %v6487 = vmul.f32 %v6372, 1.442695
        %v6488 = vpow.pop %v6487
        %v6489 = vmul.f32 %v6373, 1.442695
        %v6490 = vpow.pop %v6489
        %v6491 = vmul.f32 %v6374, 1.442695
        %v6492 = vpow.pop %v6491
        %v6493 = vmul.f32 %v6375, 1.442695
        %v6494 = vpow.pop %v6493
        %v6495 = vmul.f32 %v6376, 1.442695
        %v6496 = vpow.pop %v6495
        %v6497 = vmul.f32 %v6377, 1.442695
        %v6498 = vpow.pop %v6497
        %v6499 = vmul.f32 %v6378, 1.442695
        %v6500 = vpow.pop %v6499
        %v6501 = vmul.f32 %v6379, 1.442695
        %v6502 = vpow.pop %v6501
        %v6503 = vmul.f32 %v6380, 1.442695
        %v6504 = vpow.pop %v6503
        %v6505 = vmul.f32 %v6381, 1.442695
        %v6506 = vpow.pop %v6505
        %v6507 = vmul.f32 %v6382, 1.442695
        %v6508 = vpow.pop %v6507
        %v6509 = vmul.f32 %v6383, 1.442695
        %v6510 = vpow.pop %v6509
        %v6511 = vmul.f32 %v6384, 1.442695
        %v6512 = vpow.pop %v6511
        %v6513 = vadd.f32 %v6386, %v6390
        %v6514 = vadd.f32 %v6513, %v6394
        %v6515 = vadd.f32 %v6514, %v6398
        %v6516 = vadd.f32 %v6515, %v6402
        %v6517 = vadd.f32 %v6516, %v6406
        %v6518 = vadd.f32 %v6517, %v6410
        %v6519 = vadd.f32 %v6518, %v6414
        %v6520 = vadd.f32 %v6519, %v6418
        %v6521 = vadd.f32 %v6520, %v6422
        %v6522 = vadd.f32 %v6521, %v6426
        %v6523 = vadd.f32 %v6522, %v6430
        %v6524 = vadd.f32 %v6523, %v6434
        %v6525 = vadd.f32 %v6524, %v6438
        %v6526 = vadd.f32 %v6525, %v6442
        %v6527 = vadd.f32 %v6526, %v6446
        %v6528 = vadd.f32 %v6527, %v6450
        %v6529 = vadd.f32 %v6528, %v6454
        %v6530 = vadd.f32 %v6529, %v6458
        %v6531 = vadd.f32 %v6530, %v6462
        %v6532 = vadd.f32 %v6531, %v6466
        %v6533 = vadd.f32 %v6532, %v6470
        %v6534 = vadd.f32 %v6533, %v6474
        %v6535 = vadd.f32 %v6534, %v6478
        %v6536 = vadd.f32 %v6535, %v6482
        %v6537 = vadd.f32 %v6536, %v6486
        %v6538 = vadd.f32 %v6537, %v6490
        %v6539 = vadd.f32 %v6538, %v6494
        %v6540 = vadd.f32 %v6539, %v6498
        %v6541 = vadd.f32 %v6540, %v6502
        %v6542 = vadd.f32 %v6541, %v6506
        %v6543 = vadd.f32 %v6542, %v6510
        %v6544 = vrot.slane %v6543, 4
        %v6545 = vadd.f32 %v6543, %v6544
        %v6546 = vrot.slane %v6545, 2
        %v6547 = vadd.f32 %v6545, %v6546
        %v6548 = vrot.slane %v6547, 1
        %v6549 = vadd.f32 %v6547, %v6548
        %v6550 = vadd.f32 %v6388, %v6392
        %v6551 = vadd.f32 %v6550, %v6396
        %v6552 = vadd.f32 %v6551, %v6400
        %v6553 = vadd.f32 %v6552, %v6404
        %v6554 = vadd.f32 %v6553, %v6408
        %v6555 = vadd.f32 %v6554, %v6412
        %v6556 = vadd.f32 %v6555, %v6416
        %v6557 = vadd.f32 %v6556, %v6420
        %v6558 = vadd.f32 %v6557, %v6424
        %v6559 = vadd.f32 %v6558, %v6428
        %v6560 = vadd.f32 %v6559, %v6432
        %v6561 = vadd.f32 %v6560, %v6436
        %v6562 = vadd.f32 %v6561, %v6440
        %v6563 = vadd.f32 %v6562, %v6444
        %v6564 = vadd.f32 %v6563, %v6448
        %v6565 = vadd.f32 %v6564, %v6452
        %v6566 = vadd.f32 %v6565, %v6456
        %v6567 = vadd.f32 %v6566, %v6460
        %v6568 = vadd.f32 %v6567, %v6464
        %v6569 = vadd.f32 %v6568, %v6468
        %v6570 = vadd.f32 %v6569, %v6472
        %v6571 = vadd.f32 %v6570, %v6476
        %v6572 = vadd.f32 %v6571, %v6480
        %v6573 = vadd.f32 %v6572, %v6484
        %v6574 = vadd.f32 %v6573, %v6488
        %v6575 = vadd.f32 %v6574, %v6492
        %v6576 = vadd.f32 %v6575, %v6496
        %v6577 = vadd.f32 %v6576, %v6500
        %v6578 = vadd.f32 %v6577, %v6504
        %v6579 = vadd.f32 %v6578, %v6508
        %v6580 = vadd.f32 %v6579, %v6512
        %v6581 = vrot.slane %v6580, 4
        %v6582 = vadd.f32 %v6580, %v6581
        %v6583 = vrot.slane %v6582, 2
        %v6584 = vadd.f32 %v6582, %v6583
        %v6585 = vrot.slane %v6584, 1
        %v6586 = vadd.f32 %v6584, %v6585
        %v6587 = vrcp.pop %v6549
        %v6588 = vrcp.pop %v6586
        %v6589 = vmul.f32 %v6386, %v6587
        %v6590 = vmul.f32 %v6388, %v6588
        %v6591 = vmul.f32 %v6390, %v6587
        %v6592 = vmul.f32 %v6392, %v6588
        %v6593 = vmul.f32 %v6394, %v6587
        %v6594 = vmul.f32 %v6396, %v6588
        %v6595 = vmul.f32 %v6398, %v6587
        %v6596 = vmul.f32 %v6400, %v6588
        %v6597 = vmul.f32 %v6402, %v6587
        %v6598 = vmul.f32 %v6404, %v6588
        %v6599 = vmul.f32 %v6406, %v6587
        %v6600 = vmul.f32 %v6408, %v6588
        %v6601 = vmul.f32 %v6410, %v6587
        %v6602 = vmul.f32 %v6412, %v6588
        %v6603 = vmul.f32 %v6414, %v6587
        %v6604 = vmul.f32 %v6416, %v6588
        %v6605 = vmul.f32 %v6418, %v6587
        %v6606 = vmul.f32 %v6420, %v6588
        %v6607 = vmul.f32 %v6422, %v6587
        %v6608 = vmul.f32 %v6424, %v6588
        %v6609 = vmul.f32 %v6426, %v6587
        %v6610 = vmul.f32 %v6428, %v6588
        %v6611 = vmul.f32 %v6430, %v6587
        %v6612 = vmul.f32 %v6432, %v6588
        %v6613 = vmul.f32 %v6434, %v6587
        %v6614 = vmul.f32 %v6436, %v6588
        %v6615 = vmul.f32 %v6438, %v6587
        %v6616 = vmul.f32 %v6440, %v6588
        %v6617 = vmul.f32 %v6442, %v6587
        %v6618 = vmul.f32 %v6444, %v6588
        %v6619 = vmul.f32 %v6446, %v6587
        %v6620 = vmul.f32 %v6448, %v6588
        %v6621 = vmul.f32 %v6450, %v6587
        %v6622 = vmul.f32 %v6452, %v6588
        %v6623 = vmul.f32 %v6454, %v6587
        %v6624 = vmul.f32 %v6456, %v6588
        %v6625 = vmul.f32 %v6458, %v6587
        %v6626 = vmul.f32 %v6460, %v6588
        %v6627 = vmul.f32 %v6462, %v6587
        %v6628 = vmul.f32 %v6464, %v6588
        %v6629 = vmul.f32 %v6466, %v6587
        %v6630 = vmul.f32 %v6468, %v6588
        %v6631 = vmul.f32 %v6470, %v6587
        %v6632 = vmul.f32 %v6472, %v6588
        %v6633 = vmul.f32 %v6474, %v6587
        %v6634 = vmul.f32 %v6476, %v6588
        %v6635 = vmul.f32 %v6478, %v6587
        %v6636 = vmul.f32 %v6480, %v6588
        %v6637 = vmul.f32 %v6482, %v6587
        %v6638 = vmul.f32 %v6484, %v6588
        %v6639 = vmul.f32 %v6486, %v6587
        %v6640 = vmul.f32 %v6488, %v6588
        %v6641 = vmul.f32 %v6490, %v6587
        %v6642 = vmul.f32 %v6492, %v6588
        %v6643 = vmul.f32 %v6494, %v6587
        %v6644 = vmul.f32 %v6496, %v6588
        %v6645 = vmul.f32 %v6498, %v6587
        %v6646 = vmul.f32 %v6500, %v6588
        %v6647 = vmul.f32 %v6502, %v6587
        %v6648 = vmul.f32 %v6504, %v6588
        %v6649 = vmul.f32 %v6506, %v6587
        %v6650 = vmul.f32 %v6508, %v6588
        %v6651 = vmul.f32 %v6510, %v6587
        %v6652 = vmul.f32 %v6512, %v6588
        %6653 = vmatprep.subr.mxu0 %v6620
        %6654 = vmatpush1.msra.mxu0 %v6619
        %6655 = vmatprep.subr.mxu0 %v6618
        %6656 = vmatpush1.msra.mxu0 %v6617
        %6657 = vmatprep.subr.mxu0 %v6616
        %6658 = vmatpush1.msra.mxu0 %v6615
        %6659 = vmatprep.subr.mxu0 %v6614
        %6660 = vmatpush1.msra.mxu0 %v6613
        %6661 = vmatprep.subr.mxu0 %v6612
        %6662 = vmatpush1.msra.mxu0 %v6611
        %6663 = vmatprep.subr.mxu0 %v6610
        %6664 = vmatpush1.msra.mxu0 %v6609
        %6665 = vmatprep.subr.mxu0 %v6608
        %6666 = vmatpush1.msra.mxu0 %v6607
        %6667 = vmatprep.subr.mxu0 %v6606
        %6668 = vmatpush1.msra.mxu0 %v6605
        %6669 = vmatprep.subr.mxu0 %v6604
        %6670 = vmatpush1.msra.mxu0 %v6603
        %6671 = vmatprep.subr.mxu0 %v6602
        %6672 = vmatpush1.msra.mxu0 %v6601
        %6673 = vmatprep.subr.mxu0 %v6600
        %6674 = vmatpush1.msra.mxu0 %v6599
        %6675 = vmatprep.subr.mxu0 %v6598
        %6676 = vmatpush1.msra.mxu0 %v6597
        %6677 = vmatprep.subr.mxu0 %v6596
        %6678 = vmatpush1.msra.mxu0 %v6595
        %6679 = vmatprep.subr.mxu0 %v6594
        %6680 = vmatpush1.msra.mxu0 %v6593
        %6681 = vmatprep.subr.mxu0 %v6592
        %6682 = vmatpush1.msra.mxu0 %v6591
        %6683 = vmatprep.subr.mxu0 %v6590
        %6684 = vmatpush1.msra.mxu0 %v6589
        %6685 = vmatprep.subr.mxu0 %v6652
        %6686 = vmatpush2.msra.mxu0 %v6651
        %6687 = vmatprep.subr.mxu0 %v6650
        %6688 = vmatpush2.msra.mxu0 %v6649
        %6689 = vmatprep.subr.mxu0 %v6648
        %6690 = vmatpush2.msra.mxu0 %v6647
        %6691 = vmatprep.subr.mxu0 %v6646
        %6692 = vmatpush2.msra.mxu0 %v6645
        %6693 = vmatprep.subr.mxu0 %v6644
        %6694 = vmatpush2.msra.mxu0 %v6643
        %6695 = vmatprep.subr.mxu0 %v6642
        %6696 = vmatpush2.msra.mxu0 %v6641
        %6697 = vmatprep.subr.mxu0 %v6640
        %6698 = vmatpush2.msra.mxu0 %v6639
        %6699 = vmatprep.subr.mxu0 %v6638
        %6700 = vmatpush2.msra.mxu0 %v6637
        %6701 = vmatprep.subr.mxu0 %v6636
        %6702 = vmatpush2.msra.mxu0 %v6635
        %6703 = vmatprep.subr.mxu0 %v6634
        %6704 = vmatpush2.msra.mxu0 %v6633
        %6705 = vmatprep.subr.mxu0 %v6632
        %6706 = vmatpush2.msra.mxu0 %v6631
        %6707 = vmatprep.subr.mxu0 %v6630
        %6708 = vmatpush2.msra.mxu0 %v6629
        %6709 = vmatprep.subr.mxu0 %v6628
        %6710 = vmatpush2.msra.mxu0 %v6627
        %6711 = vmatprep.subr.mxu0 %v6626
        %6712 = vmatpush2.msra.mxu0 %v6625
        %6713 = vmatprep.subr.mxu0 %v6624
        %6714 = vmatpush2.msra.mxu0 %v6623
        %6715 = vmatprep.subr.mxu0 %v6622
        %6716 = vmatpush2.msra.mxu0 %v6621
        %6717 = vmatprep.mubr.f32.mxu0 %v376
        %6718 = vmatmul.mubr.f32.gmra.mxu0 %v374
        %v6719 = vpop.f32.mrf.mxu0
        %v6720 = vadd.f32 0.0, %v6719
        %v6721 = vpop.f32.mrf.mxu0
        %v6722 = vadd.f32 0.0, %v6721
        %6723 = vdwg.mxu0
        %v6726 = vrot.slane %v350, 4
        %v6727 = vrot.slane %v352, 4
        %6730 = vxpose.xlu0.b32.start [1/16] %v6726, 128
        %6731 = vxpose.xlu0.b32.cont [2/16] 0.0, 128
        %6732 = vxpose.xlu0.b32.cont [3/16] 0.0, 128
        %6733 = vxpose.xlu0.b32.cont [4/16] 0.0, 128
        %6734 = vxpose.xlu0.b32.cont [5/16] 0.0, 128
        %6735 = vxpose.xlu0.b32.cont [6/16] 0.0, 128
        %6736 = vxpose.xlu0.b32.cont [7/16] 0.0, 128
        %6737 = vxpose.xlu0.b32.cont [8/16] 0.0, 128
        %6738 = vxpose.xlu0.b32.cont [9/16] 0.0, 128
        %6739 = vxpose.xlu0.b32.cont [10/16] 0.0, 128
        %6740 = vxpose.xlu0.b32.cont [11/16] 0.0, 128
        %6741 = vxpose.xlu0.b32.cont [12/16] 0.0, 128
        %6742 = vxpose.xlu0.b32.cont [13/16] 0.0, 128
        %6743 = vxpose.xlu0.b32.cont [14/16] 0.0, 128
        %6744 = vxpose.xlu0.b32.cont [15/16] 0.0, 128
        %6745 = vxpose.xlu0.b32.end [16/16] 0.0, 128
        %v6746 = vpop.trf.xlu0
        %v6747 = vpop.trf.xlu0
        %v6748 = vpop.trf.xlu0
        %v6749 = vpop.trf.xlu0
        %v6750 = vpop.trf.xlu0
        %v6751 = vpop.trf.xlu0
        %v6752 = vpop.trf.xlu0
        %v6753 = vpop.trf.xlu0
        %v6754 = vpop.trf.xlu0
        %v6755 = vpop.trf.xlu0
        %v6756 = vpop.trf.xlu0
        %v6757 = vpop.trf.xlu0
        %v6758 = vpop.trf.xlu0
        %v6759 = vpop.trf.xlu0
        %v6760 = vpop.trf.xlu0
        %v6761 = vpop.trf.xlu0
        %6762 = vxpose.xlu0.b32.start [1/16] %v6727, 128
        %6763 = vxpose.xlu0.b32.cont [2/16] 0.0, 128
        %6764 = vxpose.xlu0.b32.cont [3/16] 0.0, 128
        %6765 = vxpose.xlu0.b32.cont [4/16] 0.0, 128
        %6766 = vxpose.xlu0.b32.cont [5/16] 0.0, 128
        %6767 = vxpose.xlu0.b32.cont [6/16] 0.0, 128
        %6768 = vxpose.xlu0.b32.cont [7/16] 0.0, 128
        %6769 = vxpose.xlu0.b32.cont [8/16] 0.0, 128
        %6770 = vxpose.xlu0.b32.cont [9/16] 0.0, 128
        %6771 = vxpose.xlu0.b32.cont [10/16] 0.0, 128
        %6772 = vxpose.xlu0.b32.cont [11/16] 0.0, 128
        %6773 = vxpose.xlu0.b32.cont [12/16] 0.0, 128
        %6774 = vxpose.xlu0.b32.cont [13/16] 0.0, 128
        %6775 = vxpose.xlu0.b32.cont [14/16] 0.0, 128
        %6776 = vxpose.xlu0.b32.cont [15/16] 0.0, 128
        %6777 = vxpose.xlu0.b32.end [16/16] 0.0, 128
        %v6778 = vpop.trf.xlu0
        %v6779 = vpop.trf.xlu0
        %v6780 = vpop.trf.xlu0
        %v6781 = vpop.trf.xlu0
        %v6782 = vpop.trf.xlu0
        %v6783 = vpop.trf.xlu0
        %v6784 = vpop.trf.xlu0
        %v6785 = vpop.trf.xlu0
        %v6786 = vpop.trf.xlu0
        %v6787 = vpop.trf.xlu0
        %v6788 = vpop.trf.xlu0
        %v6789 = vpop.trf.xlu0
        %v6790 = vpop.trf.xlu0
        %v6791 = vpop.trf.xlu0
        %v6792 = vpop.trf.xlu0
        %v6793 = vpop.trf.xlu0
        %v6794 = vrot.slane %v384, 4
        %v6795 = vrot.slane %v385, 4
        %v6797 = vsel %vm450, %v6746, 0
        %v6800 = vsel %vm450, %v6747, 0
        %v6803 = vsel %vm450, %v6748, 0
        %v6806 = vsel %vm450, %v6749, 0
        %v6809 = vsel %vm450, %v6750, 0
        %v6812 = vsel %vm450, %v6751, 0
        %v6815 = vsel %vm450, %v6752, 0
        %v6818 = vsel %vm450, %v6753, 0
        %v6821 = vsel %vm450, %v6754, 0
        %v6824 = vsel %vm450, %v6755, 0
        %v6827 = vsel %vm450, %v6756, 0
        %v6830 = vsel %vm450, %v6757, 0
        %v6833 = vsel %vm450, %v6758, 0
        %v6836 = vsel %vm450, %v6759, 0
        %v6839 = vsel %vm450, %v6760, 0
        %v6842 = vsel %vm450, %v6761, 0
        %v6845 = vsel %vm450, %v6778, 0
        %v6848 = vsel %vm450, %v6779, 0
        %v6851 = vsel %vm450, %v6780, 0
        %v6854 = vsel %vm450, %v6781, 0
        %v6857 = vsel %vm450, %v6782, 0
        %v6860 = vsel %vm450, %v6783, 0
        %v6863 = vsel %vm450, %v6784, 0
        %v6866 = vsel %vm450, %v6785, 0
        %v6869 = vsel %vm450, %v6786, 0
        %v6872 = vsel %vm450, %v6787, 0
        %v6875 = vsel %vm450, %v6788, 0
        %v6878 = vsel %vm450, %v6789, 0
        %v6881 = vsel %vm450, %v6790, 0
        %v6884 = vsel %vm450, %v6791, 0
        %v6887 = vsel %vm450, %v6792, 0
        %v6890 = vsel %vm450, %v6793, 0
        %v6892 = vsel %vm547, %v6794, 0
        %v6894 = vsel %vm547, %v6795, 0
        %6896 = vmatprep.subr.mxu0 0.0
        %6897 = vmatpush1.msra.mxu0 0.0
        %6898 = vmatprep.subr.mxu0 0.0
        %6899 = vmatpush1.msra.mxu0 0.0
        %6900 = vmatprep.subr.mxu0 0.0
        %6901 = vmatpush1.msra.mxu0 0.0
        %6902 = vmatprep.subr.mxu0 0.0
        %6903 = vmatpush1.msra.mxu0 0.0
        %6904 = vmatprep.subr.mxu0 0.0
        %6905 = vmatpush1.msra.mxu0 0.0
        %6906 = vmatprep.subr.mxu0 0.0
        %6907 = vmatpush1.msra.mxu0 0.0
        %6908 = vmatprep.subr.mxu0 0.0
        %6909 = vmatpush1.msra.mxu0 0.0
        %6910 = vmatprep.subr.mxu0 0.0
        %6911 = vmatpush1.msra.mxu0 0.0
        %6912 = vmatprep.subr.mxu0 0.0
        %6913 = vmatpush1.msra.mxu0 0.0
        %6914 = vmatprep.subr.mxu0 0.0
        %6915 = vmatpush1.msra.mxu0 0.0
        %6916 = vmatprep.subr.mxu0 0.0
        %6917 = vmatpush1.msra.mxu0 0.0
        %6918 = vmatprep.subr.mxu0 0.0
        %6919 = vmatpush1.msra.mxu0 0.0
        %6920 = vmatprep.subr.mxu0 0.0
        %6921 = vmatpush1.msra.mxu0 0.0
        %6922 = vmatprep.subr.mxu0 0.0
        %6923 = vmatpush1.msra.mxu0 0.0
        %6924 = vmatprep.subr.mxu0 0.0
        %6925 = vmatpush1.msra.mxu0 0.0
        %6926 = vmatprep.subr.mxu0 %v6894
        %6927 = vmatpush1.msra.mxu0 %v6892
        %6928 = vmatprep.subr.mxu0 0.0
        %6929 = vmatpush2.msra.mxu0 0.0
        %6930 = vmatprep.subr.mxu0 0.0
        %6931 = vmatpush2.msra.mxu0 0.0
        %6932 = vmatprep.subr.mxu0 0.0
        %6933 = vmatpush2.msra.mxu0 0.0
        %6934 = vmatprep.subr.mxu0 0.0
        %6935 = vmatpush2.msra.mxu0 0.0
        %6936 = vmatprep.subr.mxu0 0.0
        %6937 = vmatpush2.msra.mxu0 0.0
        %6938 = vmatprep.subr.mxu0 0.0
        %6939 = vmatpush2.msra.mxu0 0.0
        %6940 = vmatprep.subr.mxu0 0.0
        %6941 = vmatpush2.msra.mxu0 0.0
        %6942 = vmatprep.subr.mxu0 0.0
        %6943 = vmatpush2.msra.mxu0 0.0
        %6944 = vmatprep.subr.mxu0 0.0
        %6945 = vmatpush2.msra.mxu0 0.0
        %6946 = vmatprep.subr.mxu0 0.0
        %6947 = vmatpush2.msra.mxu0 0.0
        %6948 = vmatprep.subr.mxu0 0.0
        %6949 = vmatpush2.msra.mxu0 0.0
        %6950 = vmatprep.subr.mxu0 0.0
        %6951 = vmatpush2.msra.mxu0 0.0
        %6952 = vmatprep.subr.mxu0 0.0
        %6953 = vmatpush2.msra.mxu0 0.0
        %6954 = vmatprep.subr.mxu0 0.0
        %6955 = vmatpush2.msra.mxu0 0.0
        %6956 = vmatprep.subr.mxu0 0.0
        %6957 = vmatpush2.msra.mxu0 0.0
        %6958 = vmatprep.subr.mxu0 0.0
        %6959 = vmatpush2.msra.mxu0 0.0
        %6960 = vmatprep.mubr.f32.mxu0 0.0
        %6961 = vmatmul.mubr.f32.gmra.mxu0 %v6797
        %v6962 = vpop.f32.mrf.mxu0
        %v6963 = vadd.f32 0.0, %v6962
        %v6964 = vpop.f32.mrf.mxu0
        %v6965 = vadd.f32 0.0, %v6964
        %6966 = vmatprep.mubr.f32.mxu0 0.0
        %6967 = vmatmul.mubr.f32.gmra.mxu0 %v6800
        %v6968 = vpop.f32.mrf.mxu0
        %v6969 = vadd.f32 0.0, %v6968
        %v6970 = vpop.f32.mrf.mxu0
        %v6971 = vadd.f32 0.0, %v6970
        %6972 = vmatprep.mubr.f32.mxu0 0.0
        %6973 = vmatmul.mubr.f32.gmra.mxu0 %v6803
        %v6974 = vpop.f32.mrf.mxu0
        %v6975 = vadd.f32 0.0, %v6974
        %v6976 = vpop.f32.mrf.mxu0
        %v6977 = vadd.f32 0.0, %v6976
        %6978 = vmatprep.mubr.f32.mxu0 0.0
        %6979 = vmatmul.mubr.f32.gmra.mxu0 %v6806
        %v6980 = vpop.f32.mrf.mxu0
        %v6981 = vadd.f32 0.0, %v6980
        %v6982 = vpop.f32.mrf.mxu0
        %v6983 = vadd.f32 0.0, %v6982
        %6984 = vmatprep.mubr.f32.mxu0 0.0
        %6985 = vmatmul.mubr.f32.gmra.mxu0 %v6809
        %v6986 = vpop.f32.mrf.mxu0
        %v6987 = vadd.f32 0.0, %v6986
        %v6988 = vpop.f32.mrf.mxu0
        %v6989 = vadd.f32 0.0, %v6988
        %6990 = vmatprep.mubr.f32.mxu0 0.0
        %6991 = vmatmul.mubr.f32.gmra.mxu0 %v6812
        %v6992 = vpop.f32.mrf.mxu0
        %v6993 = vadd.f32 0.0, %v6992
        %v6994 = vpop.f32.mrf.mxu0
        %v6995 = vadd.f32 0.0, %v6994
        %6996 = vmatprep.mubr.f32.mxu0 0.0
        %6997 = vmatmul.mubr.f32.gmra.mxu0 %v6815
        %v6998 = vpop.f32.mrf.mxu0
        %v6999 = vadd.f32 0.0, %v6998
        %v7000 = vpop.f32.mrf.mxu0
        %v7001 = vadd.f32 0.0, %v7000
        %7002 = vmatprep.mubr.f32.mxu0 0.0
        %7003 = vmatmul.mubr.f32.gmra.mxu0 %v6818
        %v7004 = vpop.f32.mrf.mxu0
        %v7005 = vadd.f32 0.0, %v7004
        %v7006 = vpop.f32.mrf.mxu0
        %v7007 = vadd.f32 0.0, %v7006
        %7008 = vmatprep.mubr.f32.mxu0 0.0
        %7009 = vmatmul.mubr.f32.gmra.mxu0 %v6821
        %v7010 = vpop.f32.mrf.mxu0
        %v7011 = vadd.f32 0.0, %v7010
        %v7012 = vpop.f32.mrf.mxu0
        %v7013 = vadd.f32 0.0, %v7012
        %7014 = vmatprep.mubr.f32.mxu0 0.0
        %7015 = vmatmul.mubr.f32.gmra.mxu0 %v6824
        %v7016 = vpop.f32.mrf.mxu0
        %v7017 = vadd.f32 0.0, %v7016
        %v7018 = vpop.f32.mrf.mxu0
        %v7019 = vadd.f32 0.0, %v7018
        %7020 = vmatprep.mubr.f32.mxu0 0.0
        %7021 = vmatmul.mubr.f32.gmra.mxu0 %v6827
        %v7022 = vpop.f32.mrf.mxu0
        %v7023 = vadd.f32 0.0, %v7022
        %v7024 = vpop.f32.mrf.mxu0
        %v7025 = vadd.f32 0.0, %v7024
        %7026 = vmatprep.mubr.f32.mxu0 0.0
        %7027 = vmatmul.mubr.f32.gmra.mxu0 %v6830
        %v7028 = vpop.f32.mrf.mxu0
        %v7029 = vadd.f32 0.0, %v7028
        %v7030 = vpop.f32.mrf.mxu0
        %v7031 = vadd.f32 0.0, %v7030
        %7032 = vmatprep.mubr.f32.mxu0 0.0
        %7033 = vmatmul.mubr.f32.gmra.mxu0 %v6833
        %v7034 = vpop.f32.mrf.mxu0
        %v7035 = vadd.f32 0.0, %v7034
        %v7036 = vpop.f32.mrf.mxu0
        %v7037 = vadd.f32 0.0, %v7036
        %7038 = vmatprep.mubr.f32.mxu0 0.0
        %7039 = vmatmul.mubr.f32.gmra.mxu0 %v6836
        %v7040 = vpop.f32.mrf.mxu0
        %v7041 = vadd.f32 0.0, %v7040
        %v7042 = vpop.f32.mrf.mxu0
        %v7043 = vadd.f32 0.0, %v7042
        %7044 = vmatprep.mubr.f32.mxu0 0.0
        %7045 = vmatmul.mubr.f32.gmra.mxu0 %v6839
        %v7046 = vpop.f32.mrf.mxu0
        %v7047 = vadd.f32 0.0, %v7046
        %v7048 = vpop.f32.mrf.mxu0
        %v7049 = vadd.f32 0.0, %v7048
        %7050 = vmatprep.mubr.f32.mxu0 0.0
        %7051 = vmatmul.mubr.f32.gmra.mxu0 %v6842
        %v7052 = vpop.f32.mrf.mxu0
        %v7053 = vadd.f32 0.0, %v7052
        %v7054 = vpop.f32.mrf.mxu0
        %v7055 = vadd.f32 0.0, %v7054
        %7056 = vmatprep.mubr.f32.mxu0 0.0
        %7057 = vmatmul.mubr.f32.gmra.mxu0 %v6845
        %v7058 = vpop.f32.mrf.mxu0
        %v7059 = vadd.f32 0.0, %v7058
        %v7060 = vpop.f32.mrf.mxu0
        %v7061 = vadd.f32 0.0, %v7060
        %7062 = vmatprep.mubr.f32.mxu0 0.0
        %7063 = vmatmul.mubr.f32.gmra.mxu0 %v6848
        %v7064 = vpop.f32.mrf.mxu0
        %v7065 = vadd.f32 0.0, %v7064
        %v7066 = vpop.f32.mrf.mxu0
        %v7067 = vadd.f32 0.0, %v7066
        %7068 = vmatprep.mubr.f32.mxu0 0.0
        %7069 = vmatmul.mubr.f32.gmra.mxu0 %v6851
        %v7070 = vpop.f32.mrf.mxu0
        %v7071 = vadd.f32 0.0, %v7070
        %v7072 = vpop.f32.mrf.mxu0
        %v7073 = vadd.f32 0.0, %v7072
        %7074 = vmatprep.mubr.f32.mxu0 0.0
        %7075 = vmatmul.mubr.f32.gmra.mxu0 %v6854
        %v7076 = vpop.f32.mrf.mxu0
        %v7077 = vadd.f32 0.0, %v7076
        %v7078 = vpop.f32.mrf.mxu0
        %v7079 = vadd.f32 0.0, %v7078
        %7080 = vmatprep.mubr.f32.mxu0 0.0
        %7081 = vmatmul.mubr.f32.gmra.mxu0 %v6857
        %v7082 = vpop.f32.mrf.mxu0
        %v7083 = vadd.f32 0.0, %v7082
        %v7084 = vpop.f32.mrf.mxu0
        %v7085 = vadd.f32 0.0, %v7084
        %7086 = vmatprep.mubr.f32.mxu0 0.0
        %7087 = vmatmul.mubr.f32.gmra.mxu0 %v6860
        %v7088 = vpop.f32.mrf.mxu0
        %v7089 = vadd.f32 0.0, %v7088
        %v7090 = vpop.f32.mrf.mxu0
        %v7091 = vadd.f32 0.0, %v7090
        %7092 = vmatprep.mubr.f32.mxu0 0.0
        %7093 = vmatmul.mubr.f32.gmra.mxu0 %v6863
        %v7094 = vpop.f32.mrf.mxu0
        %v7095 = vadd.f32 0.0, %v7094
        %v7096 = vpop.f32.mrf.mxu0
        %v7097 = vadd.f32 0.0, %v7096
        %7098 = vmatprep.mubr.f32.mxu0 0.0
        %7099 = vmatmul.mubr.f32.gmra.mxu0 %v6866
        %v7100 = vpop.f32.mrf.mxu0
        %v7101 = vadd.f32 0.0, %v7100
        %v7102 = vpop.f32.mrf.mxu0
        %v7103 = vadd.f32 0.0, %v7102
        %7104 = vmatprep.mubr.f32.mxu0 0.0
        %7105 = vmatmul.mubr.f32.gmra.mxu0 %v6869
        %v7106 = vpop.f32.mrf.mxu0
        %v7107 = vadd.f32 0.0, %v7106
        %v7108 = vpop.f32.mrf.mxu0
        %v7109 = vadd.f32 0.0, %v7108
        %7110 = vmatprep.mubr.f32.mxu0 0.0
        %7111 = vmatmul.mubr.f32.gmra.mxu0 %v6872
        %v7112 = vpop.f32.mrf.mxu0
        %v7113 = vadd.f32 0.0, %v7112
        %v7114 = vpop.f32.mrf.mxu0
        %v7115 = vadd.f32 0.0, %v7114
        %7116 = vmatprep.mubr.f32.mxu0 0.0
        %7117 = vmatmul.mubr.f32.gmra.mxu0 %v6875
        %v7118 = vpop.f32.mrf.mxu0
        %v7119 = vadd.f32 0.0, %v7118
        %v7120 = vpop.f32.mrf.mxu0
        %v7121 = vadd.f32 0.0, %v7120
        %7122 = vmatprep.mubr.f32.mxu0 0.0
        %7123 = vmatmul.mubr.f32.gmra.mxu0 %v6878
        %v7124 = vpop.f32.mrf.mxu0
        %v7125 = vadd.f32 0.0, %v7124
        %v7126 = vpop.f32.mrf.mxu0
        %v7127 = vadd.f32 0.0, %v7126
        %7128 = vmatprep.mubr.f32.mxu0 0.0
        %7129 = vmatmul.mubr.f32.gmra.mxu0 %v6881
        %v7130 = vpop.f32.mrf.mxu0
        %v7131 = vadd.f32 0.0, %v7130
        %v7132 = vpop.f32.mrf.mxu0
        %v7133 = vadd.f32 0.0, %v7132
        %7134 = vmatprep.mubr.f32.mxu0 0.0
        %7135 = vmatmul.mubr.f32.gmra.mxu0 %v6884
        %v7136 = vpop.f32.mrf.mxu0
        %v7137 = vadd.f32 0.0, %v7136
        %v7138 = vpop.f32.mrf.mxu0
        %v7139 = vadd.f32 0.0, %v7138
        %7140 = vmatprep.mubr.f32.mxu0 0.0
        %7141 = vmatmul.mubr.f32.gmra.mxu0 %v6887
        %v7142 = vpop.f32.mrf.mxu0
        %v7143 = vadd.f32 0.0, %v7142
        %v7144 = vpop.f32.mrf.mxu0
        %v7145 = vadd.f32 0.0, %v7144
        %7146 = vmatprep.mubr.f32.mxu0 0.0
        %7147 = vmatmul.mubr.f32.gmra.mxu0 %v6890
        %v7148 = vpop.f32.mrf.mxu0
        %v7149 = vadd.f32 0.0, %v7148
        %v7150 = vpop.f32.mrf.mxu0
        %v7151 = vadd.f32 0.0, %v7150
        %7152 = vdwg.mxu0
        %v7153 = vmax.f32 %v6963, %v6975
        %v7154 = vmax.f32 %v6969, %v6981
        %v7155 = vmax.f32 %v7153, %v6987
        %v7156 = vmax.f32 %v7154, %v6993
        %v7157 = vmax.f32 %v7155, %v6999
        %v7158 = vmax.f32 %v7156, %v7005
        %v7159 = vmax.f32 %v7157, %v7011
        %v7160 = vmax.f32 %v7158, %v7017
        %v7161 = vmax.f32 %v7159, %v7023
        %v7162 = vmax.f32 %v7160, %v7029
        %v7163 = vmax.f32 %v7161, %v7035
        %v7164 = vmax.f32 %v7162, %v7041
        %v7165 = vmax.f32 %v7163, %v7047
        %v7166 = vmax.f32 %v7164, %v7053
        %v7167 = vmax.f32 %v7165, %v7059
        %v7168 = vmax.f32 %v7166, %v7065
        %v7169 = vmax.f32 %v7167, %v7071
        %v7170 = vmax.f32 %v7168, %v7077
        %v7171 = vmax.f32 %v7169, %v7083
        %v7172 = vmax.f32 %v7170, %v7089
        %v7173 = vmax.f32 %v7171, %v7095
        %v7174 = vmax.f32 %v7172, %v7101
        %v7175 = vmax.f32 %v7173, %v7107
        %v7176 = vmax.f32 %v7174, %v7113
        %v7177 = vmax.f32 %v7175, %v7119
        %v7178 = vmax.f32 %v7176, %v7125
        %v7179 = vmax.f32 %v7177, %v7131
        %v7180 = vmax.f32 %v7178, %v7137
        %v7181 = vmax.f32 %v7179, %v7143
        %v7182 = vmax.f32 %v7180, %v7149
        %v7183 = vmax.f32 %v7181, %v7182
        %v7184 = vrot.slane %v7183, 4
        %v7185 = vmax.f32 %v7183, %v7184
        %v7186 = vrot.slane %v7185, 2
        %v7187 = vmax.f32 %v7185, %v7186
        %v7188 = vrot.slane %v7187, 1
        %v7189 = vmax.f32 %v7187, %v7188
        %v7190 = vmax.f32 %v6965, %v6977
        %v7191 = vmax.f32 %v6971, %v6983
        %v7192 = vmax.f32 %v7190, %v6989
        %v7193 = vmax.f32 %v7191, %v6995
        %v7194 = vmax.f32 %v7192, %v7001
        %v7195 = vmax.f32 %v7193, %v7007
        %v7196 = vmax.f32 %v7194, %v7013
        %v7197 = vmax.f32 %v7195, %v7019
        %v7198 = vmax.f32 %v7196, %v7025
        %v7199 = vmax.f32 %v7197, %v7031
        %v7200 = vmax.f32 %v7198, %v7037
        %v7201 = vmax.f32 %v7199, %v7043
        %v7202 = vmax.f32 %v7200, %v7049
        %v7203 = vmax.f32 %v7201, %v7055
        %v7204 = vmax.f32 %v7202, %v7061
        %v7205 = vmax.f32 %v7203, %v7067
        %v7206 = vmax.f32 %v7204, %v7073
        %v7207 = vmax.f32 %v7205, %v7079
        %v7208 = vmax.f32 %v7206, %v7085
        %v7209 = vmax.f32 %v7207, %v7091
        %v7210 = vmax.f32 %v7208, %v7097
        %v7211 = vmax.f32 %v7209, %v7103
        %v7212 = vmax.f32 %v7210, %v7109
        %v7213 = vmax.f32 %v7211, %v7115
        %v7214 = vmax.f32 %v7212, %v7121
        %v7215 = vmax.f32 %v7213, %v7127
        %v7216 = vmax.f32 %v7214, %v7133
        %v7217 = vmax.f32 %v7215, %v7139
        %v7218 = vmax.f32 %v7216, %v7145
        %v7219 = vmax.f32 %v7217, %v7151
        %v7220 = vmax.f32 %v7218, %v7219
        %v7221 = vrot.slane %v7220, 4
        %v7222 = vmax.f32 %v7220, %v7221
        %v7223 = vrot.slane %v7222, 2
        %v7224 = vmax.f32 %v7222, %v7223
        %v7225 = vrot.slane %v7224, 1
        %v7226 = vmax.f32 %v7224, %v7225
        %v7227 = vsub.f32 %v6963, %v7189
        %v7228 = vsub.f32 %v6965, %v7226
        %v7229 = vsub.f32 %v6969, %v7189
        %v7230 = vsub.f32 %v6971, %v7226
        %v7231 = vsub.f32 %v6975, %v7189
        %v7232 = vsub.f32 %v6977, %v7226
        %v7233 = vsub.f32 %v6981, %v7189
        %v7234 = vsub.f32 %v6983, %v7226
        %v7235 = vsub.f32 %v6987, %v7189
        %v7236 = vsub.f32 %v6989, %v7226
        %v7237 = vsub.f32 %v6993, %v7189
        %v7238 = vsub.f32 %v6995, %v7226
        %v7239 = vsub.f32 %v6999, %v7189
        %v7240 = vsub.f32 %v7001, %v7226
        %v7241 = vsub.f32 %v7005, %v7189
        %v7242 = vsub.f32 %v7007, %v7226
        %v7243 = vsub.f32 %v7011, %v7189
        %v7244 = vsub.f32 %v7013, %v7226
        %v7245 = vsub.f32 %v7017, %v7189
        %v7246 = vsub.f32 %v7019, %v7226
        %v7247 = vsub.f32 %v7023, %v7189
        %v7248 = vsub.f32 %v7025, %v7226
        %v7249 = vsub.f32 %v7029, %v7189
        %v7250 = vsub.f32 %v7031, %v7226
        %v7251 = vsub.f32 %v7035, %v7189
        %v7252 = vsub.f32 %v7037, %v7226
        %v7253 = vsub.f32 %v7041, %v7189
        %v7254 = vsub.f32 %v7043, %v7226
        %v7255 = vsub.f32 %v7047, %v7189
        %v7256 = vsub.f32 %v7049, %v7226
        %v7257 = vsub.f32 %v7053, %v7189
        %v7258 = vsub.f32 %v7055, %v7226
        %v7259 = vsub.f32 %v7059, %v7189
        %v7260 = vsub.f32 %v7061, %v7226
        %v7261 = vsub.f32 %v7065, %v7189
        %v7262 = vsub.f32 %v7067, %v7226
        %v7263 = vsub.f32 %v7071, %v7189
        %v7264 = vsub.f32 %v7073, %v7226
        %v7265 = vsub.f32 %v7077, %v7189
        %v7266 = vsub.f32 %v7079, %v7226
        %v7267 = vsub.f32 %v7083, %v7189
        %v7268 = vsub.f32 %v7085, %v7226
        %v7269 = vsub.f32 %v7089, %v7189
        %v7270 = vsub.f32 %v7091, %v7226
        %v7271 = vsub.f32 %v7095, %v7189
        %v7272 = vsub.f32 %v7097, %v7226
        %v7273 = vsub.f32 %v7101, %v7189
        %v7274 = vsub.f32 %v7103, %v7226
        %v7275 = vsub.f32 %v7107, %v7189
        %v7276 = vsub.f32 %v7109, %v7226
        %v7277 = vsub.f32 %v7113, %v7189
        %v7278 = vsub.f32 %v7115, %v7226
        %v7279 = vsub.f32 %v7119, %v7189
        %v7280 = vsub.f32 %v7121, %v7226
        %v7281 = vsub.f32 %v7125, %v7189
        %v7282 = vsub.f32 %v7127, %v7226
        %v7283 = vsub.f32 %v7131, %v7189
        %v7284 = vsub.f32 %v7133, %v7226
        %v7285 = vsub.f32 %v7137, %v7189
        %v7286 = vsub.f32 %v7139, %v7226
        %v7287 = vsub.f32 %v7143, %v7189
        %v7288 = vsub.f32 %v7145, %v7226
        %v7289 = vsub.f32 %v7149, %v7189
        %v7290 = vsub.f32 %v7151, %v7226
        %v7291 = vmul.f32 %v7227, 1.442695
        %v7292 = vpow.pop %v7291
        %v7293 = vmul.f32 %v7228, 1.442695
        %v7294 = vpow.pop %v7293
        %v7295 = vmul.f32 %v7229, 1.442695
        %v7296 = vpow.pop %v7295
        %v7297 = vmul.f32 %v7230, 1.442695
        %v7298 = vpow.pop %v7297
        %v7299 = vmul.f32 %v7231, 1.442695
        %v7300 = vpow.pop %v7299
        %v7301 = vmul.f32 %v7232, 1.442695
        %v7302 = vpow.pop %v7301
        %v7303 = vmul.f32 %v7233, 1.442695
        %v7304 = vpow.pop %v7303
        %v7305 = vmul.f32 %v7234, 1.442695
        %v7306 = vpow.pop %v7305
        %v7307 = vmul.f32 %v7235, 1.442695
        %v7308 = vpow.pop %v7307
        %v7309 = vmul.f32 %v7236, 1.442695
        %v7310 = vpow.pop %v7309
        %v7311 = vmul.f32 %v7237, 1.442695
        %v7312 = vpow.pop %v7311
        %v7313 = vmul.f32 %v7238, 1.442695
        %v7314 = vpow.pop %v7313
        %v7315 = vmul.f32 %v7239, 1.442695
        %v7316 = vpow.pop %v7315
        %v7317 = vmul.f32 %v7240, 1.442695
        %v7318 = vpow.pop %v7317
        %v7319 = vmul.f32 %v7241, 1.442695
        %v7320 = vpow.pop %v7319
        %v7321 = vmul.f32 %v7242, 1.442695
        %v7322 = vpow.pop %v7321
        %v7323 = vmul.f32 %v7243, 1.442695
        %v7324 = vpow.pop %v7323
        %v7325 = vmul.f32 %v7244, 1.442695
        %v7326 = vpow.pop %v7325
        %v7327 = vmul.f32 %v7245, 1.442695
        %v7328 = vpow.pop %v7327
        %v7329 = vmul.f32 %v7246, 1.442695
        %v7330 = vpow.pop %v7329
        %v7331 = vmul.f32 %v7247, 1.442695
        %v7332 = vpow.pop %v7331
        %v7333 = vmul.f32 %v7248, 1.442695
        %v7334 = vpow.pop %v7333
        %v7335 = vmul.f32 %v7249, 1.442695
        %v7336 = vpow.pop %v7335
        %v7337 = vmul.f32 %v7250, 1.442695
        %v7338 = vpow.pop %v7337
        %v7339 = vmul.f32 %v7251, 1.442695
        %v7340 = vpow.pop %v7339
        %v7341 = vmul.f32 %v7252, 1.442695
        %v7342 = vpow.pop %v7341
        %v7343 = vmul.f32 %v7253, 1.442695
        %v7344 = vpow.pop %v7343
        %v7345 = vmul.f32 %v7254, 1.442695
        %v7346 = vpow.pop %v7345
        %v7347 = vmul.f32 %v7255, 1.442695
        %v7348 = vpow.pop %v7347
        %v7349 = vmul.f32 %v7256, 1.442695
        %v7350 = vpow.pop %v7349
        %v7351 = vmul.f32 %v7257, 1.442695
        %v7352 = vpow.pop %v7351
        %v7353 = vmul.f32 %v7258, 1.442695
        %v7354 = vpow.pop %v7353
        %v7355 = vmul.f32 %v7259, 1.442695
        %v7356 = vpow.pop %v7355
        %v7357 = vmul.f32 %v7260, 1.442695
        %v7358 = vpow.pop %v7357
        %v7359 = vmul.f32 %v7261, 1.442695
        %v7360 = vpow.pop %v7359
        %v7361 = vmul.f32 %v7262, 1.442695
        %v7362 = vpow.pop %v7361
        %v7363 = vmul.f32 %v7263, 1.442695
        %v7364 = vpow.pop %v7363
        %v7365 = vmul.f32 %v7264, 1.442695
        %v7366 = vpow.pop %v7365
        %v7367 = vmul.f32 %v7265, 1.442695
        %v7368 = vpow.pop %v7367
        %v7369 = vmul.f32 %v7266, 1.442695
        %v7370 = vpow.pop %v7369
        %v7371 = vmul.f32 %v7267, 1.442695
        %v7372 = vpow.pop %v7371
        %v7373 = vmul.f32 %v7268, 1.442695
        %v7374 = vpow.pop %v7373
        %v7375 = vmul.f32 %v7269, 1.442695
        %v7376 = vpow.pop %v7375
        %v7377 = vmul.f32 %v7270, 1.442695
        %v7378 = vpow.pop %v7377
        %v7379 = vmul.f32 %v7271, 1.442695
        %v7380 = vpow.pop %v7379
        %v7381 = vmul.f32 %v7272, 1.442695
        %v7382 = vpow.pop %v7381
        %v7383 = vmul.f32 %v7273, 1.442695
        %v7384 = vpow.pop %v7383
        %v7385 = vmul.f32 %v7274, 1.442695
        %v7386 = vpow.pop %v7385
        %v7387 = vmul.f32 %v7275, 1.442695
        %v7388 = vpow.pop %v7387
        %v7389 = vmul.f32 %v7276, 1.442695
        %v7390 = vpow.pop %v7389
        %v7391 = vmul.f32 %v7277, 1.442695
        %v7392 = vpow.pop %v7391
        %v7393 = vmul.f32 %v7278, 1.442695
        %v7394 = vpow.pop %v7393
        %v7395 = vmul.f32 %v7279, 1.442695
        %v7396 = vpow.pop %v7395
        %v7397 = vmul.f32 %v7280, 1.442695
        %v7398 = vpow.pop %v7397
        %v7399 = vmul.f32 %v7281, 1.442695
        %v7400 = vpow.pop %v7399
        %v7401 = vmul.f32 %v7282, 1.442695
        %v7402 = vpow.pop %v7401
        %v7403 = vmul.f32 %v7283, 1.442695
        %v7404 = vpow.pop %v7403
        %v7405 = vmul.f32 %v7284, 1.442695
        %v7406 = vpow.pop %v7405
        %v7407 = vmul.f32 %v7285, 1.442695
        %v7408 = vpow.pop %v7407
        %v7409 = vmul.f32 %v7286, 1.442695
        %v7410 = vpow.pop %v7409
        %v7411 = vmul.f32 %v7287, 1.442695
        %v7412 = vpow.pop %v7411
        %v7413 = vmul.f32 %v7288, 1.442695
        %v7414 = vpow.pop %v7413
        %v7415 = vmul.f32 %v7289, 1.442695
        %v7416 = vpow.pop %v7415
        %v7417 = vmul.f32 %v7290, 1.442695
        %v7418 = vpow.pop %v7417
        %v7419 = vadd.f32 %v7292, %v7296
        %v7420 = vadd.f32 %v7419, %v7300
        %v7421 = vadd.f32 %v7420, %v7304
        %v7422 = vadd.f32 %v7421, %v7308
        %v7423 = vadd.f32 %v7422, %v7312
        %v7424 = vadd.f32 %v7423, %v7316
        %v7425 = vadd.f32 %v7424, %v7320
        %v7426 = vadd.f32 %v7425, %v7324
        %v7427 = vadd.f32 %v7426, %v7328
        %v7428 = vadd.f32 %v7427, %v7332
        %v7429 = vadd.f32 %v7428, %v7336
        %v7430 = vadd.f32 %v7429, %v7340
        %v7431 = vadd.f32 %v7430, %v7344
        %v7432 = vadd.f32 %v7431, %v7348
        %v7433 = vadd.f32 %v7432, %v7352
        %v7434 = vadd.f32 %v7433, %v7356
        %v7435 = vadd.f32 %v7434, %v7360
        %v7436 = vadd.f32 %v7435, %v7364
        %v7437 = vadd.f32 %v7436, %v7368
        %v7438 = vadd.f32 %v7437, %v7372
        %v7439 = vadd.f32 %v7438, %v7376
        %v7440 = vadd.f32 %v7439, %v7380
        %v7441 = vadd.f32 %v7440, %v7384
        %v7442 = vadd.f32 %v7441, %v7388
        %v7443 = vadd.f32 %v7442, %v7392
        %v7444 = vadd.f32 %v7443, %v7396
        %v7445 = vadd.f32 %v7444, %v7400
        %v7446 = vadd.f32 %v7445, %v7404
        %v7447 = vadd.f32 %v7446, %v7408
        %v7448 = vadd.f32 %v7447, %v7412
        %v7449 = vadd.f32 %v7448, %v7416
        %v7450 = vrot.slane %v7449, 4
        %v7451 = vadd.f32 %v7449, %v7450
        %v7452 = vrot.slane %v7451, 2
        %v7453 = vadd.f32 %v7451, %v7452
        %v7454 = vrot.slane %v7453, 1
        %v7455 = vadd.f32 %v7453, %v7454
        %v7456 = vadd.f32 %v7294, %v7298
        %v7457 = vadd.f32 %v7456, %v7302
        %v7458 = vadd.f32 %v7457, %v7306
        %v7459 = vadd.f32 %v7458, %v7310
        %v7460 = vadd.f32 %v7459, %v7314
        %v7461 = vadd.f32 %v7460, %v7318
        %v7462 = vadd.f32 %v7461, %v7322
        %v7463 = vadd.f32 %v7462, %v7326
        %v7464 = vadd.f32 %v7463, %v7330
        %v7465 = vadd.f32 %v7464, %v7334
        %v7466 = vadd.f32 %v7465, %v7338
        %v7467 = vadd.f32 %v7466, %v7342
        %v7468 = vadd.f32 %v7467, %v7346
        %v7469 = vadd.f32 %v7468, %v7350
        %v7470 = vadd.f32 %v7469, %v7354
        %v7471 = vadd.f32 %v7470, %v7358
        %v7472 = vadd.f32 %v7471, %v7362
        %v7473 = vadd.f32 %v7472, %v7366
        %v7474 = vadd.f32 %v7473, %v7370
        %v7475 = vadd.f32 %v7474, %v7374
        %v7476 = vadd.f32 %v7475, %v7378
        %v7477 = vadd.f32 %v7476, %v7382
        %v7478 = vadd.f32 %v7477, %v7386
        %v7479 = vadd.f32 %v7478, %v7390
        %v7480 = vadd.f32 %v7479, %v7394
        %v7481 = vadd.f32 %v7480, %v7398
        %v7482 = vadd.f32 %v7481, %v7402
        %v7483 = vadd.f32 %v7482, %v7406
        %v7484 = vadd.f32 %v7483, %v7410
        %v7485 = vadd.f32 %v7484, %v7414
        %v7486 = vadd.f32 %v7485, %v7418
        %v7487 = vrot.slane %v7486, 4
        %v7488 = vadd.f32 %v7486, %v7487
        %v7489 = vrot.slane %v7488, 2
        %v7490 = vadd.f32 %v7488, %v7489
        %v7491 = vrot.slane %v7490, 1
        %v7492 = vadd.f32 %v7490, %v7491
        %v7493 = vrcp.pop %v7455
        %v7494 = vrcp.pop %v7492
        %v7495 = vmul.f32 %v7292, %v7493
        %v7496 = vmul.f32 %v7294, %v7494
        %v7497 = vmul.f32 %v7296, %v7493
        %v7498 = vmul.f32 %v7298, %v7494
        %v7499 = vmul.f32 %v7300, %v7493
        %v7500 = vmul.f32 %v7302, %v7494
        %v7501 = vmul.f32 %v7304, %v7493
        %v7502 = vmul.f32 %v7306, %v7494
        %v7503 = vmul.f32 %v7308, %v7493
        %v7504 = vmul.f32 %v7310, %v7494
        %v7505 = vmul.f32 %v7312, %v7493
        %v7506 = vmul.f32 %v7314, %v7494
        %v7507 = vmul.f32 %v7316, %v7493
        %v7508 = vmul.f32 %v7318, %v7494
        %v7509 = vmul.f32 %v7320, %v7493
        %v7510 = vmul.f32 %v7322, %v7494
        %v7511 = vmul.f32 %v7324, %v7493
        %v7512 = vmul.f32 %v7326, %v7494
        %v7513 = vmul.f32 %v7328, %v7493
        %v7514 = vmul.f32 %v7330, %v7494
        %v7515 = vmul.f32 %v7332, %v7493
        %v7516 = vmul.f32 %v7334, %v7494
        %v7517 = vmul.f32 %v7336, %v7493
        %v7518 = vmul.f32 %v7338, %v7494
        %v7519 = vmul.f32 %v7340, %v7493
        %v7520 = vmul.f32 %v7342, %v7494
        %v7521 = vmul.f32 %v7344, %v7493
        %v7522 = vmul.f32 %v7346, %v7494
        %v7523 = vmul.f32 %v7348, %v7493
        %v7524 = vmul.f32 %v7350, %v7494
        %v7525 = vmul.f32 %v7352, %v7493
        %v7526 = vmul.f32 %v7354, %v7494
        %v7527 = vmul.f32 %v7356, %v7493
        %v7528 = vmul.f32 %v7358, %v7494
        %v7529 = vmul.f32 %v7360, %v7493
        %v7530 = vmul.f32 %v7362, %v7494
        %v7531 = vmul.f32 %v7364, %v7493
        %v7532 = vmul.f32 %v7366, %v7494
        %v7533 = vmul.f32 %v7368, %v7493
        %v7534 = vmul.f32 %v7370, %v7494
        %v7535 = vmul.f32 %v7372, %v7493
        %v7536 = vmul.f32 %v7374, %v7494
        %v7537 = vmul.f32 %v7376, %v7493
        %v7538 = vmul.f32 %v7378, %v7494
        %v7539 = vmul.f32 %v7380, %v7493
        %v7540 = vmul.f32 %v7382, %v7494
        %v7541 = vmul.f32 %v7384, %v7493
        %v7542 = vmul.f32 %v7386, %v7494
        %v7543 = vmul.f32 %v7388, %v7493
        %v7544 = vmul.f32 %v7390, %v7494
        %v7545 = vmul.f32 %v7392, %v7493
        %v7546 = vmul.f32 %v7394, %v7494
        %v7547 = vmul.f32 %v7396, %v7493
        %v7548 = vmul.f32 %v7398, %v7494
        %v7549 = vmul.f32 %v7400, %v7493
        %v7550 = vmul.f32 %v7402, %v7494
        %v7551 = vmul.f32 %v7404, %v7493
        %v7552 = vmul.f32 %v7406, %v7494
        %v7553 = vmul.f32 %v7408, %v7493
        %v7554 = vmul.f32 %v7410, %v7494
        %v7555 = vmul.f32 %v7412, %v7493
        %v7556 = vmul.f32 %v7414, %v7494
        %v7557 = vmul.f32 %v7416, %v7493
        %v7558 = vmul.f32 %v7418, %v7494
        %v7561 = vrot.slane %v374, 4
        %v7562 = vrot.slane %v376, 4
        %7565 = vmatprep.subr.mxu0 %v7526
        %7566 = vmatpush1.msra.mxu0 %v7525
        %7567 = vmatprep.subr.mxu0 %v7524
        %7568 = vmatpush1.msra.mxu0 %v7523
        %7569 = vmatprep.subr.mxu0 %v7522
        %7570 = vmatpush1.msra.mxu0 %v7521
        %7571 = vmatprep.subr.mxu0 %v7520
        %7572 = vmatpush1.msra.mxu0 %v7519
        %7573 = vmatprep.subr.mxu0 %v7518
        %7574 = vmatpush1.msra.mxu0 %v7517
        %7575 = vmatprep.subr.mxu0 %v7516
        %7576 = vmatpush1.msra.mxu0 %v7515
        %7577 = vmatprep.subr.mxu0 %v7514
        %7578 = vmatpush1.msra.mxu0 %v7513
        %7579 = vmatprep.subr.mxu0 %v7512
        %7580 = vmatpush1.msra.mxu0 %v7511
        %7581 = vmatprep.subr.mxu0 %v7510
        %7582 = vmatpush1.msra.mxu0 %v7509
        %7583 = vmatprep.subr.mxu0 %v7508
        %7584 = vmatpush1.msra.mxu0 %v7507
        %7585 = vmatprep.subr.mxu0 %v7506
        %7586 = vmatpush1.msra.mxu0 %v7505
        %7587 = vmatprep.subr.mxu0 %v7504
        %7588 = vmatpush1.msra.mxu0 %v7503
        %7589 = vmatprep.subr.mxu0 %v7502
        %7590 = vmatpush1.msra.mxu0 %v7501
        %7591 = vmatprep.subr.mxu0 %v7500
        %7592 = vmatpush1.msra.mxu0 %v7499
        %7593 = vmatprep.subr.mxu0 %v7498
        %7594 = vmatpush1.msra.mxu0 %v7497
        %7595 = vmatprep.subr.mxu0 %v7496
        %7596 = vmatpush1.msra.mxu0 %v7495
        %7597 = vmatprep.subr.mxu0 %v7558
        %7598 = vmatpush2.msra.mxu0 %v7557
        %7599 = vmatprep.subr.mxu0 %v7556
        %7600 = vmatpush2.msra.mxu0 %v7555
        %7601 = vmatprep.subr.mxu0 %v7554
        %7602 = vmatpush2.msra.mxu0 %v7553
        %7603 = vmatprep.subr.mxu0 %v7552
        %7604 = vmatpush2.msra.mxu0 %v7551
        %7605 = vmatprep.subr.mxu0 %v7550
        %7606 = vmatpush2.msra.mxu0 %v7549
        %7607 = vmatprep.subr.mxu0 %v7548
        %7608 = vmatpush2.msra.mxu0 %v7547
        %7609 = vmatprep.subr.mxu0 %v7546
        %7610 = vmatpush2.msra.mxu0 %v7545
        %7611 = vmatprep.subr.mxu0 %v7544
        %7612 = vmatpush2.msra.mxu0 %v7543
        %7613 = vmatprep.subr.mxu0 %v7542
        %7614 = vmatpush2.msra.mxu0 %v7541
        %7615 = vmatprep.subr.mxu0 %v7540
        %7616 = vmatpush2.msra.mxu0 %v7539
        %7617 = vmatprep.subr.mxu0 %v7538
        %7618 = vmatpush2.msra.mxu0 %v7537
        %7619 = vmatprep.subr.mxu0 %v7536
        %7620 = vmatpush2.msra.mxu0 %v7535
        %7621 = vmatprep.subr.mxu0 %v7534
        %7622 = vmatpush2.msra.mxu0 %v7533
        %7623 = vmatprep.subr.mxu0 %v7532
        %7624 = vmatpush2.msra.mxu0 %v7531
        %7625 = vmatprep.subr.mxu0 %v7530
        %7626 = vmatpush2.msra.mxu0 %v7529
        %7627 = vmatprep.subr.mxu0 %v7528
        %7628 = vmatpush2.msra.mxu0 %v7527
        %7629 = vmatprep.mubr.f32.mxu0 %v7562
        %7630 = vmatmul.mubr.f32.gmra.mxu0 %v7561
        %v7631 = vpop.f32.mrf.mxu0
        %v7632 = vadd.f32 0.0, %v7631
        %v7633 = vpop.f32.mrf.mxu0
        %v7634 = vadd.f32 0.0, %v7633
        %7635 = vdwg.mxu0
        %v7638 = vrot.slane %v2196, 4
        %v7639 = vrot.slane %v2198, 4
        %v7644 = vrot.slane %v4008, 4
        %v7645 = vrot.slane %v4010, 4
        %v7650 = vrot.slane %v5820, 4
        %v7651 = vrot.slane %v5822, 4
        %v7656 = vrot.slane %v7632, 4
        %v7657 = vrot.slane %v7634, 4
        %v7660 = vsel %vm547, %v1284, %v7638
        %v7661 = vsel %vm547, %v1286, %v7639
        %v7662 = vsel %vm547, %v3096, %v7644
        %v7663 = vsel %vm547, %v3098, %v7645
        %v7664 = vsel %vm547, %v4908, %v7650
        %v7665 = vsel %vm547, %v4910, %v7651
        %v7666 = vsel %vm547, %v6720, %v7656
        %v7667 = vsel %vm547, %v6722, %v7657
        %v7668 = vld [vmem:[#allocation2] sm:$0xff]
        %v7669 = vld [vmem:[#allocation2 + $0x8] sm:$0xff]
        %v7670 = vld [vmem:[#allocation2 + $0x10] sm:$0xff]
        %v7671 = vld [vmem:[#allocation2 + $0x18] sm:$0xff]
        %v7673 = vsel %vm204, %v7668, 0
        %v7676 = vsel %vm204, %v7669, 0
        %v7679 = vsel %vm204, %v7670, 0
        %v7682 = vsel %vm204, %v7671, 0
        %7684 = vmatprep.subr.mxu0 0.0
        %7685 = vmatpush1.msra.mxu0 0.0
        %7686 = vmatprep.subr.mxu0 0.0
        %7687 = vmatpush1.msra.mxu0 0.0
        %7688 = vmatprep.subr.mxu0 0.0
        %7689 = vmatpush1.msra.mxu0 0.0
        %7690 = vmatprep.subr.mxu0 0.0
        %7691 = vmatpush1.msra.mxu0 0.0
        %7692 = vmatprep.subr.mxu0 0.0
        %7693 = vmatpush1.msra.mxu0 0.0
        %7694 = vmatprep.subr.mxu0 0.0
        %7695 = vmatpush1.msra.mxu0 0.0
        %7696 = vmatprep.subr.mxu0 0.0
        %7697 = vmatpush1.msra.mxu0 0.0
        %7698 = vmatprep.subr.mxu0 0.0
        %7699 = vmatpush1.msra.mxu0 0.0
        %7700 = vmatprep.subr.mxu0 0.0
        %7701 = vmatpush1.msra.mxu0 0.0
        %7702 = vmatprep.subr.mxu0 0.0
        %7703 = vmatpush1.msra.mxu0 0.0
        %7704 = vmatprep.subr.mxu0 0.0
        %7705 = vmatpush1.msra.mxu0 0.0
        %7706 = vmatprep.subr.mxu0 0.0
        %7707 = vmatpush1.msra.mxu0 0.0
        %7708 = vmatprep.subr.mxu0 %v7667
        %7709 = vmatpush1.msra.mxu0 %v7666
        %7710 = vmatprep.subr.mxu0 %v7665
        %7711 = vmatpush1.msra.mxu0 %v7664
        %7712 = vmatprep.subr.mxu0 %v7663
        %7713 = vmatpush1.msra.mxu0 %v7662
        %7714 = vmatprep.subr.mxu0 %v7661
        %7715 = vmatpush1.msra.mxu0 %v7660
        %7716 = vmatprep.subr.mxu0 0.0
        %7717 = vmatpush2.msra.mxu0 0.0
        %7718 = vmatprep.subr.mxu0 0.0
        %7719 = vmatpush2.msra.mxu0 0.0
        %7720 = vmatprep.subr.mxu0 0.0
        %7721 = vmatpush2.msra.mxu0 0.0
        %7722 = vmatprep.subr.mxu0 0.0
        %7723 = vmatpush2.msra.mxu0 0.0
        %7724 = vmatprep.subr.mxu0 0.0
        %7725 = vmatpush2.msra.mxu0 0.0
        %7726 = vmatprep.subr.mxu0 0.0
        %7727 = vmatpush2.msra.mxu0 0.0
        %7728 = vmatprep.subr.mxu0 0.0
        %7729 = vmatpush2.msra.mxu0 0.0
        %7730 = vmatprep.subr.mxu0 0.0
        %7731 = vmatpush2.msra.mxu0 0.0
        %7732 = vmatprep.subr.mxu0 0.0
        %7733 = vmatpush2.msra.mxu0 0.0
        %7734 = vmatprep.subr.mxu0 0.0
        %7735 = vmatpush2.msra.mxu0 0.0
        %7736 = vmatprep.subr.mxu0 0.0
        %7737 = vmatpush2.msra.mxu0 0.0
        %7738 = vmatprep.subr.mxu0 0.0
        %7739 = vmatpush2.msra.mxu0 0.0
        %7740 = vmatprep.subr.mxu0 0.0
        %7741 = vmatpush2.msra.mxu0 0.0
        %7742 = vmatprep.subr.mxu0 0.0
        %7743 = vmatpush2.msra.mxu0 0.0
        %7744 = vmatprep.subr.mxu0 0.0
        %7745 = vmatpush2.msra.mxu0 0.0
        %7746 = vmatprep.subr.mxu0 0.0
        %7747 = vmatpush2.msra.mxu0 0.0
        %7748 = vmatprep.mubr.f32.mxu0 0.0
        %7749 = vmatmul.mubr.f32.gmra.mxu0 %v7673
        %v7750 = vpop.f32.mrf.mxu0
        %v7751 = vadd.f32 0.0, %v7750
        %v7752 = vpop.f32.mrf.mxu0
        %v7753 = vadd.f32 0.0, %v7752
        %7754 = vmatprep.mubr.f32.mxu0 0.0
        %7755 = vmatmul.mubr.f32.gmra.mxu0 %v7676
        %v7756 = vpop.f32.mrf.mxu0
        %v7757 = vadd.f32 0.0, %v7756
        %v7758 = vpop.f32.mrf.mxu0
        %v7759 = vadd.f32 0.0, %v7758
        %7760 = vmatprep.mubr.f32.mxu0 0.0
        %7761 = vmatmul.mubr.f32.gmra.mxu0 %v7679
        %v7762 = vpop.f32.mrf.mxu0
        %v7763 = vadd.f32 0.0, %v7762
        %v7764 = vpop.f32.mrf.mxu0
        %v7765 = vadd.f32 0.0, %v7764
        %7766 = vmatprep.mubr.f32.mxu0 0.0
        %7767 = vmatmul.mubr.f32.gmra.mxu0 %v7682
        %v7768 = vpop.f32.mrf.mxu0
        %v7769 = vadd.f32 0.0, %v7768
        %v7770 = vpop.f32.mrf.mxu0
        %v7771 = vadd.f32 0.0, %v7770
        %7772 = vdwg.mxu0
        %7773 = vst [vmem:[%s178] sm:$0xff] %v7751
        %7774 = vst [vmem:[%s178 + $0x8] sm:$0xff] %v7753
        %7775 = vst [vmem:[%s178 + $0x10] sm:$0xff] %v7757
        %7776 = vst [vmem:[%s178 + $0x18] sm:$0xff] %v7759
        %7777 = vst [vmem:[%s178 + $0x20] sm:$0xff] %v7763
        %7778 = vst [vmem:[%s178 + $0x28] sm:$0xff] %v7765
        %7779 = vst [vmem:[%s178 + $0x30] sm:$0xff] %v7769
        %7780 = vst [vmem:[%s178 + $0x38] sm:$0xff] %v7771
        %s7781 = sand.u32 %s94, 1
        %s7782 = scalar_lea.sflag [#allocation4], %s7781
        %s7783 = sand.u32 %s94, 1
        %s7784 = smul.addr %s7783, 64
        %s7785 = scalar_lea.vmem [#allocation5], %s7784
        // Predicated region
        $region37: #{tpu_custom_call.1} parent=31 // pred_check
          %p7786 = pneg %p104
        $region38: #{tpu_custom_call.1} parent=31 // pred_check_branch
          %7788 = sbr.rel (%p7786) target = $region40
        $region39: #{tpu_custom_call.1} parent=31 // pred_region
          %s7790 = ssub.s32 1024, 1024
          %7791 = vsyncadd %s7782, %s7790
          %s7792 = smul.addr %s18, 8
          %s7793 = smul.addr %s7792, 128
          %s7794 = scalar_lea.hbm %s3, %s7793
          %s7795 = sshll.u32 %s7785, 4
          %s7796 = int_to_ptr.vmem [resolvable:$true] %s7795
          %7801 = dma.vmem_to_hbm [thread:$0]  %s7796, 1024, %s7794, %s7782, 256, 256, 16
        $region40: #{tpu_custom_call.1} parent=31 // pred_fallthru
          _
      $region32: #{tpu_custom_call.1} parent=5 // pred_fallthru
        _
      %p7802 = scmp.le.s32.totalorder 2, %s13
      // Predicated region
      $region41: #{tpu_custom_call.1} parent=5 // pred_check
        %p7803 = pneg %p7802
      $region42: #{tpu_custom_call.1} parent=5 // pred_check_branch
        %7805 = sbr.rel (%p7803) target = $region44
      $region43: #{tpu_custom_call.1} parent=5 // pred_region
        %s7806 = ssub.s32 %s13, 2
        // Predicated region
        $region45: #{tpu_custom_call.1} parent=43 // pred_check
          %p7807 = pneg %p110
        $region46: #{tpu_custom_call.1} parent=43 // pred_check_branch
          %7809 = sbr.rel (%p7807) target = $region48
        $region47: #{tpu_custom_call.1} parent=43 // pred_region
          %s7810 = sand.u32 %s95, 1
          %s7811 = scalar_lea.sflag [#allocation4], %s7810
          %s7812 = sand.u32 %s95, 1
          %s7813 = smul.addr %s7812, 64
          %s7814 = scalar_lea.vmem [#allocation5], %s7813
          %7815 = dma.done %s7811, 1024
        $region48: #{tpu_custom_call.1} parent=43 // pred_fallthru
          _
      $region44: #{tpu_custom_call.1} parent=5 // pred_fallthru
        _
    $region6: #{tpu_custom_call.1} parent=1 // loop_footer
      %s17 = sadd.s32 1, %s13
    $region7: #{tpu_custom_call.1} parent=1 // loop_footer_branch
      %12 = sbr.rel target = $region3
    $region8: #{tpu_custom_call.1} parent=1 // loop_exit
      _
    %7816 = vsyncpa [#allocation3], 1
    %s7817 = scalar_lea.sflag [#allocation3], 1
    %7818 = vsyncpa %s7817, 1
    %7819 = vsyncpa [#allocation4], 1
    %s7820 = scalar_lea.sflag [#allocation4], 1
    %7821 = vsyncpa %s7820, 1

</llo_original>
